<compile_context>
chip_gen: v7x
topology: tpu7x:2x2x1
jax: 0.10.0
libtpu: 0.0.40
codegen_flags: <defaults>
</compile_context>

<pallas_src>
import numpy as np
import jax
import jax.numpy as jnp
from jax import lax
from jax.experimental import pallas as pl
from jax.experimental.pallas import tpu as pltpu

_EPS = 1e-5   # PyTorch BatchNorm2d default eps
_LANE = 128


def _round_up(x, m):
    return (x + m - 1) // m * m


def _fold_bn(bn):
    scale = bn["gamma"] / jnp.sqrt(bn["var"] + _EPS)
    shift = bn["beta"] - bn["mean"] * scale
    return scale, shift


# ---------------------------- fused Pallas kernel ----------------------------

def _make_kernel(rp, g, wp, pp, has_sc):
    # row offset of tap (dy, dx) in the flattened padded-row space
    offs = [(dy - 1) * wp + (dx - 1) for dy in range(3) for dx in range(3)]

    def kernel(x_ref, mask_ref, s1_ref, t1_ref, w1_ref, sh2_ref, w2_ref, b2_ref,
               *rest):
        if has_sc:
            ws_ref, o_ref, y_sc, h_sc = rest
        else:
            o_ref, y_sc, h_sc = rest

        # ---- stage 1: bn1 + relu (fused); mask keeps spatial-pad / guard rows 0
        y_sc[...] = (jnp.maximum(x_ref[0] * s1_ref[...] + t1_ref[...], 0.0)
                     * mask_ref[...])
        # guard rows of the conv1-output buffer act as conv2's zero padding
        h_sc[...] = jnp.zeros_like(h_sc)

        # ---- stage 2: conv1 = 9 shifted-window matmuls; bn2 scale/shift folded
        acc1 = jnp.zeros((rp, pp), jnp.float32)
        for t in range(9):
            a = y_sc[pl.ds(g + offs[t], rp), :].astype(jnp.bfloat16)
            acc1 = acc1 + jnp.dot(a, w1_ref[t], preferred_element_type=jnp.float32)
        # TODO(synk): dropout is eval-mode identity (training RNG masking omitted).
        h_sc[pl.ds(g, rp), :] = (jnp.maximum(acc1 + sh2_ref[...], 0.0)
                                 * mask_ref[pl.ds(g, rp), :])

        # ---- stage 3: conv2 taps + merged bias + shortcut, fused residual add
        acc2 = jnp.zeros((rp, pp), jnp.float32)
        for t in range(9):
            a = h_sc[pl.ds(g + offs[t], rp), :].astype(jnp.bfloat16)
            acc2 = acc2 + jnp.dot(a, w2_ref[t], preferred_element_type=jnp.float32)

        xc = x_ref[0, pl.ds(g, rp), :]
        if has_sc:
            sc = jnp.dot(xc.astype(jnp.bfloat16), ws_ref[...],
                         preferred_element_type=jnp.float32)
        else:
            sc = xc
        o_ref[0] = acc2 + b2_ref[...] + sc

    return kernel


# ---------------------------- wrapper ----------------------------

def wide_basic_forward(x_nchw, params, stride):
    n, cin, h, w = x_nchw.shape
    planes = params["w1"].shape[0]
    hp, wp = h + 2, w + 2
    rp = hp * wp                         # rows per spatially-padded image
    g = _round_up(wp + 1, 8)             # guard rows (>= max |tap offset|), aligned
    rext = rp + 2 * g
    cp = _round_up(cin, _LANE)           # lane-dense channel padding
    pp = _round_up(planes, _LANE)
    has_sc = "ws" in params

    s1, t1 = _fold_bn(params["bn1"])
    s2, t2 = _fold_bn(params["bn2"])

    def padc(v, width):                  # (c,) -> (1, width) zero-padded
        return jnp.pad(v.reshape(1, -1), ((0, 0), (0, width - v.shape[0])))

    # activations: NCHW -> NHWC, spatial zero-pad (conv pad=1), channel pad,
    # flatten rows, add all-zero guard rows for the shifted-window taps.
    x_nhwc = jnp.transpose(x_nchw, (0, 2, 3, 1))
    x_rows = jnp.pad(x_nhwc, ((0, 0), (1, 1), (1, 1), (0, cp - cin))).reshape(n, rp, cp)
    x_ext = jnp.pad(x_rows, ((0, 0), (g, g), (0, 0)))

    # interior mask over extended rows (1 = real pixel, 0 = spatial pad / guard)
    m2 = np.zeros((hp, wp), np.float32)
    m2[1:hp - 1, 1:wp - 1] = 1.0
    mask = jnp.asarray(np.pad(m2.reshape(rp, 1), ((g, g), (0, 0))))

    # bn1 scale/shift (zero-padded channels stay exactly zero through bn1+relu)
    s1p, t1p = padc(s1, cp), padc(t1, cp)

    # conv1 weights with bn2 scale folded in; per-tap (cp, pp) slices in bf16
    w1 = jnp.transpose(params["w1"], (2, 3, 1, 0)).reshape(9, cin, planes)
    w1 = w1 * s2[None, None, :]
    w1 = jnp.pad(w1, ((0, 0), (0, cp - cin), (0, pp - planes))).astype(jnp.bfloat16)
    sh2 = padc(params["b1"] * s2 + t2, pp)          # folded conv1 bias + bn2 shift

    w2 = jnp.transpose(params["w2"], (2, 3, 1, 0)).reshape(9, planes, planes)
    w2 = jnp.pad(w2, ((0, 0), (0, pp - planes), (0, pp - planes))).astype(jnp.bfloat16)

    b2 = params["b2"] + (params["bs"] if has_sc else 0.0)   # merged output bias
    b2p = padc(b2, pp)

    args = [x_ext, mask, s1p, t1p, w1, sh2, w2, b2p]
    in_specs = [
        pl.BlockSpec((1, rext, cp), lambda i: (i, 0, 0)),
        pl.BlockSpec((rext, 1), lambda i: (0, 0)),
        pl.BlockSpec((1, cp), lambda i: (0, 0)),
        pl.BlockSpec((1, cp), lambda i: (0, 0)),
        pl.BlockSpec((9, cp, pp), lambda i: (0, 0, 0)),
        pl.BlockSpec((1, pp), lambda i: (0, 0)),
        pl.BlockSpec((9, pp, pp), lambda i: (0, 0, 0)),
        pl.BlockSpec((1, pp), lambda i: (0, 0)),
    ]
    if has_sc:
        ws = jnp.transpose(params["ws"][:, :, 0, 0], (1, 0))        # (cin, planes)
        ws = jnp.pad(ws, ((0, cp - cin), (0, pp - planes))).astype(jnp.bfloat16)
        args.append(ws)
        in_specs.append(pl.BlockSpec((cp, pp), lambda i: (0, 0)))

    out_rows = pl.pallas_call(
        _make_kernel(rp, g, wp, pp, has_sc),
        out_shape=jax.ShapeDtypeStruct((n, rp, pp), jnp.float32),
        grid=(n,),
        in_specs=in_specs,
        out_specs=pl.BlockSpec((1, rp, pp), lambda i: (i, 0, 0)),
        scratch_shapes=[pltpu.VMEM((rext, cp), jnp.float32),
                        pltpu.VMEM((rext, pp), jnp.float32)],
        compiler_params=pltpu.CompilerParams(dimension_semantics=("parallel",)),
    )(*args)

    # extract the strided interior (exact for k=3,pad=1 / k=1,pad=0 convs),
    # drop channel padding, back to NCHW.
    # TODO(synk): for stride>1 the kernel still evaluates conv2/shortcut at all
    # spatial positions; restricting to strided rows would save ~stride^2 MXU work.
    out = out_rows.reshape(n, hp, wp, pp)[:, 1:hp - 1:stride, 1:wp - 1:stride, :planes]
    return jnp.transpose(out, (0, 3, 1, 2))


# ---------------------------- parameters / reference ----------------------------

def init_params(key, in_planes, planes, stride):
    ks = jax.random.split(key, 14)

    def nrm(k, shape, s=0.1):
        return (s * jax.random.normal(k, shape)).astype(jnp.float32)

    p = {
        "bn1": {"gamma": 1.0 + nrm(ks[0], (in_planes,)),
                "beta": nrm(ks[1], (in_planes,)),
                "mean": nrm(ks[2], (in_planes,)),
                "var": 1.0 + jnp.abs(nrm(ks[3], (in_planes,)))},
        "w1": nrm(ks[4], (planes, in_planes, 3, 3)),
        "b1": nrm(ks[5], (planes,), 0.05),
        "bn2": {"gamma": 1.0 + nrm(ks[6], (planes,)),
                "beta": nrm(ks[7], (planes,)),
                "mean": nrm(ks[8], (planes,)),
                "var": 1.0 + jnp.abs(nrm(ks[9], (planes,)))},
        "w2": nrm(ks[10], (planes, planes, 3, 3)),
        "b2": nrm(ks[11], (planes,), 0.05),
    }
    if stride != 1 or in_planes != planes:
        p["ws"] = nrm(ks[12], (planes, in_planes, 1, 1))
        p["bs"] = nrm(ks[13], (planes,), 0.05)
    return p


def ref_forward(x, params, stride):
    dn = ("NCHW", "OIHW", "NCHW")
    hp = lax.Precision.HIGHEST

    def bn(z, p):
        s = p["gamma"] / jnp.sqrt(p["var"] + _EPS)
        t = p["beta"] - p["mean"] * s
        return z * s[None, :, None, None] + t[None, :, None, None]

    y = jax.nn.relu(bn(x, params["bn1"]))
    y = lax.conv_general_dilated(y, params["w1"], (1, 1), ((1, 1), (1, 1)),
                                 dimension_numbers=dn, precision=hp)
    y = y + params["b1"][None, :, None, None]
    y = jax.nn.relu(bn(y, params["bn2"]))
    y = lax.conv_general_dilated(y, params["w2"], (stride, stride), ((1, 1), (1, 1)),
                                 dimension_numbers=dn, precision=hp)
    y = y + params["b2"][None, :, None, None]
    if "ws" in params:
        sc = lax.conv_general_dilated(x, params["ws"], (stride, stride), ((0, 0), (0, 0)),
                                      dimension_numbers=dn, precision=hp)
        sc = sc + params["bs"][None, :, None, None]
    else:
        sc = x
    return y + sc


if __name__ == "__main__":
    key = jax.random.PRNGKey(0)
    n, h, w = 2, 16, 16
    # (in_planes, planes, stride): conv shortcut / identity shortcut / strided block
    configs = [(4, 8, 1), (8, 8, 1), (8, 8, 2)]
    for i, (cin, planes, stride) in enumerate(configs):
        kp, kx = jax.random.split(jax.random.fold_in(key, i))
        params = init_params(kp, cin, planes, stride)
        x = jax.random.normal(kx, (n, cin, h, w), dtype=jnp.float32)
        out = jax.block_until_ready(wide_basic_forward(x, params, stride))
        ref = jax.block_until_ready(ref_forward(x, params, stride))
        np.testing.assert_allclose(np.asarray(out), np.asarray(ref), rtol=2e-2, atol=2e-2)
    print("KERNEL_OK")
</pallas_src>

<mosaic_0001>
module attributes {stable_mosaic.version = 11 : i64} {
  func.func @kernel(%arg0: i32, %arg1: memref<1x372x128xf32, #tpu.memory_space<vmem>>, %arg2: memref<372x1xf32, #tpu.memory_space<vmem>>, %arg3: memref<1x128xf32, #tpu.memory_space<vmem>>, %arg4: memref<1x128xf32, #tpu.memory_space<vmem>>, %arg5: memref<9x128x128xbf16, #tpu.memory_space<vmem>>, %arg6: memref<1x128xf32, #tpu.memory_space<vmem>>, %arg7: memref<9x128x128xbf16, #tpu.memory_space<vmem>>, %arg8: memref<1x128xf32, #tpu.memory_space<vmem>>, %arg9: memref<128x128xbf16, #tpu.memory_space<vmem>>, %arg10: memref<1x324x128xf32, #tpu.memory_space<vmem>>, %arg11: memref<372x128xf32, #tpu.memory_space<vmem>>, %arg12: memref<372x128xf32, #tpu.memory_space<vmem>>) attributes {dimension_semantics = [#tpu.dimension_semantics<parallel>], iteration_bounds = array<i64: 2>, scalar_prefetch = 0 : i64, scratch_operands = 2 : i64, tpu.core_type = #tpu.core_type<tc>, window_params = [{transform_indices = @transform_0, window_bounds = array<i64: 1, 372, 128>}, {pipeline_mode = #tpu.pipeline_mode<synchronous>, transform_indices = @transform_1, window_bounds = array<i64: 372, 1>}, {pipeline_mode = #tpu.pipeline_mode<synchronous>, transform_indices = @transform_2, window_bounds = array<i64: 1, 128>}, {pipeline_mode = #tpu.pipeline_mode<synchronous>, transform_indices = @transform_3, window_bounds = array<i64: 1, 128>}, {pipeline_mode = #tpu.pipeline_mode<synchronous>, transform_indices = @transform_4, window_bounds = array<i64: 9, 128, 128>}, {pipeline_mode = #tpu.pipeline_mode<synchronous>, transform_indices = @transform_5, window_bounds = array<i64: 1, 128>}, {pipeline_mode = #tpu.pipeline_mode<synchronous>, transform_indices = @transform_6, window_bounds = array<i64: 9, 128, 128>}, {pipeline_mode = #tpu.pipeline_mode<synchronous>, transform_indices = @transform_7, window_bounds = array<i64: 1, 128>}, {pipeline_mode = #tpu.pipeline_mode<synchronous>, transform_indices = @transform_8, window_bounds = array<i64: 128, 128>}, {transform_indices = @transform_9, window_bounds = array<i64: 1, 324, 128>}]} {
    %c0 = arith.constant 0 : index
    %c0_0 = arith.constant 0 : index
    %c0_1 = arith.constant 0 : index
    %0 = vector.load %arg1[%c0, %c0_0, %c0_1] : memref<1x372x128xf32, #tpu.memory_space<vmem>>, vector<1x372x128xf32>
    %1 = vector.shape_cast %0 : vector<1x372x128xf32> to vector<372x128xf32>
    %c0_2 = arith.constant 0 : index
    %c0_3 = arith.constant 0 : index
    %2 = vector.load %arg3[%c0_2, %c0_3] : memref<1x128xf32, #tpu.memory_space<vmem>>, vector<1x128xf32>
    %3 = vector.broadcast %2 : vector<1x128xf32> to vector<372x128xf32>
    %4 = arith.mulf %1, %3 : vector<372x128xf32>
    %c0_4 = arith.constant 0 : index
    %c0_5 = arith.constant 0 : index
    %5 = vector.load %arg4[%c0_4, %c0_5] : memref<1x128xf32, #tpu.memory_space<vmem>>, vector<1x128xf32>
    %6 = vector.broadcast %5 : vector<1x128xf32> to vector<372x128xf32>
    %7 = arith.addf %4, %6 : vector<372x128xf32>
    %cst = arith.constant 0.000000e+00 : f32
    %8 = vector.broadcast %cst : f32 to vector<372x128xf32>
    %9 = arith.maximumf %7, %8 : vector<372x128xf32>
    %c0_6 = arith.constant 0 : index
    %c0_7 = arith.constant 0 : index
    %10 = vector.load %arg2[%c0_6, %c0_7] : memref<372x1xf32, #tpu.memory_space<vmem>>, vector<372x1xf32>
    %11 = vector.broadcast %10 : vector<372x1xf32> to vector<372x128xf32>
    %12 = arith.mulf %9, %11 : vector<372x128xf32>
    %c0_8 = arith.constant 0 : index
    %c0_9 = arith.constant 0 : index
    %13 = vector.load %arg11[%c0_8, %c0_9] : memref<372x128xf32, #tpu.memory_space<vmem>>, vector<372x128xf32>
    tpu.vector_store %arg11[%c0_8, %c0_9], %12 {strides = array<i32>} : memref<372x128xf32, #tpu.memory_space<vmem>>, vector<372x128xf32>,
    %cst_10 = arith.constant 0.000000e+00 : f32
    %14 = vector.broadcast %cst_10 : f32 to vector<372x128xf32>
    %c0_11 = arith.constant 0 : index
    %c0_12 = arith.constant 0 : index
    %15 = vector.load %arg12[%c0_11, %c0_12] : memref<372x128xf32, #tpu.memory_space<vmem>>, vector<372x128xf32>
    tpu.vector_store %arg12[%c0_11, %c0_12], %14 {strides = array<i32>} : memref<372x128xf32, #tpu.memory_space<vmem>>, vector<372x128xf32>,
    %cst_13 = arith.constant 0.000000e+00 : f32
    %16 = vector.broadcast %cst_13 : f32 to vector<324x128xf32>
    %c5 = arith.constant 5 : index
    %c0_14 = arith.constant 0 : index
    %17 = vector.load %arg11[%c5, %c0_14] : memref<372x128xf32, #tpu.memory_space<vmem>>, vector<324x128xf32>
    %18 = arith.truncf %17 : vector<324x128xf32> to vector<324x128xbf16>
    %c0_15 = arith.constant 0 : index
    %c0_16 = arith.constant 0 : index
    %c0_17 = arith.constant 0 : index
    %19 = vector.load %arg5[%c0_15, %c0_16, %c0_17] : memref<9x128x128xbf16, #tpu.memory_space<vmem>>, vector<1x128x128xbf16>
    %20 = vector.shape_cast %19 : vector<1x128x128xbf16> to vector<128x128xbf16>
    %cst_18 = arith.constant dense<0.000000e+00> : vector<324x128xf32>
    %21 = tpu.matmul %18, %20, %cst_18 {dimension_numbers = #tpu.dot_dimension_numbers<[1], [0], [0], [1], [0, 0, 1, 1], [], []>} : vector<324x128xbf16>, vector<128x128xbf16>, vector<324x128xf32> -> vector<324x128xf32>
    %22 = arith.addf %16, %21 : vector<324x128xf32>
    %c6 = arith.constant 6 : index
    %c0_19 = arith.constant 0 : index
    %23 = vector.load %arg11[%c6, %c0_19] : memref<372x128xf32, #tpu.memory_space<vmem>>, vector<324x128xf32>
    %24 = arith.truncf %23 : vector<324x128xf32> to vector<324x128xbf16>
    %c1 = arith.constant 1 : index
    %c0_20 = arith.constant 0 : index
    %c0_21 = arith.constant 0 : index
    %25 = vector.load %arg5[%c1, %c0_20, %c0_21] : memref<9x128x128xbf16, #tpu.memory_space<vmem>>, vector<1x128x128xbf16>
    %26 = vector.shape_cast %25 : vector<1x128x128xbf16> to vector<128x128xbf16>
    %cst_22 = arith.constant dense<0.000000e+00> : vector<324x128xf32>
    %27 = tpu.matmul %24, %26, %cst_22 {dimension_numbers = #tpu.dot_dimension_numbers<[1], [0], [0], [1], [0, 0, 1, 1], [], []>} : vector<324x128xbf16>, vector<128x128xbf16>, vector<324x128xf32> -> vector<324x128xf32>
    %28 = arith.addf %22, %27 : vector<324x128xf32>
    %c7 = arith.constant 7 : index
    %c0_23 = arith.constant 0 : index
    %29 = vector.load %arg11[%c7, %c0_23] : memref<372x128xf32, #tpu.memory_space<vmem>>, vector<324x128xf32>
    %30 = arith.truncf %29 : vector<324x128xf32> to vector<324x128xbf16>
    %c2 = arith.constant 2 : index
    %c0_24 = arith.constant 0 : index
    %c0_25 = arith.constant 0 : index
    %31 = vector.load %arg5[%c2, %c0_24, %c0_25] : memref<9x128x128xbf16, #tpu.memory_space<vmem>>, vector<1x128x128xbf16>
    %32 = vector.shape_cast %31 : vector<1x128x128xbf16> to vector<128x128xbf16>
    %cst_26 = arith.constant dense<0.000000e+00> : vector<324x128xf32>
    %33 = tpu.matmul %30, %32, %cst_26 {dimension_numbers = #tpu.dot_dimension_numbers<[1], [0], [0], [1], [0, 0, 1, 1], [], []>} : vector<324x128xbf16>, vector<128x128xbf16>, vector<324x128xf32> -> vector<324x128xf32>
    %34 = arith.addf %28, %33 : vector<324x128xf32>
    %c23 = arith.constant 23 : index
    %c0_27 = arith.constant 0 : index
    %35 = vector.load %arg11[%c23, %c0_27] : memref<372x128xf32, #tpu.memory_space<vmem>>, vector<324x128xf32>
    %36 = arith.truncf %35 : vector<324x128xf32> to vector<324x128xbf16>
    %c3 = arith.constant 3 : index
    %c0_28 = arith.constant 0 : index
    %c0_29 = arith.constant 0 : index
    %37 = vector.load %arg5[%c3, %c0_28, %c0_29] : memref<9x128x128xbf16, #tpu.memory_space<vmem>>, vector<1x128x128xbf16>
    %38 = vector.shape_cast %37 : vector<1x128x128xbf16> to vector<128x128xbf16>
    %cst_30 = arith.constant dense<0.000000e+00> : vector<324x128xf32>
    %39 = tpu.matmul %36, %38, %cst_30 {dimension_numbers = #tpu.dot_dimension_numbers<[1], [0], [0], [1], [0, 0, 1, 1], [], []>} : vector<324x128xbf16>, vector<128x128xbf16>, vector<324x128xf32> -> vector<324x128xf32>
    %40 = arith.addf %34, %39 : vector<324x128xf32>
    %c24 = arith.constant 24 : index
    %c0_31 = arith.constant 0 : index
    %41 = vector.load %arg11[%c24, %c0_31] : memref<372x128xf32, #tpu.memory_space<vmem>>, vector<324x128xf32>
    %42 = arith.truncf %41 : vector<324x128xf32> to vector<324x128xbf16>
    %c4 = arith.constant 4 : index
    %c0_32 = arith.constant 0 : index
    %c0_33 = arith.constant 0 : index
    %43 = vector.load %arg5[%c4, %c0_32, %c0_33] : memref<9x128x128xbf16, #tpu.memory_space<vmem>>, vector<1x128x128xbf16>
    %44 = vector.shape_cast %43 : vector<1x128x128xbf16> to vector<128x128xbf16>
    %cst_34 = arith.constant dense<0.000000e+00> : vector<324x128xf32>
    %45 = tpu.matmul %42, %44, %cst_34 {dimension_numbers = #tpu.dot_dimension_numbers<[1], [0], [0], [1], [0, 0, 1, 1], [], []>} : vector<324x128xbf16>, vector<128x128xbf16>, vector<324x128xf32> -> vector<324x128xf32>
    %46 = arith.addf %40, %45 : vector<324x128xf32>
    %c25 = arith.constant 25 : index
    %c0_35 = arith.constant 0 : index
    %47 = vector.load %arg11[%c25, %c0_35] : memref<372x128xf32, #tpu.memory_space<vmem>>, vector<324x128xf32>
    %48 = arith.truncf %47 : vector<324x128xf32> to vector<324x128xbf16>
    %c5_36 = arith.constant 5 : index
    %c0_37 = arith.constant 0 : index
    %c0_38 = arith.constant 0 : index
    %49 = vector.load %arg5[%c5_36, %c0_37, %c0_38] : memref<9x128x128xbf16, #tpu.memory_space<vmem>>, vector<1x128x128xbf16>
    %50 = vector.shape_cast %49 : vector<1x128x128xbf16> to vector<128x128xbf16>
    %cst_39 = arith.constant dense<0.000000e+00> : vector<324x128xf32>
    %51 = tpu.matmul %48, %50, %cst_39 {dimension_numbers = #tpu.dot_dimension_numbers<[1], [0], [0], [1], [0, 0, 1, 1], [], []>} : vector<324x128xbf16>, vector<128x128xbf16>, vector<324x128xf32> -> vector<324x128xf32>
    %52 = arith.addf %46, %51 : vector<324x128xf32>
    %c41 = arith.constant 41 : index
    %c0_40 = arith.constant 0 : index
    %53 = vector.load %arg11[%c41, %c0_40] : memref<372x128xf32, #tpu.memory_space<vmem>>, vector<324x128xf32>
    %54 = arith.truncf %53 : vector<324x128xf32> to vector<324x128xbf16>
    %c6_41 = arith.constant 6 : index
    %c0_42 = arith.constant 0 : index
    %c0_43 = arith.constant 0 : index
    %55 = vector.load %arg5[%c6_41, %c0_42, %c0_43] : memref<9x128x128xbf16, #tpu.memory_space<vmem>>, vector<1x128x128xbf16>
    %56 = vector.shape_cast %55 : vector<1x128x128xbf16> to vector<128x128xbf16>
    %cst_44 = arith.constant dense<0.000000e+00> : vector<324x128xf32>
    %57 = tpu.matmul %54, %56, %cst_44 {dimension_numbers = #tpu.dot_dimension_numbers<[1], [0], [0], [1], [0, 0, 1, 1], [], []>} : vector<324x128xbf16>, vector<128x128xbf16>, vector<324x128xf32> -> vector<324x128xf32>
    %58 = arith.addf %52, %57 : vector<324x128xf32>
    %c42 = arith.constant 42 : index
    %c0_45 = arith.constant 0 : index
    %59 = vector.load %arg11[%c42, %c0_45] : memref<372x128xf32, #tpu.memory_space<vmem>>, vector<324x128xf32>
    %60 = arith.truncf %59 : vector<324x128xf32> to vector<324x128xbf16>
    %c7_46 = arith.constant 7 : index
    %c0_47 = arith.constant 0 : index
    %c0_48 = arith.constant 0 : index
    %61 = vector.load %arg5[%c7_46, %c0_47, %c0_48] : memref<9x128x128xbf16, #tpu.memory_space<vmem>>, vector<1x128x128xbf16>
    %62 = vector.shape_cast %61 : vector<1x128x128xbf16> to vector<128x128xbf16>
    %cst_49 = arith.constant dense<0.000000e+00> : vector<324x128xf32>
    %63 = tpu.matmul %60, %62, %cst_49 {dimension_numbers = #tpu.dot_dimension_numbers<[1], [0], [0], [1], [0, 0, 1, 1], [], []>} : vector<324x128xbf16>, vector<128x128xbf16>, vector<324x128xf32> -> vector<324x128xf32>
    %64 = arith.addf %58, %63 : vector<324x128xf32>
    %c43 = arith.constant 43 : index
    %c0_50 = arith.constant 0 : index
    %65 = vector.load %arg11[%c43, %c0_50] : memref<372x128xf32, #tpu.memory_space<vmem>>, vector<324x128xf32>
    %66 = arith.truncf %65 : vector<324x128xf32> to vector<324x128xbf16>
    %c8 = arith.constant 8 : index
    %c0_51 = arith.constant 0 : index
    %c0_52 = arith.constant 0 : index
    %67 = vector.load %arg5[%c8, %c0_51, %c0_52] : memref<9x128x128xbf16, #tpu.memory_space<vmem>>, vector<1x128x128xbf16>
    %68 = vector.shape_cast %67 : vector<1x128x128xbf16> to vector<128x128xbf16>
    %cst_53 = arith.constant dense<0.000000e+00> : vector<324x128xf32>
    %69 = tpu.matmul %66, %68, %cst_53 {dimension_numbers = #tpu.dot_dimension_numbers<[1], [0], [0], [1], [0, 0, 1, 1], [], []>} : vector<324x128xbf16>, vector<128x128xbf16>, vector<324x128xf32> -> vector<324x128xf32>
    %70 = arith.addf %64, %69 : vector<324x128xf32>
    %c0_54 = arith.constant 0 : index
    %c0_55 = arith.constant 0 : index
    %71 = vector.load %arg6[%c0_54, %c0_55] : memref<1x128xf32, #tpu.memory_space<vmem>>, vector<1x128xf32>
    %72 = vector.broadcast %71 : vector<1x128xf32> to vector<324x128xf32>
    %73 = arith.addf %70, %72 : vector<324x128xf32>
    %cst_56 = arith.constant 0.000000e+00 : f32
    %74 = vector.broadcast %cst_56 : f32 to vector<324x128xf32>
    %75 = arith.maximumf %73, %74 : vector<324x128xf32>
    %c24_57 = arith.constant 24 : index
    %c0_58 = arith.constant 0 : index
    %76 = vector.load %arg2[%c24_57, %c0_58] : memref<372x1xf32, #tpu.memory_space<vmem>>, vector<324x1xf32>
    %77 = vector.broadcast %76 : vector<324x1xf32> to vector<324x128xf32>
    %78 = arith.mulf %75, %77 : vector<324x128xf32>
    %c24_59 = arith.constant 24 : index
    %c0_60 = arith.constant 0 : index
    %79 = vector.load %arg12[%c24_59, %c0_60] : memref<372x128xf32, #tpu.memory_space<vmem>>, vector<324x128xf32>
    tpu.vector_store %arg12[%c24_59, %c0_60], %78 {strides = array<i32>} : memref<372x128xf32, #tpu.memory_space<vmem>>, vector<324x128xf32>,
    %cst_61 = arith.constant 0.000000e+00 : f32
    %80 = vector.broadcast %cst_61 : f32 to vector<324x128xf32>
    %c5_62 = arith.constant 5 : index
    %c0_63 = arith.constant 0 : index
    %81 = vector.load %arg12[%c5_62, %c0_63] : memref<372x128xf32, #tpu.memory_space<vmem>>, vector<324x128xf32>
    %82 = arith.truncf %81 : vector<324x128xf32> to vector<324x128xbf16>
    %c0_64 = arith.constant 0 : index
    %c0_65 = arith.constant 0 : index
    %c0_66 = arith.constant 0 : index
    %83 = vector.load %arg7[%c0_64, %c0_65, %c0_66] : memref<9x128x128xbf16, #tpu.memory_space<vmem>>, vector<1x128x128xbf16>
    %84 = vector.shape_cast %83 : vector<1x128x128xbf16> to vector<128x128xbf16>
    %cst_67 = arith.constant dense<0.000000e+00> : vector<324x128xf32>
    %85 = tpu.matmul %82, %84, %cst_67 {dimension_numbers = #tpu.dot_dimension_numbers<[1], [0], [0], [1], [0, 0, 1, 1], [], []>} : vector<324x128xbf16>, vector<128x128xbf16>, vector<324x128xf32> -> vector<324x128xf32>
    %86 = arith.addf %80, %85 : vector<324x128xf32>
    %c6_68 = arith.constant 6 : index
    %c0_69 = arith.constant 0 : index
    %87 = vector.load %arg12[%c6_68, %c0_69] : memref<372x128xf32, #tpu.memory_space<vmem>>, vector<324x128xf32>
    %88 = arith.truncf %87 : vector<324x128xf32> to vector<324x128xbf16>
    %c1_70 = arith.constant 1 : index
    %c0_71 = arith.constant 0 : index
    %c0_72 = arith.constant 0 : index
    %89 = vector.load %arg7[%c1_70, %c0_71, %c0_72] : memref<9x128x128xbf16, #tpu.memory_space<vmem>>, vector<1x128x128xbf16>
    %90 = vector.shape_cast %89 : vector<1x128x128xbf16> to vector<128x128xbf16>
    %cst_73 = arith.constant dense<0.000000e+00> : vector<324x128xf32>
    %91 = tpu.matmul %88, %90, %cst_73 {dimension_numbers = #tpu.dot_dimension_numbers<[1], [0], [0], [1], [0, 0, 1, 1], [], []>} : vector<324x128xbf16>, vector<128x128xbf16>, vector<324x128xf32> -> vector<324x128xf32>
    %92 = arith.addf %86, %91 : vector<324x128xf32>
    %c7_74 = arith.constant 7 : index
    %c0_75 = arith.constant 0 : index
    %93 = vector.load %arg12[%c7_74, %c0_75] : memref<372x128xf32, #tpu.memory_space<vmem>>, vector<324x128xf32>
    %94 = arith.truncf %93 : vector<324x128xf32> to vector<324x128xbf16>
    %c2_76 = arith.constant 2 : index
    %c0_77 = arith.constant 0 : index
    %c0_78 = arith.constant 0 : index
    %95 = vector.load %arg7[%c2_76, %c0_77, %c0_78] : memref<9x128x128xbf16, #tpu.memory_space<vmem>>, vector<1x128x128xbf16>
    %96 = vector.shape_cast %95 : vector<1x128x128xbf16> to vector<128x128xbf16>
    %cst_79 = arith.constant dense<0.000000e+00> : vector<324x128xf32>
    %97 = tpu.matmul %94, %96, %cst_79 {dimension_numbers = #tpu.dot_dimension_numbers<[1], [0], [0], [1], [0, 0, 1, 1], [], []>} : vector<324x128xbf16>, vector<128x128xbf16>, vector<324x128xf32> -> vector<324x128xf32>
    %98 = arith.addf %92, %97 : vector<324x128xf32>
    %c23_80 = arith.constant 23 : index
    %c0_81 = arith.constant 0 : index
    %99 = vector.load %arg12[%c23_80, %c0_81] : memref<372x128xf32, #tpu.memory_space<vmem>>, vector<324x128xf32>
    %100 = arith.truncf %99 : vector<324x128xf32> to vector<324x128xbf16>
    %c3_82 = arith.constant 3 : index
    %c0_83 = arith.constant 0 : index
    %c0_84 = arith.constant 0 : index
    %101 = vector.load %arg7[%c3_82, %c0_83, %c0_84] : memref<9x128x128xbf16, #tpu.memory_space<vmem>>, vector<1x128x128xbf16>
    %102 = vector.shape_cast %101 : vector<1x128x128xbf16> to vector<128x128xbf16>
    %cst_85 = arith.constant dense<0.000000e+00> : vector<324x128xf32>
    %103 = tpu.matmul %100, %102, %cst_85 {dimension_numbers = #tpu.dot_dimension_numbers<[1], [0], [0], [1], [0, 0, 1, 1], [], []>} : vector<324x128xbf16>, vector<128x128xbf16>, vector<324x128xf32> -> vector<324x128xf32>
    %104 = arith.addf %98, %103 : vector<324x128xf32>
    %c24_86 = arith.constant 24 : index
    %c0_87 = arith.constant 0 : index
    %105 = vector.load %arg12[%c24_86, %c0_87] : memref<372x128xf32, #tpu.memory_space<vmem>>, vector<324x128xf32>
    %106 = arith.truncf %105 : vector<324x128xf32> to vector<324x128xbf16>
    %c4_88 = arith.constant 4 : index
    %c0_89 = arith.constant 0 : index
    %c0_90 = arith.constant 0 : index
    %107 = vector.load %arg7[%c4_88, %c0_89, %c0_90] : memref<9x128x128xbf16, #tpu.memory_space<vmem>>, vector<1x128x128xbf16>
    %108 = vector.shape_cast %107 : vector<1x128x128xbf16> to vector<128x128xbf16>
    %cst_91 = arith.constant dense<0.000000e+00> : vector<324x128xf32>
    %109 = tpu.matmul %106, %108, %cst_91 {dimension_numbers = #tpu.dot_dimension_numbers<[1], [0], [0], [1], [0, 0, 1, 1], [], []>} : vector<324x128xbf16>, vector<128x128xbf16>, vector<324x128xf32> -> vector<324x128xf32>
    %110 = arith.addf %104, %109 : vector<324x128xf32>
    %c25_92 = arith.constant 25 : index
    %c0_93 = arith.constant 0 : index
    %111 = vector.load %arg12[%c25_92, %c0_93] : memref<372x128xf32, #tpu.memory_space<vmem>>, vector<324x128xf32>
    %112 = arith.truncf %111 : vector<324x128xf32> to vector<324x128xbf16>
    %c5_94 = arith.constant 5 : index
    %c0_95 = arith.constant 0 : index
    %c0_96 = arith.constant 0 : index
    %113 = vector.load %arg7[%c5_94, %c0_95, %c0_96] : memref<9x128x128xbf16, #tpu.memory_space<vmem>>, vector<1x128x128xbf16>
    %114 = vector.shape_cast %113 : vector<1x128x128xbf16> to vector<128x128xbf16>
    %cst_97 = arith.constant dense<0.000000e+00> : vector<324x128xf32>
    %115 = tpu.matmul %112, %114, %cst_97 {dimension_numbers = #tpu.dot_dimension_numbers<[1], [0], [0], [1], [0, 0, 1, 1], [], []>} : vector<324x128xbf16>, vector<128x128xbf16>, vector<324x128xf32> -> vector<324x128xf32>
    %116 = arith.addf %110, %115 : vector<324x128xf32>
    %c41_98 = arith.constant 41 : index
    %c0_99 = arith.constant 0 : index
    %117 = vector.load %arg12[%c41_98, %c0_99] : memref<372x128xf32, #tpu.memory_space<vmem>>, vector<324x128xf32>
    %118 = arith.truncf %117 : vector<324x128xf32> to vector<324x128xbf16>
    %c6_100 = arith.constant 6 : index
    %c0_101 = arith.constant 0 : index
    %c0_102 = arith.constant 0 : index
    %119 = vector.load %arg7[%c6_100, %c0_101, %c0_102] : memref<9x128x128xbf16, #tpu.memory_space<vmem>>, vector<1x128x128xbf16>
    %120 = vector.shape_cast %119 : vector<1x128x128xbf16> to vector<128x128xbf16>
    %cst_103 = arith.constant dense<0.000000e+00> : vector<324x128xf32>
    %121 = tpu.matmul %118, %120, %cst_103 {dimension_numbers = #tpu.dot_dimension_numbers<[1], [0], [0], [1], [0, 0, 1, 1], [], []>} : vector<324x128xbf16>, vector<128x128xbf16>, vector<324x128xf32> -> vector<324x128xf32>
    %122 = arith.addf %116, %121 : vector<324x128xf32>
    %c42_104 = arith.constant 42 : index
    %c0_105 = arith.constant 0 : index
    %123 = vector.load %arg12[%c42_104, %c0_105] : memref<372x128xf32, #tpu.memory_space<vmem>>, vector<324x128xf32>
    %124 = arith.truncf %123 : vector<324x128xf32> to vector<324x128xbf16>
    %c7_106 = arith.constant 7 : index
    %c0_107 = arith.constant 0 : index
    %c0_108 = arith.constant 0 : index
    %125 = vector.load %arg7[%c7_106, %c0_107, %c0_108] : memref<9x128x128xbf16, #tpu.memory_space<vmem>>, vector<1x128x128xbf16>
    %126 = vector.shape_cast %125 : vector<1x128x128xbf16> to vector<128x128xbf16>
    %cst_109 = arith.constant dense<0.000000e+00> : vector<324x128xf32>
    %127 = tpu.matmul %124, %126, %cst_109 {dimension_numbers = #tpu.dot_dimension_numbers<[1], [0], [0], [1], [0, 0, 1, 1], [], []>} : vector<324x128xbf16>, vector<128x128xbf16>, vector<324x128xf32> -> vector<324x128xf32>
    %128 = arith.addf %122, %127 : vector<324x128xf32>
    %c43_110 = arith.constant 43 : index
    %c0_111 = arith.constant 0 : index
    %129 = vector.load %arg12[%c43_110, %c0_111] : memref<372x128xf32, #tpu.memory_space<vmem>>, vector<324x128xf32>
    %130 = arith.truncf %129 : vector<324x128xf32> to vector<324x128xbf16>
    %c8_112 = arith.constant 8 : index
    %c0_113 = arith.constant 0 : index
    %c0_114 = arith.constant 0 : index
    %131 = vector.load %arg7[%c8_112, %c0_113, %c0_114] : memref<9x128x128xbf16, #tpu.memory_space<vmem>>, vector<1x128x128xbf16>
    %132 = vector.shape_cast %131 : vector<1x128x128xbf16> to vector<128x128xbf16>
    %cst_115 = arith.constant dense<0.000000e+00> : vector<324x128xf32>
    %133 = tpu.matmul %130, %132, %cst_115 {dimension_numbers = #tpu.dot_dimension_numbers<[1], [0], [0], [1], [0, 0, 1, 1], [], []>} : vector<324x128xbf16>, vector<128x128xbf16>, vector<324x128xf32> -> vector<324x128xf32>
    %134 = arith.addf %128, %133 : vector<324x128xf32>
    %c0_116 = arith.constant 0 : index
    %c24_117 = arith.constant 24 : index
    %c0_118 = arith.constant 0 : index
    %135 = vector.load %arg1[%c0_116, %c24_117, %c0_118] : memref<1x372x128xf32, #tpu.memory_space<vmem>>, vector<1x324x128xf32>
    %136 = vector.shape_cast %135 : vector<1x324x128xf32> to vector<324x128xf32>
    %137 = arith.truncf %136 : vector<324x128xf32> to vector<324x128xbf16>
    %c0_119 = arith.constant 0 : index
    %c0_120 = arith.constant 0 : index
    %138 = vector.load %arg9[%c0_119, %c0_120] : memref<128x128xbf16, #tpu.memory_space<vmem>>, vector<128x128xbf16>
    %cst_121 = arith.constant dense<0.000000e+00> : vector<324x128xf32>
    %139 = tpu.matmul %137, %138, %cst_121 {dimension_numbers = #tpu.dot_dimension_numbers<[1], [0], [0], [1], [0, 0, 1, 1], [], []>} : vector<324x128xbf16>, vector<128x128xbf16>, vector<324x128xf32> -> vector<324x128xf32>
    %c0_122 = arith.constant 0 : index
    %c0_123 = arith.constant 0 : index
    %140 = vector.load %arg8[%c0_122, %c0_123] : memref<1x128xf32, #tpu.memory_space<vmem>>, vector<1x128xf32>
    %141 = vector.broadcast %140 : vector<1x128xf32> to vector<324x128xf32>
    %142 = arith.addf %134, %141 : vector<324x128xf32>
    %143 = arith.addf %142, %139 : vector<324x128xf32>
    %c0_124 = arith.constant 0 : index
    %c0_125 = arith.constant 0 : index
    %c0_126 = arith.constant 0 : index
    %144 = vector.load %arg10[%c0_124, %c0_125, %c0_126] : memref<1x324x128xf32, #tpu.memory_space<vmem>>, vector<1x324x128xf32>
    %145 = vector.shape_cast %144 : vector<1x324x128xf32> to vector<324x128xf32>
    %146 = vector.shape_cast %143 : vector<324x128xf32> to vector<1x324x128xf32>
    tpu.vector_store %arg10[%c0_124, %c0_125, %c0_126], %146 {strides = array<i32>} : memref<1x324x128xf32, #tpu.memory_space<vmem>>, vector<1x324x128xf32>,
    return
  }
  func.func @transform_0(%arg0: i32) -> (i32, i32, i32) {
    %c0_i32 = arith.constant 0 : i32
    %c0_i32_0 = arith.constant 0 : i32
    %c0_i32_1 = arith.constant 0 : i32
    return %arg0, %c0_i32, %c0_i32_0 : i32, i32, i32
  }
  func.func @transform_1(%arg0: i32) -> (i32, i32) {
    %c0_i32 = arith.constant 0 : i32
    %c0_i32_0 = arith.constant 0 : i32
    %c0_i32_1 = arith.constant 0 : i32
    return %c0_i32, %c0_i32_0 : i32, i32
  }
  func.func @transform_2(%arg0: i32) -> (i32, i32) {
    %c0_i32 = arith.constant 0 : i32
    %c0_i32_0 = arith.constant 0 : i32
    %c0_i32_1 = arith.constant 0 : i32
    return %c0_i32, %c0_i32_0 : i32, i32
  }
  func.func @transform_3(%arg0: i32) -> (i32, i32) {
    %c0_i32 = arith.constant 0 : i32
    %c0_i32_0 = arith.constant 0 : i32
    %c0_i32_1 = arith.constant 0 : i32
    return %c0_i32, %c0_i32_0 : i32, i32
  }
  func.func @transform_4(%arg0: i32) -> (i32, i32, i32) {
    %c0_i32 = arith.constant 0 : i32
    %c0_i32_0 = arith.constant 0 : i32
    %c0_i32_1 = arith.constant 0 : i32
    %c0_i32_2 = arith.constant 0 : i32
    return %c0_i32, %c0_i32_0, %c0_i32_1 : i32, i32, i32
  }
  func.func @transform_5(%arg0: i32) -> (i32, i32) {
    %c0_i32 = arith.constant 0 : i32
    %c0_i32_0 = arith.constant 0 : i32
    %c0_i32_1 = arith.constant 0 : i32
    return %c0_i32, %c0_i32_0 : i32, i32
  }
  func.func @transform_6(%arg0: i32) -> (i32, i32, i32) {
    %c0_i32 = arith.constant 0 : i32
    %c0_i32_0 = arith.constant 0 : i32
    %c0_i32_1 = arith.constant 0 : i32
    %c0_i32_2 = arith.constant 0 : i32
    return %c0_i32, %c0_i32_0, %c0_i32_1 : i32, i32, i32
  }
  func.func @transform_7(%arg0: i32) -> (i32, i32) {
    %c0_i32 = arith.constant 0 : i32
    %c0_i32_0 = arith.constant 0 : i32
    %c0_i32_1 = arith.constant 0 : i32
    return %c0_i32, %c0_i32_0 : i32, i32
  }
  func.func @transform_8(%arg0: i32) -> (i32, i32) {
    %c0_i32 = arith.constant 0 : i32
    %c0_i32_0 = arith.constant 0 : i32
    %c0_i32_1 = arith.constant 0 : i32
    return %c0_i32, %c0_i32_0 : i32, i32
  }
  func.func @transform_9(%arg0: i32) -> (i32, i32, i32) {
    %c0_i32 = arith.constant 0 : i32
    %c0_i32_0 = arith.constant 0 : i32
    %c0_i32_1 = arith.constant 0 : i32
    return %arg0, %c0_i32, %c0_i32_0 : i32, i32, i32
  }
}

</mosaic_0001>

<llo_original>
// kernel: tpu_custom_call.1
$region0: #{tpu_custom_call.1}
  #allocation0 [shape = 'u32[]', space=smem, size = 0x4, offset = 0x4, fixed_abs, tag = 'smem constant byte address 0x4 - core index']
  #allocation1 [shape = 'u32[144,128]{1,0:T(1,128)}', space=vmem, size = 0x12000, scoped, tag = 'internal scratch']
  #allocation2 [shape = 'f32[372,128]{1,0:T(8,128)}', space=vmem, size = 0x2f000, scoped, tag = 'scratch operand']
  #allocation3 [shape = 'f32[372,128]{1,0:T(8,128)}', space=vmem, size = 0x2f000, scoped, tag = 'scratch operand']
  %s0 = inlined_call_operand.vmem [shape: f32[2,372,128], index: 0, kind: input, shape index: {}]
  %s1 = inlined_call_operand.vmem [shape: f32[372,1], index: 1, kind: input, shape index: {}]
  %s2 = inlined_call_operand.vmem [shape: f32[1,128], index: 2, kind: input, shape index: {}]
  %s3 = inlined_call_operand.vmem [shape: f32[1,128], index: 3, kind: input, shape index: {}]
  %s4 = inlined_call_operand.vmem [shape: bf16[9,128,128], index: 4, kind: input, shape index: {}]
  %s5 = inlined_call_operand.vmem [shape: f32[1,128], index: 5, kind: input, shape index: {}]
  %s6 = inlined_call_operand.vmem [shape: bf16[9,128,128], index: 6, kind: input, shape index: {}]
  %s7 = inlined_call_operand.vmem [shape: f32[1,128], index: 7, kind: input, shape index: {}]
  %s8 = inlined_call_operand.vmem [shape: bf16[128,128], index: 8, kind: input, shape index: {}]
  %s9 = inlined_call_operand.vmem [shape: f32[2,324,128], index: 9, kind: output, shape index: {}]
  %s10 = sld [smem:[#allocation0]]
  $region69: #{tpu_custom_call.1} parent=0
    _
  %s12 = ssub.s32 1, %s10
  %s13 = scalar_select 0, %s12, %s10
  loop: start=0, step=1, limit=4
  $region2: #{tpu_custom_call.1} parent=0 // loop_pre_header
    _
  $region3: #{tpu_custom_call.1} parent=0 // loop_header
    %s15 = sphi 0, %s19
    %p16 = scmp.ge.s32.totalorder %s15, 4
    %s25 = sphi 0, %s27
    %s28 = sphi 0, %s25
    %s29 = sphi 0, %s28
    %s45 = sphi 0, %s29
    %s49 = sphi 0, %s49
    %s51 = sphi 0, %s49
    %s52 = sphi 0, %s51
    %s66 = sphi 0, %s52
    %s70 = sphi 0, %s70
    %s72 = sphi 0, %s70
    %s73 = sphi 0, %s72
    %s87 = sphi 0, %s73
    %s91 = sphi 0, %s91
    %s93 = sphi 0, %s91
    %s94 = sphi 0, %s93
    %s108 = sphi 0, %s94
    %s112 = sphi 0, %s112
    %s114 = sphi 0, %s112
    %s115 = sphi 0, %s114
    %s129 = sphi 0, %s115
    %s133 = sphi 0, %s133
    %s135 = sphi 0, %s133
    %s136 = sphi 0, %s135
    %s150 = sphi 0, %s136
    %s154 = sphi 0, %s154
    %s156 = sphi 0, %s154
    %s157 = sphi 0, %s156
    %s171 = sphi 0, %s157
    %s175 = sphi 0, %s175
    %s177 = sphi 0, %s175
    %s178 = sphi 0, %s177
    %s192 = sphi 0, %s178
    %s196 = sphi 0, %s196
    %s198 = sphi 0, %s196
    %s199 = sphi 0, %s198
    %s213 = sphi 0, %s199
    %s219 = sphi 0, %s221
    %s222 = sphi 0, %s219
    %s223 = sphi 0, %s222
    %s239 = sphi 0, %s223
  $region4: #{tpu_custom_call.1} parent=0 // loop_header_branch
    %18 = sbr.rel (%p16) target = $region8
  $region5: #{tpu_custom_call.1} parent=0 // loop_body
    %s20 = ssub.s32 %s15, 1
    %s21 = ssub.s32 %s15, 2
    %s22 = sadd.s32 %s15, 1
    %s23 = ssub.s32 %s15, %s22
    %p24 = scmp.eq.s32.totalorder %s23, 0
    %s26 = sadd.s32 %s25, 1
    %s27 = scalar_select %p24, %s25, %s26
    %p30 = pneg %p24
    %p31 = scmp.eq.s32.totalorder %s15, 1
    %p32 = por %p30, %p31
    %p33 = scmp.ne.s32.totalorder %s25, %s28
    %p34 = scmp.eq.s32.totalorder %s15, 0
    %p35 = por %p33, %p34
    %p36 = scmp.ne.s32.totalorder %s25, %s28
    %p37 = scmp.eq.s32.totalorder %s20, 1
    %p38 = por %p36, %p37
    %p39 = scmp.ne.s32.totalorder %s28, %s29
    %p40 = scmp.eq.s32.totalorder %s20, 0
    %p41 = por %p39, %p40
    %p42 = scmp.ne.s32.totalorder %s28, %s29
    %p43 = scmp.eq.s32.totalorder %s21, 1
    %p44 = por %p42, %p43
    %p46 = scmp.ne.s32.totalorder %s29, %s45
    %p47 = scmp.eq.s32.totalorder %s21, 0
    %p48 = por %p46, %p47
    %s50 = sadd.s32 %s49, 1
    %p53 = scmp.eq.s32.totalorder %s15, 1
    %p54 = scmp.ne.s32.totalorder %s49, %s51
    %p55 = scmp.eq.s32.totalorder %s15, 0
    %p56 = por %p54, %p55
    %p57 = scmp.ne.s32.totalorder %s49, %s51
    %p58 = scmp.eq.s32.totalorder %s20, 1
    %p59 = por %p57, %p58
    %p60 = scmp.ne.s32.totalorder %s51, %s52
    %p61 = scmp.eq.s32.totalorder %s20, 0
    %p62 = por %p60, %p61
    %p63 = scmp.ne.s32.totalorder %s51, %s52
    %p64 = scmp.eq.s32.totalorder %s21, 1
    %p65 = por %p63, %p64
    %p67 = scmp.ne.s32.totalorder %s52, %s66
    %p68 = scmp.eq.s32.totalorder %s21, 0
    %p69 = por %p67, %p68
    %s71 = sadd.s32 %s70, 1
    %p74 = scmp.eq.s32.totalorder %s15, 1
    %p75 = scmp.ne.s32.totalorder %s70, %s72
    %p76 = scmp.eq.s32.totalorder %s15, 0
    %p77 = por %p75, %p76
    %p78 = scmp.ne.s32.totalorder %s70, %s72
    %p79 = scmp.eq.s32.totalorder %s20, 1
    %p80 = por %p78, %p79
    %p81 = scmp.ne.s32.totalorder %s72, %s73
    %p82 = scmp.eq.s32.totalorder %s20, 0
    %p83 = por %p81, %p82
    %p84 = scmp.ne.s32.totalorder %s72, %s73
    %p85 = scmp.eq.s32.totalorder %s21, 1
    %p86 = por %p84, %p85
    %p88 = scmp.ne.s32.totalorder %s73, %s87
    %p89 = scmp.eq.s32.totalorder %s21, 0
    %p90 = por %p88, %p89
    %s92 = sadd.s32 %s91, 1
    %p95 = scmp.eq.s32.totalorder %s15, 1
    %p96 = scmp.ne.s32.totalorder %s91, %s93
    %p97 = scmp.eq.s32.totalorder %s15, 0
    %p98 = por %p96, %p97
    %p99 = scmp.ne.s32.totalorder %s91, %s93
    %p100 = scmp.eq.s32.totalorder %s20, 1
    %p101 = por %p99, %p100
    %p102 = scmp.ne.s32.totalorder %s93, %s94
    %p103 = scmp.eq.s32.totalorder %s20, 0
    %p104 = por %p102, %p103
    %p105 = scmp.ne.s32.totalorder %s93, %s94
    %p106 = scmp.eq.s32.totalorder %s21, 1
    %p107 = por %p105, %p106
    %p109 = scmp.ne.s32.totalorder %s94, %s108
    %p110 = scmp.eq.s32.totalorder %s21, 0
    %p111 = por %p109, %p110
    %s113 = sadd.s32 %s112, 1
    %p116 = scmp.eq.s32.totalorder %s15, 1
    %p117 = scmp.ne.s32.totalorder %s112, %s114
    %p118 = scmp.eq.s32.totalorder %s15, 0
    %p119 = por %p117, %p118
    %p120 = scmp.ne.s32.totalorder %s112, %s114
    %p121 = scmp.eq.s32.totalorder %s20, 1
    %p122 = por %p120, %p121
    %p123 = scmp.ne.s32.totalorder %s114, %s115
    %p124 = scmp.eq.s32.totalorder %s20, 0
    %p125 = por %p123, %p124
    %p126 = scmp.ne.s32.totalorder %s114, %s115
    %p127 = scmp.eq.s32.totalorder %s21, 1
    %p128 = por %p126, %p127
    %p130 = scmp.ne.s32.totalorder %s115, %s129
    %p131 = scmp.eq.s32.totalorder %s21, 0
    %p132 = por %p130, %p131
    %s134 = sadd.s32 %s133, 1
    %p137 = scmp.eq.s32.totalorder %s15, 1
    %p138 = scmp.ne.s32.totalorder %s133, %s135
    %p139 = scmp.eq.s32.totalorder %s15, 0
    %p140 = por %p138, %p139
    %p141 = scmp.ne.s32.totalorder %s133, %s135
    %p142 = scmp.eq.s32.totalorder %s20, 1
    %p143 = por %p141, %p142
    %p144 = scmp.ne.s32.totalorder %s135, %s136
    %p145 = scmp.eq.s32.totalorder %s20, 0
    %p146 = por %p144, %p145
    %p147 = scmp.ne.s32.totalorder %s135, %s136
    %p148 = scmp.eq.s32.totalorder %s21, 1
    %p149 = por %p147, %p148
    %p151 = scmp.ne.s32.totalorder %s136, %s150
    %p152 = scmp.eq.s32.totalorder %s21, 0
    %p153 = por %p151, %p152
    %s155 = sadd.s32 %s154, 1
    %p158 = scmp.eq.s32.totalorder %s15, 1
    %p159 = scmp.ne.s32.totalorder %s154, %s156
    %p160 = scmp.eq.s32.totalorder %s15, 0
    %p161 = por %p159, %p160
    %p162 = scmp.ne.s32.totalorder %s154, %s156
    %p163 = scmp.eq.s32.totalorder %s20, 1
    %p164 = por %p162, %p163
    %p165 = scmp.ne.s32.totalorder %s156, %s157
    %p166 = scmp.eq.s32.totalorder %s20, 0
    %p167 = por %p165, %p166
    %p168 = scmp.ne.s32.totalorder %s156, %s157
    %p169 = scmp.eq.s32.totalorder %s21, 1
    %p170 = por %p168, %p169
    %p172 = scmp.ne.s32.totalorder %s157, %s171
    %p173 = scmp.eq.s32.totalorder %s21, 0
    %p174 = por %p172, %p173
    %s176 = sadd.s32 %s175, 1
    %p179 = scmp.eq.s32.totalorder %s15, 1
    %p180 = scmp.ne.s32.totalorder %s175, %s177
    %p181 = scmp.eq.s32.totalorder %s15, 0
    %p182 = por %p180, %p181
    %p183 = scmp.ne.s32.totalorder %s175, %s177
    %p184 = scmp.eq.s32.totalorder %s20, 1
    %p185 = por %p183, %p184
    %p186 = scmp.ne.s32.totalorder %s177, %s178
    %p187 = scmp.eq.s32.totalorder %s20, 0
    %p188 = por %p186, %p187
    %p189 = scmp.ne.s32.totalorder %s177, %s178
    %p190 = scmp.eq.s32.totalorder %s21, 1
    %p191 = por %p189, %p190
    %p193 = scmp.ne.s32.totalorder %s178, %s192
    %p194 = scmp.eq.s32.totalorder %s21, 0
    %p195 = por %p193, %p194
    %s197 = sadd.s32 %s196, 1
    %p200 = scmp.eq.s32.totalorder %s15, 1
    %p201 = scmp.ne.s32.totalorder %s196, %s198
    %p202 = scmp.eq.s32.totalorder %s15, 0
    %p203 = por %p201, %p202
    %p204 = scmp.ne.s32.totalorder %s196, %s198
    %p205 = scmp.eq.s32.totalorder %s20, 1
    %p206 = por %p204, %p205
    %p207 = scmp.ne.s32.totalorder %s198, %s199
    %p208 = scmp.eq.s32.totalorder %s20, 0
    %p209 = por %p207, %p208
    %p210 = scmp.ne.s32.totalorder %s198, %s199
    %p211 = scmp.eq.s32.totalorder %s21, 1
    %p212 = por %p210, %p211
    %p214 = scmp.ne.s32.totalorder %s199, %s213
    %p215 = scmp.eq.s32.totalorder %s21, 0
    %p216 = por %p214, %p215
    %s217 = ssub.s32 %s15, %s22
    %p218 = scmp.eq.s32.totalorder %s217, 0
    %s220 = sadd.s32 %s219, 1
    %s221 = scalar_select %p218, %s219, %s220
    %p224 = pneg %p218
    %p225 = scmp.eq.s32.totalorder %s15, 1
    %p226 = por %p224, %p225
    %p227 = scmp.ne.s32.totalorder %s219, %s222
    %p228 = scmp.eq.s32.totalorder %s15, 0
    %p229 = por %p227, %p228
    %p230 = scmp.ne.s32.totalorder %s219, %s222
    %p231 = scmp.eq.s32.totalorder %s20, 1
    %p232 = por %p230, %p231
    %p233 = scmp.ne.s32.totalorder %s222, %s223
    %p234 = scmp.eq.s32.totalorder %s20, 0
    %p235 = por %p233, %p234
    %p236 = scmp.ne.s32.totalorder %s222, %s223
    %p237 = scmp.eq.s32.totalorder %s21, 1
    %p238 = por %p236, %p237
    %p240 = scmp.ne.s32.totalorder %s223, %s239
    %p241 = scmp.eq.s32.totalorder %s21, 0
    %p242 = por %p240, %p241
    %p243 = scmp.le.s32.totalorder 1, %s15
    %p244 = scmp.lt.s32.totalorder %s15, 3
    %p245 = pnand %p243, %p244
    %p246 = pneg %p245
    // Predicated region
    $region9: #{tpu_custom_call.1} parent=5 // pred_check
      _
    $region10: #{tpu_custom_call.1} parent=5 // pred_check_branch
      %248 = sbr.rel (%p245) target = $region12
    $region11: #{tpu_custom_call.1} parent=5 // pred_region
      %s249 = ssub.s32 %s15, 1
      // Predicated region
      $region13: #{tpu_custom_call.1} parent=11 // pred_check
        %p250 = pneg %p62
      $region14: #{tpu_custom_call.1} parent=11 // pred_check_branch
        %252 = sbr.rel (%p250) target = $region16
      $region15: #{tpu_custom_call.1} parent=11 // pred_region
        _
      $region16: #{tpu_custom_call.1} parent=11 // pred_fallthru
        _
      // Predicated region
      $region17: #{tpu_custom_call.1} parent=11 // pred_check
        %p253 = pneg %p83
      $region18: #{tpu_custom_call.1} parent=11 // pred_check_branch
        %255 = sbr.rel (%p253) target = $region20
      $region19: #{tpu_custom_call.1} parent=11 // pred_region
        _
      $region20: #{tpu_custom_call.1} parent=11 // pred_fallthru
        _
      // Predicated region
      $region21: #{tpu_custom_call.1} parent=11 // pred_check
        %p256 = pneg %p104
      $region22: #{tpu_custom_call.1} parent=11 // pred_check_branch
        %258 = sbr.rel (%p256) target = $region24
      $region23: #{tpu_custom_call.1} parent=11 // pred_region
        _
      $region24: #{tpu_custom_call.1} parent=11 // pred_fallthru
        _
      // Predicated region
      $region25: #{tpu_custom_call.1} parent=11 // pred_check
        %p259 = pneg %p125
      $region26: #{tpu_custom_call.1} parent=11 // pred_check_branch
        %261 = sbr.rel (%p259) target = $region28
      $region27: #{tpu_custom_call.1} parent=11 // pred_region
        _
      $region28: #{tpu_custom_call.1} parent=11 // pred_fallthru
        _
      // Predicated region
      $region29: #{tpu_custom_call.1} parent=11 // pred_check
        %p262 = pneg %p146
      $region30: #{tpu_custom_call.1} parent=11 // pred_check_branch
        %264 = sbr.rel (%p262) target = $region32
      $region31: #{tpu_custom_call.1} parent=11 // pred_region
        _
      $region32: #{tpu_custom_call.1} parent=11 // pred_fallthru
        _
      // Predicated region
      $region33: #{tpu_custom_call.1} parent=11 // pred_check
        %p265 = pneg %p167
      $region34: #{tpu_custom_call.1} parent=11 // pred_check_branch
        %267 = sbr.rel (%p265) target = $region36
      $region35: #{tpu_custom_call.1} parent=11 // pred_region
        _
      $region36: #{tpu_custom_call.1} parent=11 // pred_fallthru
        _
      // Predicated region
      $region37: #{tpu_custom_call.1} parent=11 // pred_check
        %p268 = pneg %p188
      $region38: #{tpu_custom_call.1} parent=11 // pred_check_branch
        %270 = sbr.rel (%p268) target = $region40
      $region39: #{tpu_custom_call.1} parent=11 // pred_region
        _
      $region40: #{tpu_custom_call.1} parent=11 // pred_fallthru
        _
      // Predicated region
      $region41: #{tpu_custom_call.1} parent=11 // pred_check
        %p271 = pneg %p209
      $region42: #{tpu_custom_call.1} parent=11 // pred_check_branch
        %273 = sbr.rel (%p271) target = $region44
      $region43: #{tpu_custom_call.1} parent=11 // pred_region
        _
      $region44: #{tpu_custom_call.1} parent=11 // pred_fallthru
        _
    $region12: #{tpu_custom_call.1} parent=5 // pred_fallthru
      _
    %p274 = scmp.lt.s32.totalorder %s15, 2
    // Predicated region
    $region45: #{tpu_custom_call.1} parent=5 // pred_check
      %p275 = pneg %p274
    $region46: #{tpu_custom_call.1} parent=5 // pred_check_branch
      %277 = sbr.rel (%p275) target = $region48
    $region47: #{tpu_custom_call.1} parent=5 // pred_region
      // Predicated region
      $region49: #{tpu_custom_call.1} parent=47 // pred_check
        %p278 = pneg %p35
      $region50: #{tpu_custom_call.1} parent=47 // pred_check_branch
        %280 = sbr.rel (%p278) target = $region52
      $region51: #{tpu_custom_call.1} parent=47 // pred_region
        %p281 = scmp.lt.s32.totalorder %s15, 1
        %s282 = scalar_select %p281, %s15, 1
        %s283 = smul.addr %s282, 47
        %s284 = smul.addr %s283, 8
        %s285 = scalar_lea.vmem %s0, %s284
      $region52: #{tpu_custom_call.1} parent=47 // pred_fallthru
        _
    $region48: #{tpu_custom_call.1} parent=5 // pred_fallthru
      _
    %p286 = scmp.le.s32.totalorder 1, %s15
    %p287 = scmp.lt.s32.totalorder %s15, 3
    %p288 = pnand %p286, %p287
    %p289 = pneg %p288
    // Predicated region
    $region53: #{tpu_custom_call.1} parent=5 // pred_check
      _
    $region54: #{tpu_custom_call.1} parent=5 // pred_check_branch
      %291 = sbr.rel (%p288) target = $region56
    $region55: #{tpu_custom_call.1} parent=5 // pred_region
      %s292 = ssub.s32 %s15, 1
      %p293 = scmp.lt.s32.totalorder %s20, 1
      %s294 = scalar_select %p293, %s20, 1
      %s295 = smul.addr %s294, 47
      %s296 = smul.addr %s295, 8
      %s297 = scalar_lea.vmem %s0, %s296
      %p298 = pneg %p41
      %p299 = pneg %p38
      %p300 = pneg %p62
      %p301 = pneg %p59
      %p302 = pneg %p83
      %p303 = pneg %p80
      %p304 = pneg %p104
      %p305 = pneg %p101
      %p306 = pneg %p125
      %p307 = pneg %p122
      %p308 = pneg %p146
      %p309 = pneg %p143
      %p310 = pneg %p167
      %p311 = pneg %p164
      %p312 = pneg %p188
      %p313 = pneg %p185
      %p314 = pneg %p209
      %p315 = pneg %p206
      %p316 = pneg %p235
      %p317 = pneg %p232
      %p318 = scmp.lt.s32.totalorder %s20, 1
      %s319 = scalar_select %p318, %s20, 1
      %s320 = smul.addr %s319, 41
      %s321 = smul.addr %s320, 8
      %s322 = scalar_lea.vmem %s9, %s321
      %p323 = scmp.lt.s32.totalorder %s20, 1
      %s324 = scalar_select %p323, %s20, 1
      %s325 = smul.addr %s324, 47
      %s326 = smul.addr %s325, 8
      %s327 = scalar_lea.vmem %s0, %s326
      %p328 = scmp.lt.s32.totalorder %s20, 1
      %s329 = scalar_select %p328, %s20, 1
      %s330 = smul.addr %s329, 41
      %s331 = smul.addr %s330, 8
      %s332 = scalar_lea.vmem %s9, %s331
      %v334 = vld [vmem:[%s327] sm:$0xff]
      %v335 = vld [vmem:[%s327 + $0x8] sm:$0xff]
      %v336 = vld [vmem:[%s327 + $0x10] sm:$0xff]
      %v337 = vld [vmem:[%s327 + $0x18] sm:$0xff]
      %v338 = vld [vmem:[%s327 + $0x20] sm:$0xff]
      %v339 = vld [vmem:[%s327 + $0x28] sm:$0xff]
      %v340 = vld [vmem:[%s327 + $0x30] sm:$0xff]
      %v341 = vld [vmem:[%s327 + $0x38] sm:$0xff]
      %v342 = vld [vmem:[%s327 + $0x40] sm:$0xff]
      %v343 = vld [vmem:[%s327 + $0x48] sm:$0xff]
      %v344 = vld [vmem:[%s327 + $0x50] sm:$0xff]
      %v345 = vld [vmem:[%s327 + $0x58] sm:$0xff]
      %v346 = vld [vmem:[%s327 + $0x60] sm:$0xff]
      %v347 = vld [vmem:[%s327 + $0x68] sm:$0xff]
      %v348 = vld [vmem:[%s327 + $0x70] sm:$0xff]
      %v349 = vld [vmem:[%s327 + $0x78] sm:$0xff]
      %v350 = vld [vmem:[%s327 + $0x80] sm:$0xff]
      %v351 = vld [vmem:[%s327 + $0x88] sm:$0xff]
      %v352 = vld [vmem:[%s327 + $0x90] sm:$0xff]
      %v353 = vld [vmem:[%s327 + $0x98] sm:$0xff]
      %v354 = vld [vmem:[%s327 + $0xa0] sm:$0xff]
      %v355 = vld [vmem:[%s327 + $0xa8] sm:$0xff]
      %v356 = vld [vmem:[%s327 + $0xb0] sm:$0xff]
      %v357 = vld [vmem:[%s327 + $0xb8] sm:$0xff]
      %v358 = vld [vmem:[%s327 + $0xc0] sm:$0xff]
      %v359 = vld [vmem:[%s327 + $0xc8] sm:$0xff]
      %v360 = vld [vmem:[%s327 + $0xd0] sm:$0xff]
      %v361 = vld [vmem:[%s327 + $0xd8] sm:$0xff]
      %v362 = vld [vmem:[%s327 + $0xe0] sm:$0xff]
      %v363 = vld [vmem:[%s327 + $0xe8] sm:$0xff]
      %v364 = vld [vmem:[%s327 + $0xf0] sm:$0xff]
      %v365 = vld [vmem:[%s327 + $0xf8] sm:$0xff]
      %v366 = vld [vmem:[%s327 + $0x100] sm:$0xff]
      %v367 = vld [vmem:[%s327 + $0x108] sm:$0xff]
      %v368 = vld [vmem:[%s327 + $0x110] sm:$0xff]
      %v369 = vld [vmem:[%s327 + $0x118] sm:$0xff]
      %v370 = vld [vmem:[%s327 + $0x120] sm:$0xff]
      %v371 = vld [vmem:[%s327 + $0x128] sm:$0xff]
      %v372 = vld [vmem:[%s327 + $0x130] sm:$0xff]
      %v373 = vld [vmem:[%s327 + $0x138] sm:$0xff]
      %v374 = vld [vmem:[%s327 + $0x140] sm:$0xff]
      %v375 = vld [vmem:[%s327 + $0x148] sm:$0xff]
      %v376 = vld [vmem:[%s327 + $0x150] sm:$0xff]
      %v377 = vld [vmem:[%s327 + $0x158] sm:$0xff]
      %v378 = vld [vmem:[%s327 + $0x160] sm:$0xff]
      %v379 = vld [vmem:[%s327 + $0x168] sm:$0xff]
      %v380 = vld [vmem:[%s327 + $0x170] sm:$0xf]
      %v381 = vld [vmem:[%s2] sm:$0x1]
      %v383 = vlaneseq
      %v384 = vshrl.u32 %v383, 7
      %v385 = vsub.s32 0, %v384
      %v386 = vrot.slane %v381, %v385
      %v388 = vmul.f32 %v334, %v386
      %v389 = vmul.f32 %v335, %v386
      %v390 = vmul.f32 %v336, %v386
      %v391 = vmul.f32 %v337, %v386
      %v392 = vmul.f32 %v338, %v386
      %v393 = vmul.f32 %v339, %v386
      %v394 = vmul.f32 %v340, %v386
      %v395 = vmul.f32 %v341, %v386
      %v396 = vmul.f32 %v342, %v386
      %v397 = vmul.f32 %v343, %v386
      %v398 = vmul.f32 %v344, %v386
      %v399 = vmul.f32 %v345, %v386
      %v400 = vmul.f32 %v346, %v386
      %v401 = vmul.f32 %v347, %v386
      %v402 = vmul.f32 %v348, %v386
      %v403 = vmul.f32 %v349, %v386
      %v404 = vmul.f32 %v350, %v386
      %v405 = vmul.f32 %v351, %v386
      %v406 = vmul.f32 %v352, %v386
      %v407 = vmul.f32 %v353, %v386
      %v408 = vmul.f32 %v354, %v386
      %v409 = vmul.f32 %v355, %v386
      %v410 = vmul.f32 %v356, %v386
      %v411 = vmul.f32 %v357, %v386
      %v412 = vmul.f32 %v358, %v386
      %v413 = vmul.f32 %v359, %v386
      %v414 = vmul.f32 %v360, %v386
      %v415 = vmul.f32 %v361, %v386
      %v416 = vmul.f32 %v362, %v386
      %v417 = vmul.f32 %v363, %v386
      %v418 = vmul.f32 %v364, %v386
      %v419 = vmul.f32 %v365, %v386
      %v420 = vmul.f32 %v366, %v386
      %v421 = vmul.f32 %v367, %v386
      %v422 = vmul.f32 %v368, %v386
      %v423 = vmul.f32 %v369, %v386
      %v424 = vmul.f32 %v370, %v386
      %v425 = vmul.f32 %v371, %v386
      %v426 = vmul.f32 %v372, %v386
      %v427 = vmul.f32 %v373, %v386
      %v428 = vmul.f32 %v374, %v386
      %v429 = vmul.f32 %v375, %v386
      %v430 = vmul.f32 %v376, %v386
      %v431 = vmul.f32 %v377, %v386
      %v432 = vmul.f32 %v378, %v386
      %v433 = vmul.f32 %v379, %v386
      %v434 = vmul.f32 %v380, %v386
      %v435 = vld [vmem:[%s3] sm:$0x1]
      %v437 = vlaneseq
      %v438 = vshrl.u32 %v437, 7
      %v439 = vsub.s32 0, %v438
      %v440 = vrot.slane %v435, %v439
      %v442 = vadd.f32 %v388, %v440
      %v443 = vadd.f32 %v389, %v440
      %v444 = vadd.f32 %v390, %v440
      %v445 = vadd.f32 %v391, %v440
      %v446 = vadd.f32 %v392, %v440
      %v447 = vadd.f32 %v393, %v440
      %v448 = vadd.f32 %v394, %v440
      %v449 = vadd.f32 %v395, %v440
      %v450 = vadd.f32 %v396, %v440
      %v451 = vadd.f32 %v397, %v440
      %v452 = vadd.f32 %v398, %v440
      %v453 = vadd.f32 %v399, %v440
      %v454 = vadd.f32 %v400, %v440
      %v455 = vadd.f32 %v401, %v440
      %v456 = vadd.f32 %v402, %v440
      %v457 = vadd.f32 %v403, %v440
      %v458 = vadd.f32 %v404, %v440
      %v459 = vadd.f32 %v405, %v440
      %v460 = vadd.f32 %v406, %v440
      %v461 = vadd.f32 %v407, %v440
      %v462 = vadd.f32 %v408, %v440
      %v463 = vadd.f32 %v409, %v440
      %v464 = vadd.f32 %v410, %v440
      %v465 = vadd.f32 %v411, %v440
      %v466 = vadd.f32 %v412, %v440
      %v467 = vadd.f32 %v413, %v440
      %v468 = vadd.f32 %v414, %v440
      %v469 = vadd.f32 %v415, %v440
      %v470 = vadd.f32 %v416, %v440
      %v471 = vadd.f32 %v417, %v440
      %v472 = vadd.f32 %v418, %v440
      %v473 = vadd.f32 %v419, %v440
      %v474 = vadd.f32 %v420, %v440
      %v475 = vadd.f32 %v421, %v440
      %v476 = vadd.f32 %v422, %v440
      %v477 = vadd.f32 %v423, %v440
      %v478 = vadd.f32 %v424, %v440
      %v479 = vadd.f32 %v425, %v440
      %v480 = vadd.f32 %v426, %v440
      %v481 = vadd.f32 %v427, %v440
      %v482 = vadd.f32 %v428, %v440
      %v483 = vadd.f32 %v429, %v440
      %v484 = vadd.f32 %v430, %v440
      %v485 = vadd.f32 %v431, %v440
      %v486 = vadd.f32 %v432, %v440
      %v487 = vadd.f32 %v433, %v440
      %v488 = vadd.f32 %v434, %v440
      %v489 = vmax.f32 %v442, 0.0
      %v490 = vmax.f32 %v443, 0.0
      %v491 = vmax.f32 %v444, 0.0
      %v492 = vmax.f32 %v445, 0.0
      %v493 = vmax.f32 %v446, 0.0
      %v494 = vmax.f32 %v447, 0.0
      %v495 = vmax.f32 %v448, 0.0
      %v496 = vmax.f32 %v449, 0.0
      %v497 = vmax.f32 %v450, 0.0
      %v498 = vmax.f32 %v451, 0.0
      %v499 = vmax.f32 %v452, 0.0
      %v500 = vmax.f32 %v453, 0.0
      %v501 = vmax.f32 %v454, 0.0
      %v502 = vmax.f32 %v455, 0.0
      %v503 = vmax.f32 %v456, 0.0
      %v504 = vmax.f32 %v457, 0.0
      %v505 = vmax.f32 %v458, 0.0
      %v506 = vmax.f32 %v459, 0.0
      %v507 = vmax.f32 %v460, 0.0
      %v508 = vmax.f32 %v461, 0.0
      %v509 = vmax.f32 %v462, 0.0
      %v510 = vmax.f32 %v463, 0.0
      %v511 = vmax.f32 %v464, 0.0
      %v512 = vmax.f32 %v465, 0.0
      %v513 = vmax.f32 %v466, 0.0
      %v514 = vmax.f32 %v467, 0.0
      %v515 = vmax.f32 %v468, 0.0
      %v516 = vmax.f32 %v469, 0.0
      %v517 = vmax.f32 %v470, 0.0
      %v518 = vmax.f32 %v471, 0.0
      %v519 = vmax.f32 %v472, 0.0
      %v520 = vmax.f32 %v473, 0.0
      %v521 = vmax.f32 %v474, 0.0
      %v522 = vmax.f32 %v475, 0.0
      %v523 = vmax.f32 %v476, 0.0
      %v524 = vmax.f32 %v477, 0.0
      %v525 = vmax.f32 %v478, 0.0
      %v526 = vmax.f32 %v479, 0.0
      %v527 = vmax.f32 %v480, 0.0
      %v528 = vmax.f32 %v481, 0.0
      %v529 = vmax.f32 %v482, 0.0
      %v530 = vmax.f32 %v483, 0.0
      %v531 = vmax.f32 %v484, 0.0
      %v532 = vmax.f32 %v485, 0.0
      %v533 = vmax.f32 %v486, 0.0
      %v534 = vmax.f32 %v487, 0.0
      %v535 = vmax.f32 %v488, 0.0
      %v536 = vld [vmem:[%s1] sm:$0xff]
      %v537 = vld [vmem:[%s1 + $0x8] sm:$0xff]
      %v538 = vld [vmem:[%s1 + $0x10] sm:$0xff]
      %v539 = vld [vmem:[%s1 + $0x18] sm:$0xff]
      %v540 = vld [vmem:[%s1 + $0x20] sm:$0xff]
      %v541 = vld [vmem:[%s1 + $0x28] sm:$0xff]
      %v542 = vld [vmem:[%s1 + $0x30] sm:$0xff]
      %v543 = vld [vmem:[%s1 + $0x38] sm:$0xff]
      %v544 = vld [vmem:[%s1 + $0x40] sm:$0xff]
      %v545 = vld [vmem:[%s1 + $0x48] sm:$0xff]
      %v546 = vld [vmem:[%s1 + $0x50] sm:$0xff]
      %v547 = vld [vmem:[%s1 + $0x58] sm:$0xff]
      %v548 = vld [vmem:[%s1 + $0x60] sm:$0xff]
      %v549 = vld [vmem:[%s1 + $0x68] sm:$0xff]
      %v550 = vld [vmem:[%s1 + $0x70] sm:$0xff]
      %v551 = vld [vmem:[%s1 + $0x78] sm:$0xff]
      %v552 = vld [vmem:[%s1 + $0x80] sm:$0xff]
      %v553 = vld [vmem:[%s1 + $0x88] sm:$0xff]
      %v554 = vld [vmem:[%s1 + $0x90] sm:$0xff]
      %v555 = vld [vmem:[%s1 + $0x98] sm:$0xff]
      %v556 = vld [vmem:[%s1 + $0xa0] sm:$0xff]
      %v557 = vld [vmem:[%s1 + $0xa8] sm:$0xff]
      %v558 = vld [vmem:[%s1 + $0xb0] sm:$0xff]
      %v559 = vld [vmem:[%s1 + $0xb8] sm:$0xff]
      %v560 = vld [vmem:[%s1 + $0xc0] sm:$0xff]
      %v561 = vld [vmem:[%s1 + $0xc8] sm:$0xff]
      %v562 = vld [vmem:[%s1 + $0xd0] sm:$0xff]
      %v563 = vld [vmem:[%s1 + $0xd8] sm:$0xff]
      %v564 = vld [vmem:[%s1 + $0xe0] sm:$0xff]
      %v565 = vld [vmem:[%s1 + $0xe8] sm:$0xff]
      %v566 = vld [vmem:[%s1 + $0xf0] sm:$0xff]
      %v567 = vld [vmem:[%s1 + $0xf8] sm:$0xff]
      %v568 = vld [vmem:[%s1 + $0x100] sm:$0xff]
      %v569 = vld [vmem:[%s1 + $0x108] sm:$0xff]
      %v570 = vld [vmem:[%s1 + $0x110] sm:$0xff]
      %v571 = vld [vmem:[%s1 + $0x118] sm:$0xff]
      %v572 = vld [vmem:[%s1 + $0x120] sm:$0xff]
      %v573 = vld [vmem:[%s1 + $0x128] sm:$0xff]
      %v574 = vld [vmem:[%s1 + $0x130] sm:$0xff]
      %v575 = vld [vmem:[%s1 + $0x138] sm:$0xff]
      %v576 = vld [vmem:[%s1 + $0x140] sm:$0xff]
      %v577 = vld [vmem:[%s1 + $0x148] sm:$0xff]
      %v578 = vld [vmem:[%s1 + $0x150] sm:$0xff]
      %v579 = vld [vmem:[%s1 + $0x158] sm:$0xff]
      %v580 = vld [vmem:[%s1 + $0x160] sm:$0xff]
      %v581 = vld [vmem:[%s1 + $0x168] sm:$0xff]
      %v582 = vld [vmem:[%s1 + $0x170] sm:$0xf]
      %584 = vset.pattern.permute.xlu0 0
      %585 = vperm.xlu0 %584, %v536
      %v586 = vpop.permute.xlu0 %585
      %589 = vset.pattern.permute.xlu0 0
      %590 = vperm.xlu0 %589, %v537
      %v591 = vpop.permute.xlu0 %590
      %594 = vset.pattern.permute.xlu0 0
      %595 = vperm.xlu0 %594, %v538
      %v596 = vpop.permute.xlu0 %595
      %599 = vset.pattern.permute.xlu0 0
      %600 = vperm.xlu0 %599, %v539
      %v601 = vpop.permute.xlu0 %600
      %604 = vset.pattern.permute.xlu0 0
      %605 = vperm.xlu0 %604, %v540
      %v606 = vpop.permute.xlu0 %605
      %609 = vset.pattern.permute.xlu0 0
      %610 = vperm.xlu0 %609, %v541
      %v611 = vpop.permute.xlu0 %610
      %614 = vset.pattern.permute.xlu0 0
      %615 = vperm.xlu0 %614, %v542
      %v616 = vpop.permute.xlu0 %615
      %619 = vset.pattern.permute.xlu0 0
      %620 = vperm.xlu0 %619, %v543
      %v621 = vpop.permute.xlu0 %620
      %624 = vset.pattern.permute.xlu0 0
      %625 = vperm.xlu0 %624, %v544
      %v626 = vpop.permute.xlu0 %625
      %629 = vset.pattern.permute.xlu0 0
      %630 = vperm.xlu0 %629, %v545
      %v631 = vpop.permute.xlu0 %630
      %634 = vset.pattern.permute.xlu0 0
      %635 = vperm.xlu0 %634, %v546
      %v636 = vpop.permute.xlu0 %635
      %639 = vset.pattern.permute.xlu0 0
      %640 = vperm.xlu0 %639, %v547
      %v641 = vpop.permute.xlu0 %640
      %644 = vset.pattern.permute.xlu0 0
      %645 = vperm.xlu0 %644, %v548
      %v646 = vpop.permute.xlu0 %645
      %649 = vset.pattern.permute.xlu0 0
      %650 = vperm.xlu0 %649, %v549
      %v651 = vpop.permute.xlu0 %650
      %654 = vset.pattern.permute.xlu0 0
      %655 = vperm.xlu0 %654, %v550
      %v656 = vpop.permute.xlu0 %655
      %659 = vset.pattern.permute.xlu0 0
      %660 = vperm.xlu0 %659, %v551
      %v661 = vpop.permute.xlu0 %660
      %664 = vset.pattern.permute.xlu0 0
      %665 = vperm.xlu0 %664, %v552
      %v666 = vpop.permute.xlu0 %665
      %669 = vset.pattern.permute.xlu0 0
      %670 = vperm.xlu0 %669, %v553
      %v671 = vpop.permute.xlu0 %670
      %674 = vset.pattern.permute.xlu0 0
      %675 = vperm.xlu0 %674, %v554
      %v676 = vpop.permute.xlu0 %675
      %679 = vset.pattern.permute.xlu0 0
      %680 = vperm.xlu0 %679, %v555
      %v681 = vpop.permute.xlu0 %680
      %684 = vset.pattern.permute.xlu0 0
      %685 = vperm.xlu0 %684, %v556
      %v686 = vpop.permute.xlu0 %685
      %689 = vset.pattern.permute.xlu0 0
      %690 = vperm.xlu0 %689, %v557
      %v691 = vpop.permute.xlu0 %690
      %694 = vset.pattern.permute.xlu0 0
      %695 = vperm.xlu0 %694, %v558
      %v696 = vpop.permute.xlu0 %695
      %699 = vset.pattern.permute.xlu0 0
      %700 = vperm.xlu0 %699, %v559
      %v701 = vpop.permute.xlu0 %700
      %704 = vset.pattern.permute.xlu0 0
      %705 = vperm.xlu0 %704, %v560
      %v706 = vpop.permute.xlu0 %705
      %709 = vset.pattern.permute.xlu0 0
      %710 = vperm.xlu0 %709, %v561
      %v711 = vpop.permute.xlu0 %710
      %714 = vset.pattern.permute.xlu0 0
      %715 = vperm.xlu0 %714, %v562
      %v716 = vpop.permute.xlu0 %715
      %719 = vset.pattern.permute.xlu0 0
      %720 = vperm.xlu0 %719, %v563
      %v721 = vpop.permute.xlu0 %720
      %724 = vset.pattern.permute.xlu0 0
      %725 = vperm.xlu0 %724, %v564
      %v726 = vpop.permute.xlu0 %725
      %729 = vset.pattern.permute.xlu0 0
      %730 = vperm.xlu0 %729, %v565
      %v731 = vpop.permute.xlu0 %730
      %734 = vset.pattern.permute.xlu0 0
      %735 = vperm.xlu0 %734, %v566
      %v736 = vpop.permute.xlu0 %735
      %739 = vset.pattern.permute.xlu0 0
      %740 = vperm.xlu0 %739, %v567
      %v741 = vpop.permute.xlu0 %740
      %744 = vset.pattern.permute.xlu0 0
      %745 = vperm.xlu0 %744, %v568
      %v746 = vpop.permute.xlu0 %745
      %749 = vset.pattern.permute.xlu0 0
      %750 = vperm.xlu0 %749, %v569
      %v751 = vpop.permute.xlu0 %750
      %754 = vset.pattern.permute.xlu0 0
      %755 = vperm.xlu0 %754, %v570
      %v756 = vpop.permute.xlu0 %755
      %759 = vset.pattern.permute.xlu0 0
      %760 = vperm.xlu0 %759, %v571
      %v761 = vpop.permute.xlu0 %760
      %764 = vset.pattern.permute.xlu0 0
      %765 = vperm.xlu0 %764, %v572
      %v766 = vpop.permute.xlu0 %765
      %769 = vset.pattern.permute.xlu0 0
      %770 = vperm.xlu0 %769, %v573
      %v771 = vpop.permute.xlu0 %770
      %774 = vset.pattern.permute.xlu0 0
      %775 = vperm.xlu0 %774, %v574
      %v776 = vpop.permute.xlu0 %775
      %779 = vset.pattern.permute.xlu0 0
      %780 = vperm.xlu0 %779, %v575
      %v781 = vpop.permute.xlu0 %780
      %784 = vset.pattern.permute.xlu0 0
      %785 = vperm.xlu0 %784, %v576
      %v786 = vpop.permute.xlu0 %785
      %789 = vset.pattern.permute.xlu0 0
      %790 = vperm.xlu0 %789, %v577
      %v791 = vpop.permute.xlu0 %790
      %794 = vset.pattern.permute.xlu0 0
      %795 = vperm.xlu0 %794, %v578
      %v796 = vpop.permute.xlu0 %795
      %799 = vset.pattern.permute.xlu0 0
      %800 = vperm.xlu0 %799, %v579
      %v801 = vpop.permute.xlu0 %800
      %804 = vset.pattern.permute.xlu0 0
      %805 = vperm.xlu0 %804, %v580
      %v806 = vpop.permute.xlu0 %805
      %809 = vset.pattern.permute.xlu0 0
      %810 = vperm.xlu0 %809, %v581
      %v811 = vpop.permute.xlu0 %810
      %814 = vset.pattern.permute.xlu0 0
      %815 = vperm.xlu0 %814, %v582
      %v816 = vpop.permute.xlu0 %815
      %v818 = vmul.f32 %v489, %v586
      %v819 = vmul.f32 %v490, %v591
      %v820 = vmul.f32 %v491, %v596
      %v821 = vmul.f32 %v492, %v601
      %v822 = vmul.f32 %v493, %v606
      %v823 = vmul.f32 %v494, %v611
      %v824 = vmul.f32 %v495, %v616
      %v825 = vmul.f32 %v496, %v621
      %v826 = vmul.f32 %v497, %v626
      %v827 = vmul.f32 %v498, %v631
      %v828 = vmul.f32 %v499, %v636
      %v829 = vmul.f32 %v500, %v641
      %v830 = vmul.f32 %v501, %v646
      %v831 = vmul.f32 %v502, %v651
      %v832 = vmul.f32 %v503, %v656
      %v833 = vmul.f32 %v504, %v661
      %v834 = vmul.f32 %v505, %v666
      %v835 = vmul.f32 %v506, %v671
      %v836 = vmul.f32 %v507, %v676
      %v837 = vmul.f32 %v508, %v681
      %v838 = vmul.f32 %v509, %v686
      %v839 = vmul.f32 %v510, %v691
      %v840 = vmul.f32 %v511, %v696
      %v841 = vmul.f32 %v512, %v701
      %v842 = vmul.f32 %v513, %v706
      %v843 = vmul.f32 %v514, %v711
      %v844 = vmul.f32 %v515, %v716
      %v845 = vmul.f32 %v516, %v721
      %v846 = vmul.f32 %v517, %v726
      %v847 = vmul.f32 %v518, %v731
      %v848 = vmul.f32 %v519, %v736
      %v849 = vmul.f32 %v520, %v741
      %v850 = vmul.f32 %v521, %v746
      %v851 = vmul.f32 %v522, %v751
      %v852 = vmul.f32 %v523, %v756
      %v853 = vmul.f32 %v524, %v761
      %v854 = vmul.f32 %v525, %v766
      %v855 = vmul.f32 %v526, %v771
      %v856 = vmul.f32 %v527, %v776
      %v857 = vmul.f32 %v528, %v781
      %v858 = vmul.f32 %v529, %v786
      %v859 = vmul.f32 %v530, %v791
      %v860 = vmul.f32 %v531, %v796
      %v861 = vmul.f32 %v532, %v801
      %v862 = vmul.f32 %v533, %v806
      %v863 = vmul.f32 %v534, %v811
      %v864 = vmul.f32 %v535, %v816
      %865 = vst [vmem:[#allocation2] sm:$0xff] %v818
      %866 = vst [vmem:[#allocation2 + $0x8] sm:$0xff] %v819
      %867 = vst [vmem:[#allocation2 + $0x10] sm:$0xff] %v820
      %868 = vst [vmem:[#allocation2 + $0x18] sm:$0xff] %v821
      %869 = vst [vmem:[#allocation2 + $0x20] sm:$0xff] %v822
      %870 = vst [vmem:[#allocation2 + $0x28] sm:$0xff] %v823
      %871 = vst [vmem:[#allocation2 + $0x30] sm:$0xff] %v824
      %872 = vst [vmem:[#allocation2 + $0x38] sm:$0xff] %v825
      %873 = vst [vmem:[#allocation2 + $0x40] sm:$0xff] %v826
      %874 = vst [vmem:[#allocation2 + $0x48] sm:$0xff] %v827
      %875 = vst [vmem:[#allocation2 + $0x50] sm:$0xff] %v828
      %876 = vst [vmem:[#allocation2 + $0x58] sm:$0xff] %v829
      %877 = vst [vmem:[#allocation2 + $0x60] sm:$0xff] %v830
      %878 = vst [vmem:[#allocation2 + $0x68] sm:$0xff] %v831
      %879 = vst [vmem:[#allocation2 + $0x70] sm:$0xff] %v832
      %880 = vst [vmem:[#allocation2 + $0x78] sm:$0xff] %v833
      %881 = vst [vmem:[#allocation2 + $0x80] sm:$0xff] %v834
      %882 = vst [vmem:[#allocation2 + $0x88] sm:$0xff] %v835
      %883 = vst [vmem:[#allocation2 + $0x90] sm:$0xff] %v836
      %884 = vst [vmem:[#allocation2 + $0x98] sm:$0xff] %v837
      %885 = vst [vmem:[#allocation2 + $0xa0] sm:$0xff] %v838
      %886 = vst [vmem:[#allocation2 + $0xa8] sm:$0xff] %v839
      %887 = vst [vmem:[#allocation2 + $0xb0] sm:$0xff] %v840
      %888 = vst [vmem:[#allocation2 + $0xb8] sm:$0xff] %v841
      %889 = vst [vmem:[#allocation2 + $0xc0] sm:$0xff] %v842
      %890 = vst [vmem:[#allocation2 + $0xc8] sm:$0xff] %v843
      %891 = vst [vmem:[#allocation2 + $0xd0] sm:$0xff] %v844
      %892 = vst [vmem:[#allocation2 + $0xd8] sm:$0xff] %v845
      %893 = vst [vmem:[#allocation2 + $0xe0] sm:$0xff] %v846
      %894 = vst [vmem:[#allocation2 + $0xe8] sm:$0xff] %v847
      %895 = vst [vmem:[#allocation2 + $0xf0] sm:$0xff] %v848
      %896 = vst [vmem:[#allocation2 + $0xf8] sm:$0xff] %v849
      %897 = vst [vmem:[#allocation2 + $0x100] sm:$0xff] %v850
      %898 = vst [vmem:[#allocation2 + $0x108] sm:$0xff] %v851
      %899 = vst [vmem:[#allocation2 + $0x110] sm:$0xff] %v852
      %900 = vst [vmem:[#allocation2 + $0x118] sm:$0xff] %v853
      %901 = vst [vmem:[#allocation2 + $0x120] sm:$0xff] %v854
      %902 = vst [vmem:[#allocation2 + $0x128] sm:$0xff] %v855
      %903 = vst [vmem:[#allocation2 + $0x130] sm:$0xff] %v856
      %904 = vst [vmem:[#allocation2 + $0x138] sm:$0xff] %v857
      %905 = vst [vmem:[#allocation2 + $0x140] sm:$0xff] %v858
      %906 = vst [vmem:[#allocation2 + $0x148] sm:$0xff] %v859
      %907 = vst [vmem:[#allocation2 + $0x150] sm:$0xff] %v860
      %908 = vst [vmem:[#allocation2 + $0x158] sm:$0xff] %v861
      %909 = vst [vmem:[#allocation2 + $0x160] sm:$0xff] %v862
      %910 = vst [vmem:[#allocation2 + $0x168] sm:$0xff] %v863
      %911 = vst [vmem:[#allocation2 + $0x170] sm:$0xf] %v864
      %912 = vst [vmem:[#allocation3] sm:$0xff] 0.0
      %913 = vst [vmem:[#allocation3 + $0x8] sm:$0xff] 0.0
      %914 = vst [vmem:[#allocation3 + $0x10] sm:$0xff] 0.0
      %915 = vst [vmem:[#allocation3 + $0x18] sm:$0xff] 0.0
      %916 = vst [vmem:[#allocation3 + $0x20] sm:$0xff] 0.0
      %917 = vst [vmem:[#allocation3 + $0x28] sm:$0xff] 0.0
      %918 = vst [vmem:[#allocation3 + $0x30] sm:$0xff] 0.0
      %919 = vst [vmem:[#allocation3 + $0x38] sm:$0xff] 0.0
      %920 = vst [vmem:[#allocation3 + $0x40] sm:$0xff] 0.0
      %921 = vst [vmem:[#allocation3 + $0x48] sm:$0xff] 0.0
      %922 = vst [vmem:[#allocation3 + $0x50] sm:$0xff] 0.0
      %923 = vst [vmem:[#allocation3 + $0x58] sm:$0xff] 0.0
      %924 = vst [vmem:[#allocation3 + $0x60] sm:$0xff] 0.0
      %925 = vst [vmem:[#allocation3 + $0x68] sm:$0xff] 0.0
      %926 = vst [vmem:[#allocation3 + $0x70] sm:$0xff] 0.0
      %927 = vst [vmem:[#allocation3 + $0x78] sm:$0xff] 0.0
      %928 = vst [vmem:[#allocation3 + $0x80] sm:$0xff] 0.0
      %929 = vst [vmem:[#allocation3 + $0x88] sm:$0xff] 0.0
      %930 = vst [vmem:[#allocation3 + $0x90] sm:$0xff] 0.0
      %931 = vst [vmem:[#allocation3 + $0x98] sm:$0xff] 0.0
      %932 = vst [vmem:[#allocation3 + $0xa0] sm:$0xff] 0.0
      %933 = vst [vmem:[#allocation3 + $0xa8] sm:$0xff] 0.0
      %934 = vst [vmem:[#allocation3 + $0xb0] sm:$0xff] 0.0
      %935 = vst [vmem:[#allocation3 + $0xb8] sm:$0xff] 0.0
      %936 = vst [vmem:[#allocation3 + $0xc0] sm:$0xff] 0.0
      %937 = vst [vmem:[#allocation3 + $0xc8] sm:$0xff] 0.0
      %938 = vst [vmem:[#allocation3 + $0xd0] sm:$0xff] 0.0
      %939 = vst [vmem:[#allocation3 + $0xd8] sm:$0xff] 0.0
      %940 = vst [vmem:[#allocation3 + $0xe0] sm:$0xff] 0.0
      %941 = vst [vmem:[#allocation3 + $0xe8] sm:$0xff] 0.0
      %942 = vst [vmem:[#allocation3 + $0xf0] sm:$0xff] 0.0
      %943 = vst [vmem:[#allocation3 + $0xf8] sm:$0xff] 0.0
      %944 = vst [vmem:[#allocation3 + $0x100] sm:$0xff] 0.0
      %945 = vst [vmem:[#allocation3 + $0x108] sm:$0xff] 0.0
      %946 = vst [vmem:[#allocation3 + $0x110] sm:$0xff] 0.0
      %947 = vst [vmem:[#allocation3 + $0x118] sm:$0xff] 0.0
      %948 = vst [vmem:[#allocation3 + $0x120] sm:$0xff] 0.0
      %949 = vst [vmem:[#allocation3 + $0x128] sm:$0xff] 0.0
      %950 = vst [vmem:[#allocation3 + $0x130] sm:$0xff] 0.0
      %951 = vst [vmem:[#allocation3 + $0x138] sm:$0xff] 0.0
      %952 = vst [vmem:[#allocation3 + $0x140] sm:$0xff] 0.0
      %953 = vst [vmem:[#allocation3 + $0x148] sm:$0xff] 0.0
      %954 = vst [vmem:[#allocation3 + $0x150] sm:$0xff] 0.0
      %955 = vst [vmem:[#allocation3 + $0x158] sm:$0xff] 0.0
      %956 = vst [vmem:[#allocation3 + $0x160] sm:$0xff] 0.0
      %957 = vst [vmem:[#allocation3 + $0x168] sm:$0xff] 0.0
      %958 = vst [vmem:[#allocation3 + $0x170] sm:$0xf] 0.0
      %v959 = vld [vmem:[#allocation2 + $0x5] sm:$0xff]
      %v960 = vld [vmem:[#allocation2 + $0xd] sm:$0xff]
      %v961 = vld [vmem:[#allocation2 + $0x15] sm:$0xff]
      %v962 = vld [vmem:[#allocation2 + $0x1d] sm:$0xff]
      %v963 = vld [vmem:[#allocation2 + $0x25] sm:$0xff]
      %v964 = vld [vmem:[#allocation2 + $0x2d] sm:$0xff]
      %v965 = vld [vmem:[#allocation2 + $0x35] sm:$0xff]
      %v966 = vld [vmem:[#allocation2 + $0x3d] sm:$0xff]
      %v967 = vld [vmem:[#allocation2 + $0x45] sm:$0xff]
      %v968 = vld [vmem:[#allocation2 + $0x4d] sm:$0xff]
      %v969 = vld [vmem:[#allocation2 + $0x55] sm:$0xff]
      %v970 = vld [vmem:[#allocation2 + $0x5d] sm:$0xff]
      %v971 = vld [vmem:[#allocation2 + $0x65] sm:$0xff]
      %v972 = vld [vmem:[#allocation2 + $0x6d] sm:$0xff]
      %v973 = vld [vmem:[#allocation2 + $0x75] sm:$0xff]
      %v974 = vld [vmem:[#allocation2 + $0x7d] sm:$0xff]
      %v975 = vld [vmem:[#allocation2 + $0x85] sm:$0xff]
      %v976 = vld [vmem:[#allocation2 + $0x8d] sm:$0xff]
      %v977 = vld [vmem:[#allocation2 + $0x95] sm:$0xff]
      %v978 = vld [vmem:[#allocation2 + $0x9d] sm:$0xff]
      %v979 = vld [vmem:[#allocation2 + $0xa5] sm:$0xff]
      %v980 = vld [vmem:[#allocation2 + $0xad] sm:$0xff]
      %v981 = vld [vmem:[#allocation2 + $0xb5] sm:$0xff]
      %v982 = vld [vmem:[#allocation2 + $0xbd] sm:$0xff]
      %v983 = vld [vmem:[#allocation2 + $0xc5] sm:$0xff]
      %v984 = vld [vmem:[#allocation2 + $0xcd] sm:$0xff]
      %v985 = vld [vmem:[#allocation2 + $0xd5] sm:$0xff]
      %v986 = vld [vmem:[#allocation2 + $0xdd] sm:$0xff]
      %v987 = vld [vmem:[#allocation2 + $0xe5] sm:$0xff]
      %v988 = vld [vmem:[#allocation2 + $0xed] sm:$0xff]
      %v989 = vld [vmem:[#allocation2 + $0xf5] sm:$0xff]
      %v990 = vld [vmem:[#allocation2 + $0xfd] sm:$0xff]
      %v991 = vld [vmem:[#allocation2 + $0x105] sm:$0xff]
      %v992 = vld [vmem:[#allocation2 + $0x10d] sm:$0xff]
      %v993 = vld [vmem:[#allocation2 + $0x115] sm:$0xff]
      %v994 = vld [vmem:[#allocation2 + $0x11d] sm:$0xff]
      %v995 = vld [vmem:[#allocation2 + $0x125] sm:$0xff]
      %v996 = vld [vmem:[#allocation2 + $0x12d] sm:$0xff]
      %v997 = vld [vmem:[#allocation2 + $0x135] sm:$0xff]
      %v998 = vld [vmem:[#allocation2 + $0x13d] sm:$0xff]
      %v999 = vld [vmem:[#allocation2 + $0x145] sm:$0xf]
      %v1000 = vpack.c.bf16 %v960, %v959
      %v1001 = vpack.c.bf16 %v962, %v961
      %v1002 = vpack.c.bf16 %v964, %v963
      %v1003 = vpack.c.bf16 %v966, %v965
      %v1004 = vpack.c.bf16 %v968, %v967
      %v1005 = vpack.c.bf16 %v970, %v969
      %v1006 = vpack.c.bf16 %v972, %v971
      %v1007 = vpack.c.bf16 %v974, %v973
      %v1008 = vpack.c.bf16 %v976, %v975
      %v1009 = vpack.c.bf16 %v978, %v977
      %v1010 = vpack.c.bf16 %v980, %v979
      %v1011 = vpack.c.bf16 %v982, %v981
      %v1012 = vpack.c.bf16 %v984, %v983
      %v1013 = vpack.c.bf16 %v986, %v985
      %v1014 = vpack.c.bf16 %v988, %v987
      %v1015 = vpack.c.bf16 %v990, %v989
      %v1016 = vpack.c.bf16 %v992, %v991
      %v1017 = vpack.c.bf16 %v994, %v993
      %v1018 = vpack.c.bf16 %v996, %v995
      %v1019 = vpack.c.bf16 %v998, %v997
      %v1020 = vpack.c.bf16 %v999, %v999
      %v1021 = vld [vmem:[%s4] sm:$0xf]
      %v1022 = vld [vmem:[%s4 + $0x4] sm:$0xf]
      %v1023 = vld [vmem:[%s4 + $0x8] sm:$0xf]
      %v1024 = vld [vmem:[%s4 + $0xc] sm:$0xf]
      %v1025 = vld [vmem:[%s4 + $0x10] sm:$0xf]
      %v1026 = vld [vmem:[%s4 + $0x14] sm:$0xf]
      %v1027 = vld [vmem:[%s4 + $0x18] sm:$0xf]
      %v1028 = vld [vmem:[%s4 + $0x1c] sm:$0xf]
      %v1029 = vld [vmem:[%s4 + $0x20] sm:$0xf]
      %v1030 = vld [vmem:[%s4 + $0x24] sm:$0xf]
      %v1031 = vld [vmem:[%s4 + $0x28] sm:$0xf]
      %v1032 = vld [vmem:[%s4 + $0x2c] sm:$0xf]
      %v1033 = vld [vmem:[%s4 + $0x30] sm:$0xf]
      %v1034 = vld [vmem:[%s4 + $0x34] sm:$0xf]
      %v1035 = vld [vmem:[%s4 + $0x38] sm:$0xf]
      %v1036 = vld [vmem:[%s4 + $0x3c] sm:$0xf]
      %v1037 = vld [vmem:[#allocation2 + $0x6] sm:$0xff]
      %v1038 = vld [vmem:[#allocation2 + $0xe] sm:$0xff]
      %v1039 = vld [vmem:[#allocation2 + $0x16] sm:$0xff]
      %v1040 = vld [vmem:[#allocation2 + $0x1e] sm:$0xff]
      %v1041 = vld [vmem:[#allocation2 + $0x26] sm:$0xff]
      %v1042 = vld [vmem:[#allocation2 + $0x2e] sm:$0xff]
      %v1043 = vld [vmem:[#allocation2 + $0x36] sm:$0xff]
      %v1044 = vld [vmem:[#allocation2 + $0x3e] sm:$0xff]
      %v1045 = vld [vmem:[#allocation2 + $0x46] sm:$0xff]
      %v1046 = vld [vmem:[#allocation2 + $0x4e] sm:$0xff]
      %v1047 = vld [vmem:[#allocation2 + $0x56] sm:$0xff]
      %v1048 = vld [vmem:[#allocation2 + $0x5e] sm:$0xff]
      %v1049 = vld [vmem:[#allocation2 + $0x66] sm:$0xff]
      %v1050 = vld [vmem:[#allocation2 + $0x6e] sm:$0xff]
      %v1051 = vld [vmem:[#allocation2 + $0x76] sm:$0xff]
      %v1052 = vld [vmem:[#allocation2 + $0x7e] sm:$0xff]
      %v1053 = vld [vmem:[#allocation2 + $0x86] sm:$0xff]
      %v1054 = vld [vmem:[#allocation2 + $0x8e] sm:$0xff]
      %v1055 = vld [vmem:[#allocation2 + $0x96] sm:$0xff]
      %v1056 = vld [vmem:[#allocation2 + $0x9e] sm:$0xff]
      %v1057 = vld [vmem:[#allocation2 + $0xa6] sm:$0xff]
      %v1058 = vld [vmem:[#allocation2 + $0xae] sm:$0xff]
      %v1059 = vld [vmem:[#allocation2 + $0xb6] sm:$0xff]
      %v1060 = vld [vmem:[#allocation2 + $0xbe] sm:$0xff]
      %v1061 = vld [vmem:[#allocation2 + $0xc6] sm:$0xff]
      %v1062 = vld [vmem:[#allocation2 + $0xce] sm:$0xff]
      %v1063 = vld [vmem:[#allocation2 + $0xd6] sm:$0xff]
      %v1064 = vld [vmem:[#allocation2 + $0xde] sm:$0xff]
      %v1065 = vld [vmem:[#allocation2 + $0xe6] sm:$0xff]
      %v1066 = vld [vmem:[#allocation2 + $0xee] sm:$0xff]
      %v1067 = vld [vmem:[#allocation2 + $0xf6] sm:$0xff]
      %v1068 = vld [vmem:[#allocation2 + $0xfe] sm:$0xff]
      %v1069 = vld [vmem:[#allocation2 + $0x106] sm:$0xff]
      %v1070 = vld [vmem:[#allocation2 + $0x10e] sm:$0xff]
      %v1071 = vld [vmem:[#allocation2 + $0x116] sm:$0xff]
      %v1072 = vld [vmem:[#allocation2 + $0x11e] sm:$0xff]
      %v1073 = vld [vmem:[#allocation2 + $0x126] sm:$0xff]
      %v1074 = vld [vmem:[#allocation2 + $0x12e] sm:$0xff]
      %v1075 = vld [vmem:[#allocation2 + $0x136] sm:$0xff]
      %v1076 = vld [vmem:[#allocation2 + $0x13e] sm:$0xff]
      %v1077 = vld [vmem:[#allocation2 + $0x146] sm:$0xf]
      %v1078 = vpack.c.bf16 %v1038, %v1037
      %v1079 = vpack.c.bf16 %v1040, %v1039
      %v1080 = vpack.c.bf16 %v1042, %v1041
      %v1081 = vpack.c.bf16 %v1044, %v1043
      %v1082 = vpack.c.bf16 %v1046, %v1045
      %v1083 = vpack.c.bf16 %v1048, %v1047
      %v1084 = vpack.c.bf16 %v1050, %v1049
      %v1085 = vpack.c.bf16 %v1052, %v1051
      %v1086 = vpack.c.bf16 %v1054, %v1053
      %v1087 = vpack.c.bf16 %v1056, %v1055
      %v1088 = vpack.c.bf16 %v1058, %v1057
      %v1089 = vpack.c.bf16 %v1060, %v1059
      %v1090 = vpack.c.bf16 %v1062, %v1061
      %v1091 = vpack.c.bf16 %v1064, %v1063
      %v1092 = vpack.c.bf16 %v1066, %v1065
      %v1093 = vpack.c.bf16 %v1068, %v1067
      %v1094 = vpack.c.bf16 %v1070, %v1069
      %v1095 = vpack.c.bf16 %v1072, %v1071
      %v1096 = vpack.c.bf16 %v1074, %v1073
      %v1097 = vpack.c.bf16 %v1076, %v1075
      %v1098 = vpack.c.bf16 %v1077, %v1077
      %s1099 = scalar_lea.vmem %s4, 64
      %v1100 = vld [vmem:[%s1099] sm:$0xf]
      %v1101 = vld [vmem:[%s1099 + $0x4] sm:$0xf]
      %v1102 = vld [vmem:[%s1099 + $0x8] sm:$0xf]
      %v1103 = vld [vmem:[%s1099 + $0xc] sm:$0xf]
      %v1104 = vld [vmem:[%s1099 + $0x10] sm:$0xf]
      %v1105 = vld [vmem:[%s1099 + $0x14] sm:$0xf]
      %v1106 = vld [vmem:[%s1099 + $0x18] sm:$0xf]
      %v1107 = vld [vmem:[%s1099 + $0x1c] sm:$0xf]
      %v1108 = vld [vmem:[%s1099 + $0x20] sm:$0xf]
      %v1109 = vld [vmem:[%s1099 + $0x24] sm:$0xf]
      %v1110 = vld [vmem:[%s1099 + $0x28] sm:$0xf]
      %v1111 = vld [vmem:[%s1099 + $0x2c] sm:$0xf]
      %v1112 = vld [vmem:[%s1099 + $0x30] sm:$0xf]
      %v1113 = vld [vmem:[%s1099 + $0x34] sm:$0xf]
      %v1114 = vld [vmem:[%s1099 + $0x38] sm:$0xf]
      %v1115 = vld [vmem:[%s1099 + $0x3c] sm:$0xf]
      %v1132 = vunpack.c.l.b16 %v1100
      %v1133 = vunpack.c.l.b16 %v1101
      %v1134 = vunpack.c.l.b16 %v1102
      %v1135 = vunpack.c.l.b16 %v1103
      %v1136 = vunpack.c.l.b16 %v1104
      %v1137 = vunpack.c.l.b16 %v1105
      %v1138 = vunpack.c.l.b16 %v1106
      %v1139 = vunpack.c.l.b16 %v1107
      %v1140 = vunpack.c.l.b16 %v1108
      %v1141 = vunpack.c.l.b16 %v1109
      %v1142 = vunpack.c.l.b16 %v1110
      %v1143 = vunpack.c.l.b16 %v1111
      %v1144 = vunpack.c.l.b16 %v1112
      %v1145 = vunpack.c.l.b16 %v1113
      %v1146 = vunpack.c.l.b16 %v1114
      %v1147 = vunpack.c.l.b16 %v1115
      %v1148 = vpack.c.b16 %v1133, %v1132
      %v1149 = vpack.c.b16 %v1135, %v1134
      %v1150 = vpack.c.b16 %v1137, %v1136
      %v1151 = vpack.c.b16 %v1139, %v1138
      %v1152 = vpack.c.b16 %v1141, %v1140
      %v1153 = vpack.c.b16 %v1143, %v1142
      %v1154 = vpack.c.b16 %v1145, %v1144
      %v1155 = vpack.c.b16 %v1147, %v1146
      %1164 = vmatprep.subr.bf16.mxu0 0
      %1165 = vmatpush1.bf16.msra.mxu0 %v1148
      %1166 = vmatprep.subr.bf16.mxu0 0
      %1167 = vmatpush1.bf16.msra.mxu0 %v1149
      %1168 = vmatprep.subr.bf16.mxu0 0
      %1169 = vmatpush1.bf16.msra.mxu0 %v1150
      %1170 = vmatprep.subr.bf16.mxu0 0
      %1171 = vmatpush1.bf16.msra.mxu0 %v1151
      %1172 = vmatprep.subr.bf16.mxu0 0
      %1173 = vmatpush1.bf16.msra.mxu0 %v1152
      %1174 = vmatprep.subr.bf16.mxu0 0
      %1175 = vmatpush1.bf16.msra.mxu0 %v1153
      %1176 = vmatprep.subr.bf16.mxu0 0
      %1177 = vmatpush1.bf16.msra.mxu0 %v1154
      %1178 = vmatprep.subr.bf16.mxu0 0
      %1179 = vmatpush1.bf16.msra.mxu0 %v1155
      %1180 = vmatprep.subr.bf16.mxu0 0
      %1181 = vmatpush1.bf16.msra.mxu0 0
      %1182 = vmatprep.subr.bf16.mxu0 0
      %1183 = vmatpush1.bf16.msra.mxu0 0
      %1184 = vmatprep.subr.bf16.mxu0 0
      %1185 = vmatpush1.bf16.msra.mxu0 0
      %1186 = vmatprep.subr.bf16.mxu0 0
      %1187 = vmatpush1.bf16.msra.mxu0 0
      %1188 = vmatprep.subr.bf16.mxu0 0
      %1189 = vmatpush1.bf16.msra.mxu0 0
      %1190 = vmatprep.subr.bf16.mxu0 0
      %1191 = vmatpush1.bf16.msra.mxu0 0
      %1192 = vmatprep.subr.bf16.mxu0 0
      %1193 = vmatpush1.bf16.msra.mxu0 0
      %1194 = vmatprep.subr.bf16.mxu0 0
      %1195 = vmatpush1.bf16.msra.mxu0 0
      %1196 = vmatprep.mubr.bf16.mxu0 0
      %1197 = vmatmul.mubr.bf16.gmra.mrb[0].mxu0 %v1078
      %v1198 = vpop.f32.mrb[0].mxu0
      %v1199 = vadd.f32 0.0, %v1198
      %v1200 = vpop.f32.mrb[0].mxu0
      %v1201 = vpop.f32.mrb[0].mxu0
      %v1202 = vadd.f32 0.0, %v1201
      %v1203 = vpop.f32.mrb[0].mxu0
      %1204 = vmatprep.mubr.bf16.mxu0 0
      %1205 = vmatmul.mubr.bf16.gmra.mrb[0].mxu0 %v1079
      %v1206 = vpop.f32.mrb[0].mxu0
      %v1207 = vadd.f32 0.0, %v1206
      %v1208 = vpop.f32.mrb[0].mxu0
      %v1209 = vpop.f32.mrb[0].mxu0
      %v1210 = vadd.f32 0.0, %v1209
      %v1211 = vpop.f32.mrb[0].mxu0
      %1212 = vmatprep.mubr.bf16.mxu0 0
      %1213 = vmatmul.mubr.bf16.gmra.mrb[0].mxu0 %v1080
      %v1214 = vpop.f32.mrb[0].mxu0
      %v1215 = vadd.f32 0.0, %v1214
      %v1216 = vpop.f32.mrb[0].mxu0
      %v1217 = vpop.f32.mrb[0].mxu0
      %v1218 = vadd.f32 0.0, %v1217
      %v1219 = vpop.f32.mrb[0].mxu0
      %1220 = vmatprep.mubr.bf16.mxu0 0
      %1221 = vmatmul.mubr.bf16.gmra.mrb[0].mxu0 %v1081
      %v1222 = vpop.f32.mrb[0].mxu0
      %v1223 = vadd.f32 0.0, %v1222
      %v1224 = vpop.f32.mrb[0].mxu0
      %v1225 = vpop.f32.mrb[0].mxu0
      %v1226 = vadd.f32 0.0, %v1225
      %v1227 = vpop.f32.mrb[0].mxu0
      %1228 = vmatprep.mubr.bf16.mxu0 0
      %1229 = vmatmul.mubr.bf16.gmra.mrb[0].mxu0 %v1082
      %v1230 = vpop.f32.mrb[0].mxu0
      %v1231 = vadd.f32 0.0, %v1230
      %v1232 = vpop.f32.mrb[0].mxu0
      %v1233 = vpop.f32.mrb[0].mxu0
      %v1234 = vadd.f32 0.0, %v1233
      %v1235 = vpop.f32.mrb[0].mxu0
      %1236 = vmatprep.mubr.bf16.mxu0 0
      %1237 = vmatmul.mubr.bf16.gmra.mrb[0].mxu0 %v1083
      %v1238 = vpop.f32.mrb[0].mxu0
      %v1239 = vadd.f32 0.0, %v1238
      %v1240 = vpop.f32.mrb[0].mxu0
      %v1241 = vpop.f32.mrb[0].mxu0
      %v1242 = vadd.f32 0.0, %v1241
      %v1243 = vpop.f32.mrb[0].mxu0
      %1244 = vmatprep.mubr.bf16.mxu0 0
      %1245 = vmatmul.mubr.bf16.gmra.mrb[0].mxu0 %v1084
      %v1246 = vpop.f32.mrb[0].mxu0
      %v1247 = vadd.f32 0.0, %v1246
      %v1248 = vpop.f32.mrb[0].mxu0
      %v1249 = vpop.f32.mrb[0].mxu0
      %v1250 = vadd.f32 0.0, %v1249
      %v1251 = vpop.f32.mrb[0].mxu0
      %1252 = vmatprep.mubr.bf16.mxu0 0
      %1253 = vmatmul.mubr.bf16.gmra.mrb[0].mxu0 %v1085
      %v1254 = vpop.f32.mrb[0].mxu0
      %v1255 = vadd.f32 0.0, %v1254
      %v1256 = vpop.f32.mrb[0].mxu0
      %v1257 = vpop.f32.mrb[0].mxu0
      %v1258 = vadd.f32 0.0, %v1257
      %v1259 = vpop.f32.mrb[0].mxu0
      %1260 = vmatprep.mubr.bf16.mxu0 0
      %1261 = vmatmul.mubr.bf16.gmra.mrb[0].mxu0 %v1086
      %v1262 = vpop.f32.mrb[0].mxu0
      %v1263 = vadd.f32 0.0, %v1262
      %v1264 = vpop.f32.mrb[0].mxu0
      %v1265 = vpop.f32.mrb[0].mxu0
      %v1266 = vadd.f32 0.0, %v1265
      %v1267 = vpop.f32.mrb[0].mxu0
      %1268 = vmatprep.mubr.bf16.mxu0 0
      %1269 = vmatmul.mubr.bf16.gmra.mrb[0].mxu0 %v1087
      %v1270 = vpop.f32.mrb[0].mxu0
      %v1271 = vadd.f32 0.0, %v1270
      %v1272 = vpop.f32.mrb[0].mxu0
      %v1273 = vpop.f32.mrb[0].mxu0
      %v1274 = vadd.f32 0.0, %v1273
      %v1275 = vpop.f32.mrb[0].mxu0
      %1276 = vmatprep.mubr.bf16.mxu0 0
      %1277 = vmatmul.mubr.bf16.gmra.mrb[0].mxu0 %v1088
      %v1278 = vpop.f32.mrb[0].mxu0
      %v1279 = vadd.f32 0.0, %v1278
      %v1280 = vpop.f32.mrb[0].mxu0
      %v1281 = vpop.f32.mrb[0].mxu0
      %v1282 = vadd.f32 0.0, %v1281
      %v1283 = vpop.f32.mrb[0].mxu0
      %1284 = vmatprep.mubr.bf16.mxu0 0
      %1285 = vmatmul.mubr.bf16.gmra.mrb[0].mxu0 %v1089
      %v1286 = vpop.f32.mrb[0].mxu0
      %v1287 = vadd.f32 0.0, %v1286
      %v1288 = vpop.f32.mrb[0].mxu0
      %v1289 = vpop.f32.mrb[0].mxu0
      %v1290 = vadd.f32 0.0, %v1289
      %v1291 = vpop.f32.mrb[0].mxu0
      %1292 = vmatprep.mubr.bf16.mxu0 0
      %1293 = vmatmul.mubr.bf16.gmra.mrb[0].mxu0 %v1090
      %v1294 = vpop.f32.mrb[0].mxu0
      %v1295 = vadd.f32 0.0, %v1294
      %v1296 = vpop.f32.mrb[0].mxu0
      %v1297 = vpop.f32.mrb[0].mxu0
      %v1298 = vadd.f32 0.0, %v1297
      %v1299 = vpop.f32.mrb[0].mxu0
      %1300 = vmatprep.mubr.bf16.mxu0 0
      %1301 = vmatmul.mubr.bf16.gmra.mrb[0].mxu0 %v1091
      %v1302 = vpop.f32.mrb[0].mxu0
      %v1303 = vadd.f32 0.0, %v1302
      %v1304 = vpop.f32.mrb[0].mxu0
      %v1305 = vpop.f32.mrb[0].mxu0
      %v1306 = vadd.f32 0.0, %v1305
      %v1307 = vpop.f32.mrb[0].mxu0
      %1308 = vmatprep.mubr.bf16.mxu0 0
      %1309 = vmatmul.mubr.bf16.gmra.mrb[0].mxu0 %v1092
      %v1310 = vpop.f32.mrb[0].mxu0
      %v1311 = vadd.f32 0.0, %v1310
      %v1312 = vpop.f32.mrb[0].mxu0
      %v1313 = vpop.f32.mrb[0].mxu0
      %v1314 = vadd.f32 0.0, %v1313
      %v1315 = vpop.f32.mrb[0].mxu0
      %1316 = vmatprep.mubr.bf16.mxu0 0
      %1317 = vmatmul.mubr.bf16.gmra.mrb[0].mxu0 %v1093
      %v1318 = vpop.f32.mrb[0].mxu0
      %v1319 = vadd.f32 0.0, %v1318
      %v1320 = vpop.f32.mrb[0].mxu0
      %v1321 = vpop.f32.mrb[0].mxu0
      %v1322 = vadd.f32 0.0, %v1321
      %v1323 = vpop.f32.mrb[0].mxu0
      %1324 = vmatprep.mubr.bf16.mxu0 0
      %1325 = vmatmul.mubr.bf16.gmra.mrb[0].mxu0 %v1094
      %v1326 = vpop.f32.mrb[0].mxu0
      %v1327 = vadd.f32 0.0, %v1326
      %v1328 = vpop.f32.mrb[0].mxu0
      %v1329 = vpop.f32.mrb[0].mxu0
      %v1330 = vadd.f32 0.0, %v1329
      %v1331 = vpop.f32.mrb[0].mxu0
      %1332 = vmatprep.mubr.bf16.mxu0 0
      %1333 = vmatmul.mubr.bf16.gmra.mrb[0].mxu0 %v1095
      %v1334 = vpop.f32.mrb[0].mxu0
      %v1335 = vadd.f32 0.0, %v1334
      %v1336 = vpop.f32.mrb[0].mxu0
      %v1337 = vpop.f32.mrb[0].mxu0
      %v1338 = vadd.f32 0.0, %v1337
      %v1339 = vpop.f32.mrb[0].mxu0
      %1340 = vmatprep.mubr.bf16.mxu0 0
      %1341 = vmatmul.mubr.bf16.gmra.mrb[0].mxu0 %v1096
      %v1342 = vpop.f32.mrb[0].mxu0
      %v1343 = vadd.f32 0.0, %v1342
      %v1344 = vpop.f32.mrb[0].mxu0
      %v1345 = vpop.f32.mrb[0].mxu0
      %v1346 = vadd.f32 0.0, %v1345
      %v1347 = vpop.f32.mrb[0].mxu0
      %1348 = vmatprep.mubr.bf16.mxu0 0
      %1349 = vmatmul.mubr.bf16.gmra.mrb[0].mxu0 %v1097
      %v1350 = vpop.f32.mrb[0].mxu0
      %v1351 = vadd.f32 0.0, %v1350
      %v1352 = vpop.f32.mrb[0].mxu0
      %v1353 = vpop.f32.mrb[0].mxu0
      %v1354 = vadd.f32 0.0, %v1353
      %v1355 = vpop.f32.mrb[0].mxu0
      %1356 = vmatprep.mubr.bf16.mxu0 0
      %1357 = vmatmul.mubr.bf16.gmra.mrb[0].mxu0 %v1098
      %v1358 = vpop.f32.mrb[0].mxu0
      %v1359 = vadd.f32 0.0, %v1358
      %v1360 = vpop.f32.mrb[0].mxu0
      %v1361 = vpop.f32.mrb[0].mxu0
      %v1362 = vpop.f32.mrb[0].mxu0
      %1363 = vdwg.mxu0
      %v1380 = vunpack.c.l.b16 %v1021
      %v1381 = vunpack.c.l.b16 %v1022
      %v1382 = vunpack.c.l.b16 %v1023
      %v1383 = vunpack.c.l.b16 %v1024
      %v1384 = vunpack.c.l.b16 %v1025
      %v1385 = vunpack.c.l.b16 %v1026
      %v1386 = vunpack.c.l.b16 %v1027
      %v1387 = vunpack.c.l.b16 %v1028
      %v1388 = vunpack.c.l.b16 %v1029
      %v1389 = vunpack.c.l.b16 %v1030
      %v1390 = vunpack.c.l.b16 %v1031
      %v1391 = vunpack.c.l.b16 %v1032
      %v1392 = vunpack.c.l.b16 %v1033
      %v1393 = vunpack.c.l.b16 %v1034
      %v1394 = vunpack.c.l.b16 %v1035
      %v1395 = vunpack.c.l.b16 %v1036
      %v1396 = vpack.c.b16 %v1381, %v1380
      %v1397 = vpack.c.b16 %v1383, %v1382
      %v1398 = vpack.c.b16 %v1385, %v1384
      %v1399 = vpack.c.b16 %v1387, %v1386
      %v1400 = vpack.c.b16 %v1389, %v1388
      %v1401 = vpack.c.b16 %v1391, %v1390
      %v1402 = vpack.c.b16 %v1393, %v1392
      %v1403 = vpack.c.b16 %v1395, %v1394
      %1412 = vmatprep.subr.bf16.mxu0 0
      %1413 = vmatpush1.bf16.msra.mxu0 %v1396
      %1414 = vmatprep.subr.bf16.mxu0 0
      %1415 = vmatpush1.bf16.msra.mxu0 %v1397
      %1416 = vmatprep.subr.bf16.mxu0 0
      %1417 = vmatpush1.bf16.msra.mxu0 %v1398
      %1418 = vmatprep.subr.bf16.mxu0 0
      %1419 = vmatpush1.bf16.msra.mxu0 %v1399
      %1420 = vmatprep.subr.bf16.mxu0 0
      %1421 = vmatpush1.bf16.msra.mxu0 %v1400
      %1422 = vmatprep.subr.bf16.mxu0 0
      %1423 = vmatpush1.bf16.msra.mxu0 %v1401
      %1424 = vmatprep.subr.bf16.mxu0 0
      %1425 = vmatpush1.bf16.msra.mxu0 %v1402
      %1426 = vmatprep.subr.bf16.mxu0 0
      %1427 = vmatpush1.bf16.msra.mxu0 %v1403
      %1428 = vmatprep.subr.bf16.mxu0 0
      %1429 = vmatpush1.bf16.msra.mxu0 0
      %1430 = vmatprep.subr.bf16.mxu0 0
      %1431 = vmatpush1.bf16.msra.mxu0 0
      %1432 = vmatprep.subr.bf16.mxu0 0
      %1433 = vmatpush1.bf16.msra.mxu0 0
      %1434 = vmatprep.subr.bf16.mxu0 0
      %1435 = vmatpush1.bf16.msra.mxu0 0
      %1436 = vmatprep.subr.bf16.mxu0 0
      %1437 = vmatpush1.bf16.msra.mxu0 0
      %1438 = vmatprep.subr.bf16.mxu0 0
      %1439 = vmatpush1.bf16.msra.mxu0 0
      %1440 = vmatprep.subr.bf16.mxu0 0
      %1441 = vmatpush1.bf16.msra.mxu0 0
      %1442 = vmatprep.subr.bf16.mxu0 0
      %1443 = vmatpush1.bf16.msra.mxu0 0
      %1444 = vmatprep.mubr.bf16.mxu0 0
      %1445 = vmatmul.mubr.bf16.gmra.mrb[0].mxu0 %v1000
      %v1446 = vpop.f32.mrb[0].mxu0
      %v1447 = vadd.f32 %v1199, %v1446
      %v1448 = vpop.f32.mrb[0].mxu0
      %v1449 = vpop.f32.mrb[0].mxu0
      %v1450 = vadd.f32 %v1202, %v1449
      %v1451 = vpop.f32.mrb[0].mxu0
      %1452 = vmatprep.mubr.bf16.mxu0 0
      %1453 = vmatmul.mubr.bf16.gmra.mrb[0].mxu0 %v1001
      %v1454 = vpop.f32.mrb[0].mxu0
      %v1455 = vadd.f32 %v1207, %v1454
      %v1456 = vpop.f32.mrb[0].mxu0
      %v1457 = vpop.f32.mrb[0].mxu0
      %v1458 = vadd.f32 %v1210, %v1457
      %v1459 = vpop.f32.mrb[0].mxu0
      %1460 = vmatprep.mubr.bf16.mxu0 0
      %1461 = vmatmul.mubr.bf16.gmra.mrb[0].mxu0 %v1002
      %v1462 = vpop.f32.mrb[0].mxu0
      %v1463 = vadd.f32 %v1215, %v1462
      %v1464 = vpop.f32.mrb[0].mxu0
      %v1465 = vpop.f32.mrb[0].mxu0
      %v1466 = vadd.f32 %v1218, %v1465
      %v1467 = vpop.f32.mrb[0].mxu0
      %1468 = vmatprep.mubr.bf16.mxu0 0
      %1469 = vmatmul.mubr.bf16.gmra.mrb[0].mxu0 %v1003
      %v1470 = vpop.f32.mrb[0].mxu0
      %v1471 = vadd.f32 %v1223, %v1470
      %v1472 = vpop.f32.mrb[0].mxu0
      %v1473 = vpop.f32.mrb[0].mxu0
      %v1474 = vadd.f32 %v1226, %v1473
      %v1475 = vpop.f32.mrb[0].mxu0
      %1476 = vmatprep.mubr.bf16.mxu0 0
      %1477 = vmatmul.mubr.bf16.gmra.mrb[0].mxu0 %v1004
      %v1478 = vpop.f32.mrb[0].mxu0
      %v1479 = vadd.f32 %v1231, %v1478
      %v1480 = vpop.f32.mrb[0].mxu0
      %v1481 = vpop.f32.mrb[0].mxu0
      %v1482 = vadd.f32 %v1234, %v1481
      %v1483 = vpop.f32.mrb[0].mxu0
      %1484 = vmatprep.mubr.bf16.mxu0 0
      %1485 = vmatmul.mubr.bf16.gmra.mrb[0].mxu0 %v1005
      %v1486 = vpop.f32.mrb[0].mxu0
      %v1487 = vadd.f32 %v1239, %v1486
      %v1488 = vpop.f32.mrb[0].mxu0
      %v1489 = vpop.f32.mrb[0].mxu0
      %v1490 = vadd.f32 %v1242, %v1489
      %v1491 = vpop.f32.mrb[0].mxu0
      %1492 = vmatprep.mubr.bf16.mxu0 0
      %1493 = vmatmul.mubr.bf16.gmra.mrb[0].mxu0 %v1006
      %v1494 = vpop.f32.mrb[0].mxu0
      %v1495 = vadd.f32 %v1247, %v1494
      %v1496 = vpop.f32.mrb[0].mxu0
      %v1497 = vpop.f32.mrb[0].mxu0
      %v1498 = vadd.f32 %v1250, %v1497
      %v1499 = vpop.f32.mrb[0].mxu0
      %1500 = vmatprep.mubr.bf16.mxu0 0
      %1501 = vmatmul.mubr.bf16.gmra.mrb[0].mxu0 %v1007
      %v1502 = vpop.f32.mrb[0].mxu0
      %v1503 = vadd.f32 %v1255, %v1502
      %v1504 = vpop.f32.mrb[0].mxu0
      %v1505 = vpop.f32.mrb[0].mxu0
      %v1506 = vadd.f32 %v1258, %v1505
      %v1507 = vpop.f32.mrb[0].mxu0
      %1508 = vmatprep.mubr.bf16.mxu0 0
      %1509 = vmatmul.mubr.bf16.gmra.mrb[0].mxu0 %v1008
      %v1510 = vpop.f32.mrb[0].mxu0
      %v1511 = vadd.f32 %v1263, %v1510
      %v1512 = vpop.f32.mrb[0].mxu0
      %v1513 = vpop.f32.mrb[0].mxu0
      %v1514 = vadd.f32 %v1266, %v1513
      %v1515 = vpop.f32.mrb[0].mxu0
      %1516 = vmatprep.mubr.bf16.mxu0 0
      %1517 = vmatmul.mubr.bf16.gmra.mrb[0].mxu0 %v1009
      %v1518 = vpop.f32.mrb[0].mxu0
      %v1519 = vadd.f32 %v1271, %v1518
      %v1520 = vpop.f32.mrb[0].mxu0
      %v1521 = vpop.f32.mrb[0].mxu0
      %v1522 = vadd.f32 %v1274, %v1521
      %v1523 = vpop.f32.mrb[0].mxu0
      %1524 = vmatprep.mubr.bf16.mxu0 0
      %1525 = vmatmul.mubr.bf16.gmra.mrb[0].mxu0 %v1010
      %v1526 = vpop.f32.mrb[0].mxu0
      %v1527 = vadd.f32 %v1279, %v1526
      %v1528 = vpop.f32.mrb[0].mxu0
      %v1529 = vpop.f32.mrb[0].mxu0
      %v1530 = vadd.f32 %v1282, %v1529
      %v1531 = vpop.f32.mrb[0].mxu0
      %1532 = vmatprep.mubr.bf16.mxu0 0
      %1533 = vmatmul.mubr.bf16.gmra.mrb[0].mxu0 %v1011
      %v1534 = vpop.f32.mrb[0].mxu0
      %v1535 = vadd.f32 %v1287, %v1534
      %v1536 = vpop.f32.mrb[0].mxu0
      %v1537 = vpop.f32.mrb[0].mxu0
      %v1538 = vadd.f32 %v1290, %v1537
      %v1539 = vpop.f32.mrb[0].mxu0
      %1540 = vmatprep.mubr.bf16.mxu0 0
      %1541 = vmatmul.mubr.bf16.gmra.mrb[0].mxu0 %v1012
      %v1542 = vpop.f32.mrb[0].mxu0
      %v1543 = vadd.f32 %v1295, %v1542
      %v1544 = vpop.f32.mrb[0].mxu0
      %v1545 = vpop.f32.mrb[0].mxu0
      %v1546 = vadd.f32 %v1298, %v1545
      %v1547 = vpop.f32.mrb[0].mxu0
      %1548 = vmatprep.mubr.bf16.mxu0 0
      %1549 = vmatmul.mubr.bf16.gmra.mrb[0].mxu0 %v1013
      %v1550 = vpop.f32.mrb[0].mxu0
      %v1551 = vadd.f32 %v1303, %v1550
      %v1552 = vpop.f32.mrb[0].mxu0
      %v1553 = vpop.f32.mrb[0].mxu0
      %v1554 = vadd.f32 %v1306, %v1553
      %v1555 = vpop.f32.mrb[0].mxu0
      %1556 = vmatprep.mubr.bf16.mxu0 0
      %1557 = vmatmul.mubr.bf16.gmra.mrb[0].mxu0 %v1014
      %v1558 = vpop.f32.mrb[0].mxu0
      %v1559 = vadd.f32 %v1311, %v1558
      %v1560 = vpop.f32.mrb[0].mxu0
      %v1561 = vpop.f32.mrb[0].mxu0
      %v1562 = vadd.f32 %v1314, %v1561
      %v1563 = vpop.f32.mrb[0].mxu0
      %1564 = vmatprep.mubr.bf16.mxu0 0
      %1565 = vmatmul.mubr.bf16.gmra.mrb[0].mxu0 %v1015
      %v1566 = vpop.f32.mrb[0].mxu0
      %v1567 = vadd.f32 %v1319, %v1566
      %v1568 = vpop.f32.mrb[0].mxu0
      %v1569 = vpop.f32.mrb[0].mxu0
      %v1570 = vadd.f32 %v1322, %v1569
      %v1571 = vpop.f32.mrb[0].mxu0
      %1572 = vmatprep.mubr.bf16.mxu0 0
      %1573 = vmatmul.mubr.bf16.gmra.mrb[0].mxu0 %v1016
      %v1574 = vpop.f32.mrb[0].mxu0
      %v1575 = vadd.f32 %v1327, %v1574
      %v1576 = vpop.f32.mrb[0].mxu0
      %v1577 = vpop.f32.mrb[0].mxu0
      %v1578 = vadd.f32 %v1330, %v1577
      %v1579 = vpop.f32.mrb[0].mxu0
      %1580 = vmatprep.mubr.bf16.mxu0 0
      %1581 = vmatmul.mubr.bf16.gmra.mrb[0].mxu0 %v1017
      %v1582 = vpop.f32.mrb[0].mxu0
      %v1583 = vadd.f32 %v1335, %v1582
      %v1584 = vpop.f32.mrb[0].mxu0
      %v1585 = vpop.f32.mrb[0].mxu0
      %v1586 = vadd.f32 %v1338, %v1585
      %v1587 = vpop.f32.mrb[0].mxu0
      %1588 = vmatprep.mubr.bf16.mxu0 0
      %1589 = vmatmul.mubr.bf16.gmra.mrb[0].mxu0 %v1018
      %v1590 = vpop.f32.mrb[0].mxu0
      %v1591 = vadd.f32 %v1343, %v1590
      %v1592 = vpop.f32.mrb[0].mxu0
      %v1593 = vpop.f32.mrb[0].mxu0
      %v1594 = vadd.f32 %v1346, %v1593
      %v1595 = vpop.f32.mrb[0].mxu0
      %1596 = vmatprep.mubr.bf16.mxu0 0
      %1597 = vmatmul.mubr.bf16.gmra.mrb[0].mxu0 %v1019
      %v1598 = vpop.f32.mrb[0].mxu0
      %v1599 = vadd.f32 %v1351, %v1598
      %v1600 = vpop.f32.mrb[0].mxu0
      %v1601 = vpop.f32.mrb[0].mxu0
      %v1602 = vadd.f32 %v1354, %v1601
      %v1603 = vpop.f32.mrb[0].mxu0
      %1604 = vmatprep.mubr.bf16.mxu0 0
      %1605 = vmatmul.mubr.bf16.gmra.mrb[0].mxu0 %v1020
      %v1606 = vpop.f32.mrb[0].mxu0
      %v1607 = vadd.f32 %v1359, %v1606
      %v1608 = vpop.f32.mrb[0].mxu0
      %v1609 = vpop.f32.mrb[0].mxu0
      %v1610 = vpop.f32.mrb[0].mxu0
      %1611 = vdwg.mxu0
      %v1612 = vld [vmem:[#allocation2 + $0x7] sm:$0xff]
      %v1613 = vld [vmem:[#allocation2 + $0xf] sm:$0xff]
      %v1614 = vld [vmem:[#allocation2 + $0x17] sm:$0xff]
      %v1615 = vld [vmem:[#allocation2 + $0x1f] sm:$0xff]
      %v1616 = vld [vmem:[#allocation2 + $0x27] sm:$0xff]
      %v1617 = vld [vmem:[#allocation2 + $0x2f] sm:$0xff]
      %v1618 = vld [vmem:[#allocation2 + $0x37] sm:$0xff]
      %v1619 = vld [vmem:[#allocation2 + $0x3f] sm:$0xff]
      %v1620 = vld [vmem:[#allocation2 + $0x47] sm:$0xff]
      %v1621 = vld [vmem:[#allocation2 + $0x4f] sm:$0xff]
      %v1622 = vld [vmem:[#allocation2 + $0x57] sm:$0xff]
      %v1623 = vld [vmem:[#allocation2 + $0x5f] sm:$0xff]
      %v1624 = vld [vmem:[#allocation2 + $0x67] sm:$0xff]
      %v1625 = vld [vmem:[#allocation2 + $0x6f] sm:$0xff]
      %v1626 = vld [vmem:[#allocation2 + $0x77] sm:$0xff]
      %v1627 = vld [vmem:[#allocation2 + $0x7f] sm:$0xff]
      %v1628 = vld [vmem:[#allocation2 + $0x87] sm:$0xff]
      %v1629 = vld [vmem:[#allocation2 + $0x8f] sm:$0xff]
      %v1630 = vld [vmem:[#allocation2 + $0x97] sm:$0xff]
      %v1631 = vld [vmem:[#allocation2 + $0x9f] sm:$0xff]
      %v1632 = vld [vmem:[#allocation2 + $0xa7] sm:$0xff]
      %v1633 = vld [vmem:[#allocation2 + $0xaf] sm:$0xff]
      %v1634 = vld [vmem:[#allocation2 + $0xb7] sm:$0xff]
      %v1635 = vld [vmem:[#allocation2 + $0xbf] sm:$0xff]
      %v1636 = vld [vmem:[#allocation2 + $0xc7] sm:$0xff]
      %v1637 = vld [vmem:[#allocation2 + $0xcf] sm:$0xff]
      %v1638 = vld [vmem:[#allocation2 + $0xd7] sm:$0xff]
      %v1639 = vld [vmem:[#allocation2 + $0xdf] sm:$0xff]
      %v1640 = vld [vmem:[#allocation2 + $0xe7] sm:$0xff]
      %v1641 = vld [vmem:[#allocation2 + $0xef] sm:$0xff]
      %v1642 = vld [vmem:[#allocation2 + $0xf7] sm:$0xff]
      %v1643 = vld [vmem:[#allocation2 + $0xff] sm:$0xff]
      %v1644 = vld [vmem:[#allocation2 + $0x107] sm:$0xff]
      %v1645 = vld [vmem:[#allocation2 + $0x10f] sm:$0xff]
      %v1646 = vld [vmem:[#allocation2 + $0x117] sm:$0xff]
      %v1647 = vld [vmem:[#allocation2 + $0x11f] sm:$0xff]
      %v1648 = vld [vmem:[#allocation2 + $0x127] sm:$0xff]
      %v1649 = vld [vmem:[#allocation2 + $0x12f] sm:$0xff]
      %v1650 = vld [vmem:[#allocation2 + $0x137] sm:$0xff]
      %v1651 = vld [vmem:[#allocation2 + $0x13f] sm:$0xff]
      %v1652 = vld [vmem:[#allocation2 + $0x147] sm:$0xf]
      %v1653 = vpack.c.bf16 %v1613, %v1612
      %v1654 = vpack.c.bf16 %v1615, %v1614
      %v1655 = vpack.c.bf16 %v1617, %v1616
      %v1656 = vpack.c.bf16 %v1619, %v1618
      %v1657 = vpack.c.bf16 %v1621, %v1620
      %v1658 = vpack.c.bf16 %v1623, %v1622
      %v1659 = vpack.c.bf16 %v1625, %v1624
      %v1660 = vpack.c.bf16 %v1627, %v1626
      %v1661 = vpack.c.bf16 %v1629, %v1628
      %v1662 = vpack.c.bf16 %v1631, %v1630
      %v1663 = vpack.c.bf16 %v1633, %v1632
      %v1664 = vpack.c.bf16 %v1635, %v1634
      %v1665 = vpack.c.bf16 %v1637, %v1636
      %v1666 = vpack.c.bf16 %v1639, %v1638
      %v1667 = vpack.c.bf16 %v1641, %v1640
      %v1668 = vpack.c.bf16 %v1643, %v1642
      %v1669 = vpack.c.bf16 %v1645, %v1644
      %v1670 = vpack.c.bf16 %v1647, %v1646
      %v1671 = vpack.c.bf16 %v1649, %v1648
      %v1672 = vpack.c.bf16 %v1651, %v1650
      %v1673 = vpack.c.bf16 %v1652, %v1652
      %s1674 = scalar_lea.vmem %s4, 128
      %v1675 = vld [vmem:[%s1674] sm:$0xf]
      %v1676 = vld [vmem:[%s1674 + $0x4] sm:$0xf]
      %v1677 = vld [vmem:[%s1674 + $0x8] sm:$0xf]
      %v1678 = vld [vmem:[%s1674 + $0xc] sm:$0xf]
      %v1679 = vld [vmem:[%s1674 + $0x10] sm:$0xf]
      %v1680 = vld [vmem:[%s1674 + $0x14] sm:$0xf]
      %v1681 = vld [vmem:[%s1674 + $0x18] sm:$0xf]
      %v1682 = vld [vmem:[%s1674 + $0x1c] sm:$0xf]
      %v1683 = vld [vmem:[%s1674 + $0x20] sm:$0xf]
      %v1684 = vld [vmem:[%s1674 + $0x24] sm:$0xf]
      %v1685 = vld [vmem:[%s1674 + $0x28] sm:$0xf]
      %v1686 = vld [vmem:[%s1674 + $0x2c] sm:$0xf]
      %v1687 = vld [vmem:[%s1674 + $0x30] sm:$0xf]
      %v1688 = vld [vmem:[%s1674 + $0x34] sm:$0xf]
      %v1689 = vld [vmem:[%s1674 + $0x38] sm:$0xf]
      %v1690 = vld [vmem:[%s1674 + $0x3c] sm:$0xf]
      %v1707 = vunpack.c.l.b16 %v1675
      %v1708 = vunpack.c.l.b16 %v1676
      %v1709 = vunpack.c.l.b16 %v1677
      %v1710 = vunpack.c.l.b16 %v1678
      %v1711 = vunpack.c.l.b16 %v1679
      %v1712 = vunpack.c.l.b16 %v1680
      %v1713 = vunpack.c.l.b16 %v1681
      %v1714 = vunpack.c.l.b16 %v1682
      %v1715 = vunpack.c.l.b16 %v1683
      %v1716 = vunpack.c.l.b16 %v1684
      %v1717 = vunpack.c.l.b16 %v1685
      %v1718 = vunpack.c.l.b16 %v1686
      %v1719 = vunpack.c.l.b16 %v1687
      %v1720 = vunpack.c.l.b16 %v1688
      %v1721 = vunpack.c.l.b16 %v1689
      %v1722 = vunpack.c.l.b16 %v1690
      %v1723 = vpack.c.b16 %v1708, %v1707
      %v1724 = vpack.c.b16 %v1710, %v1709
      %v1725 = vpack.c.b16 %v1712, %v1711
      %v1726 = vpack.c.b16 %v1714, %v1713
      %v1727 = vpack.c.b16 %v1716, %v1715
      %v1728 = vpack.c.b16 %v1718, %v1717
      %v1729 = vpack.c.b16 %v1720, %v1719
      %v1730 = vpack.c.b16 %v1722, %v1721
      %1739 = vmatprep.subr.bf16.mxu0 0
      %1740 = vmatpush1.bf16.msra.mxu0 %v1723
      %1741 = vmatprep.subr.bf16.mxu0 0
      %1742 = vmatpush1.bf16.msra.mxu0 %v1724
      %1743 = vmatprep.subr.bf16.mxu0 0
      %1744 = vmatpush1.bf16.msra.mxu0 %v1725
      %1745 = vmatprep.subr.bf16.mxu0 0
      %1746 = vmatpush1.bf16.msra.mxu0 %v1726
      %1747 = vmatprep.subr.bf16.mxu0 0
      %1748 = vmatpush1.bf16.msra.mxu0 %v1727
      %1749 = vmatprep.subr.bf16.mxu0 0
      %1750 = vmatpush1.bf16.msra.mxu0 %v1728
      %1751 = vmatprep.subr.bf16.mxu0 0
      %1752 = vmatpush1.bf16.msra.mxu0 %v1729
      %1753 = vmatprep.subr.bf16.mxu0 0
      %1754 = vmatpush1.bf16.msra.mxu0 %v1730
      %1755 = vmatprep.subr.bf16.mxu0 0
      %1756 = vmatpush1.bf16.msra.mxu0 0
      %1757 = vmatprep.subr.bf16.mxu0 0
      %1758 = vmatpush1.bf16.msra.mxu0 0
      %1759 = vmatprep.subr.bf16.mxu0 0
      %1760 = vmatpush1.bf16.msra.mxu0 0
      %1761 = vmatprep.subr.bf16.mxu0 0
      %1762 = vmatpush1.bf16.msra.mxu0 0
      %1763 = vmatprep.subr.bf16.mxu0 0
      %1764 = vmatpush1.bf16.msra.mxu0 0
      %1765 = vmatprep.subr.bf16.mxu0 0
      %1766 = vmatpush1.bf16.msra.mxu0 0
      %1767 = vmatprep.subr.bf16.mxu0 0
      %1768 = vmatpush1.bf16.msra.mxu0 0
      %1769 = vmatprep.subr.bf16.mxu0 0
      %1770 = vmatpush1.bf16.msra.mxu0 0
      %1771 = vmatprep.mubr.bf16.mxu0 0
      %1772 = vmatmul.mubr.bf16.gmra.mrb[0].mxu0 %v1653
      %v1773 = vpop.f32.mrb[0].mxu0
      %v1774 = vadd.f32 0.0, %v1773
      %v1775 = vpop.f32.mrb[0].mxu0
      %v1776 = vpop.f32.mrb[0].mxu0
      %v1777 = vadd.f32 0.0, %v1776
      %v1778 = vpop.f32.mrb[0].mxu0
      %1779 = vmatprep.mubr.bf16.mxu0 0
      %1780 = vmatmul.mubr.bf16.gmra.mrb[0].mxu0 %v1654
      %v1781 = vpop.f32.mrb[0].mxu0
      %v1782 = vadd.f32 0.0, %v1781
      %v1783 = vpop.f32.mrb[0].mxu0
      %v1784 = vpop.f32.mrb[0].mxu0
      %v1785 = vadd.f32 0.0, %v1784
      %v1786 = vpop.f32.mrb[0].mxu0
      %1787 = vmatprep.mubr.bf16.mxu0 0
      %1788 = vmatmul.mubr.bf16.gmra.mrb[0].mxu0 %v1655
      %v1789 = vpop.f32.mrb[0].mxu0
      %v1790 = vadd.f32 0.0, %v1789
      %v1791 = vpop.f32.mrb[0].mxu0
      %v1792 = vpop.f32.mrb[0].mxu0
      %v1793 = vadd.f32 0.0, %v1792
      %v1794 = vpop.f32.mrb[0].mxu0
      %1795 = vmatprep.mubr.bf16.mxu0 0
      %1796 = vmatmul.mubr.bf16.gmra.mrb[0].mxu0 %v1656
      %v1797 = vpop.f32.mrb[0].mxu0
      %v1798 = vadd.f32 0.0, %v1797
      %v1799 = vpop.f32.mrb[0].mxu0
      %v1800 = vpop.f32.mrb[0].mxu0
      %v1801 = vadd.f32 0.0, %v1800
      %v1802 = vpop.f32.mrb[0].mxu0
      %1803 = vmatprep.mubr.bf16.mxu0 0
      %1804 = vmatmul.mubr.bf16.gmra.mrb[0].mxu0 %v1657
      %v1805 = vpop.f32.mrb[0].mxu0
      %v1806 = vadd.f32 0.0, %v1805
      %v1807 = vpop.f32.mrb[0].mxu0
      %v1808 = vpop.f32.mrb[0].mxu0
      %v1809 = vadd.f32 0.0, %v1808
      %v1810 = vpop.f32.mrb[0].mxu0
      %1811 = vmatprep.mubr.bf16.mxu0 0
      %1812 = vmatmul.mubr.bf16.gmra.mrb[0].mxu0 %v1658
      %v1813 = vpop.f32.mrb[0].mxu0
      %v1814 = vadd.f32 0.0, %v1813
      %v1815 = vpop.f32.mrb[0].mxu0
      %v1816 = vpop.f32.mrb[0].mxu0
      %v1817 = vadd.f32 0.0, %v1816
      %v1818 = vpop.f32.mrb[0].mxu0
      %1819 = vmatprep.mubr.bf16.mxu0 0
      %1820 = vmatmul.mubr.bf16.gmra.mrb[0].mxu0 %v1659
      %v1821 = vpop.f32.mrb[0].mxu0
      %v1822 = vadd.f32 0.0, %v1821
      %v1823 = vpop.f32.mrb[0].mxu0
      %v1824 = vpop.f32.mrb[0].mxu0
      %v1825 = vadd.f32 0.0, %v1824
      %v1826 = vpop.f32.mrb[0].mxu0
      %1827 = vmatprep.mubr.bf16.mxu0 0
      %1828 = vmatmul.mubr.bf16.gmra.mrb[0].mxu0 %v1660
      %v1829 = vpop.f32.mrb[0].mxu0
      %v1830 = vadd.f32 0.0, %v1829
      %v1831 = vpop.f32.mrb[0].mxu0
      %v1832 = vpop.f32.mrb[0].mxu0
      %v1833 = vadd.f32 0.0, %v1832
      %v1834 = vpop.f32.mrb[0].mxu0
      %1835 = vmatprep.mubr.bf16.mxu0 0
      %1836 = vmatmul.mubr.bf16.gmra.mrb[0].mxu0 %v1661
      %v1837 = vpop.f32.mrb[0].mxu0
      %v1838 = vadd.f32 0.0, %v1837
      %v1839 = vpop.f32.mrb[0].mxu0
      %v1840 = vpop.f32.mrb[0].mxu0
      %v1841 = vadd.f32 0.0, %v1840
      %v1842 = vpop.f32.mrb[0].mxu0
      %1843 = vmatprep.mubr.bf16.mxu0 0
      %1844 = vmatmul.mubr.bf16.gmra.mrb[0].mxu0 %v1662
      %v1845 = vpop.f32.mrb[0].mxu0
      %v1846 = vadd.f32 0.0, %v1845
      %v1847 = vpop.f32.mrb[0].mxu0
      %v1848 = vpop.f32.mrb[0].mxu0
      %v1849 = vadd.f32 0.0, %v1848
      %v1850 = vpop.f32.mrb[0].mxu0
      %1851 = vmatprep.mubr.bf16.mxu0 0
      %1852 = vmatmul.mubr.bf16.gmra.mrb[0].mxu0 %v1663
      %v1853 = vpop.f32.mrb[0].mxu0
      %v1854 = vadd.f32 0.0, %v1853
      %v1855 = vpop.f32.mrb[0].mxu0
      %v1856 = vpop.f32.mrb[0].mxu0
      %v1857 = vadd.f32 0.0, %v1856
      %v1858 = vpop.f32.mrb[0].mxu0
      %1859 = vmatprep.mubr.bf16.mxu0 0
      %1860 = vmatmul.mubr.bf16.gmra.mrb[0].mxu0 %v1664
      %v1861 = vpop.f32.mrb[0].mxu0
      %v1862 = vadd.f32 0.0, %v1861
      %v1863 = vpop.f32.mrb[0].mxu0
      %v1864 = vpop.f32.mrb[0].mxu0
      %v1865 = vadd.f32 0.0, %v1864
      %v1866 = vpop.f32.mrb[0].mxu0
      %1867 = vmatprep.mubr.bf16.mxu0 0
      %1868 = vmatmul.mubr.bf16.gmra.mrb[0].mxu0 %v1665
      %v1869 = vpop.f32.mrb[0].mxu0
      %v1870 = vadd.f32 0.0, %v1869
      %v1871 = vpop.f32.mrb[0].mxu0
      %v1872 = vpop.f32.mrb[0].mxu0
      %v1873 = vadd.f32 0.0, %v1872
      %v1874 = vpop.f32.mrb[0].mxu0
      %1875 = vmatprep.mubr.bf16.mxu0 0
      %1876 = vmatmul.mubr.bf16.gmra.mrb[0].mxu0 %v1666
      %v1877 = vpop.f32.mrb[0].mxu0
      %v1878 = vadd.f32 0.0, %v1877
      %v1879 = vpop.f32.mrb[0].mxu0
      %v1880 = vpop.f32.mrb[0].mxu0
      %v1881 = vadd.f32 0.0, %v1880
      %v1882 = vpop.f32.mrb[0].mxu0
      %1883 = vmatprep.mubr.bf16.mxu0 0
      %1884 = vmatmul.mubr.bf16.gmra.mrb[0].mxu0 %v1667
      %v1885 = vpop.f32.mrb[0].mxu0
      %v1886 = vadd.f32 0.0, %v1885
      %v1887 = vpop.f32.mrb[0].mxu0
      %v1888 = vpop.f32.mrb[0].mxu0
      %v1889 = vadd.f32 0.0, %v1888
      %v1890 = vpop.f32.mrb[0].mxu0
      %1891 = vmatprep.mubr.bf16.mxu0 0
      %1892 = vmatmul.mubr.bf16.gmra.mrb[0].mxu0 %v1668
      %v1893 = vpop.f32.mrb[0].mxu0
      %v1894 = vadd.f32 0.0, %v1893
      %v1895 = vpop.f32.mrb[0].mxu0
      %v1896 = vpop.f32.mrb[0].mxu0
      %v1897 = vadd.f32 0.0, %v1896
      %v1898 = vpop.f32.mrb[0].mxu0
      %1899 = vmatprep.mubr.bf16.mxu0 0
      %1900 = vmatmul.mubr.bf16.gmra.mrb[0].mxu0 %v1669
      %v1901 = vpop.f32.mrb[0].mxu0
      %v1902 = vadd.f32 0.0, %v1901
      %v1903 = vpop.f32.mrb[0].mxu0
      %v1904 = vpop.f32.mrb[0].mxu0
      %v1905 = vadd.f32 0.0, %v1904
      %v1906 = vpop.f32.mrb[0].mxu0
      %1907 = vmatprep.mubr.bf16.mxu0 0
      %1908 = vmatmul.mubr.bf16.gmra.mrb[0].mxu0 %v1670
      %v1909 = vpop.f32.mrb[0].mxu0
      %v1910 = vadd.f32 0.0, %v1909
      %v1911 = vpop.f32.mrb[0].mxu0
      %v1912 = vpop.f32.mrb[0].mxu0
      %v1913 = vadd.f32 0.0, %v1912
      %v1914 = vpop.f32.mrb[0].mxu0
      %1915 = vmatprep.mubr.bf16.mxu0 0
      %1916 = vmatmul.mubr.bf16.gmra.mrb[0].mxu0 %v1671
      %v1917 = vpop.f32.mrb[0].mxu0
      %v1918 = vadd.f32 0.0, %v1917
      %v1919 = vpop.f32.mrb[0].mxu0
      %v1920 = vpop.f32.mrb[0].mxu0
      %v1921 = vadd.f32 0.0, %v1920
      %v1922 = vpop.f32.mrb[0].mxu0
      %1923 = vmatprep.mubr.bf16.mxu0 0
      %1924 = vmatmul.mubr.bf16.gmra.mrb[0].mxu0 %v1672
      %v1925 = vpop.f32.mrb[0].mxu0
      %v1926 = vadd.f32 0.0, %v1925
      %v1927 = vpop.f32.mrb[0].mxu0
      %v1928 = vpop.f32.mrb[0].mxu0
      %v1929 = vadd.f32 0.0, %v1928
      %v1930 = vpop.f32.mrb[0].mxu0
      %1931 = vmatprep.mubr.bf16.mxu0 0
      %1932 = vmatmul.mubr.bf16.gmra.mrb[0].mxu0 %v1673
      %v1933 = vpop.f32.mrb[0].mxu0
      %v1934 = vadd.f32 0.0, %v1933
      %v1935 = vpop.f32.mrb[0].mxu0
      %v1936 = vpop.f32.mrb[0].mxu0
      %v1937 = vpop.f32.mrb[0].mxu0
      %1938 = vdwg.mxu0
      %v1939 = vadd.f32 %v1447, %v1774
      %v1940 = vadd.f32 %v1450, %v1777
      %v1941 = vadd.f32 %v1455, %v1782
      %v1942 = vadd.f32 %v1458, %v1785
      %v1943 = vadd.f32 %v1463, %v1790
      %v1944 = vadd.f32 %v1466, %v1793
      %v1945 = vadd.f32 %v1471, %v1798
      %v1946 = vadd.f32 %v1474, %v1801
      %v1947 = vadd.f32 %v1479, %v1806
      %v1948 = vadd.f32 %v1482, %v1809
      %v1949 = vadd.f32 %v1487, %v1814
      %v1950 = vadd.f32 %v1490, %v1817
      %v1951 = vadd.f32 %v1495, %v1822
      %v1952 = vadd.f32 %v1498, %v1825
      %v1953 = vadd.f32 %v1503, %v1830
      %v1954 = vadd.f32 %v1506, %v1833
      %v1955 = vadd.f32 %v1511, %v1838
      %v1956 = vadd.f32 %v1514, %v1841
      %v1957 = vadd.f32 %v1519, %v1846
      %v1958 = vadd.f32 %v1522, %v1849
      %v1959 = vadd.f32 %v1527, %v1854
      %v1960 = vadd.f32 %v1530, %v1857
      %v1961 = vadd.f32 %v1535, %v1862
      %v1962 = vadd.f32 %v1538, %v1865
      %v1963 = vadd.f32 %v1543, %v1870
      %v1964 = vadd.f32 %v1546, %v1873
      %v1965 = vadd.f32 %v1551, %v1878
      %v1966 = vadd.f32 %v1554, %v1881
      %v1967 = vadd.f32 %v1559, %v1886
      %v1968 = vadd.f32 %v1562, %v1889
      %v1969 = vadd.f32 %v1567, %v1894
      %v1970 = vadd.f32 %v1570, %v1897
      %v1971 = vadd.f32 %v1575, %v1902
      %v1972 = vadd.f32 %v1578, %v1905
      %v1973 = vadd.f32 %v1583, %v1910
      %v1974 = vadd.f32 %v1586, %v1913
      %v1975 = vadd.f32 %v1591, %v1918
      %v1976 = vadd.f32 %v1594, %v1921
      %v1977 = vadd.f32 %v1599, %v1926
      %v1978 = vadd.f32 %v1602, %v1929
      %v1979 = vadd.f32 %v1607, %v1934
      %v1980 = vld [vmem:[#allocation2 + $0x17] sm:$0xff]
      %v1981 = vld [vmem:[#allocation2 + $0x1f] sm:$0xff]
      %v1982 = vld [vmem:[#allocation2 + $0x27] sm:$0xff]
      %v1983 = vld [vmem:[#allocation2 + $0x2f] sm:$0xff]
      %v1984 = vld [vmem:[#allocation2 + $0x37] sm:$0xff]
      %v1985 = vld [vmem:[#allocation2 + $0x3f] sm:$0xff]
      %v1986 = vld [vmem:[#allocation2 + $0x47] sm:$0xff]
      %v1987 = vld [vmem:[#allocation2 + $0x4f] sm:$0xff]
      %v1988 = vld [vmem:[#allocation2 + $0x57] sm:$0xff]
      %v1989 = vld [vmem:[#allocation2 + $0x5f] sm:$0xff]
      %v1990 = vld [vmem:[#allocation2 + $0x67] sm:$0xff]
      %v1991 = vld [vmem:[#allocation2 + $0x6f] sm:$0xff]
      %v1992 = vld [vmem:[#allocation2 + $0x77] sm:$0xff]
      %v1993 = vld [vmem:[#allocation2 + $0x7f] sm:$0xff]
      %v1994 = vld [vmem:[#allocation2 + $0x87] sm:$0xff]
      %v1995 = vld [vmem:[#allocation2 + $0x8f] sm:$0xff]
      %v1996 = vld [vmem:[#allocation2 + $0x97] sm:$0xff]
      %v1997 = vld [vmem:[#allocation2 + $0x9f] sm:$0xff]
      %v1998 = vld [vmem:[#allocation2 + $0xa7] sm:$0xff]
      %v1999 = vld [vmem:[#allocation2 + $0xaf] sm:$0xff]
      %v2000 = vld [vmem:[#allocation2 + $0xb7] sm:$0xff]
      %v2001 = vld [vmem:[#allocation2 + $0xbf] sm:$0xff]
      %v2002 = vld [vmem:[#allocation2 + $0xc7] sm:$0xff]
      %v2003 = vld [vmem:[#allocation2 + $0xcf] sm:$0xff]
      %v2004 = vld [vmem:[#allocation2 + $0xd7] sm:$0xff]
      %v2005 = vld [vmem:[#allocation2 + $0xdf] sm:$0xff]
      %v2006 = vld [vmem:[#allocation2 + $0xe7] sm:$0xff]
      %v2007 = vld [vmem:[#allocation2 + $0xef] sm:$0xff]
      %v2008 = vld [vmem:[#allocation2 + $0xf7] sm:$0xff]
      %v2009 = vld [vmem:[#allocation2 + $0xff] sm:$0xff]
      %v2010 = vld [vmem:[#allocation2 + $0x107] sm:$0xff]
      %v2011 = vld [vmem:[#allocation2 + $0x10f] sm:$0xff]
      %v2012 = vld [vmem:[#allocation2 + $0x117] sm:$0xff]
      %v2013 = vld [vmem:[#allocation2 + $0x11f] sm:$0xff]
      %v2014 = vld [vmem:[#allocation2 + $0x127] sm:$0xff]
      %v2015 = vld [vmem:[#allocation2 + $0x12f] sm:$0xff]
      %v2016 = vld [vmem:[#allocation2 + $0x137] sm:$0xff]
      %v2017 = vld [vmem:[#allocation2 + $0x13f] sm:$0xff]
      %v2018 = vld [vmem:[#allocation2 + $0x147] sm:$0xff]
      %v2019 = vld [vmem:[#allocation2 + $0x14f] sm:$0xff]
      %v2020 = vld [vmem:[#allocation2 + $0x157] sm:$0xf]
      %v2021 = vpack.c.bf16 %v1981, %v1980
      %v2022 = vpack.c.bf16 %v1983, %v1982
      %v2023 = vpack.c.bf16 %v1985, %v1984
      %v2024 = vpack.c.bf16 %v1987, %v1986
      %v2025 = vpack.c.bf16 %v1989, %v1988
      %v2026 = vpack.c.bf16 %v1991, %v1990
      %v2027 = vpack.c.bf16 %v1993, %v1992
      %v2028 = vpack.c.bf16 %v1995, %v1994
      %v2029 = vpack.c.bf16 %v1997, %v1996
      %v2030 = vpack.c.bf16 %v1999, %v1998
      %v2031 = vpack.c.bf16 %v2001, %v2000
      %v2032 = vpack.c.bf16 %v2003, %v2002
      %v2033 = vpack.c.bf16 %v2005, %v2004
      %v2034 = vpack.c.bf16 %v2007, %v2006
      %v2035 = vpack.c.bf16 %v2009, %v2008
      %v2036 = vpack.c.bf16 %v2011, %v2010
      %v2037 = vpack.c.bf16 %v2013, %v2012
      %v2038 = vpack.c.bf16 %v2015, %v2014
      %v2039 = vpack.c.bf16 %v2017, %v2016
      %v2040 = vpack.c.bf16 %v2019, %v2018
      %v2041 = vpack.c.bf16 %v2020, %v2020
      %s2042 = scalar_lea.vmem %s4, 192
      %v2043 = vld [vmem:[%s2042] sm:$0xf]
      %v2044 = vld [vmem:[%s2042 + $0x4] sm:$0xf]
      %v2045 = vld [vmem:[%s2042 + $0x8] sm:$0xf]
      %v2046 = vld [vmem:[%s2042 + $0xc] sm:$0xf]
      %v2047 = vld [vmem:[%s2042 + $0x10] sm:$0xf]
      %v2048 = vld [vmem:[%s2042 + $0x14] sm:$0xf]
      %v2049 = vld [vmem:[%s2042 + $0x18] sm:$0xf]
      %v2050 = vld [vmem:[%s2042 + $0x1c] sm:$0xf]
      %v2051 = vld [vmem:[%s2042 + $0x20] sm:$0xf]
      %v2052 = vld [vmem:[%s2042 + $0x24] sm:$0xf]
      %v2053 = vld [vmem:[%s2042 + $0x28] sm:$0xf]
      %v2054 = vld [vmem:[%s2042 + $0x2c] sm:$0xf]
      %v2055 = vld [vmem:[%s2042 + $0x30] sm:$0xf]
      %v2056 = vld [vmem:[%s2042 + $0x34] sm:$0xf]
      %v2057 = vld [vmem:[%s2042 + $0x38] sm:$0xf]
      %v2058 = vld [vmem:[%s2042 + $0x3c] sm:$0xf]
      %v2075 = vunpack.c.l.b16 %v2043
      %v2076 = vunpack.c.l.b16 %v2044
      %v2077 = vunpack.c.l.b16 %v2045
      %v2078 = vunpack.c.l.b16 %v2046
      %v2079 = vunpack.c.l.b16 %v2047
      %v2080 = vunpack.c.l.b16 %v2048
      %v2081 = vunpack.c.l.b16 %v2049
      %v2082 = vunpack.c.l.b16 %v2050
      %v2083 = vunpack.c.l.b16 %v2051
      %v2084 = vunpack.c.l.b16 %v2052
      %v2085 = vunpack.c.l.b16 %v2053
      %v2086 = vunpack.c.l.b16 %v2054
      %v2087 = vunpack.c.l.b16 %v2055
      %v2088 = vunpack.c.l.b16 %v2056
      %v2089 = vunpack.c.l.b16 %v2057
      %v2090 = vunpack.c.l.b16 %v2058
      %v2091 = vpack.c.b16 %v2076, %v2075
      %v2092 = vpack.c.b16 %v2078, %v2077
      %v2093 = vpack.c.b16 %v2080, %v2079
      %v2094 = vpack.c.b16 %v2082, %v2081
      %v2095 = vpack.c.b16 %v2084, %v2083
      %v2096 = vpack.c.b16 %v2086, %v2085
      %v2097 = vpack.c.b16 %v2088, %v2087
      %v2098 = vpack.c.b16 %v2090, %v2089
      %2107 = vmatprep.subr.bf16.mxu0 0
      %2108 = vmatpush1.bf16.msra.mxu0 %v2091
      %2109 = vmatprep.subr.bf16.mxu0 0
      %2110 = vmatpush1.bf16.msra.mxu0 %v2092
      %2111 = vmatprep.subr.bf16.mxu0 0
      %2112 = vmatpush1.bf16.msra.mxu0 %v2093
      %2113 = vmatprep.subr.bf16.mxu0 0
      %2114 = vmatpush1.bf16.msra.mxu0 %v2094
      %2115 = vmatprep.subr.bf16.mxu0 0
      %2116 = vmatpush1.bf16.msra.mxu0 %v2095
      %2117 = vmatprep.subr.bf16.mxu0 0
      %2118 = vmatpush1.bf16.msra.mxu0 %v2096
      %2119 = vmatprep.subr.bf16.mxu0 0
      %2120 = vmatpush1.bf16.msra.mxu0 %v2097
      %2121 = vmatprep.subr.bf16.mxu0 0
      %2122 = vmatpush1.bf16.msra.mxu0 %v2098
      %2123 = vmatprep.subr.bf16.mxu0 0
      %2124 = vmatpush1.bf16.msra.mxu0 0
      %2125 = vmatprep.subr.bf16.mxu0 0
      %2126 = vmatpush1.bf16.msra.mxu0 0
      %2127 = vmatprep.subr.bf16.mxu0 0
      %2128 = vmatpush1.bf16.msra.mxu0 0
      %2129 = vmatprep.subr.bf16.mxu0 0
      %2130 = vmatpush1.bf16.msra.mxu0 0
      %2131 = vmatprep.subr.bf16.mxu0 0
      %2132 = vmatpush1.bf16.msra.mxu0 0
      %2133 = vmatprep.subr.bf16.mxu0 0
      %2134 = vmatpush1.bf16.msra.mxu0 0
      %2135 = vmatprep.subr.bf16.mxu0 0
      %2136 = vmatpush1.bf16.msra.mxu0 0
      %2137 = vmatprep.subr.bf16.mxu0 0
      %2138 = vmatpush1.bf16.msra.mxu0 0
      %2139 = vmatprep.mubr.bf16.mxu0 0
      %2140 = vmatmul.mubr.bf16.gmra.mrb[0].mxu0 %v2021
      %v2141 = vpop.f32.mrb[0].mxu0
      %v2142 = vadd.f32 0.0, %v2141
      %v2143 = vpop.f32.mrb[0].mxu0
      %v2144 = vpop.f32.mrb[0].mxu0
      %v2145 = vadd.f32 0.0, %v2144
      %v2146 = vpop.f32.mrb[0].mxu0
      %2147 = vmatprep.mubr.bf16.mxu0 0
      %2148 = vmatmul.mubr.bf16.gmra.mrb[0].mxu0 %v2022
      %v2149 = vpop.f32.mrb[0].mxu0
      %v2150 = vadd.f32 0.0, %v2149
      %v2151 = vpop.f32.mrb[0].mxu0
      %v2152 = vpop.f32.mrb[0].mxu0
      %v2153 = vadd.f32 0.0, %v2152
      %v2154 = vpop.f32.mrb[0].mxu0
      %2155 = vmatprep.mubr.bf16.mxu0 0
      %2156 = vmatmul.mubr.bf16.gmra.mrb[0].mxu0 %v2023
      %v2157 = vpop.f32.mrb[0].mxu0
      %v2158 = vadd.f32 0.0, %v2157
      %v2159 = vpop.f32.mrb[0].mxu0
      %v2160 = vpop.f32.mrb[0].mxu0
      %v2161 = vadd.f32 0.0, %v2160
      %v2162 = vpop.f32.mrb[0].mxu0
      %2163 = vmatprep.mubr.bf16.mxu0 0
      %2164 = vmatmul.mubr.bf16.gmra.mrb[0].mxu0 %v2024
      %v2165 = vpop.f32.mrb[0].mxu0
      %v2166 = vadd.f32 0.0, %v2165
      %v2167 = vpop.f32.mrb[0].mxu0
      %v2168 = vpop.f32.mrb[0].mxu0
      %v2169 = vadd.f32 0.0, %v2168
      %v2170 = vpop.f32.mrb[0].mxu0
      %2171 = vmatprep.mubr.bf16.mxu0 0
      %2172 = vmatmul.mubr.bf16.gmra.mrb[0].mxu0 %v2025
      %v2173 = vpop.f32.mrb[0].mxu0
      %v2174 = vadd.f32 0.0, %v2173
      %v2175 = vpop.f32.mrb[0].mxu0
      %v2176 = vpop.f32.mrb[0].mxu0
      %v2177 = vadd.f32 0.0, %v2176
      %v2178 = vpop.f32.mrb[0].mxu0
      %2179 = vmatprep.mubr.bf16.mxu0 0
      %2180 = vmatmul.mubr.bf16.gmra.mrb[0].mxu0 %v2026
      %v2181 = vpop.f32.mrb[0].mxu0
      %v2182 = vadd.f32 0.0, %v2181
      %v2183 = vpop.f32.mrb[0].mxu0
      %v2184 = vpop.f32.mrb[0].mxu0
      %v2185 = vadd.f32 0.0, %v2184
      %v2186 = vpop.f32.mrb[0].mxu0
      %2187 = vmatprep.mubr.bf16.mxu0 0
      %2188 = vmatmul.mubr.bf16.gmra.mrb[0].mxu0 %v2027
      %v2189 = vpop.f32.mrb[0].mxu0
      %v2190 = vadd.f32 0.0, %v2189
      %v2191 = vpop.f32.mrb[0].mxu0
      %v2192 = vpop.f32.mrb[0].mxu0
      %v2193 = vadd.f32 0.0, %v2192
      %v2194 = vpop.f32.mrb[0].mxu0
      %2195 = vmatprep.mubr.bf16.mxu0 0
      %2196 = vmatmul.mubr.bf16.gmra.mrb[0].mxu0 %v2028
      %v2197 = vpop.f32.mrb[0].mxu0
      %v2198 = vadd.f32 0.0, %v2197
      %v2199 = vpop.f32.mrb[0].mxu0
      %v2200 = vpop.f32.mrb[0].mxu0
      %v2201 = vadd.f32 0.0, %v2200
      %v2202 = vpop.f32.mrb[0].mxu0
      %2203 = vmatprep.mubr.bf16.mxu0 0
      %2204 = vmatmul.mubr.bf16.gmra.mrb[0].mxu0 %v2029
      %v2205 = vpop.f32.mrb[0].mxu0
      %v2206 = vadd.f32 0.0, %v2205
      %v2207 = vpop.f32.mrb[0].mxu0
      %v2208 = vpop.f32.mrb[0].mxu0
      %v2209 = vadd.f32 0.0, %v2208
      %v2210 = vpop.f32.mrb[0].mxu0
      %2211 = vmatprep.mubr.bf16.mxu0 0
      %2212 = vmatmul.mubr.bf16.gmra.mrb[0].mxu0 %v2030
      %v2213 = vpop.f32.mrb[0].mxu0
      %v2214 = vadd.f32 0.0, %v2213
      %v2215 = vpop.f32.mrb[0].mxu0
      %v2216 = vpop.f32.mrb[0].mxu0
      %v2217 = vadd.f32 0.0, %v2216
      %v2218 = vpop.f32.mrb[0].mxu0
      %2219 = vmatprep.mubr.bf16.mxu0 0
      %2220 = vmatmul.mubr.bf16.gmra.mrb[0].mxu0 %v2031
      %v2221 = vpop.f32.mrb[0].mxu0
      %v2222 = vadd.f32 0.0, %v2221
      %v2223 = vpop.f32.mrb[0].mxu0
      %v2224 = vpop.f32.mrb[0].mxu0
      %v2225 = vadd.f32 0.0, %v2224
      %v2226 = vpop.f32.mrb[0].mxu0
      %2227 = vmatprep.mubr.bf16.mxu0 0
      %2228 = vmatmul.mubr.bf16.gmra.mrb[0].mxu0 %v2032
      %v2229 = vpop.f32.mrb[0].mxu0
      %v2230 = vadd.f32 0.0, %v2229
      %v2231 = vpop.f32.mrb[0].mxu0
      %v2232 = vpop.f32.mrb[0].mxu0
      %v2233 = vadd.f32 0.0, %v2232
      %v2234 = vpop.f32.mrb[0].mxu0
      %2235 = vmatprep.mubr.bf16.mxu0 0
      %2236 = vmatmul.mubr.bf16.gmra.mrb[0].mxu0 %v2033
      %v2237 = vpop.f32.mrb[0].mxu0
      %v2238 = vadd.f32 0.0, %v2237
      %v2239 = vpop.f32.mrb[0].mxu0
      %v2240 = vpop.f32.mrb[0].mxu0
      %v2241 = vadd.f32 0.0, %v2240
      %v2242 = vpop.f32.mrb[0].mxu0
      %2243 = vmatprep.mubr.bf16.mxu0 0
      %2244 = vmatmul.mubr.bf16.gmra.mrb[0].mxu0 %v2034
      %v2245 = vpop.f32.mrb[0].mxu0
      %v2246 = vadd.f32 0.0, %v2245
      %v2247 = vpop.f32.mrb[0].mxu0
      %v2248 = vpop.f32.mrb[0].mxu0
      %v2249 = vadd.f32 0.0, %v2248
      %v2250 = vpop.f32.mrb[0].mxu0
      %2251 = vmatprep.mubr.bf16.mxu0 0
      %2252 = vmatmul.mubr.bf16.gmra.mrb[0].mxu0 %v2035
      %v2253 = vpop.f32.mrb[0].mxu0
      %v2254 = vadd.f32 0.0, %v2253
      %v2255 = vpop.f32.mrb[0].mxu0
      %v2256 = vpop.f32.mrb[0].mxu0
      %v2257 = vadd.f32 0.0, %v2256
      %v2258 = vpop.f32.mrb[0].mxu0
      %2259 = vmatprep.mubr.bf16.mxu0 0
      %2260 = vmatmul.mubr.bf16.gmra.mrb[0].mxu0 %v2036
      %v2261 = vpop.f32.mrb[0].mxu0
      %v2262 = vadd.f32 0.0, %v2261
      %v2263 = vpop.f32.mrb[0].mxu0
      %v2264 = vpop.f32.mrb[0].mxu0
      %v2265 = vadd.f32 0.0, %v2264
      %v2266 = vpop.f32.mrb[0].mxu0
      %2267 = vmatprep.mubr.bf16.mxu0 0
      %2268 = vmatmul.mubr.bf16.gmra.mrb[0].mxu0 %v2037
      %v2269 = vpop.f32.mrb[0].mxu0
      %v2270 = vadd.f32 0.0, %v2269
      %v2271 = vpop.f32.mrb[0].mxu0
      %v2272 = vpop.f32.mrb[0].mxu0
      %v2273 = vadd.f32 0.0, %v2272
      %v2274 = vpop.f32.mrb[0].mxu0
      %2275 = vmatprep.mubr.bf16.mxu0 0
      %2276 = vmatmul.mubr.bf16.gmra.mrb[0].mxu0 %v2038
      %v2277 = vpop.f32.mrb[0].mxu0
      %v2278 = vadd.f32 0.0, %v2277
      %v2279 = vpop.f32.mrb[0].mxu0
      %v2280 = vpop.f32.mrb[0].mxu0
      %v2281 = vadd.f32 0.0, %v2280
      %v2282 = vpop.f32.mrb[0].mxu0
      %2283 = vmatprep.mubr.bf16.mxu0 0
      %2284 = vmatmul.mubr.bf16.gmra.mrb[0].mxu0 %v2039
      %v2285 = vpop.f32.mrb[0].mxu0
      %v2286 = vadd.f32 0.0, %v2285
      %v2287 = vpop.f32.mrb[0].mxu0
      %v2288 = vpop.f32.mrb[0].mxu0
      %v2289 = vadd.f32 0.0, %v2288
      %v2290 = vpop.f32.mrb[0].mxu0
      %2291 = vmatprep.mubr.bf16.mxu0 0
      %2292 = vmatmul.mubr.bf16.gmra.mrb[0].mxu0 %v2040
      %v2293 = vpop.f32.mrb[0].mxu0
      %v2294 = vadd.f32 0.0, %v2293
      %v2295 = vpop.f32.mrb[0].mxu0
      %v2296 = vpop.f32.mrb[0].mxu0
      %v2297 = vadd.f32 0.0, %v2296
      %v2298 = vpop.f32.mrb[0].mxu0
      %2299 = vmatprep.mubr.bf16.mxu0 0
      %2300 = vmatmul.mubr.bf16.gmra.mrb[0].mxu0 %v2041
      %v2301 = vpop.f32.mrb[0].mxu0
      %v2302 = vadd.f32 0.0, %v2301
      %v2303 = vpop.f32.mrb[0].mxu0
      %v2304 = vpop.f32.mrb[0].mxu0
      %v2305 = vpop.f32.mrb[0].mxu0
      %2306 = vdwg.mxu0
      %v2307 = vadd.f32 %v1939, %v2142
      %v2308 = vadd.f32 %v1940, %v2145
      %v2309 = vadd.f32 %v1941, %v2150
      %v2310 = vadd.f32 %v1942, %v2153
      %v2311 = vadd.f32 %v1943, %v2158
      %v2312 = vadd.f32 %v1944, %v2161
      %v2313 = vadd.f32 %v1945, %v2166
      %v2314 = vadd.f32 %v1946, %v2169
      %v2315 = vadd.f32 %v1947, %v2174
      %v2316 = vadd.f32 %v1948, %v2177
      %v2317 = vadd.f32 %v1949, %v2182
      %v2318 = vadd.f32 %v1950, %v2185
      %v2319 = vadd.f32 %v1951, %v2190
      %v2320 = vadd.f32 %v1952, %v2193
      %v2321 = vadd.f32 %v1953, %v2198
      %v2322 = vadd.f32 %v1954, %v2201
      %v2323 = vadd.f32 %v1955, %v2206
      %v2324 = vadd.f32 %v1956, %v2209
      %v2325 = vadd.f32 %v1957, %v2214
      %v2326 = vadd.f32 %v1958, %v2217
      %v2327 = vadd.f32 %v1959, %v2222
      %v2328 = vadd.f32 %v1960, %v2225
      %v2329 = vadd.f32 %v1961, %v2230
      %v2330 = vadd.f32 %v1962, %v2233
      %v2331 = vadd.f32 %v1963, %v2238
      %v2332 = vadd.f32 %v1964, %v2241
      %v2333 = vadd.f32 %v1965, %v2246
      %v2334 = vadd.f32 %v1966, %v2249
      %v2335 = vadd.f32 %v1967, %v2254
      %v2336 = vadd.f32 %v1968, %v2257
      %v2337 = vadd.f32 %v1969, %v2262
      %v2338 = vadd.f32 %v1970, %v2265
      %v2339 = vadd.f32 %v1971, %v2270
      %v2340 = vadd.f32 %v1972, %v2273
      %v2341 = vadd.f32 %v1973, %v2278
      %v2342 = vadd.f32 %v1974, %v2281
      %v2343 = vadd.f32 %v1975, %v2286
      %v2344 = vadd.f32 %v1976, %v2289
      %v2345 = vadd.f32 %v1977, %v2294
      %v2346 = vadd.f32 %v1978, %v2297
      %v2347 = vadd.f32 %v1979, %v2302
      %v2348 = vld [vmem:[#allocation2 + $0x18] sm:$0xff]
      %v2349 = vld [vmem:[#allocation2 + $0x20] sm:$0xff]
      %v2350 = vld [vmem:[#allocation2 + $0x28] sm:$0xff]
      %v2351 = vld [vmem:[#allocation2 + $0x30] sm:$0xff]
      %v2352 = vld [vmem:[#allocation2 + $0x38] sm:$0xff]
      %v2353 = vld [vmem:[#allocation2 + $0x40] sm:$0xff]
      %v2354 = vld [vmem:[#allocation2 + $0x48] sm:$0xff]
      %v2355 = vld [vmem:[#allocation2 + $0x50] sm:$0xff]
      %v2356 = vld [vmem:[#allocation2 + $0x58] sm:$0xff]
      %v2357 = vld [vmem:[#allocation2 + $0x60] sm:$0xff]
      %v2358 = vld [vmem:[#allocation2 + $0x68] sm:$0xff]
      %v2359 = vld [vmem:[#allocation2 + $0x70] sm:$0xff]
      %v2360 = vld [vmem:[#allocation2 + $0x78] sm:$0xff]
      %v2361 = vld [vmem:[#allocation2 + $0x80] sm:$0xff]
      %v2362 = vld [vmem:[#allocation2 + $0x88] sm:$0xff]
      %v2363 = vld [vmem:[#allocation2 + $0x90] sm:$0xff]
      %v2364 = vld [vmem:[#allocation2 + $0x98] sm:$0xff]
      %v2365 = vld [vmem:[#allocation2 + $0xa0] sm:$0xff]
      %v2366 = vld [vmem:[#allocation2 + $0xa8] sm:$0xff]
      %v2367 = vld [vmem:[#allocation2 + $0xb0] sm:$0xff]
      %v2368 = vld [vmem:[#allocation2 + $0xb8] sm:$0xff]
      %v2369 = vld [vmem:[#allocation2 + $0xc0] sm:$0xff]
      %v2370 = vld [vmem:[#allocation2 + $0xc8] sm:$0xff]
      %v2371 = vld [vmem:[#allocation2 + $0xd0] sm:$0xff]
      %v2372 = vld [vmem:[#allocation2 + $0xd8] sm:$0xff]
      %v2373 = vld [vmem:[#allocation2 + $0xe0] sm:$0xff]
      %v2374 = vld [vmem:[#allocation2 + $0xe8] sm:$0xff]
      %v2375 = vld [vmem:[#allocation2 + $0xf0] sm:$0xff]
      %v2376 = vld [vmem:[#allocation2 + $0xf8] sm:$0xff]
      %v2377 = vld [vmem:[#allocation2 + $0x100] sm:$0xff]
      %v2378 = vld [vmem:[#allocation2 + $0x108] sm:$0xff]
      %v2379 = vld [vmem:[#allocation2 + $0x110] sm:$0xff]
      %v2380 = vld [vmem:[#allocation2 + $0x118] sm:$0xff]
      %v2381 = vld [vmem:[#allocation2 + $0x120] sm:$0xff]
      %v2382 = vld [vmem:[#allocation2 + $0x128] sm:$0xff]
      %v2383 = vld [vmem:[#allocation2 + $0x130] sm:$0xff]
      %v2384 = vld [vmem:[#allocation2 + $0x138] sm:$0xff]
      %v2385 = vld [vmem:[#allocation2 + $0x140] sm:$0xff]
      %v2386 = vld [vmem:[#allocation2 + $0x148] sm:$0xff]
      %v2387 = vld [vmem:[#allocation2 + $0x150] sm:$0xff]
      %v2388 = vld [vmem:[#allocation2 + $0x158] sm:$0xf]
      %v2389 = vpack.c.bf16 %v2349, %v2348
      %v2390 = vpack.c.bf16 %v2351, %v2350
      %v2391 = vpack.c.bf16 %v2353, %v2352
      %v2392 = vpack.c.bf16 %v2355, %v2354
      %v2393 = vpack.c.bf16 %v2357, %v2356
      %v2394 = vpack.c.bf16 %v2359, %v2358
      %v2395 = vpack.c.bf16 %v2361, %v2360
      %v2396 = vpack.c.bf16 %v2363, %v2362
      %v2397 = vpack.c.bf16 %v2365, %v2364
      %v2398 = vpack.c.bf16 %v2367, %v2366
      %v2399 = vpack.c.bf16 %v2369, %v2368
      %v2400 = vpack.c.bf16 %v2371, %v2370
      %v2401 = vpack.c.bf16 %v2373, %v2372
      %v2402 = vpack.c.bf16 %v2375, %v2374
      %v2403 = vpack.c.bf16 %v2377, %v2376
      %v2404 = vpack.c.bf16 %v2379, %v2378
      %v2405 = vpack.c.bf16 %v2381, %v2380
      %v2406 = vpack.c.bf16 %v2383, %v2382
      %v2407 = vpack.c.bf16 %v2385, %v2384
      %v2408 = vpack.c.bf16 %v2387, %v2386
      %v2409 = vpack.c.bf16 %v2388, %v2388
      %s2410 = scalar_lea.vmem %s4, 256
      %v2411 = vld [vmem:[%s2410] sm:$0xf]
      %v2412 = vld [vmem:[%s2410 + $0x4] sm:$0xf]
      %v2413 = vld [vmem:[%s2410 + $0x8] sm:$0xf]
      %v2414 = vld [vmem:[%s2410 + $0xc] sm:$0xf]
      %v2415 = vld [vmem:[%s2410 + $0x10] sm:$0xf]
      %v2416 = vld [vmem:[%s2410 + $0x14] sm:$0xf]
      %v2417 = vld [vmem:[%s2410 + $0x18] sm:$0xf]
      %v2418 = vld [vmem:[%s2410 + $0x1c] sm:$0xf]
      %v2419 = vld [vmem:[%s2410 + $0x20] sm:$0xf]
      %v2420 = vld [vmem:[%s2410 + $0x24] sm:$0xf]
      %v2421 = vld [vmem:[%s2410 + $0x28] sm:$0xf]
      %v2422 = vld [vmem:[%s2410 + $0x2c] sm:$0xf]
      %v2423 = vld [vmem:[%s2410 + $0x30] sm:$0xf]
      %v2424 = vld [vmem:[%s2410 + $0x34] sm:$0xf]
      %v2425 = vld [vmem:[%s2410 + $0x38] sm:$0xf]
      %v2426 = vld [vmem:[%s2410 + $0x3c] sm:$0xf]
      %v2443 = vunpack.c.l.b16 %v2411
      %v2444 = vunpack.c.l.b16 %v2412
      %v2445 = vunpack.c.l.b16 %v2413
      %v2446 = vunpack.c.l.b16 %v2414
      %v2447 = vunpack.c.l.b16 %v2415
      %v2448 = vunpack.c.l.b16 %v2416
      %v2449 = vunpack.c.l.b16 %v2417
      %v2450 = vunpack.c.l.b16 %v2418
      %v2451 = vunpack.c.l.b16 %v2419
      %v2452 = vunpack.c.l.b16 %v2420
      %v2453 = vunpack.c.l.b16 %v2421
      %v2454 = vunpack.c.l.b16 %v2422
      %v2455 = vunpack.c.l.b16 %v2423
      %v2456 = vunpack.c.l.b16 %v2424
      %v2457 = vunpack.c.l.b16 %v2425
      %v2458 = vunpack.c.l.b16 %v2426
      %v2459 = vpack.c.b16 %v2444, %v2443
      %v2460 = vpack.c.b16 %v2446, %v2445
      %v2461 = vpack.c.b16 %v2448, %v2447
      %v2462 = vpack.c.b16 %v2450, %v2449
      %v2463 = vpack.c.b16 %v2452, %v2451
      %v2464 = vpack.c.b16 %v2454, %v2453
      %v2465 = vpack.c.b16 %v2456, %v2455
      %v2466 = vpack.c.b16 %v2458, %v2457
      %2475 = vmatprep.subr.bf16.mxu0 0
      %2476 = vmatpush1.bf16.msra.mxu0 %v2459
      %2477 = vmatprep.subr.bf16.mxu0 0
      %2478 = vmatpush1.bf16.msra.mxu0 %v2460
      %2479 = vmatprep.subr.bf16.mxu0 0
      %2480 = vmatpush1.bf16.msra.mxu0 %v2461
      %2481 = vmatprep.subr.bf16.mxu0 0
      %2482 = vmatpush1.bf16.msra.mxu0 %v2462
      %2483 = vmatprep.subr.bf16.mxu0 0
      %2484 = vmatpush1.bf16.msra.mxu0 %v2463
      %2485 = vmatprep.subr.bf16.mxu0 0
      %2486 = vmatpush1.bf16.msra.mxu0 %v2464
      %2487 = vmatprep.subr.bf16.mxu0 0
      %2488 = vmatpush1.bf16.msra.mxu0 %v2465
      %2489 = vmatprep.subr.bf16.mxu0 0
      %2490 = vmatpush1.bf16.msra.mxu0 %v2466
      %2491 = vmatprep.subr.bf16.mxu0 0
      %2492 = vmatpush1.bf16.msra.mxu0 0
      %2493 = vmatprep.subr.bf16.mxu0 0
      %2494 = vmatpush1.bf16.msra.mxu0 0
      %2495 = vmatprep.subr.bf16.mxu0 0
      %2496 = vmatpush1.bf16.msra.mxu0 0
      %2497 = vmatprep.subr.bf16.mxu0 0
      %2498 = vmatpush1.bf16.msra.mxu0 0
      %2499 = vmatprep.subr.bf16.mxu0 0
      %2500 = vmatpush1.bf16.msra.mxu0 0
      %2501 = vmatprep.subr.bf16.mxu0 0
      %2502 = vmatpush1.bf16.msra.mxu0 0
      %2503 = vmatprep.subr.bf16.mxu0 0
      %2504 = vmatpush1.bf16.msra.mxu0 0
      %2505 = vmatprep.subr.bf16.mxu0 0
      %2506 = vmatpush1.bf16.msra.mxu0 0
      %2507 = vmatprep.mubr.bf16.mxu0 0
      %2508 = vmatmul.mubr.bf16.gmra.mrb[0].mxu0 %v2389
      %v2509 = vpop.f32.mrb[0].mxu0
      %v2510 = vadd.f32 0.0, %v2509
      %v2511 = vpop.f32.mrb[0].mxu0
      %v2512 = vpop.f32.mrb[0].mxu0
      %v2513 = vadd.f32 0.0, %v2512
      %v2514 = vpop.f32.mrb[0].mxu0
      %2515 = vmatprep.mubr.bf16.mxu0 0
      %2516 = vmatmul.mubr.bf16.gmra.mrb[0].mxu0 %v2390
      %v2517 = vpop.f32.mrb[0].mxu0
      %v2518 = vadd.f32 0.0, %v2517
      %v2519 = vpop.f32.mrb[0].mxu0
      %v2520 = vpop.f32.mrb[0].mxu0
      %v2521 = vadd.f32 0.0, %v2520
      %v2522 = vpop.f32.mrb[0].mxu0
      %2523 = vmatprep.mubr.bf16.mxu0 0
      %2524 = vmatmul.mubr.bf16.gmra.mrb[0].mxu0 %v2391
      %v2525 = vpop.f32.mrb[0].mxu0
      %v2526 = vadd.f32 0.0, %v2525
      %v2527 = vpop.f32.mrb[0].mxu0
      %v2528 = vpop.f32.mrb[0].mxu0
      %v2529 = vadd.f32 0.0, %v2528
      %v2530 = vpop.f32.mrb[0].mxu0
      %2531 = vmatprep.mubr.bf16.mxu0 0
      %2532 = vmatmul.mubr.bf16.gmra.mrb[0].mxu0 %v2392
      %v2533 = vpop.f32.mrb[0].mxu0
      %v2534 = vadd.f32 0.0, %v2533
      %v2535 = vpop.f32.mrb[0].mxu0
      %v2536 = vpop.f32.mrb[0].mxu0
      %v2537 = vadd.f32 0.0, %v2536
      %v2538 = vpop.f32.mrb[0].mxu0
      %2539 = vmatprep.mubr.bf16.mxu0 0
      %2540 = vmatmul.mubr.bf16.gmra.mrb[0].mxu0 %v2393
      %v2541 = vpop.f32.mrb[0].mxu0
      %v2542 = vadd.f32 0.0, %v2541
      %v2543 = vpop.f32.mrb[0].mxu0
      %v2544 = vpop.f32.mrb[0].mxu0
      %v2545 = vadd.f32 0.0, %v2544
      %v2546 = vpop.f32.mrb[0].mxu0
      %2547 = vmatprep.mubr.bf16.mxu0 0
      %2548 = vmatmul.mubr.bf16.gmra.mrb[0].mxu0 %v2394
      %v2549 = vpop.f32.mrb[0].mxu0
      %v2550 = vadd.f32 0.0, %v2549
      %v2551 = vpop.f32.mrb[0].mxu0
      %v2552 = vpop.f32.mrb[0].mxu0
      %v2553 = vadd.f32 0.0, %v2552
      %v2554 = vpop.f32.mrb[0].mxu0
      %2555 = vmatprep.mubr.bf16.mxu0 0
      %2556 = vmatmul.mubr.bf16.gmra.mrb[0].mxu0 %v2395
      %v2557 = vpop.f32.mrb[0].mxu0
      %v2558 = vadd.f32 0.0, %v2557
      %v2559 = vpop.f32.mrb[0].mxu0
      %v2560 = vpop.f32.mrb[0].mxu0
      %v2561 = vadd.f32 0.0, %v2560
      %v2562 = vpop.f32.mrb[0].mxu0
      %2563 = vmatprep.mubr.bf16.mxu0 0
      %2564 = vmatmul.mubr.bf16.gmra.mrb[0].mxu0 %v2396
      %v2565 = vpop.f32.mrb[0].mxu0
      %v2566 = vadd.f32 0.0, %v2565
      %v2567 = vpop.f32.mrb[0].mxu0
      %v2568 = vpop.f32.mrb[0].mxu0
      %v2569 = vadd.f32 0.0, %v2568
      %v2570 = vpop.f32.mrb[0].mxu0
      %2571 = vmatprep.mubr.bf16.mxu0 0
      %2572 = vmatmul.mubr.bf16.gmra.mrb[0].mxu0 %v2397
      %v2573 = vpop.f32.mrb[0].mxu0
      %v2574 = vadd.f32 0.0, %v2573
      %v2575 = vpop.f32.mrb[0].mxu0
      %v2576 = vpop.f32.mrb[0].mxu0
      %v2577 = vadd.f32 0.0, %v2576
      %v2578 = vpop.f32.mrb[0].mxu0
      %2579 = vmatprep.mubr.bf16.mxu0 0
      %2580 = vmatmul.mubr.bf16.gmra.mrb[0].mxu0 %v2398
      %v2581 = vpop.f32.mrb[0].mxu0
      %v2582 = vadd.f32 0.0, %v2581
      %v2583 = vpop.f32.mrb[0].mxu0
      %v2584 = vpop.f32.mrb[0].mxu0
      %v2585 = vadd.f32 0.0, %v2584
      %v2586 = vpop.f32.mrb[0].mxu0
      %2587 = vmatprep.mubr.bf16.mxu0 0
      %2588 = vmatmul.mubr.bf16.gmra.mrb[0].mxu0 %v2399
      %v2589 = vpop.f32.mrb[0].mxu0
      %v2590 = vadd.f32 0.0, %v2589
      %v2591 = vpop.f32.mrb[0].mxu0
      %v2592 = vpop.f32.mrb[0].mxu0
      %v2593 = vadd.f32 0.0, %v2592
      %v2594 = vpop.f32.mrb[0].mxu0
      %2595 = vmatprep.mubr.bf16.mxu0 0
      %2596 = vmatmul.mubr.bf16.gmra.mrb[0].mxu0 %v2400
      %v2597 = vpop.f32.mrb[0].mxu0
      %v2598 = vadd.f32 0.0, %v2597
      %v2599 = vpop.f32.mrb[0].mxu0
      %v2600 = vpop.f32.mrb[0].mxu0
      %v2601 = vadd.f32 0.0, %v2600
      %v2602 = vpop.f32.mrb[0].mxu0
      %2603 = vmatprep.mubr.bf16.mxu0 0
      %2604 = vmatmul.mubr.bf16.gmra.mrb[0].mxu0 %v2401
      %v2605 = vpop.f32.mrb[0].mxu0
      %v2606 = vadd.f32 0.0, %v2605
      %v2607 = vpop.f32.mrb[0].mxu0
      %v2608 = vpop.f32.mrb[0].mxu0
      %v2609 = vadd.f32 0.0, %v2608
      %v2610 = vpop.f32.mrb[0].mxu0
      %2611 = vmatprep.mubr.bf16.mxu0 0
      %2612 = vmatmul.mubr.bf16.gmra.mrb[0].mxu0 %v2402
      %v2613 = vpop.f32.mrb[0].mxu0
      %v2614 = vadd.f32 0.0, %v2613
      %v2615 = vpop.f32.mrb[0].mxu0
      %v2616 = vpop.f32.mrb[0].mxu0
      %v2617 = vadd.f32 0.0, %v2616
      %v2618 = vpop.f32.mrb[0].mxu0
      %2619 = vmatprep.mubr.bf16.mxu0 0
      %2620 = vmatmul.mubr.bf16.gmra.mrb[0].mxu0 %v2403
      %v2621 = vpop.f32.mrb[0].mxu0
      %v2622 = vadd.f32 0.0, %v2621
      %v2623 = vpop.f32.mrb[0].mxu0
      %v2624 = vpop.f32.mrb[0].mxu0
      %v2625 = vadd.f32 0.0, %v2624
      %v2626 = vpop.f32.mrb[0].mxu0
      %2627 = vmatprep.mubr.bf16.mxu0 0
      %2628 = vmatmul.mubr.bf16.gmra.mrb[0].mxu0 %v2404
      %v2629 = vpop.f32.mrb[0].mxu0
      %v2630 = vadd.f32 0.0, %v2629
      %v2631 = vpop.f32.mrb[0].mxu0
      %v2632 = vpop.f32.mrb[0].mxu0
      %v2633 = vadd.f32 0.0, %v2632
      %v2634 = vpop.f32.mrb[0].mxu0
      %2635 = vmatprep.mubr.bf16.mxu0 0
      %2636 = vmatmul.mubr.bf16.gmra.mrb[0].mxu0 %v2405
      %v2637 = vpop.f32.mrb[0].mxu0
      %v2638 = vadd.f32 0.0, %v2637
      %v2639 = vpop.f32.mrb[0].mxu0
      %v2640 = vpop.f32.mrb[0].mxu0
      %v2641 = vadd.f32 0.0, %v2640
      %v2642 = vpop.f32.mrb[0].mxu0
      %2643 = vmatprep.mubr.bf16.mxu0 0
      %2644 = vmatmul.mubr.bf16.gmra.mrb[0].mxu0 %v2406
      %v2645 = vpop.f32.mrb[0].mxu0
      %v2646 = vadd.f32 0.0, %v2645
      %v2647 = vpop.f32.mrb[0].mxu0
      %v2648 = vpop.f32.mrb[0].mxu0
      %v2649 = vadd.f32 0.0, %v2648
      %v2650 = vpop.f32.mrb[0].mxu0
      %2651 = vmatprep.mubr.bf16.mxu0 0
      %2652 = vmatmul.mubr.bf16.gmra.mrb[0].mxu0 %v2407
      %v2653 = vpop.f32.mrb[0].mxu0
      %v2654 = vadd.f32 0.0, %v2653
      %v2655 = vpop.f32.mrb[0].mxu0
      %v2656 = vpop.f32.mrb[0].mxu0
      %v2657 = vadd.f32 0.0, %v2656
      %v2658 = vpop.f32.mrb[0].mxu0
      %2659 = vmatprep.mubr.bf16.mxu0 0
      %2660 = vmatmul.mubr.bf16.gmra.mrb[0].mxu0 %v2408
      %v2661 = vpop.f32.mrb[0].mxu0
      %v2662 = vadd.f32 0.0, %v2661
      %v2663 = vpop.f32.mrb[0].mxu0
      %v2664 = vpop.f32.mrb[0].mxu0
      %v2665 = vadd.f32 0.0, %v2664
      %v2666 = vpop.f32.mrb[0].mxu0
      %2667 = vmatprep.mubr.bf16.mxu0 0
      %2668 = vmatmul.mubr.bf16.gmra.mrb[0].mxu0 %v2409
      %v2669 = vpop.f32.mrb[0].mxu0
      %v2670 = vadd.f32 0.0, %v2669
      %v2671 = vpop.f32.mrb[0].mxu0
      %v2672 = vpop.f32.mrb[0].mxu0
      %v2673 = vpop.f32.mrb[0].mxu0
      %2674 = vdwg.mxu0
      %v2675 = vadd.f32 %v2307, %v2510
      %v2676 = vadd.f32 %v2308, %v2513
      %v2677 = vadd.f32 %v2309, %v2518
      %v2678 = vadd.f32 %v2310, %v2521
      %v2679 = vadd.f32 %v2311, %v2526
      %v2680 = vadd.f32 %v2312, %v2529
      %v2681 = vadd.f32 %v2313, %v2534
      %v2682 = vadd.f32 %v2314, %v2537
      %v2683 = vadd.f32 %v2315, %v2542
      %v2684 = vadd.f32 %v2316, %v2545
      %v2685 = vadd.f32 %v2317, %v2550
      %v2686 = vadd.f32 %v2318, %v2553
      %v2687 = vadd.f32 %v2319, %v2558
      %v2688 = vadd.f32 %v2320, %v2561
      %v2689 = vadd.f32 %v2321, %v2566
      %v2690 = vadd.f32 %v2322, %v2569
      %v2691 = vadd.f32 %v2323, %v2574
      %v2692 = vadd.f32 %v2324, %v2577
      %v2693 = vadd.f32 %v2325, %v2582
      %v2694 = vadd.f32 %v2326, %v2585
      %v2695 = vadd.f32 %v2327, %v2590
      %v2696 = vadd.f32 %v2328, %v2593
      %v2697 = vadd.f32 %v2329, %v2598
      %v2698 = vadd.f32 %v2330, %v2601
      %v2699 = vadd.f32 %v2331, %v2606
      %v2700 = vadd.f32 %v2332, %v2609
      %v2701 = vadd.f32 %v2333, %v2614
      %v2702 = vadd.f32 %v2334, %v2617
      %v2703 = vadd.f32 %v2335, %v2622
      %v2704 = vadd.f32 %v2336, %v2625
      %v2705 = vadd.f32 %v2337, %v2630
      %v2706 = vadd.f32 %v2338, %v2633
      %v2707 = vadd.f32 %v2339, %v2638
      %v2708 = vadd.f32 %v2340, %v2641
      %v2709 = vadd.f32 %v2341, %v2646
      %v2710 = vadd.f32 %v2342, %v2649
      %v2711 = vadd.f32 %v2343, %v2654
      %v2712 = vadd.f32 %v2344, %v2657
      %v2713 = vadd.f32 %v2345, %v2662
      %v2714 = vadd.f32 %v2346, %v2665
      %v2715 = vadd.f32 %v2347, %v2670
      %v2716 = vld [vmem:[#allocation2 + $0x19] sm:$0xff]
      %v2717 = vld [vmem:[#allocation2 + $0x21] sm:$0xff]
      %v2718 = vld [vmem:[#allocation2 + $0x29] sm:$0xff]
      %v2719 = vld [vmem:[#allocation2 + $0x31] sm:$0xff]
      %v2720 = vld [vmem:[#allocation2 + $0x39] sm:$0xff]
      %v2721 = vld [vmem:[#allocation2 + $0x41] sm:$0xff]
      %v2722 = vld [vmem:[#allocation2 + $0x49] sm:$0xff]
      %v2723 = vld [vmem:[#allocation2 + $0x51] sm:$0xff]
      %v2724 = vld [vmem:[#allocation2 + $0x59] sm:$0xff]
      %v2725 = vld [vmem:[#allocation2 + $0x61] sm:$0xff]
      %v2726 = vld [vmem:[#allocation2 + $0x69] sm:$0xff]
      %v2727 = vld [vmem:[#allocation2 + $0x71] sm:$0xff]
      %v2728 = vld [vmem:[#allocation2 + $0x79] sm:$0xff]
      %v2729 = vld [vmem:[#allocation2 + $0x81] sm:$0xff]
      %v2730 = vld [vmem:[#allocation2 + $0x89] sm:$0xff]
      %v2731 = vld [vmem:[#allocation2 + $0x91] sm:$0xff]
      %v2732 = vld [vmem:[#allocation2 + $0x99] sm:$0xff]
      %v2733 = vld [vmem:[#allocation2 + $0xa1] sm:$0xff]
      %v2734 = vld [vmem:[#allocation2 + $0xa9] sm:$0xff]
      %v2735 = vld [vmem:[#allocation2 + $0xb1] sm:$0xff]
      %v2736 = vld [vmem:[#allocation2 + $0xb9] sm:$0xff]
      %v2737 = vld [vmem:[#allocation2 + $0xc1] sm:$0xff]
      %v2738 = vld [vmem:[#allocation2 + $0xc9] sm:$0xff]
      %v2739 = vld [vmem:[#allocation2 + $0xd1] sm:$0xff]
      %v2740 = vld [vmem:[#allocation2 + $0xd9] sm:$0xff]
      %v2741 = vld [vmem:[#allocation2 + $0xe1] sm:$0xff]
      %v2742 = vld [vmem:[#allocation2 + $0xe9] sm:$0xff]
      %v2743 = vld [vmem:[#allocation2 + $0xf1] sm:$0xff]
      %v2744 = vld [vmem:[#allocation2 + $0xf9] sm:$0xff]
      %v2745 = vld [vmem:[#allocation2 + $0x101] sm:$0xff]
      %v2746 = vld [vmem:[#allocation2 + $0x109] sm:$0xff]
      %v2747 = vld [vmem:[#allocation2 + $0x111] sm:$0xff]
      %v2748 = vld [vmem:[#allocation2 + $0x119] sm:$0xff]
      %v2749 = vld [vmem:[#allocation2 + $0x121] sm:$0xff]
      %v2750 = vld [vmem:[#allocation2 + $0x129] sm:$0xff]
      %v2751 = vld [vmem:[#allocation2 + $0x131] sm:$0xff]
      %v2752 = vld [vmem:[#allocation2 + $0x139] sm:$0xff]
      %v2753 = vld [vmem:[#allocation2 + $0x141] sm:$0xff]
      %v2754 = vld [vmem:[#allocation2 + $0x149] sm:$0xff]
      %v2755 = vld [vmem:[#allocation2 + $0x151] sm:$0xff]
      %v2756 = vld [vmem:[#allocation2 + $0x159] sm:$0xf]
      %v2757 = vpack.c.bf16 %v2717, %v2716
      %v2758 = vpack.c.bf16 %v2719, %v2718
      %v2759 = vpack.c.bf16 %v2721, %v2720
      %v2760 = vpack.c.bf16 %v2723, %v2722
      %v2761 = vpack.c.bf16 %v2725, %v2724
      %v2762 = vpack.c.bf16 %v2727, %v2726
      %v2763 = vpack.c.bf16 %v2729, %v2728
      %v2764 = vpack.c.bf16 %v2731, %v2730
      %v2765 = vpack.c.bf16 %v2733, %v2732
      %v2766 = vpack.c.bf16 %v2735, %v2734
      %v2767 = vpack.c.bf16 %v2737, %v2736
      %v2768 = vpack.c.bf16 %v2739, %v2738
      %v2769 = vpack.c.bf16 %v2741, %v2740
      %v2770 = vpack.c.bf16 %v2743, %v2742
      %v2771 = vpack.c.bf16 %v2745, %v2744
      %v2772 = vpack.c.bf16 %v2747, %v2746
      %v2773 = vpack.c.bf16 %v2749, %v2748
      %v2774 = vpack.c.bf16 %v2751, %v2750
      %v2775 = vpack.c.bf16 %v2753, %v2752
      %v2776 = vpack.c.bf16 %v2755, %v2754
      %v2777 = vpack.c.bf16 %v2756, %v2756
      %s2778 = scalar_lea.vmem %s4, 320
      %v2779 = vld [vmem:[%s2778] sm:$0xf]
      %v2780 = vld [vmem:[%s2778 + $0x4] sm:$0xf]
      %v2781 = vld [vmem:[%s2778 + $0x8] sm:$0xf]
      %v2782 = vld [vmem:[%s2778 + $0xc] sm:$0xf]
      %v2783 = vld [vmem:[%s2778 + $0x10] sm:$0xf]
      %v2784 = vld [vmem:[%s2778 + $0x14] sm:$0xf]
      %v2785 = vld [vmem:[%s2778 + $0x18] sm:$0xf]
      %v2786 = vld [vmem:[%s2778 + $0x1c] sm:$0xf]
      %v2787 = vld [vmem:[%s2778 + $0x20] sm:$0xf]
      %v2788 = vld [vmem:[%s2778 + $0x24] sm:$0xf]
      %v2789 = vld [vmem:[%s2778 + $0x28] sm:$0xf]
      %v2790 = vld [vmem:[%s2778 + $0x2c] sm:$0xf]
      %v2791 = vld [vmem:[%s2778 + $0x30] sm:$0xf]
      %v2792 = vld [vmem:[%s2778 + $0x34] sm:$0xf]
      %v2793 = vld [vmem:[%s2778 + $0x38] sm:$0xf]
      %v2794 = vld [vmem:[%s2778 + $0x3c] sm:$0xf]
      %v2811 = vunpack.c.l.b16 %v2779
      %v2812 = vunpack.c.l.b16 %v2780
      %v2813 = vunpack.c.l.b16 %v2781
      %v2814 = vunpack.c.l.b16 %v2782
      %v2815 = vunpack.c.l.b16 %v2783
      %v2816 = vunpack.c.l.b16 %v2784
      %v2817 = vunpack.c.l.b16 %v2785
      %v2818 = vunpack.c.l.b16 %v2786
      %v2819 = vunpack.c.l.b16 %v2787
      %v2820 = vunpack.c.l.b16 %v2788
      %v2821 = vunpack.c.l.b16 %v2789
      %v2822 = vunpack.c.l.b16 %v2790
      %v2823 = vunpack.c.l.b16 %v2791
      %v2824 = vunpack.c.l.b16 %v2792
      %v2825 = vunpack.c.l.b16 %v2793
      %v2826 = vunpack.c.l.b16 %v2794
      %v2827 = vpack.c.b16 %v2812, %v2811
      %v2828 = vpack.c.b16 %v2814, %v2813
      %v2829 = vpack.c.b16 %v2816, %v2815
      %v2830 = vpack.c.b16 %v2818, %v2817
      %v2831 = vpack.c.b16 %v2820, %v2819
      %v2832 = vpack.c.b16 %v2822, %v2821
      %v2833 = vpack.c.b16 %v2824, %v2823
      %v2834 = vpack.c.b16 %v2826, %v2825
      %2843 = vmatprep.subr.bf16.mxu0 0
      %2844 = vmatpush1.bf16.msra.mxu0 %v2827
      %2845 = vmatprep.subr.bf16.mxu0 0
      %2846 = vmatpush1.bf16.msra.mxu0 %v2828
      %2847 = vmatprep.subr.bf16.mxu0 0
      %2848 = vmatpush1.bf16.msra.mxu0 %v2829
      %2849 = vmatprep.subr.bf16.mxu0 0
      %2850 = vmatpush1.bf16.msra.mxu0 %v2830
      %2851 = vmatprep.subr.bf16.mxu0 0
      %2852 = vmatpush1.bf16.msra.mxu0 %v2831
      %2853 = vmatprep.subr.bf16.mxu0 0
      %2854 = vmatpush1.bf16.msra.mxu0 %v2832
      %2855 = vmatprep.subr.bf16.mxu0 0
      %2856 = vmatpush1.bf16.msra.mxu0 %v2833
      %2857 = vmatprep.subr.bf16.mxu0 0
      %2858 = vmatpush1.bf16.msra.mxu0 %v2834
      %2859 = vmatprep.subr.bf16.mxu0 0
      %2860 = vmatpush1.bf16.msra.mxu0 0
      %2861 = vmatprep.subr.bf16.mxu0 0
      %2862 = vmatpush1.bf16.msra.mxu0 0
      %2863 = vmatprep.subr.bf16.mxu0 0
      %2864 = vmatpush1.bf16.msra.mxu0 0
      %2865 = vmatprep.subr.bf16.mxu0 0
      %2866 = vmatpush1.bf16.msra.mxu0 0
      %2867 = vmatprep.subr.bf16.mxu0 0
      %2868 = vmatpush1.bf16.msra.mxu0 0
      %2869 = vmatprep.subr.bf16.mxu0 0
      %2870 = vmatpush1.bf16.msra.mxu0 0
      %2871 = vmatprep.subr.bf16.mxu0 0
      %2872 = vmatpush1.bf16.msra.mxu0 0
      %2873 = vmatprep.subr.bf16.mxu0 0
      %2874 = vmatpush1.bf16.msra.mxu0 0
      %2875 = vmatprep.mubr.bf16.mxu0 0
      %2876 = vmatmul.mubr.bf16.gmra.mrb[0].mxu0 %v2757
      %v2877 = vpop.f32.mrb[0].mxu0
      %v2878 = vadd.f32 0.0, %v2877
      %v2879 = vpop.f32.mrb[0].mxu0
      %v2880 = vpop.f32.mrb[0].mxu0
      %v2881 = vadd.f32 0.0, %v2880
      %v2882 = vpop.f32.mrb[0].mxu0
      %2883 = vmatprep.mubr.bf16.mxu0 0
      %2884 = vmatmul.mubr.bf16.gmra.mrb[0].mxu0 %v2758
      %v2885 = vpop.f32.mrb[0].mxu0
      %v2886 = vadd.f32 0.0, %v2885
      %v2887 = vpop.f32.mrb[0].mxu0
      %v2888 = vpop.f32.mrb[0].mxu0
      %v2889 = vadd.f32 0.0, %v2888
      %v2890 = vpop.f32.mrb[0].mxu0
      %2891 = vmatprep.mubr.bf16.mxu0 0
      %2892 = vmatmul.mubr.bf16.gmra.mrb[0].mxu0 %v2759
      %v2893 = vpop.f32.mrb[0].mxu0
      %v2894 = vadd.f32 0.0, %v2893
      %v2895 = vpop.f32.mrb[0].mxu0
      %v2896 = vpop.f32.mrb[0].mxu0
      %v2897 = vadd.f32 0.0, %v2896
      %v2898 = vpop.f32.mrb[0].mxu0
      %2899 = vmatprep.mubr.bf16.mxu0 0
      %2900 = vmatmul.mubr.bf16.gmra.mrb[0].mxu0 %v2760
      %v2901 = vpop.f32.mrb[0].mxu0
      %v2902 = vadd.f32 0.0, %v2901
      %v2903 = vpop.f32.mrb[0].mxu0
      %v2904 = vpop.f32.mrb[0].mxu0
      %v2905 = vadd.f32 0.0, %v2904
      %v2906 = vpop.f32.mrb[0].mxu0
      %2907 = vmatprep.mubr.bf16.mxu0 0
      %2908 = vmatmul.mubr.bf16.gmra.mrb[0].mxu0 %v2761
      %v2909 = vpop.f32.mrb[0].mxu0
      %v2910 = vadd.f32 0.0, %v2909
      %v2911 = vpop.f32.mrb[0].mxu0
      %v2912 = vpop.f32.mrb[0].mxu0
      %v2913 = vadd.f32 0.0, %v2912
      %v2914 = vpop.f32.mrb[0].mxu0
      %2915 = vmatprep.mubr.bf16.mxu0 0
      %2916 = vmatmul.mubr.bf16.gmra.mrb[0].mxu0 %v2762
      %v2917 = vpop.f32.mrb[0].mxu0
      %v2918 = vadd.f32 0.0, %v2917
      %v2919 = vpop.f32.mrb[0].mxu0
      %v2920 = vpop.f32.mrb[0].mxu0
      %v2921 = vadd.f32 0.0, %v2920
      %v2922 = vpop.f32.mrb[0].mxu0
      %2923 = vmatprep.mubr.bf16.mxu0 0
      %2924 = vmatmul.mubr.bf16.gmra.mrb[0].mxu0 %v2763
      %v2925 = vpop.f32.mrb[0].mxu0
      %v2926 = vadd.f32 0.0, %v2925
      %v2927 = vpop.f32.mrb[0].mxu0
      %v2928 = vpop.f32.mrb[0].mxu0
      %v2929 = vadd.f32 0.0, %v2928
      %v2930 = vpop.f32.mrb[0].mxu0
      %2931 = vmatprep.mubr.bf16.mxu0 0
      %2932 = vmatmul.mubr.bf16.gmra.mrb[0].mxu0 %v2764
      %v2933 = vpop.f32.mrb[0].mxu0
      %v2934 = vadd.f32 0.0, %v2933
      %v2935 = vpop.f32.mrb[0].mxu0
      %v2936 = vpop.f32.mrb[0].mxu0
      %v2937 = vadd.f32 0.0, %v2936
      %v2938 = vpop.f32.mrb[0].mxu0
      %2939 = vmatprep.mubr.bf16.mxu0 0
      %2940 = vmatmul.mubr.bf16.gmra.mrb[0].mxu0 %v2765
      %v2941 = vpop.f32.mrb[0].mxu0
      %v2942 = vadd.f32 0.0, %v2941
      %v2943 = vpop.f32.mrb[0].mxu0
      %v2944 = vpop.f32.mrb[0].mxu0
      %v2945 = vadd.f32 0.0, %v2944
      %v2946 = vpop.f32.mrb[0].mxu0
      %2947 = vmatprep.mubr.bf16.mxu0 0
      %2948 = vmatmul.mubr.bf16.gmra.mrb[0].mxu0 %v2766
      %v2949 = vpop.f32.mrb[0].mxu0
      %v2950 = vadd.f32 0.0, %v2949
      %v2951 = vpop.f32.mrb[0].mxu0
      %v2952 = vpop.f32.mrb[0].mxu0
      %v2953 = vadd.f32 0.0, %v2952
      %v2954 = vpop.f32.mrb[0].mxu0
      %2955 = vmatprep.mubr.bf16.mxu0 0
      %2956 = vmatmul.mubr.bf16.gmra.mrb[0].mxu0 %v2767
      %v2957 = vpop.f32.mrb[0].mxu0
      %v2958 = vadd.f32 0.0, %v2957
      %v2959 = vpop.f32.mrb[0].mxu0
      %v2960 = vpop.f32.mrb[0].mxu0
      %v2961 = vadd.f32 0.0, %v2960
      %v2962 = vpop.f32.mrb[0].mxu0
      %2963 = vmatprep.mubr.bf16.mxu0 0
      %2964 = vmatmul.mubr.bf16.gmra.mrb[0].mxu0 %v2768
      %v2965 = vpop.f32.mrb[0].mxu0
      %v2966 = vadd.f32 0.0, %v2965
      %v2967 = vpop.f32.mrb[0].mxu0
      %v2968 = vpop.f32.mrb[0].mxu0
      %v2969 = vadd.f32 0.0, %v2968
      %v2970 = vpop.f32.mrb[0].mxu0
      %2971 = vmatprep.mubr.bf16.mxu0 0
      %2972 = vmatmul.mubr.bf16.gmra.mrb[0].mxu0 %v2769
      %v2973 = vpop.f32.mrb[0].mxu0
      %v2974 = vadd.f32 0.0, %v2973
      %v2975 = vpop.f32.mrb[0].mxu0
      %v2976 = vpop.f32.mrb[0].mxu0
      %v2977 = vadd.f32 0.0, %v2976
      %v2978 = vpop.f32.mrb[0].mxu0
      %2979 = vmatprep.mubr.bf16.mxu0 0
      %2980 = vmatmul.mubr.bf16.gmra.mrb[0].mxu0 %v2770
      %v2981 = vpop.f32.mrb[0].mxu0
      %v2982 = vadd.f32 0.0, %v2981
      %v2983 = vpop.f32.mrb[0].mxu0
      %v2984 = vpop.f32.mrb[0].mxu0
      %v2985 = vadd.f32 0.0, %v2984
      %v2986 = vpop.f32.mrb[0].mxu0
      %2987 = vmatprep.mubr.bf16.mxu0 0
      %2988 = vmatmul.mubr.bf16.gmra.mrb[0].mxu0 %v2771
      %v2989 = vpop.f32.mrb[0].mxu0
      %v2990 = vadd.f32 0.0, %v2989
      %v2991 = vpop.f32.mrb[0].mxu0
      %v2992 = vpop.f32.mrb[0].mxu0
      %v2993 = vadd.f32 0.0, %v2992
      %v2994 = vpop.f32.mrb[0].mxu0
      %2995 = vmatprep.mubr.bf16.mxu0 0
      %2996 = vmatmul.mubr.bf16.gmra.mrb[0].mxu0 %v2772
      %v2997 = vpop.f32.mrb[0].mxu0
      %v2998 = vadd.f32 0.0, %v2997
      %v2999 = vpop.f32.mrb[0].mxu0
      %v3000 = vpop.f32.mrb[0].mxu0
      %v3001 = vadd.f32 0.0, %v3000
      %v3002 = vpop.f32.mrb[0].mxu0
      %3003 = vmatprep.mubr.bf16.mxu0 0
      %3004 = vmatmul.mubr.bf16.gmra.mrb[0].mxu0 %v2773
      %v3005 = vpop.f32.mrb[0].mxu0
      %v3006 = vadd.f32 0.0, %v3005
      %v3007 = vpop.f32.mrb[0].mxu0
      %v3008 = vpop.f32.mrb[0].mxu0
      %v3009 = vadd.f32 0.0, %v3008
      %v3010 = vpop.f32.mrb[0].mxu0
      %3011 = vmatprep.mubr.bf16.mxu0 0
      %3012 = vmatmul.mubr.bf16.gmra.mrb[0].mxu0 %v2774
      %v3013 = vpop.f32.mrb[0].mxu0
      %v3014 = vadd.f32 0.0, %v3013
      %v3015 = vpop.f32.mrb[0].mxu0
      %v3016 = vpop.f32.mrb[0].mxu0
      %v3017 = vadd.f32 0.0, %v3016
      %v3018 = vpop.f32.mrb[0].mxu0
      %3019 = vmatprep.mubr.bf16.mxu0 0
      %3020 = vmatmul.mubr.bf16.gmra.mrb[0].mxu0 %v2775
      %v3021 = vpop.f32.mrb[0].mxu0
      %v3022 = vadd.f32 0.0, %v3021
      %v3023 = vpop.f32.mrb[0].mxu0
      %v3024 = vpop.f32.mrb[0].mxu0
      %v3025 = vadd.f32 0.0, %v3024
      %v3026 = vpop.f32.mrb[0].mxu0
      %3027 = vmatprep.mubr.bf16.mxu0 0
      %3028 = vmatmul.mubr.bf16.gmra.mrb[0].mxu0 %v2776
      %v3029 = vpop.f32.mrb[0].mxu0
      %v3030 = vadd.f32 0.0, %v3029
      %v3031 = vpop.f32.mrb[0].mxu0
      %v3032 = vpop.f32.mrb[0].mxu0
      %v3033 = vadd.f32 0.0, %v3032
      %v3034 = vpop.f32.mrb[0].mxu0
      %3035 = vmatprep.mubr.bf16.mxu0 0
      %3036 = vmatmul.mubr.bf16.gmra.mrb[0].mxu0 %v2777
      %v3037 = vpop.f32.mrb[0].mxu0
      %v3038 = vadd.f32 0.0, %v3037
      %v3039 = vpop.f32.mrb[0].mxu0
      %v3040 = vpop.f32.mrb[0].mxu0
      %v3041 = vpop.f32.mrb[0].mxu0
      %3042 = vdwg.mxu0
      %v3043 = vadd.f32 %v2675, %v2878
      %v3044 = vadd.f32 %v2676, %v2881
      %v3045 = vadd.f32 %v2677, %v2886
      %v3046 = vadd.f32 %v2678, %v2889
      %v3047 = vadd.f32 %v2679, %v2894
      %v3048 = vadd.f32 %v2680, %v2897
      %v3049 = vadd.f32 %v2681, %v2902
      %v3050 = vadd.f32 %v2682, %v2905
      %v3051 = vadd.f32 %v2683, %v2910
      %v3052 = vadd.f32 %v2684, %v2913
      %v3053 = vadd.f32 %v2685, %v2918
      %v3054 = vadd.f32 %v2686, %v2921
      %v3055 = vadd.f32 %v2687, %v2926
      %v3056 = vadd.f32 %v2688, %v2929
      %v3057 = vadd.f32 %v2689, %v2934
      %v3058 = vadd.f32 %v2690, %v2937
      %v3059 = vadd.f32 %v2691, %v2942
      %v3060 = vadd.f32 %v2692, %v2945
      %v3061 = vadd.f32 %v2693, %v2950
      %v3062 = vadd.f32 %v2694, %v2953
      %v3063 = vadd.f32 %v2695, %v2958
      %v3064 = vadd.f32 %v2696, %v2961
      %v3065 = vadd.f32 %v2697, %v2966
      %v3066 = vadd.f32 %v2698, %v2969
      %v3067 = vadd.f32 %v2699, %v2974
      %v3068 = vadd.f32 %v2700, %v2977
      %v3069 = vadd.f32 %v2701, %v2982
      %v3070 = vadd.f32 %v2702, %v2985
      %v3071 = vadd.f32 %v2703, %v2990
      %v3072 = vadd.f32 %v2704, %v2993
      %v3073 = vadd.f32 %v2705, %v2998
      %v3074 = vadd.f32 %v2706, %v3001
      %v3075 = vadd.f32 %v2707, %v3006
      %v3076 = vadd.f32 %v2708, %v3009
      %v3077 = vadd.f32 %v2709, %v3014
      %v3078 = vadd.f32 %v2710, %v3017
      %v3079 = vadd.f32 %v2711, %v3022
      %v3080 = vadd.f32 %v2712, %v3025
      %v3081 = vadd.f32 %v2713, %v3030
      %v3082 = vadd.f32 %v2714, %v3033
      %v3083 = vadd.f32 %v2715, %v3038
      %v3084 = vld [vmem:[#allocation2 + $0x29] sm:$0xff]
      %v3085 = vld [vmem:[#allocation2 + $0x31] sm:$0xff]
      %v3086 = vld [vmem:[#allocation2 + $0x39] sm:$0xff]
      %v3087 = vld [vmem:[#allocation2 + $0x41] sm:$0xff]
      %v3088 = vld [vmem:[#allocation2 + $0x49] sm:$0xff]
      %v3089 = vld [vmem:[#allocation2 + $0x51] sm:$0xff]
      %v3090 = vld [vmem:[#allocation2 + $0x59] sm:$0xff]
      %v3091 = vld [vmem:[#allocation2 + $0x61] sm:$0xff]
      %v3092 = vld [vmem:[#allocation2 + $0x69] sm:$0xff]
      %v3093 = vld [vmem:[#allocation2 + $0x71] sm:$0xff]
      %v3094 = vld [vmem:[#allocation2 + $0x79] sm:$0xff]
      %v3095 = vld [vmem:[#allocation2 + $0x81] sm:$0xff]
      %v3096 = vld [vmem:[#allocation2 + $0x89] sm:$0xff]
      %v3097 = vld [vmem:[#allocation2 + $0x91] sm:$0xff]
      %v3098 = vld [vmem:[#allocation2 + $0x99] sm:$0xff]
      %v3099 = vld [vmem:[#allocation2 + $0xa1] sm:$0xff]
      %v3100 = vld [vmem:[#allocation2 + $0xa9] sm:$0xff]
      %v3101 = vld [vmem:[#allocation2 + $0xb1] sm:$0xff]
      %v3102 = vld [vmem:[#allocation2 + $0xb9] sm:$0xff]
      %v3103 = vld [vmem:[#allocation2 + $0xc1] sm:$0xff]
      %v3104 = vld [vmem:[#allocation2 + $0xc9] sm:$0xff]
      %v3105 = vld [vmem:[#allocation2 + $0xd1] sm:$0xff]
      %v3106 = vld [vmem:[#allocation2 + $0xd9] sm:$0xff]
      %v3107 = vld [vmem:[#allocation2 + $0xe1] sm:$0xff]
      %v3108 = vld [vmem:[#allocation2 + $0xe9] sm:$0xff]
      %v3109 = vld [vmem:[#allocation2 + $0xf1] sm:$0xff]
      %v3110 = vld [vmem:[#allocation2 + $0xf9] sm:$0xff]
      %v3111 = vld [vmem:[#allocation2 + $0x101] sm:$0xff]
      %v3112 = vld [vmem:[#allocation2 + $0x109] sm:$0xff]
      %v3113 = vld [vmem:[#allocation2 + $0x111] sm:$0xff]
      %v3114 = vld [vmem:[#allocation2 + $0x119] sm:$0xff]
      %v3115 = vld [vmem:[#allocation2 + $0x121] sm:$0xff]
      %v3116 = vld [vmem:[#allocation2 + $0x129] sm:$0xff]
      %v3117 = vld [vmem:[#allocation2 + $0x131] sm:$0xff]
      %v3118 = vld [vmem:[#allocation2 + $0x139] sm:$0xff]
      %v3119 = vld [vmem:[#allocation2 + $0x141] sm:$0xff]
      %v3120 = vld [vmem:[#allocation2 + $0x149] sm:$0xff]
      %v3121 = vld [vmem:[#allocation2 + $0x151] sm:$0xff]
      %v3122 = vld [vmem:[#allocation2 + $0x159] sm:$0xff]
      %v3123 = vld [vmem:[#allocation2 + $0x161] sm:$0xff]
      %v3124 = vld [vmem:[#allocation2 + $0x169] sm:$0xf]
      %v3125 = vpack.c.bf16 %v3085, %v3084
      %v3126 = vpack.c.bf16 %v3087, %v3086
      %v3127 = vpack.c.bf16 %v3089, %v3088
      %v3128 = vpack.c.bf16 %v3091, %v3090
      %v3129 = vpack.c.bf16 %v3093, %v3092
      %v3130 = vpack.c.bf16 %v3095, %v3094
      %v3131 = vpack.c.bf16 %v3097, %v3096
      %v3132 = vpack.c.bf16 %v3099, %v3098
      %v3133 = vpack.c.bf16 %v3101, %v3100
      %v3134 = vpack.c.bf16 %v3103, %v3102
      %v3135 = vpack.c.bf16 %v3105, %v3104
      %v3136 = vpack.c.bf16 %v3107, %v3106
      %v3137 = vpack.c.bf16 %v3109, %v3108
      %v3138 = vpack.c.bf16 %v3111, %v3110
      %v3139 = vpack.c.bf16 %v3113, %v3112
      %v3140 = vpack.c.bf16 %v3115, %v3114
      %v3141 = vpack.c.bf16 %v3117, %v3116
      %v3142 = vpack.c.bf16 %v3119, %v3118
      %v3143 = vpack.c.bf16 %v3121, %v3120
      %v3144 = vpack.c.bf16 %v3123, %v3122
      %v3145 = vpack.c.bf16 %v3124, %v3124
      %s3146 = scalar_lea.vmem %s4, 384
      %v3147 = vld [vmem:[%s3146] sm:$0xf]
      %v3148 = vld [vmem:[%s3146 + $0x4] sm:$0xf]
      %v3149 = vld [vmem:[%s3146 + $0x8] sm:$0xf]
      %v3150 = vld [vmem:[%s3146 + $0xc] sm:$0xf]
      %v3151 = vld [vmem:[%s3146 + $0x10] sm:$0xf]
      %v3152 = vld [vmem:[%s3146 + $0x14] sm:$0xf]
      %v3153 = vld [vmem:[%s3146 + $0x18] sm:$0xf]
      %v3154 = vld [vmem:[%s3146 + $0x1c] sm:$0xf]
      %v3155 = vld [vmem:[%s3146 + $0x20] sm:$0xf]
      %v3156 = vld [vmem:[%s3146 + $0x24] sm:$0xf]
      %v3157 = vld [vmem:[%s3146 + $0x28] sm:$0xf]
      %v3158 = vld [vmem:[%s3146 + $0x2c] sm:$0xf]
      %v3159 = vld [vmem:[%s3146 + $0x30] sm:$0xf]
      %v3160 = vld [vmem:[%s3146 + $0x34] sm:$0xf]
      %v3161 = vld [vmem:[%s3146 + $0x38] sm:$0xf]
      %v3162 = vld [vmem:[%s3146 + $0x3c] sm:$0xf]
      %v3179 = vunpack.c.l.b16 %v3147
      %v3180 = vunpack.c.l.b16 %v3148
      %v3181 = vunpack.c.l.b16 %v3149
      %v3182 = vunpack.c.l.b16 %v3150
      %v3183 = vunpack.c.l.b16 %v3151
      %v3184 = vunpack.c.l.b16 %v3152
      %v3185 = vunpack.c.l.b16 %v3153
      %v3186 = vunpack.c.l.b16 %v3154
      %v3187 = vunpack.c.l.b16 %v3155
      %v3188 = vunpack.c.l.b16 %v3156
      %v3189 = vunpack.c.l.b16 %v3157
      %v3190 = vunpack.c.l.b16 %v3158
      %v3191 = vunpack.c.l.b16 %v3159
      %v3192 = vunpack.c.l.b16 %v3160
      %v3193 = vunpack.c.l.b16 %v3161
      %v3194 = vunpack.c.l.b16 %v3162
      %v3195 = vpack.c.b16 %v3180, %v3179
      %v3196 = vpack.c.b16 %v3182, %v3181
      %v3197 = vpack.c.b16 %v3184, %v3183
      %v3198 = vpack.c.b16 %v3186, %v3185
      %v3199 = vpack.c.b16 %v3188, %v3187
      %v3200 = vpack.c.b16 %v3190, %v3189
      %v3201 = vpack.c.b16 %v3192, %v3191
      %v3202 = vpack.c.b16 %v3194, %v3193
      %3211 = vmatprep.subr.bf16.mxu0 0
      %3212 = vmatpush1.bf16.msra.mxu0 %v3195
      %3213 = vmatprep.subr.bf16.mxu0 0
      %3214 = vmatpush1.bf16.msra.mxu0 %v3196
      %3215 = vmatprep.subr.bf16.mxu0 0
      %3216 = vmatpush1.bf16.msra.mxu0 %v3197
      %3217 = vmatprep.subr.bf16.mxu0 0
      %3218 = vmatpush1.bf16.msra.mxu0 %v3198
      %3219 = vmatprep.subr.bf16.mxu0 0
      %3220 = vmatpush1.bf16.msra.mxu0 %v3199
      %3221 = vmatprep.subr.bf16.mxu0 0
      %3222 = vmatpush1.bf16.msra.mxu0 %v3200
      %3223 = vmatprep.subr.bf16.mxu0 0
      %3224 = vmatpush1.bf16.msra.mxu0 %v3201
      %3225 = vmatprep.subr.bf16.mxu0 0
      %3226 = vmatpush1.bf16.msra.mxu0 %v3202
      %3227 = vmatprep.subr.bf16.mxu0 0
      %3228 = vmatpush1.bf16.msra.mxu0 0
      %3229 = vmatprep.subr.bf16.mxu0 0
      %3230 = vmatpush1.bf16.msra.mxu0 0
      %3231 = vmatprep.subr.bf16.mxu0 0
      %3232 = vmatpush1.bf16.msra.mxu0 0
      %3233 = vmatprep.subr.bf16.mxu0 0
      %3234 = vmatpush1.bf16.msra.mxu0 0
      %3235 = vmatprep.subr.bf16.mxu0 0
      %3236 = vmatpush1.bf16.msra.mxu0 0
      %3237 = vmatprep.subr.bf16.mxu0 0
      %3238 = vmatpush1.bf16.msra.mxu0 0
      %3239 = vmatprep.subr.bf16.mxu0 0
      %3240 = vmatpush1.bf16.msra.mxu0 0
      %3241 = vmatprep.subr.bf16.mxu0 0
      %3242 = vmatpush1.bf16.msra.mxu0 0
      %3243 = vmatprep.mubr.bf16.mxu0 0
      %3244 = vmatmul.mubr.bf16.gmra.mrb[0].mxu0 %v3125
      %v3245 = vpop.f32.mrb[0].mxu0
      %v3246 = vadd.f32 0.0, %v3245
      %v3247 = vpop.f32.mrb[0].mxu0
      %v3248 = vpop.f32.mrb[0].mxu0
      %v3249 = vadd.f32 0.0, %v3248
      %v3250 = vpop.f32.mrb[0].mxu0
      %3251 = vmatprep.mubr.bf16.mxu0 0
      %3252 = vmatmul.mubr.bf16.gmra.mrb[0].mxu0 %v3126
      %v3253 = vpop.f32.mrb[0].mxu0
      %v3254 = vadd.f32 0.0, %v3253
      %v3255 = vpop.f32.mrb[0].mxu0
      %v3256 = vpop.f32.mrb[0].mxu0
      %v3257 = vadd.f32 0.0, %v3256
      %v3258 = vpop.f32.mrb[0].mxu0
      %3259 = vmatprep.mubr.bf16.mxu0 0
      %3260 = vmatmul.mubr.bf16.gmra.mrb[0].mxu0 %v3127
      %v3261 = vpop.f32.mrb[0].mxu0
      %v3262 = vadd.f32 0.0, %v3261
      %v3263 = vpop.f32.mrb[0].mxu0
      %v3264 = vpop.f32.mrb[0].mxu0
      %v3265 = vadd.f32 0.0, %v3264
      %v3266 = vpop.f32.mrb[0].mxu0
      %3267 = vmatprep.mubr.bf16.mxu0 0
      %3268 = vmatmul.mubr.bf16.gmra.mrb[0].mxu0 %v3128
      %v3269 = vpop.f32.mrb[0].mxu0
      %v3270 = vadd.f32 0.0, %v3269
      %v3271 = vpop.f32.mrb[0].mxu0
      %v3272 = vpop.f32.mrb[0].mxu0
      %v3273 = vadd.f32 0.0, %v3272
      %v3274 = vpop.f32.mrb[0].mxu0
      %3275 = vmatprep.mubr.bf16.mxu0 0
      %3276 = vmatmul.mubr.bf16.gmra.mrb[0].mxu0 %v3129
      %v3277 = vpop.f32.mrb[0].mxu0
      %v3278 = vadd.f32 0.0, %v3277
      %v3279 = vpop.f32.mrb[0].mxu0
      %v3280 = vpop.f32.mrb[0].mxu0
      %v3281 = vadd.f32 0.0, %v3280
      %v3282 = vpop.f32.mrb[0].mxu0
      %3283 = vmatprep.mubr.bf16.mxu0 0
      %3284 = vmatmul.mubr.bf16.gmra.mrb[0].mxu0 %v3130
      %v3285 = vpop.f32.mrb[0].mxu0
      %v3286 = vadd.f32 0.0, %v3285
      %v3287 = vpop.f32.mrb[0].mxu0
      %v3288 = vpop.f32.mrb[0].mxu0
      %v3289 = vadd.f32 0.0, %v3288
      %v3290 = vpop.f32.mrb[0].mxu0
      %3291 = vmatprep.mubr.bf16.mxu0 0
      %3292 = vmatmul.mubr.bf16.gmra.mrb[0].mxu0 %v3131
      %v3293 = vpop.f32.mrb[0].mxu0
      %v3294 = vadd.f32 0.0, %v3293
      %v3295 = vpop.f32.mrb[0].mxu0
      %v3296 = vpop.f32.mrb[0].mxu0
      %v3297 = vadd.f32 0.0, %v3296
      %v3298 = vpop.f32.mrb[0].mxu0
      %3299 = vmatprep.mubr.bf16.mxu0 0
      %3300 = vmatmul.mubr.bf16.gmra.mrb[0].mxu0 %v3132
      %v3301 = vpop.f32.mrb[0].mxu0
      %v3302 = vadd.f32 0.0, %v3301
      %v3303 = vpop.f32.mrb[0].mxu0
      %v3304 = vpop.f32.mrb[0].mxu0
      %v3305 = vadd.f32 0.0, %v3304
      %v3306 = vpop.f32.mrb[0].mxu0
      %3307 = vmatprep.mubr.bf16.mxu0 0
      %3308 = vmatmul.mubr.bf16.gmra.mrb[0].mxu0 %v3133
      %v3309 = vpop.f32.mrb[0].mxu0
      %v3310 = vadd.f32 0.0, %v3309
      %v3311 = vpop.f32.mrb[0].mxu0
      %v3312 = vpop.f32.mrb[0].mxu0
      %v3313 = vadd.f32 0.0, %v3312
      %v3314 = vpop.f32.mrb[0].mxu0
      %3315 = vmatprep.mubr.bf16.mxu0 0
      %3316 = vmatmul.mubr.bf16.gmra.mrb[0].mxu0 %v3134
      %v3317 = vpop.f32.mrb[0].mxu0
      %v3318 = vadd.f32 0.0, %v3317
      %v3319 = vpop.f32.mrb[0].mxu0
      %v3320 = vpop.f32.mrb[0].mxu0
      %v3321 = vadd.f32 0.0, %v3320
      %v3322 = vpop.f32.mrb[0].mxu0
      %3323 = vmatprep.mubr.bf16.mxu0 0
      %3324 = vmatmul.mubr.bf16.gmra.mrb[0].mxu0 %v3135
      %v3325 = vpop.f32.mrb[0].mxu0
      %v3326 = vadd.f32 0.0, %v3325
      %v3327 = vpop.f32.mrb[0].mxu0
      %v3328 = vpop.f32.mrb[0].mxu0
      %v3329 = vadd.f32 0.0, %v3328
      %v3330 = vpop.f32.mrb[0].mxu0
      %3331 = vmatprep.mubr.bf16.mxu0 0
      %3332 = vmatmul.mubr.bf16.gmra.mrb[0].mxu0 %v3136
      %v3333 = vpop.f32.mrb[0].mxu0
      %v3334 = vadd.f32 0.0, %v3333
      %v3335 = vpop.f32.mrb[0].mxu0
      %v3336 = vpop.f32.mrb[0].mxu0
      %v3337 = vadd.f32 0.0, %v3336
      %v3338 = vpop.f32.mrb[0].mxu0
      %3339 = vmatprep.mubr.bf16.mxu0 0
      %3340 = vmatmul.mubr.bf16.gmra.mrb[0].mxu0 %v3137
      %v3341 = vpop.f32.mrb[0].mxu0
      %v3342 = vadd.f32 0.0, %v3341
      %v3343 = vpop.f32.mrb[0].mxu0
      %v3344 = vpop.f32.mrb[0].mxu0
      %v3345 = vadd.f32 0.0, %v3344
      %v3346 = vpop.f32.mrb[0].mxu0
      %3347 = vmatprep.mubr.bf16.mxu0 0
      %3348 = vmatmul.mubr.bf16.gmra.mrb[0].mxu0 %v3138
      %v3349 = vpop.f32.mrb[0].mxu0
      %v3350 = vadd.f32 0.0, %v3349
      %v3351 = vpop.f32.mrb[0].mxu0
      %v3352 = vpop.f32.mrb[0].mxu0
      %v3353 = vadd.f32 0.0, %v3352
      %v3354 = vpop.f32.mrb[0].mxu0
      %3355 = vmatprep.mubr.bf16.mxu0 0
      %3356 = vmatmul.mubr.bf16.gmra.mrb[0].mxu0 %v3139
      %v3357 = vpop.f32.mrb[0].mxu0
      %v3358 = vadd.f32 0.0, %v3357
      %v3359 = vpop.f32.mrb[0].mxu0
      %v3360 = vpop.f32.mrb[0].mxu0
      %v3361 = vadd.f32 0.0, %v3360
      %v3362 = vpop.f32.mrb[0].mxu0
      %3363 = vmatprep.mubr.bf16.mxu0 0
      %3364 = vmatmul.mubr.bf16.gmra.mrb[0].mxu0 %v3140
      %v3365 = vpop.f32.mrb[0].mxu0
      %v3366 = vadd.f32 0.0, %v3365
      %v3367 = vpop.f32.mrb[0].mxu0
      %v3368 = vpop.f32.mrb[0].mxu0
      %v3369 = vadd.f32 0.0, %v3368
      %v3370 = vpop.f32.mrb[0].mxu0
      %3371 = vmatprep.mubr.bf16.mxu0 0
      %3372 = vmatmul.mubr.bf16.gmra.mrb[0].mxu0 %v3141
      %v3373 = vpop.f32.mrb[0].mxu0
      %v3374 = vadd.f32 0.0, %v3373
      %v3375 = vpop.f32.mrb[0].mxu0
      %v3376 = vpop.f32.mrb[0].mxu0
      %v3377 = vadd.f32 0.0, %v3376
      %v3378 = vpop.f32.mrb[0].mxu0
      %3379 = vmatprep.mubr.bf16.mxu0 0
      %3380 = vmatmul.mubr.bf16.gmra.mrb[0].mxu0 %v3142
      %v3381 = vpop.f32.mrb[0].mxu0
      %v3382 = vadd.f32 0.0, %v3381
      %v3383 = vpop.f32.mrb[0].mxu0
      %v3384 = vpop.f32.mrb[0].mxu0
      %v3385 = vadd.f32 0.0, %v3384
      %v3386 = vpop.f32.mrb[0].mxu0
      %3387 = vmatprep.mubr.bf16.mxu0 0
      %3388 = vmatmul.mubr.bf16.gmra.mrb[0].mxu0 %v3143
      %v3389 = vpop.f32.mrb[0].mxu0
      %v3390 = vadd.f32 0.0, %v3389
      %v3391 = vpop.f32.mrb[0].mxu0
      %v3392 = vpop.f32.mrb[0].mxu0
      %v3393 = vadd.f32 0.0, %v3392
      %v3394 = vpop.f32.mrb[0].mxu0
      %3395 = vmatprep.mubr.bf16.mxu0 0
      %3396 = vmatmul.mubr.bf16.gmra.mrb[0].mxu0 %v3144
      %v3397 = vpop.f32.mrb[0].mxu0
      %v3398 = vadd.f32 0.0, %v3397
      %v3399 = vpop.f32.mrb[0].mxu0
      %v3400 = vpop.f32.mrb[0].mxu0
      %v3401 = vadd.f32 0.0, %v3400
      %v3402 = vpop.f32.mrb[0].mxu0
      %3403 = vmatprep.mubr.bf16.mxu0 0
      %3404 = vmatmul.mubr.bf16.gmra.mrb[0].mxu0 %v3145
      %v3405 = vpop.f32.mrb[0].mxu0
      %v3406 = vadd.f32 0.0, %v3405
      %v3407 = vpop.f32.mrb[0].mxu0
      %v3408 = vpop.f32.mrb[0].mxu0
      %v3409 = vpop.f32.mrb[0].mxu0
      %3410 = vdwg.mxu0
      %v3411 = vadd.f32 %v3043, %v3246
      %v3412 = vadd.f32 %v3044, %v3249
      %v3413 = vadd.f32 %v3045, %v3254
      %v3414 = vadd.f32 %v3046, %v3257
      %v3415 = vadd.f32 %v3047, %v3262
      %v3416 = vadd.f32 %v3048, %v3265
      %v3417 = vadd.f32 %v3049, %v3270
      %v3418 = vadd.f32 %v3050, %v3273
      %v3419 = vadd.f32 %v3051, %v3278
      %v3420 = vadd.f32 %v3052, %v3281
      %v3421 = vadd.f32 %v3053, %v3286
      %v3422 = vadd.f32 %v3054, %v3289
      %v3423 = vadd.f32 %v3055, %v3294
      %v3424 = vadd.f32 %v3056, %v3297
      %v3425 = vadd.f32 %v3057, %v3302
      %v3426 = vadd.f32 %v3058, %v3305
      %v3427 = vadd.f32 %v3059, %v3310
      %v3428 = vadd.f32 %v3060, %v3313
      %v3429 = vadd.f32 %v3061, %v3318
      %v3430 = vadd.f32 %v3062, %v3321
      %v3431 = vadd.f32 %v3063, %v3326
      %v3432 = vadd.f32 %v3064, %v3329
      %v3433 = vadd.f32 %v3065, %v3334
      %v3434 = vadd.f32 %v3066, %v3337
      %v3435 = vadd.f32 %v3067, %v3342
      %v3436 = vadd.f32 %v3068, %v3345
      %v3437 = vadd.f32 %v3069, %v3350
      %v3438 = vadd.f32 %v3070, %v3353
      %v3439 = vadd.f32 %v3071, %v3358
      %v3440 = vadd.f32 %v3072, %v3361
      %v3441 = vadd.f32 %v3073, %v3366
      %v3442 = vadd.f32 %v3074, %v3369
      %v3443 = vadd.f32 %v3075, %v3374
      %v3444 = vadd.f32 %v3076, %v3377
      %v3445 = vadd.f32 %v3077, %v3382
      %v3446 = vadd.f32 %v3078, %v3385
      %v3447 = vadd.f32 %v3079, %v3390
      %v3448 = vadd.f32 %v3080, %v3393
      %v3449 = vadd.f32 %v3081, %v3398
      %v3450 = vadd.f32 %v3082, %v3401
      %v3451 = vadd.f32 %v3083, %v3406
      %v3452 = vld [vmem:[#allocation2 + $0x2a] sm:$0xff]
      %v3453 = vld [vmem:[#allocation2 + $0x32] sm:$0xff]
      %v3454 = vld [vmem:[#allocation2 + $0x3a] sm:$0xff]
      %v3455 = vld [vmem:[#allocation2 + $0x42] sm:$0xff]
      %v3456 = vld [vmem:[#allocation2 + $0x4a] sm:$0xff]
      %v3457 = vld [vmem:[#allocation2 + $0x52] sm:$0xff]
      %v3458 = vld [vmem:[#allocation2 + $0x5a] sm:$0xff]
      %v3459 = vld [vmem:[#allocation2 + $0x62] sm:$0xff]
      %v3460 = vld [vmem:[#allocation2 + $0x6a] sm:$0xff]
      %v3461 = vld [vmem:[#allocation2 + $0x72] sm:$0xff]
      %v3462 = vld [vmem:[#allocation2 + $0x7a] sm:$0xff]
      %v3463 = vld [vmem:[#allocation2 + $0x82] sm:$0xff]
      %v3464 = vld [vmem:[#allocation2 + $0x8a] sm:$0xff]
      %v3465 = vld [vmem:[#allocation2 + $0x92] sm:$0xff]
      %v3466 = vld [vmem:[#allocation2 + $0x9a] sm:$0xff]
      %v3467 = vld [vmem:[#allocation2 + $0xa2] sm:$0xff]
      %v3468 = vld [vmem:[#allocation2 + $0xaa] sm:$0xff]
      %v3469 = vld [vmem:[#allocation2 + $0xb2] sm:$0xff]
      %v3470 = vld [vmem:[#allocation2 + $0xba] sm:$0xff]
      %v3471 = vld [vmem:[#allocation2 + $0xc2] sm:$0xff]
      %v3472 = vld [vmem:[#allocation2 + $0xca] sm:$0xff]
      %v3473 = vld [vmem:[#allocation2 + $0xd2] sm:$0xff]
      %v3474 = vld [vmem:[#allocation2 + $0xda] sm:$0xff]
      %v3475 = vld [vmem:[#allocation2 + $0xe2] sm:$0xff]
      %v3476 = vld [vmem:[#allocation2 + $0xea] sm:$0xff]
      %v3477 = vld [vmem:[#allocation2 + $0xf2] sm:$0xff]
      %v3478 = vld [vmem:[#allocation2 + $0xfa] sm:$0xff]
      %v3479 = vld [vmem:[#allocation2 + $0x102] sm:$0xff]
      %v3480 = vld [vmem:[#allocation2 + $0x10a] sm:$0xff]
      %v3481 = vld [vmem:[#allocation2 + $0x112] sm:$0xff]
      %v3482 = vld [vmem:[#allocation2 + $0x11a] sm:$0xff]
      %v3483 = vld [vmem:[#allocation2 + $0x122] sm:$0xff]
      %v3484 = vld [vmem:[#allocation2 + $0x12a] sm:$0xff]
      %v3485 = vld [vmem:[#allocation2 + $0x132] sm:$0xff]
      %v3486 = vld [vmem:[#allocation2 + $0x13a] sm:$0xff]
      %v3487 = vld [vmem:[#allocation2 + $0x142] sm:$0xff]
      %v3488 = vld [vmem:[#allocation2 + $0x14a] sm:$0xff]
      %v3489 = vld [vmem:[#allocation2 + $0x152] sm:$0xff]
      %v3490 = vld [vmem:[#allocation2 + $0x15a] sm:$0xff]
      %v3491 = vld [vmem:[#allocation2 + $0x162] sm:$0xff]
      %v3492 = vld [vmem:[#allocation2 + $0x16a] sm:$0xf]
      %v3493 = vpack.c.bf16 %v3453, %v3452
      %v3494 = vpack.c.bf16 %v3455, %v3454
      %v3495 = vpack.c.bf16 %v3457, %v3456
      %v3496 = vpack.c.bf16 %v3459, %v3458
      %v3497 = vpack.c.bf16 %v3461, %v3460
      %v3498 = vpack.c.bf16 %v3463, %v3462
      %v3499 = vpack.c.bf16 %v3465, %v3464
      %v3500 = vpack.c.bf16 %v3467, %v3466
      %v3501 = vpack.c.bf16 %v3469, %v3468
      %v3502 = vpack.c.bf16 %v3471, %v3470
      %v3503 = vpack.c.bf16 %v3473, %v3472
      %v3504 = vpack.c.bf16 %v3475, %v3474
      %v3505 = vpack.c.bf16 %v3477, %v3476
      %v3506 = vpack.c.bf16 %v3479, %v3478
      %v3507 = vpack.c.bf16 %v3481, %v3480
      %v3508 = vpack.c.bf16 %v3483, %v3482
      %v3509 = vpack.c.bf16 %v3485, %v3484
      %v3510 = vpack.c.bf16 %v3487, %v3486
      %v3511 = vpack.c.bf16 %v3489, %v3488
      %v3512 = vpack.c.bf16 %v3491, %v3490
      %v3513 = vpack.c.bf16 %v3492, %v3492
      %s3514 = scalar_lea.vmem %s4, 448
      %v3515 = vld [vmem:[%s3514] sm:$0xf]
      %v3516 = vld [vmem:[%s3514 + $0x4] sm:$0xf]
      %v3517 = vld [vmem:[%s3514 + $0x8] sm:$0xf]
      %v3518 = vld [vmem:[%s3514 + $0xc] sm:$0xf]
      %v3519 = vld [vmem:[%s3514 + $0x10] sm:$0xf]
      %v3520 = vld [vmem:[%s3514 + $0x14] sm:$0xf]
      %v3521 = vld [vmem:[%s3514 + $0x18] sm:$0xf]
      %v3522 = vld [vmem:[%s3514 + $0x1c] sm:$0xf]
      %v3523 = vld [vmem:[%s3514 + $0x20] sm:$0xf]
      %v3524 = vld [vmem:[%s3514 + $0x24] sm:$0xf]
      %v3525 = vld [vmem:[%s3514 + $0x28] sm:$0xf]
      %v3526 = vld [vmem:[%s3514 + $0x2c] sm:$0xf]
      %v3527 = vld [vmem:[%s3514 + $0x30] sm:$0xf]
      %v3528 = vld [vmem:[%s3514 + $0x34] sm:$0xf]
      %v3529 = vld [vmem:[%s3514 + $0x38] sm:$0xf]
      %v3530 = vld [vmem:[%s3514 + $0x3c] sm:$0xf]
      %v3547 = vunpack.c.l.b16 %v3515
      %v3548 = vunpack.c.l.b16 %v3516
      %v3549 = vunpack.c.l.b16 %v3517
      %v3550 = vunpack.c.l.b16 %v3518
      %v3551 = vunpack.c.l.b16 %v3519
      %v3552 = vunpack.c.l.b16 %v3520
      %v3553 = vunpack.c.l.b16 %v3521
      %v3554 = vunpack.c.l.b16 %v3522
      %v3555 = vunpack.c.l.b16 %v3523
      %v3556 = vunpack.c.l.b16 %v3524
      %v3557 = vunpack.c.l.b16 %v3525
      %v3558 = vunpack.c.l.b16 %v3526
      %v3559 = vunpack.c.l.b16 %v3527
      %v3560 = vunpack.c.l.b16 %v3528
      %v3561 = vunpack.c.l.b16 %v3529
      %v3562 = vunpack.c.l.b16 %v3530
      %v3563 = vpack.c.b16 %v3548, %v3547
      %v3564 = vpack.c.b16 %v3550, %v3549
      %v3565 = vpack.c.b16 %v3552, %v3551
      %v3566 = vpack.c.b16 %v3554, %v3553
      %v3567 = vpack.c.b16 %v3556, %v3555
      %v3568 = vpack.c.b16 %v3558, %v3557
      %v3569 = vpack.c.b16 %v3560, %v3559
      %v3570 = vpack.c.b16 %v3562, %v3561
      %3579 = vmatprep.subr.bf16.mxu0 0
      %3580 = vmatpush1.bf16.msra.mxu0 %v3563
      %3581 = vmatprep.subr.bf16.mxu0 0
      %3582 = vmatpush1.bf16.msra.mxu0 %v3564
      %3583 = vmatprep.subr.bf16.mxu0 0
      %3584 = vmatpush1.bf16.msra.mxu0 %v3565
      %3585 = vmatprep.subr.bf16.mxu0 0
      %3586 = vmatpush1.bf16.msra.mxu0 %v3566
      %3587 = vmatprep.subr.bf16.mxu0 0
      %3588 = vmatpush1.bf16.msra.mxu0 %v3567
      %3589 = vmatprep.subr.bf16.mxu0 0
      %3590 = vmatpush1.bf16.msra.mxu0 %v3568
      %3591 = vmatprep.subr.bf16.mxu0 0
      %3592 = vmatpush1.bf16.msra.mxu0 %v3569
      %3593 = vmatprep.subr.bf16.mxu0 0
      %3594 = vmatpush1.bf16.msra.mxu0 %v3570
      %3595 = vmatprep.subr.bf16.mxu0 0
      %3596 = vmatpush1.bf16.msra.mxu0 0
      %3597 = vmatprep.subr.bf16.mxu0 0
      %3598 = vmatpush1.bf16.msra.mxu0 0
      %3599 = vmatprep.subr.bf16.mxu0 0
      %3600 = vmatpush1.bf16.msra.mxu0 0
      %3601 = vmatprep.subr.bf16.mxu0 0
      %3602 = vmatpush1.bf16.msra.mxu0 0
      %3603 = vmatprep.subr.bf16.mxu0 0
      %3604 = vmatpush1.bf16.msra.mxu0 0
      %3605 = vmatprep.subr.bf16.mxu0 0
      %3606 = vmatpush1.bf16.msra.mxu0 0
      %3607 = vmatprep.subr.bf16.mxu0 0
      %3608 = vmatpush1.bf16.msra.mxu0 0
      %3609 = vmatprep.subr.bf16.mxu0 0
      %3610 = vmatpush1.bf16.msra.mxu0 0
      %3611 = vmatprep.mubr.bf16.mxu0 0
      %3612 = vmatmul.mubr.bf16.gmra.mrb[0].mxu0 %v3493
      %v3613 = vpop.f32.mrb[0].mxu0
      %v3614 = vadd.f32 0.0, %v3613
      %v3615 = vpop.f32.mrb[0].mxu0
      %v3616 = vpop.f32.mrb[0].mxu0
      %v3617 = vadd.f32 0.0, %v3616
      %v3618 = vpop.f32.mrb[0].mxu0
      %3619 = vmatprep.mubr.bf16.mxu0 0
      %3620 = vmatmul.mubr.bf16.gmra.mrb[0].mxu0 %v3494
      %v3621 = vpop.f32.mrb[0].mxu0
      %v3622 = vadd.f32 0.0, %v3621
      %v3623 = vpop.f32.mrb[0].mxu0
      %v3624 = vpop.f32.mrb[0].mxu0
      %v3625 = vadd.f32 0.0, %v3624
      %v3626 = vpop.f32.mrb[0].mxu0
      %3627 = vmatprep.mubr.bf16.mxu0 0
      %3628 = vmatmul.mubr.bf16.gmra.mrb[0].mxu0 %v3495
      %v3629 = vpop.f32.mrb[0].mxu0
      %v3630 = vadd.f32 0.0, %v3629
      %v3631 = vpop.f32.mrb[0].mxu0
      %v3632 = vpop.f32.mrb[0].mxu0
      %v3633 = vadd.f32 0.0, %v3632
      %v3634 = vpop.f32.mrb[0].mxu0
      %3635 = vmatprep.mubr.bf16.mxu0 0
      %3636 = vmatmul.mubr.bf16.gmra.mrb[0].mxu0 %v3496
      %v3637 = vpop.f32.mrb[0].mxu0
      %v3638 = vadd.f32 0.0, %v3637
      %v3639 = vpop.f32.mrb[0].mxu0
      %v3640 = vpop.f32.mrb[0].mxu0
      %v3641 = vadd.f32 0.0, %v3640
      %v3642 = vpop.f32.mrb[0].mxu0
      %3643 = vmatprep.mubr.bf16.mxu0 0
      %3644 = vmatmul.mubr.bf16.gmra.mrb[0].mxu0 %v3497
      %v3645 = vpop.f32.mrb[0].mxu0
      %v3646 = vadd.f32 0.0, %v3645
      %v3647 = vpop.f32.mrb[0].mxu0
      %v3648 = vpop.f32.mrb[0].mxu0
      %v3649 = vadd.f32 0.0, %v3648
      %v3650 = vpop.f32.mrb[0].mxu0
      %3651 = vmatprep.mubr.bf16.mxu0 0
      %3652 = vmatmul.mubr.bf16.gmra.mrb[0].mxu0 %v3498
      %v3653 = vpop.f32.mrb[0].mxu0
      %v3654 = vadd.f32 0.0, %v3653
      %v3655 = vpop.f32.mrb[0].mxu0
      %v3656 = vpop.f32.mrb[0].mxu0
      %v3657 = vadd.f32 0.0, %v3656
      %v3658 = vpop.f32.mrb[0].mxu0
      %3659 = vmatprep.mubr.bf16.mxu0 0
      %3660 = vmatmul.mubr.bf16.gmra.mrb[0].mxu0 %v3499
      %v3661 = vpop.f32.mrb[0].mxu0
      %v3662 = vadd.f32 0.0, %v3661
      %v3663 = vpop.f32.mrb[0].mxu0
      %v3664 = vpop.f32.mrb[0].mxu0
      %v3665 = vadd.f32 0.0, %v3664
      %v3666 = vpop.f32.mrb[0].mxu0
      %3667 = vmatprep.mubr.bf16.mxu0 0
      %3668 = vmatmul.mubr.bf16.gmra.mrb[0].mxu0 %v3500
      %v3669 = vpop.f32.mrb[0].mxu0
      %v3670 = vadd.f32 0.0, %v3669
      %v3671 = vpop.f32.mrb[0].mxu0
      %v3672 = vpop.f32.mrb[0].mxu0
      %v3673 = vadd.f32 0.0, %v3672
      %v3674 = vpop.f32.mrb[0].mxu0
      %3675 = vmatprep.mubr.bf16.mxu0 0
      %3676 = vmatmul.mubr.bf16.gmra.mrb[0].mxu0 %v3501
      %v3677 = vpop.f32.mrb[0].mxu0
      %v3678 = vadd.f32 0.0, %v3677
      %v3679 = vpop.f32.mrb[0].mxu0
      %v3680 = vpop.f32.mrb[0].mxu0
      %v3681 = vadd.f32 0.0, %v3680
      %v3682 = vpop.f32.mrb[0].mxu0
      %3683 = vmatprep.mubr.bf16.mxu0 0
      %3684 = vmatmul.mubr.bf16.gmra.mrb[0].mxu0 %v3502
      %v3685 = vpop.f32.mrb[0].mxu0
      %v3686 = vadd.f32 0.0, %v3685
      %v3687 = vpop.f32.mrb[0].mxu0
      %v3688 = vpop.f32.mrb[0].mxu0
      %v3689 = vadd.f32 0.0, %v3688
      %v3690 = vpop.f32.mrb[0].mxu0
      %3691 = vmatprep.mubr.bf16.mxu0 0
      %3692 = vmatmul.mubr.bf16.gmra.mrb[0].mxu0 %v3503
      %v3693 = vpop.f32.mrb[0].mxu0
      %v3694 = vadd.f32 0.0, %v3693
      %v3695 = vpop.f32.mrb[0].mxu0
      %v3696 = vpop.f32.mrb[0].mxu0
      %v3697 = vadd.f32 0.0, %v3696
      %v3698 = vpop.f32.mrb[0].mxu0
      %3699 = vmatprep.mubr.bf16.mxu0 0
      %3700 = vmatmul.mubr.bf16.gmra.mrb[0].mxu0 %v3504
      %v3701 = vpop.f32.mrb[0].mxu0
      %v3702 = vadd.f32 0.0, %v3701
      %v3703 = vpop.f32.mrb[0].mxu0
      %v3704 = vpop.f32.mrb[0].mxu0
      %v3705 = vadd.f32 0.0, %v3704
      %v3706 = vpop.f32.mrb[0].mxu0
      %3707 = vmatprep.mubr.bf16.mxu0 0
      %3708 = vmatmul.mubr.bf16.gmra.mrb[0].mxu0 %v3505
      %v3709 = vpop.f32.mrb[0].mxu0
      %v3710 = vadd.f32 0.0, %v3709
      %v3711 = vpop.f32.mrb[0].mxu0
      %v3712 = vpop.f32.mrb[0].mxu0
      %v3713 = vadd.f32 0.0, %v3712
      %v3714 = vpop.f32.mrb[0].mxu0
      %3715 = vmatprep.mubr.bf16.mxu0 0
      %3716 = vmatmul.mubr.bf16.gmra.mrb[0].mxu0 %v3506
      %v3717 = vpop.f32.mrb[0].mxu0
      %v3718 = vadd.f32 0.0, %v3717
      %v3719 = vpop.f32.mrb[0].mxu0
      %v3720 = vpop.f32.mrb[0].mxu0
      %v3721 = vadd.f32 0.0, %v3720
      %v3722 = vpop.f32.mrb[0].mxu0
      %3723 = vmatprep.mubr.bf16.mxu0 0
      %3724 = vmatmul.mubr.bf16.gmra.mrb[0].mxu0 %v3507
      %v3725 = vpop.f32.mrb[0].mxu0
      %v3726 = vadd.f32 0.0, %v3725
      %v3727 = vpop.f32.mrb[0].mxu0
      %v3728 = vpop.f32.mrb[0].mxu0
      %v3729 = vadd.f32 0.0, %v3728
      %v3730 = vpop.f32.mrb[0].mxu0
      %3731 = vmatprep.mubr.bf16.mxu0 0
      %3732 = vmatmul.mubr.bf16.gmra.mrb[0].mxu0 %v3508
      %v3733 = vpop.f32.mrb[0].mxu0
      %v3734 = vadd.f32 0.0, %v3733
      %v3735 = vpop.f32.mrb[0].mxu0
      %v3736 = vpop.f32.mrb[0].mxu0
      %v3737 = vadd.f32 0.0, %v3736
      %v3738 = vpop.f32.mrb[0].mxu0
      %3739 = vmatprep.mubr.bf16.mxu0 0
      %3740 = vmatmul.mubr.bf16.gmra.mrb[0].mxu0 %v3509
      %v3741 = vpop.f32.mrb[0].mxu0
      %v3742 = vadd.f32 0.0, %v3741
      %v3743 = vpop.f32.mrb[0].mxu0
      %v3744 = vpop.f32.mrb[0].mxu0
      %v3745 = vadd.f32 0.0, %v3744
      %v3746 = vpop.f32.mrb[0].mxu0
      %3747 = vmatprep.mubr.bf16.mxu0 0
      %3748 = vmatmul.mubr.bf16.gmra.mrb[0].mxu0 %v3510
      %v3749 = vpop.f32.mrb[0].mxu0
      %v3750 = vadd.f32 0.0, %v3749
      %v3751 = vpop.f32.mrb[0].mxu0
      %v3752 = vpop.f32.mrb[0].mxu0
      %v3753 = vadd.f32 0.0, %v3752
      %v3754 = vpop.f32.mrb[0].mxu0
      %3755 = vmatprep.mubr.bf16.mxu0 0
      %3756 = vmatmul.mubr.bf16.gmra.mrb[0].mxu0 %v3511
      %v3757 = vpop.f32.mrb[0].mxu0
      %v3758 = vadd.f32 0.0, %v3757
      %v3759 = vpop.f32.mrb[0].mxu0
      %v3760 = vpop.f32.mrb[0].mxu0
      %v3761 = vadd.f32 0.0, %v3760
      %v3762 = vpop.f32.mrb[0].mxu0
      %3763 = vmatprep.mubr.bf16.mxu0 0
      %3764 = vmatmul.mubr.bf16.gmra.mrb[0].mxu0 %v3512
      %v3765 = vpop.f32.mrb[0].mxu0
      %v3766 = vadd.f32 0.0, %v3765
      %v3767 = vpop.f32.mrb[0].mxu0
      %v3768 = vpop.f32.mrb[0].mxu0
      %v3769 = vadd.f32 0.0, %v3768
      %v3770 = vpop.f32.mrb[0].mxu0
      %3771 = vmatprep.mubr.bf16.mxu0 0
      %3772 = vmatmul.mubr.bf16.gmra.mrb[0].mxu0 %v3513
      %v3773 = vpop.f32.mrb[0].mxu0
      %v3774 = vadd.f32 0.0, %v3773
      %v3775 = vpop.f32.mrb[0].mxu0
      %v3776 = vpop.f32.mrb[0].mxu0
      %v3777 = vpop.f32.mrb[0].mxu0
      %3778 = vdwg.mxu0
      %v3779 = vadd.f32 %v3411, %v3614
      %v3780 = vadd.f32 %v3412, %v3617
      %v3781 = vadd.f32 %v3413, %v3622
      %v3782 = vadd.f32 %v3414, %v3625
      %v3783 = vadd.f32 %v3415, %v3630
      %v3784 = vadd.f32 %v3416, %v3633
      %v3785 = vadd.f32 %v3417, %v3638
      %v3786 = vadd.f32 %v3418, %v3641
      %v3787 = vadd.f32 %v3419, %v3646
      %v3788 = vadd.f32 %v3420, %v3649
      %v3789 = vadd.f32 %v3421, %v3654
      %v3790 = vadd.f32 %v3422, %v3657
      %v3791 = vadd.f32 %v3423, %v3662
      %v3792 = vadd.f32 %v3424, %v3665
      %v3793 = vadd.f32 %v3425, %v3670
      %v3794 = vadd.f32 %v3426, %v3673
      %v3795 = vadd.f32 %v3427, %v3678
      %v3796 = vadd.f32 %v3428, %v3681
      %v3797 = vadd.f32 %v3429, %v3686
      %v3798 = vadd.f32 %v3430, %v3689
      %v3799 = vadd.f32 %v3431, %v3694
      %v3800 = vadd.f32 %v3432, %v3697
      %v3801 = vadd.f32 %v3433, %v3702
      %v3802 = vadd.f32 %v3434, %v3705
      %v3803 = vadd.f32 %v3435, %v3710
      %v3804 = vadd.f32 %v3436, %v3713
      %v3805 = vadd.f32 %v3437, %v3718
      %v3806 = vadd.f32 %v3438, %v3721
      %v3807 = vadd.f32 %v3439, %v3726
      %v3808 = vadd.f32 %v3440, %v3729
      %v3809 = vadd.f32 %v3441, %v3734
      %v3810 = vadd.f32 %v3442, %v3737
      %v3811 = vadd.f32 %v3443, %v3742
      %v3812 = vadd.f32 %v3444, %v3745
      %v3813 = vadd.f32 %v3445, %v3750
      %v3814 = vadd.f32 %v3446, %v3753
      %v3815 = vadd.f32 %v3447, %v3758
      %v3816 = vadd.f32 %v3448, %v3761
      %v3817 = vadd.f32 %v3449, %v3766
      %v3818 = vadd.f32 %v3450, %v3769
      %v3819 = vadd.f32 %v3451, %v3774
      %v3820 = vld [vmem:[#allocation2 + $0x2b] sm:$0xff]
      %v3821 = vld [vmem:[#allocation2 + $0x33] sm:$0xff]
      %v3822 = vld [vmem:[#allocation2 + $0x3b] sm:$0xff]
      %v3823 = vld [vmem:[#allocation2 + $0x43] sm:$0xff]
      %v3824 = vld [vmem:[#allocation2 + $0x4b] sm:$0xff]
      %v3825 = vld [vmem:[#allocation2 + $0x53] sm:$0xff]
      %v3826 = vld [vmem:[#allocation2 + $0x5b] sm:$0xff]
      %v3827 = vld [vmem:[#allocation2 + $0x63] sm:$0xff]
      %v3828 = vld [vmem:[#allocation2 + $0x6b] sm:$0xff]
      %v3829 = vld [vmem:[#allocation2 + $0x73] sm:$0xff]
      %v3830 = vld [vmem:[#allocation2 + $0x7b] sm:$0xff]
      %v3831 = vld [vmem:[#allocation2 + $0x83] sm:$0xff]
      %v3832 = vld [vmem:[#allocation2 + $0x8b] sm:$0xff]
      %v3833 = vld [vmem:[#allocation2 + $0x93] sm:$0xff]
      %v3834 = vld [vmem:[#allocation2 + $0x9b] sm:$0xff]
      %v3835 = vld [vmem:[#allocation2 + $0xa3] sm:$0xff]
      %v3836 = vld [vmem:[#allocation2 + $0xab] sm:$0xff]
      %v3837 = vld [vmem:[#allocation2 + $0xb3] sm:$0xff]
      %v3838 = vld [vmem:[#allocation2 + $0xbb] sm:$0xff]
      %v3839 = vld [vmem:[#allocation2 + $0xc3] sm:$0xff]
      %v3840 = vld [vmem:[#allocation2 + $0xcb] sm:$0xff]
      %v3841 = vld [vmem:[#allocation2 + $0xd3] sm:$0xff]
      %v3842 = vld [vmem:[#allocation2 + $0xdb] sm:$0xff]
      %v3843 = vld [vmem:[#allocation2 + $0xe3] sm:$0xff]
      %v3844 = vld [vmem:[#allocation2 + $0xeb] sm:$0xff]
      %v3845 = vld [vmem:[#allocation2 + $0xf3] sm:$0xff]
      %v3846 = vld [vmem:[#allocation2 + $0xfb] sm:$0xff]
      %v3847 = vld [vmem:[#allocation2 + $0x103] sm:$0xff]
      %v3848 = vld [vmem:[#allocation2 + $0x10b] sm:$0xff]
      %v3849 = vld [vmem:[#allocation2 + $0x113] sm:$0xff]
      %v3850 = vld [vmem:[#allocation2 + $0x11b] sm:$0xff]
      %v3851 = vld [vmem:[#allocation2 + $0x123] sm:$0xff]
      %v3852 = vld [vmem:[#allocation2 + $0x12b] sm:$0xff]
      %v3853 = vld [vmem:[#allocation2 + $0x133] sm:$0xff]
      %v3854 = vld [vmem:[#allocation2 + $0x13b] sm:$0xff]
      %v3855 = vld [vmem:[#allocation2 + $0x143] sm:$0xff]
      %v3856 = vld [vmem:[#allocation2 + $0x14b] sm:$0xff]
      %v3857 = vld [vmem:[#allocation2 + $0x153] sm:$0xff]
      %v3858 = vld [vmem:[#allocation2 + $0x15b] sm:$0xff]
      %v3859 = vld [vmem:[#allocation2 + $0x163] sm:$0xff]
      %v3860 = vld [vmem:[#allocation2 + $0x16b] sm:$0xf]
      %v3861 = vpack.c.bf16 %v3821, %v3820
      %v3862 = vpack.c.bf16 %v3823, %v3822
      %v3863 = vpack.c.bf16 %v3825, %v3824
      %v3864 = vpack.c.bf16 %v3827, %v3826
      %v3865 = vpack.c.bf16 %v3829, %v3828
      %v3866 = vpack.c.bf16 %v3831, %v3830
      %v3867 = vpack.c.bf16 %v3833, %v3832
      %v3868 = vpack.c.bf16 %v3835, %v3834
      %v3869 = vpack.c.bf16 %v3837, %v3836
      %v3870 = vpack.c.bf16 %v3839, %v3838
      %v3871 = vpack.c.bf16 %v3841, %v3840
      %v3872 = vpack.c.bf16 %v3843, %v3842
      %v3873 = vpack.c.bf16 %v3845, %v3844
      %v3874 = vpack.c.bf16 %v3847, %v3846
      %v3875 = vpack.c.bf16 %v3849, %v3848
      %v3876 = vpack.c.bf16 %v3851, %v3850
      %v3877 = vpack.c.bf16 %v3853, %v3852
      %v3878 = vpack.c.bf16 %v3855, %v3854
      %v3879 = vpack.c.bf16 %v3857, %v3856
      %v3880 = vpack.c.bf16 %v3859, %v3858
      %v3881 = vpack.c.bf16 %v3860, %v3860
      %s3882 = scalar_lea.vmem %s4, 512
      %v3883 = vld [vmem:[%s3882] sm:$0xf]
      %v3884 = vld [vmem:[%s3882 + $0x4] sm:$0xf]
      %v3885 = vld [vmem:[%s3882 + $0x8] sm:$0xf]
      %v3886 = vld [vmem:[%s3882 + $0xc] sm:$0xf]
      %v3887 = vld [vmem:[%s3882 + $0x10] sm:$0xf]
      %v3888 = vld [vmem:[%s3882 + $0x14] sm:$0xf]
      %v3889 = vld [vmem:[%s3882 + $0x18] sm:$0xf]
      %v3890 = vld [vmem:[%s3882 + $0x1c] sm:$0xf]
      %v3891 = vld [vmem:[%s3882 + $0x20] sm:$0xf]
      %v3892 = vld [vmem:[%s3882 + $0x24] sm:$0xf]
      %v3893 = vld [vmem:[%s3882 + $0x28] sm:$0xf]
      %v3894 = vld [vmem:[%s3882 + $0x2c] sm:$0xf]
      %v3895 = vld [vmem:[%s3882 + $0x30] sm:$0xf]
      %v3896 = vld [vmem:[%s3882 + $0x34] sm:$0xf]
      %v3897 = vld [vmem:[%s3882 + $0x38] sm:$0xf]
      %v3898 = vld [vmem:[%s3882 + $0x3c] sm:$0xf]
      %v3915 = vunpack.c.l.b16 %v3883
      %v3916 = vunpack.c.l.b16 %v3884
      %v3917 = vunpack.c.l.b16 %v3885
      %v3918 = vunpack.c.l.b16 %v3886
      %v3919 = vunpack.c.l.b16 %v3887
      %v3920 = vunpack.c.l.b16 %v3888
      %v3921 = vunpack.c.l.b16 %v3889
      %v3922 = vunpack.c.l.b16 %v3890
      %v3923 = vunpack.c.l.b16 %v3891
      %v3924 = vunpack.c.l.b16 %v3892
      %v3925 = vunpack.c.l.b16 %v3893
      %v3926 = vunpack.c.l.b16 %v3894
      %v3927 = vunpack.c.l.b16 %v3895
      %v3928 = vunpack.c.l.b16 %v3896
      %v3929 = vunpack.c.l.b16 %v3897
      %v3930 = vunpack.c.l.b16 %v3898
      %v3931 = vpack.c.b16 %v3916, %v3915
      %v3932 = vpack.c.b16 %v3918, %v3917
      %v3933 = vpack.c.b16 %v3920, %v3919
      %v3934 = vpack.c.b16 %v3922, %v3921
      %v3935 = vpack.c.b16 %v3924, %v3923
      %v3936 = vpack.c.b16 %v3926, %v3925
      %v3937 = vpack.c.b16 %v3928, %v3927
      %v3938 = vpack.c.b16 %v3930, %v3929
      %3947 = vmatprep.subr.bf16.mxu0 0
      %3948 = vmatpush1.bf16.msra.mxu0 %v3931
      %3949 = vmatprep.subr.bf16.mxu0 0
      %3950 = vmatpush1.bf16.msra.mxu0 %v3932
      %3951 = vmatprep.subr.bf16.mxu0 0
      %3952 = vmatpush1.bf16.msra.mxu0 %v3933
      %3953 = vmatprep.subr.bf16.mxu0 0
      %3954 = vmatpush1.bf16.msra.mxu0 %v3934
      %3955 = vmatprep.subr.bf16.mxu0 0
      %3956 = vmatpush1.bf16.msra.mxu0 %v3935
      %3957 = vmatprep.subr.bf16.mxu0 0
      %3958 = vmatpush1.bf16.msra.mxu0 %v3936
      %3959 = vmatprep.subr.bf16.mxu0 0
      %3960 = vmatpush1.bf16.msra.mxu0 %v3937
      %3961 = vmatprep.subr.bf16.mxu0 0
      %3962 = vmatpush1.bf16.msra.mxu0 %v3938
      %3963 = vmatprep.subr.bf16.mxu0 0
      %3964 = vmatpush1.bf16.msra.mxu0 0
      %3965 = vmatprep.subr.bf16.mxu0 0
      %3966 = vmatpush1.bf16.msra.mxu0 0
      %3967 = vmatprep.subr.bf16.mxu0 0
      %3968 = vmatpush1.bf16.msra.mxu0 0
      %3969 = vmatprep.subr.bf16.mxu0 0
      %3970 = vmatpush1.bf16.msra.mxu0 0
      %3971 = vmatprep.subr.bf16.mxu0 0
      %3972 = vmatpush1.bf16.msra.mxu0 0
      %3973 = vmatprep.subr.bf16.mxu0 0
      %3974 = vmatpush1.bf16.msra.mxu0 0
      %3975 = vmatprep.subr.bf16.mxu0 0
      %3976 = vmatpush1.bf16.msra.mxu0 0
      %3977 = vmatprep.subr.bf16.mxu0 0
      %3978 = vmatpush1.bf16.msra.mxu0 0
      %3979 = vmatprep.mubr.bf16.mxu0 0
      %3980 = vmatmul.mubr.bf16.gmra.mrb[0].mxu0 %v3861
      %v3981 = vpop.f32.mrb[0].mxu0
      %v3982 = vadd.f32 0.0, %v3981
      %v3983 = vpop.f32.mrb[0].mxu0
      %v3984 = vpop.f32.mrb[0].mxu0
      %v3985 = vadd.f32 0.0, %v3984
      %v3986 = vpop.f32.mrb[0].mxu0
      %3987 = vmatprep.mubr.bf16.mxu0 0
      %3988 = vmatmul.mubr.bf16.gmra.mrb[0].mxu0 %v3862
      %v3989 = vpop.f32.mrb[0].mxu0
      %v3990 = vadd.f32 0.0, %v3989
      %v3991 = vpop.f32.mrb[0].mxu0
      %v3992 = vpop.f32.mrb[0].mxu0
      %v3993 = vadd.f32 0.0, %v3992
      %v3994 = vpop.f32.mrb[0].mxu0
      %3995 = vmatprep.mubr.bf16.mxu0 0
      %3996 = vmatmul.mubr.bf16.gmra.mrb[0].mxu0 %v3863
      %v3997 = vpop.f32.mrb[0].mxu0
      %v3998 = vadd.f32 0.0, %v3997
      %v3999 = vpop.f32.mrb[0].mxu0
      %v4000 = vpop.f32.mrb[0].mxu0
      %v4001 = vadd.f32 0.0, %v4000
      %v4002 = vpop.f32.mrb[0].mxu0
      %4003 = vmatprep.mubr.bf16.mxu0 0
      %4004 = vmatmul.mubr.bf16.gmra.mrb[0].mxu0 %v3864
      %v4005 = vpop.f32.mrb[0].mxu0
      %v4006 = vadd.f32 0.0, %v4005
      %v4007 = vpop.f32.mrb[0].mxu0
      %v4008 = vpop.f32.mrb[0].mxu0
      %v4009 = vadd.f32 0.0, %v4008
      %v4010 = vpop.f32.mrb[0].mxu0
      %4011 = vmatprep.mubr.bf16.mxu0 0
      %4012 = vmatmul.mubr.bf16.gmra.mrb[0].mxu0 %v3865
      %v4013 = vpop.f32.mrb[0].mxu0
      %v4014 = vadd.f32 0.0, %v4013
      %v4015 = vpop.f32.mrb[0].mxu0
      %v4016 = vpop.f32.mrb[0].mxu0
      %v4017 = vadd.f32 0.0, %v4016
      %v4018 = vpop.f32.mrb[0].mxu0
      %4019 = vmatprep.mubr.bf16.mxu0 0
      %4020 = vmatmul.mubr.bf16.gmra.mrb[0].mxu0 %v3866
      %v4021 = vpop.f32.mrb[0].mxu0
      %v4022 = vadd.f32 0.0, %v4021
      %v4023 = vpop.f32.mrb[0].mxu0
      %v4024 = vpop.f32.mrb[0].mxu0
      %v4025 = vadd.f32 0.0, %v4024
      %v4026 = vpop.f32.mrb[0].mxu0
      %4027 = vmatprep.mubr.bf16.mxu0 0
      %4028 = vmatmul.mubr.bf16.gmra.mrb[0].mxu0 %v3867
      %v4029 = vpop.f32.mrb[0].mxu0
      %v4030 = vadd.f32 0.0, %v4029
      %v4031 = vpop.f32.mrb[0].mxu0
      %v4032 = vpop.f32.mrb[0].mxu0
      %v4033 = vadd.f32 0.0, %v4032
      %v4034 = vpop.f32.mrb[0].mxu0
      %4035 = vmatprep.mubr.bf16.mxu0 0
      %4036 = vmatmul.mubr.bf16.gmra.mrb[0].mxu0 %v3868
      %v4037 = vpop.f32.mrb[0].mxu0
      %v4038 = vadd.f32 0.0, %v4037
      %v4039 = vpop.f32.mrb[0].mxu0
      %v4040 = vpop.f32.mrb[0].mxu0
      %v4041 = vadd.f32 0.0, %v4040
      %v4042 = vpop.f32.mrb[0].mxu0
      %4043 = vmatprep.mubr.bf16.mxu0 0
      %4044 = vmatmul.mubr.bf16.gmra.mrb[0].mxu0 %v3869
      %v4045 = vpop.f32.mrb[0].mxu0
      %v4046 = vadd.f32 0.0, %v4045
      %v4047 = vpop.f32.mrb[0].mxu0
      %v4048 = vpop.f32.mrb[0].mxu0
      %v4049 = vadd.f32 0.0, %v4048
      %v4050 = vpop.f32.mrb[0].mxu0
      %4051 = vmatprep.mubr.bf16.mxu0 0
      %4052 = vmatmul.mubr.bf16.gmra.mrb[0].mxu0 %v3870
      %v4053 = vpop.f32.mrb[0].mxu0
      %v4054 = vadd.f32 0.0, %v4053
      %v4055 = vpop.f32.mrb[0].mxu0
      %v4056 = vpop.f32.mrb[0].mxu0
      %v4057 = vadd.f32 0.0, %v4056
      %v4058 = vpop.f32.mrb[0].mxu0
      %4059 = vmatprep.mubr.bf16.mxu0 0
      %4060 = vmatmul.mubr.bf16.gmra.mrb[0].mxu0 %v3871
      %v4061 = vpop.f32.mrb[0].mxu0
      %v4062 = vadd.f32 0.0, %v4061
      %v4063 = vpop.f32.mrb[0].mxu0
      %v4064 = vpop.f32.mrb[0].mxu0
      %v4065 = vadd.f32 0.0, %v4064
      %v4066 = vpop.f32.mrb[0].mxu0
      %4067 = vmatprep.mubr.bf16.mxu0 0
      %4068 = vmatmul.mubr.bf16.gmra.mrb[0].mxu0 %v3872
      %v4069 = vpop.f32.mrb[0].mxu0
      %v4070 = vadd.f32 0.0, %v4069
      %v4071 = vpop.f32.mrb[0].mxu0
      %v4072 = vpop.f32.mrb[0].mxu0
      %v4073 = vadd.f32 0.0, %v4072
      %v4074 = vpop.f32.mrb[0].mxu0
      %4075 = vmatprep.mubr.bf16.mxu0 0
      %4076 = vmatmul.mubr.bf16.gmra.mrb[0].mxu0 %v3873
      %v4077 = vpop.f32.mrb[0].mxu0
      %v4078 = vadd.f32 0.0, %v4077
      %v4079 = vpop.f32.mrb[0].mxu0
      %v4080 = vpop.f32.mrb[0].mxu0
      %v4081 = vadd.f32 0.0, %v4080
      %v4082 = vpop.f32.mrb[0].mxu0
      %4083 = vmatprep.mubr.bf16.mxu0 0
      %4084 = vmatmul.mubr.bf16.gmra.mrb[0].mxu0 %v3874
      %v4085 = vpop.f32.mrb[0].mxu0
      %v4086 = vadd.f32 0.0, %v4085
      %v4087 = vpop.f32.mrb[0].mxu0
      %v4088 = vpop.f32.mrb[0].mxu0
      %v4089 = vadd.f32 0.0, %v4088
      %v4090 = vpop.f32.mrb[0].mxu0
      %4091 = vmatprep.mubr.bf16.mxu0 0
      %4092 = vmatmul.mubr.bf16.gmra.mrb[0].mxu0 %v3875
      %v4093 = vpop.f32.mrb[0].mxu0
      %v4094 = vadd.f32 0.0, %v4093
      %v4095 = vpop.f32.mrb[0].mxu0
      %v4096 = vpop.f32.mrb[0].mxu0
      %v4097 = vadd.f32 0.0, %v4096
      %v4098 = vpop.f32.mrb[0].mxu0
      %4099 = vmatprep.mubr.bf16.mxu0 0
      %4100 = vmatmul.mubr.bf16.gmra.mrb[0].mxu0 %v3876
      %v4101 = vpop.f32.mrb[0].mxu0
      %v4102 = vadd.f32 0.0, %v4101
      %v4103 = vpop.f32.mrb[0].mxu0
      %v4104 = vpop.f32.mrb[0].mxu0
      %v4105 = vadd.f32 0.0, %v4104
      %v4106 = vpop.f32.mrb[0].mxu0
      %4107 = vmatprep.mubr.bf16.mxu0 0
      %4108 = vmatmul.mubr.bf16.gmra.mrb[0].mxu0 %v3877
      %v4109 = vpop.f32.mrb[0].mxu0
      %v4110 = vadd.f32 0.0, %v4109
      %v4111 = vpop.f32.mrb[0].mxu0
      %v4112 = vpop.f32.mrb[0].mxu0
      %v4113 = vadd.f32 0.0, %v4112
      %v4114 = vpop.f32.mrb[0].mxu0
      %4115 = vmatprep.mubr.bf16.mxu0 0
      %4116 = vmatmul.mubr.bf16.gmra.mrb[0].mxu0 %v3878
      %v4117 = vpop.f32.mrb[0].mxu0
      %v4118 = vadd.f32 0.0, %v4117
      %v4119 = vpop.f32.mrb[0].mxu0
      %v4120 = vpop.f32.mrb[0].mxu0
      %v4121 = vadd.f32 0.0, %v4120
      %v4122 = vpop.f32.mrb[0].mxu0
      %4123 = vmatprep.mubr.bf16.mxu0 0
      %4124 = vmatmul.mubr.bf16.gmra.mrb[0].mxu0 %v3879
      %v4125 = vpop.f32.mrb[0].mxu0
      %v4126 = vadd.f32 0.0, %v4125
      %v4127 = vpop.f32.mrb[0].mxu0
      %v4128 = vpop.f32.mrb[0].mxu0
      %v4129 = vadd.f32 0.0, %v4128
      %v4130 = vpop.f32.mrb[0].mxu0
      %4131 = vmatprep.mubr.bf16.mxu0 0
      %4132 = vmatmul.mubr.bf16.gmra.mrb[0].mxu0 %v3880
      %v4133 = vpop.f32.mrb[0].mxu0
      %v4134 = vadd.f32 0.0, %v4133
      %v4135 = vpop.f32.mrb[0].mxu0
      %v4136 = vpop.f32.mrb[0].mxu0
      %v4137 = vadd.f32 0.0, %v4136
      %v4138 = vpop.f32.mrb[0].mxu0
      %4139 = vmatprep.mubr.bf16.mxu0 0
      %4140 = vmatmul.mubr.bf16.gmra.mrb[0].mxu0 %v3881
      %v4141 = vpop.f32.mrb[0].mxu0
      %v4142 = vadd.f32 0.0, %v4141
      %v4143 = vpop.f32.mrb[0].mxu0
      %v4144 = vpop.f32.mrb[0].mxu0
      %v4145 = vpop.f32.mrb[0].mxu0
      %4146 = vdwg.mxu0
      %v4147 = vadd.f32 %v3779, %v3982
      %v4148 = vadd.f32 %v3780, %v3985
      %v4149 = vadd.f32 %v3781, %v3990
      %v4150 = vadd.f32 %v3782, %v3993
      %v4151 = vadd.f32 %v3783, %v3998
      %v4152 = vadd.f32 %v3784, %v4001
      %v4153 = vadd.f32 %v3785, %v4006
      %v4154 = vadd.f32 %v3786, %v4009
      %v4155 = vadd.f32 %v3787, %v4014
      %v4156 = vadd.f32 %v3788, %v4017
      %v4157 = vadd.f32 %v3789, %v4022
      %v4158 = vadd.f32 %v3790, %v4025
      %v4159 = vadd.f32 %v3791, %v4030
      %v4160 = vadd.f32 %v3792, %v4033
      %v4161 = vadd.f32 %v3793, %v4038
      %v4162 = vadd.f32 %v3794, %v4041
      %v4163 = vadd.f32 %v3795, %v4046
      %v4164 = vadd.f32 %v3796, %v4049
      %v4165 = vadd.f32 %v3797, %v4054
      %v4166 = vadd.f32 %v3798, %v4057
      %v4167 = vadd.f32 %v3799, %v4062
      %v4168 = vadd.f32 %v3800, %v4065
      %v4169 = vadd.f32 %v3801, %v4070
      %v4170 = vadd.f32 %v3802, %v4073
      %v4171 = vadd.f32 %v3803, %v4078
      %v4172 = vadd.f32 %v3804, %v4081
      %v4173 = vadd.f32 %v3805, %v4086
      %v4174 = vadd.f32 %v3806, %v4089
      %v4175 = vadd.f32 %v3807, %v4094
      %v4176 = vadd.f32 %v3808, %v4097
      %v4177 = vadd.f32 %v3809, %v4102
      %v4178 = vadd.f32 %v3810, %v4105
      %v4179 = vadd.f32 %v3811, %v4110
      %v4180 = vadd.f32 %v3812, %v4113
      %v4181 = vadd.f32 %v3813, %v4118
      %v4182 = vadd.f32 %v3814, %v4121
      %v4183 = vadd.f32 %v3815, %v4126
      %v4184 = vadd.f32 %v3816, %v4129
      %v4185 = vadd.f32 %v3817, %v4134
      %v4186 = vadd.f32 %v3818, %v4137
      %v4187 = vadd.f32 %v3819, %v4142
      %v4188 = vld [vmem:[%s5] sm:$0x1]
      %v4190 = vlaneseq
      %v4191 = vshrl.u32 %v4190, 7
      %v4192 = vsub.s32 0, %v4191
      %v4193 = vrot.slane %v4188, %v4192
      %v4195 = vadd.f32 %v4147, %v4193
      %v4196 = vadd.f32 %v4148, %v4193
      %v4197 = vadd.f32 %v4149, %v4193
      %v4198 = vadd.f32 %v4150, %v4193
      %v4199 = vadd.f32 %v4151, %v4193
      %v4200 = vadd.f32 %v4152, %v4193
      %v4201 = vadd.f32 %v4153, %v4193
      %v4202 = vadd.f32 %v4154, %v4193
      %v4203 = vadd.f32 %v4155, %v4193
      %v4204 = vadd.f32 %v4156, %v4193
      %v4205 = vadd.f32 %v4157, %v4193
      %v4206 = vadd.f32 %v4158, %v4193
      %v4207 = vadd.f32 %v4159, %v4193
      %v4208 = vadd.f32 %v4160, %v4193
      %v4209 = vadd.f32 %v4161, %v4193
      %v4210 = vadd.f32 %v4162, %v4193
      %v4211 = vadd.f32 %v4163, %v4193
      %v4212 = vadd.f32 %v4164, %v4193
      %v4213 = vadd.f32 %v4165, %v4193
      %v4214 = vadd.f32 %v4166, %v4193
      %v4215 = vadd.f32 %v4167, %v4193
      %v4216 = vadd.f32 %v4168, %v4193
      %v4217 = vadd.f32 %v4169, %v4193
      %v4218 = vadd.f32 %v4170, %v4193
      %v4219 = vadd.f32 %v4171, %v4193
      %v4220 = vadd.f32 %v4172, %v4193
      %v4221 = vadd.f32 %v4173, %v4193
      %v4222 = vadd.f32 %v4174, %v4193
      %v4223 = vadd.f32 %v4175, %v4193
      %v4224 = vadd.f32 %v4176, %v4193
      %v4225 = vadd.f32 %v4177, %v4193
      %v4226 = vadd.f32 %v4178, %v4193
      %v4227 = vadd.f32 %v4179, %v4193
      %v4228 = vadd.f32 %v4180, %v4193
      %v4229 = vadd.f32 %v4181, %v4193
      %v4230 = vadd.f32 %v4182, %v4193
      %v4231 = vadd.f32 %v4183, %v4193
      %v4232 = vadd.f32 %v4184, %v4193
      %v4233 = vadd.f32 %v4185, %v4193
      %v4234 = vadd.f32 %v4186, %v4193
      %v4235 = vadd.f32 %v4187, %v4193
      %v4236 = vmax.f32 %v4195, 0.0
      %v4237 = vmax.f32 %v4196, 0.0
      %v4238 = vmax.f32 %v4197, 0.0
      %v4239 = vmax.f32 %v4198, 0.0
      %v4240 = vmax.f32 %v4199, 0.0
      %v4241 = vmax.f32 %v4200, 0.0
      %v4242 = vmax.f32 %v4201, 0.0
      %v4243 = vmax.f32 %v4202, 0.0
      %v4244 = vmax.f32 %v4203, 0.0
      %v4245 = vmax.f32 %v4204, 0.0
      %v4246 = vmax.f32 %v4205, 0.0
      %v4247 = vmax.f32 %v4206, 0.0
      %v4248 = vmax.f32 %v4207, 0.0
      %v4249 = vmax.f32 %v4208, 0.0
      %v4250 = vmax.f32 %v4209, 0.0
      %v4251 = vmax.f32 %v4210, 0.0
      %v4252 = vmax.f32 %v4211, 0.0
      %v4253 = vmax.f32 %v4212, 0.0
      %v4254 = vmax.f32 %v4213, 0.0
      %v4255 = vmax.f32 %v4214, 0.0
      %v4256 = vmax.f32 %v4215, 0.0
      %v4257 = vmax.f32 %v4216, 0.0
      %v4258 = vmax.f32 %v4217, 0.0
      %v4259 = vmax.f32 %v4218, 0.0
      %v4260 = vmax.f32 %v4219, 0.0
      %v4261 = vmax.f32 %v4220, 0.0
      %v4262 = vmax.f32 %v4221, 0.0
      %v4263 = vmax.f32 %v4222, 0.0
      %v4264 = vmax.f32 %v4223, 0.0
      %v4265 = vmax.f32 %v4224, 0.0
      %v4266 = vmax.f32 %v4225, 0.0
      %v4267 = vmax.f32 %v4226, 0.0
      %v4268 = vmax.f32 %v4227, 0.0
      %v4269 = vmax.f32 %v4228, 0.0
      %v4270 = vmax.f32 %v4229, 0.0
      %v4271 = vmax.f32 %v4230, 0.0
      %v4272 = vmax.f32 %v4231, 0.0
      %v4273 = vmax.f32 %v4232, 0.0
      %v4274 = vmax.f32 %v4233, 0.0
      %v4275 = vmax.f32 %v4234, 0.0
      %v4276 = vmax.f32 %v4235, 0.0
      %v4277 = vld [vmem:[%s1 + $0x18] sm:$0xff]
      %v4278 = vld [vmem:[%s1 + $0x20] sm:$0xff]
      %v4279 = vld [vmem:[%s1 + $0x28] sm:$0xff]
      %v4280 = vld [vmem:[%s1 + $0x30] sm:$0xff]
      %v4281 = vld [vmem:[%s1 + $0x38] sm:$0xff]
      %v4282 = vld [vmem:[%s1 + $0x40] sm:$0xff]
      %v4283 = vld [vmem:[%s1 + $0x48] sm:$0xff]
      %v4284 = vld [vmem:[%s1 + $0x50] sm:$0xff]
      %v4285 = vld [vmem:[%s1 + $0x58] sm:$0xff]
      %v4286 = vld [vmem:[%s1 + $0x60] sm:$0xff]
      %v4287 = vld [vmem:[%s1 + $0x68] sm:$0xff]
      %v4288 = vld [vmem:[%s1 + $0x70] sm:$0xff]
      %v4289 = vld [vmem:[%s1 + $0x78] sm:$0xff]
      %v4290 = vld [vmem:[%s1 + $0x80] sm:$0xff]
      %v4291 = vld [vmem:[%s1 + $0x88] sm:$0xff]
      %v4292 = vld [vmem:[%s1 + $0x90] sm:$0xff]
      %v4293 = vld [vmem:[%s1 + $0x98] sm:$0xff]
      %v4294 = vld [vmem:[%s1 + $0xa0] sm:$0xff]
      %v4295 = vld [vmem:[%s1 + $0xa8] sm:$0xff]
      %v4296 = vld [vmem:[%s1 + $0xb0] sm:$0xff]
      %v4297 = vld [vmem:[%s1 + $0xb8] sm:$0xff]
      %v4298 = vld [vmem:[%s1 + $0xc0] sm:$0xff]
      %v4299 = vld [vmem:[%s1 + $0xc8] sm:$0xff]
      %v4300 = vld [vmem:[%s1 + $0xd0] sm:$0xff]
      %v4301 = vld [vmem:[%s1 + $0xd8] sm:$0xff]
      %v4302 = vld [vmem:[%s1 + $0xe0] sm:$0xff]
      %v4303 = vld [vmem:[%s1 + $0xe8] sm:$0xff]
      %v4304 = vld [vmem:[%s1 + $0xf0] sm:$0xff]
      %v4305 = vld [vmem:[%s1 + $0xf8] sm:$0xff]
      %v4306 = vld [vmem:[%s1 + $0x100] sm:$0xff]
      %v4307 = vld [vmem:[%s1 + $0x108] sm:$0xff]
      %v4308 = vld [vmem:[%s1 + $0x110] sm:$0xff]
      %v4309 = vld [vmem:[%s1 + $0x118] sm:$0xff]
      %v4310 = vld [vmem:[%s1 + $0x120] sm:$0xff]
      %v4311 = vld [vmem:[%s1 + $0x128] sm:$0xff]
      %v4312 = vld [vmem:[%s1 + $0x130] sm:$0xff]
      %v4313 = vld [vmem:[%s1 + $0x138] sm:$0xff]
      %v4314 = vld [vmem:[%s1 + $0x140] sm:$0xff]
      %v4315 = vld [vmem:[%s1 + $0x148] sm:$0xff]
      %v4316 = vld [vmem:[%s1 + $0x150] sm:$0xff]
      %v4317 = vld [vmem:[%s1 + $0x158] sm:$0xf]
      %4319 = vset.pattern.permute.xlu0 0
      %4320 = vperm.xlu0 %4319, %v4277
      %v4321 = vpop.permute.xlu0 %4320
      %4324 = vset.pattern.permute.xlu0 0
      %4325 = vperm.xlu0 %4324, %v4278
      %v4326 = vpop.permute.xlu0 %4325
      %4329 = vset.pattern.permute.xlu0 0
      %4330 = vperm.xlu0 %4329, %v4279
      %v4331 = vpop.permute.xlu0 %4330
      %4334 = vset.pattern.permute.xlu0 0
      %4335 = vperm.xlu0 %4334, %v4280
      %v4336 = vpop.permute.xlu0 %4335
      %4339 = vset.pattern.permute.xlu0 0
      %4340 = vperm.xlu0 %4339, %v4281
      %v4341 = vpop.permute.xlu0 %4340
      %4344 = vset.pattern.permute.xlu0 0
      %4345 = vperm.xlu0 %4344, %v4282
      %v4346 = vpop.permute.xlu0 %4345
      %4349 = vset.pattern.permute.xlu0 0
      %4350 = vperm.xlu0 %4349, %v4283
      %v4351 = vpop.permute.xlu0 %4350
      %4354 = vset.pattern.permute.xlu0 0
      %4355 = vperm.xlu0 %4354, %v4284
      %v4356 = vpop.permute.xlu0 %4355
      %4359 = vset.pattern.permute.xlu0 0
      %4360 = vperm.xlu0 %4359, %v4285
      %v4361 = vpop.permute.xlu0 %4360
      %4364 = vset.pattern.permute.xlu0 0
      %4365 = vperm.xlu0 %4364, %v4286
      %v4366 = vpop.permute.xlu0 %4365
      %4369 = vset.pattern.permute.xlu0 0
      %4370 = vperm.xlu0 %4369, %v4287
      %v4371 = vpop.permute.xlu0 %4370
      %4374 = vset.pattern.permute.xlu0 0
      %4375 = vperm.xlu0 %4374, %v4288
      %v4376 = vpop.permute.xlu0 %4375
      %4379 = vset.pattern.permute.xlu0 0
      %4380 = vperm.xlu0 %4379, %v4289
      %v4381 = vpop.permute.xlu0 %4380
      %4384 = vset.pattern.permute.xlu0 0
      %4385 = vperm.xlu0 %4384, %v4290
      %v4386 = vpop.permute.xlu0 %4385
      %4389 = vset.pattern.permute.xlu0 0
      %4390 = vperm.xlu0 %4389, %v4291
      %v4391 = vpop.permute.xlu0 %4390
      %4394 = vset.pattern.permute.xlu0 0
      %4395 = vperm.xlu0 %4394, %v4292
      %v4396 = vpop.permute.xlu0 %4395
      %4399 = vset.pattern.permute.xlu0 0
      %4400 = vperm.xlu0 %4399, %v4293
      %v4401 = vpop.permute.xlu0 %4400
      %4404 = vset.pattern.permute.xlu0 0
      %4405 = vperm.xlu0 %4404, %v4294
      %v4406 = vpop.permute.xlu0 %4405
      %4409 = vset.pattern.permute.xlu0 0
      %4410 = vperm.xlu0 %4409, %v4295
      %v4411 = vpop.permute.xlu0 %4410
      %4414 = vset.pattern.permute.xlu0 0
      %4415 = vperm.xlu0 %4414, %v4296
      %v4416 = vpop.permute.xlu0 %4415
      %4419 = vset.pattern.permute.xlu0 0
      %4420 = vperm.xlu0 %4419, %v4297
      %v4421 = vpop.permute.xlu0 %4420
      %4424 = vset.pattern.permute.xlu0 0
      %4425 = vperm.xlu0 %4424, %v4298
      %v4426 = vpop.permute.xlu0 %4425
      %4429 = vset.pattern.permute.xlu0 0
      %4430 = vperm.xlu0 %4429, %v4299
      %v4431 = vpop.permute.xlu0 %4430
      %4434 = vset.pattern.permute.xlu0 0
      %4435 = vperm.xlu0 %4434, %v4300
      %v4436 = vpop.permute.xlu0 %4435
      %4439 = vset.pattern.permute.xlu0 0
      %4440 = vperm.xlu0 %4439, %v4301
      %v4441 = vpop.permute.xlu0 %4440
      %4444 = vset.pattern.permute.xlu0 0
      %4445 = vperm.xlu0 %4444, %v4302
      %v4446 = vpop.permute.xlu0 %4445
      %4449 = vset.pattern.permute.xlu0 0
      %4450 = vperm.xlu0 %4449, %v4303
      %v4451 = vpop.permute.xlu0 %4450
      %4454 = vset.pattern.permute.xlu0 0
      %4455 = vperm.xlu0 %4454, %v4304
      %v4456 = vpop.permute.xlu0 %4455
      %4459 = vset.pattern.permute.xlu0 0
      %4460 = vperm.xlu0 %4459, %v4305
      %v4461 = vpop.permute.xlu0 %4460
      %4464 = vset.pattern.permute.xlu0 0
      %4465 = vperm.xlu0 %4464, %v4306
      %v4466 = vpop.permute.xlu0 %4465
      %4469 = vset.pattern.permute.xlu0 0
      %4470 = vperm.xlu0 %4469, %v4307
      %v4471 = vpop.permute.xlu0 %4470
      %4474 = vset.pattern.permute.xlu0 0
      %4475 = vperm.xlu0 %4474, %v4308
      %v4476 = vpop.permute.xlu0 %4475
      %4479 = vset.pattern.permute.xlu0 0
      %4480 = vperm.xlu0 %4479, %v4309
      %v4481 = vpop.permute.xlu0 %4480
      %4484 = vset.pattern.permute.xlu0 0
      %4485 = vperm.xlu0 %4484, %v4310
      %v4486 = vpop.permute.xlu0 %4485
      %4489 = vset.pattern.permute.xlu0 0
      %4490 = vperm.xlu0 %4489, %v4311
      %v4491 = vpop.permute.xlu0 %4490
      %4494 = vset.pattern.permute.xlu0 0
      %4495 = vperm.xlu0 %4494, %v4312
      %v4496 = vpop.permute.xlu0 %4495
      %4499 = vset.pattern.permute.xlu0 0
      %4500 = vperm.xlu0 %4499, %v4313
      %v4501 = vpop.permute.xlu0 %4500
      %4504 = vset.pattern.permute.xlu0 0
      %4505 = vperm.xlu0 %4504, %v4314
      %v4506 = vpop.permute.xlu0 %4505
      %4509 = vset.pattern.permute.xlu0 0
      %4510 = vperm.xlu0 %4509, %v4315
      %v4511 = vpop.permute.xlu0 %4510
      %4514 = vset.pattern.permute.xlu0 0
      %4515 = vperm.xlu0 %4514, %v4316
      %v4516 = vpop.permute.xlu0 %4515
      %4519 = vset.pattern.permute.xlu0 0
      %4520 = vperm.xlu0 %4519, %v4317
      %v4521 = vpop.permute.xlu0 %4520
      %v4523 = vmul.f32 %v4236, %v4321
      %v4524 = vmul.f32 %v4237, %v4326
      %v4525 = vmul.f32 %v4238, %v4331
      %v4526 = vmul.f32 %v4239, %v4336
      %v4527 = vmul.f32 %v4240, %v4341
      %v4528 = vmul.f32 %v4241, %v4346
      %v4529 = vmul.f32 %v4242, %v4351
      %v4530 = vmul.f32 %v4243, %v4356
      %v4531 = vmul.f32 %v4244, %v4361
      %v4532 = vmul.f32 %v4245, %v4366
      %v4533 = vmul.f32 %v4246, %v4371
      %v4534 = vmul.f32 %v4247, %v4376
      %v4535 = vmul.f32 %v4248, %v4381
      %v4536 = vmul.f32 %v4249, %v4386
      %v4537 = vmul.f32 %v4250, %v4391
      %v4538 = vmul.f32 %v4251, %v4396
      %v4539 = vmul.f32 %v4252, %v4401
      %v4540 = vmul.f32 %v4253, %v4406
      %v4541 = vmul.f32 %v4254, %v4411
      %v4542 = vmul.f32 %v4255, %v4416
      %v4543 = vmul.f32 %v4256, %v4421
      %v4544 = vmul.f32 %v4257, %v4426
      %v4545 = vmul.f32 %v4258, %v4431
      %v4546 = vmul.f32 %v4259, %v4436
      %v4547 = vmul.f32 %v4260, %v4441
      %v4548 = vmul.f32 %v4261, %v4446
      %v4549 = vmul.f32 %v4262, %v4451
      %v4550 = vmul.f32 %v4263, %v4456
      %v4551 = vmul.f32 %v4264, %v4461
      %v4552 = vmul.f32 %v4265, %v4466
      %v4553 = vmul.f32 %v4266, %v4471
      %v4554 = vmul.f32 %v4267, %v4476
      %v4555 = vmul.f32 %v4268, %v4481
      %v4556 = vmul.f32 %v4269, %v4486
      %v4557 = vmul.f32 %v4270, %v4491
      %v4558 = vmul.f32 %v4271, %v4496
      %v4559 = vmul.f32 %v4272, %v4501
      %v4560 = vmul.f32 %v4273, %v4506
      %v4561 = vmul.f32 %v4274, %v4511
      %v4562 = vmul.f32 %v4275, %v4516
      %v4563 = vmul.f32 %v4276, %v4521
      %4564 = vst [vmem:[#allocation3 + $0x18] sm:$0xff] %v4523
      %4565 = vst [vmem:[#allocation3 + $0x20] sm:$0xff] %v4524
      %4566 = vst [vmem:[#allocation3 + $0x28] sm:$0xff] %v4525
      %4567 = vst [vmem:[#allocation3 + $0x30] sm:$0xff] %v4526
      %4568 = vst [vmem:[#allocation3 + $0x38] sm:$0xff] %v4527
      %4569 = vst [vmem:[#allocation3 + $0x40] sm:$0xff] %v4528
      %4570 = vst [vmem:[#allocation3 + $0x48] sm:$0xff] %v4529
      %4571 = vst [vmem:[#allocation3 + $0x50] sm:$0xff] %v4530
      %4572 = vst [vmem:[#allocation3 + $0x58] sm:$0xff] %v4531
      %4573 = vst [vmem:[#allocation3 + $0x60] sm:$0xff] %v4532
      %4574 = vst [vmem:[#allocation3 + $0x68] sm:$0xff] %v4533
      %4575 = vst [vmem:[#allocation3 + $0x70] sm:$0xff] %v4534
      %4576 = vst [vmem:[#allocation3 + $0x78] sm:$0xff] %v4535
      %4577 = vst [vmem:[#allocation3 + $0x80] sm:$0xff] %v4536
      %4578 = vst [vmem:[#allocation3 + $0x88] sm:$0xff] %v4537
      %4579 = vst [vmem:[#allocation3 + $0x90] sm:$0xff] %v4538
      %4580 = vst [vmem:[#allocation3 + $0x98] sm:$0xff] %v4539
      %4581 = vst [vmem:[#allocation3 + $0xa0] sm:$0xff] %v4540
      %4582 = vst [vmem:[#allocation3 + $0xa8] sm:$0xff] %v4541
      %4583 = vst [vmem:[#allocation3 + $0xb0] sm:$0xff] %v4542
      %4584 = vst [vmem:[#allocation3 + $0xb8] sm:$0xff] %v4543
      %4585 = vst [vmem:[#allocation3 + $0xc0] sm:$0xff] %v4544
      %4586 = vst [vmem:[#allocation3 + $0xc8] sm:$0xff] %v4545
      %4587 = vst [vmem:[#allocation3 + $0xd0] sm:$0xff] %v4546
      %4588 = vst [vmem:[#allocation3 + $0xd8] sm:$0xff] %v4547
      %4589 = vst [vmem:[#allocation3 + $0xe0] sm:$0xff] %v4548
      %4590 = vst [vmem:[#allocation3 + $0xe8] sm:$0xff] %v4549
      %4591 = vst [vmem:[#allocation3 + $0xf0] sm:$0xff] %v4550
      %4592 = vst [vmem:[#allocation3 + $0xf8] sm:$0xff] %v4551
      %4593 = vst [vmem:[#allocation3 + $0x100] sm:$0xff] %v4552
      %4594 = vst [vmem:[#allocation3 + $0x108] sm:$0xff] %v4553
      %4595 = vst [vmem:[#allocation3 + $0x110] sm:$0xff] %v4554
      %4596 = vst [vmem:[#allocation3 + $0x118] sm:$0xff] %v4555
      %4597 = vst [vmem:[#allocation3 + $0x120] sm:$0xff] %v4556
      %4598 = vst [vmem:[#allocation3 + $0x128] sm:$0xff] %v4557
      %4599 = vst [vmem:[#allocation3 + $0x130] sm:$0xff] %v4558
      %4600 = vst [vmem:[#allocation3 + $0x138] sm:$0xff] %v4559
      %4601 = vst [vmem:[#allocation3 + $0x140] sm:$0xff] %v4560
      %4602 = vst [vmem:[#allocation3 + $0x148] sm:$0xff] %v4561
      %4603 = vst [vmem:[#allocation3 + $0x150] sm:$0xff] %v4562
      %4604 = vst [vmem:[#allocation3 + $0x158] sm:$0xf] %v4563
      %v4605 = vld [vmem:[#allocation3 + $0x5] sm:$0xff]
      %v4606 = vld [vmem:[#allocation3 + $0xd] sm:$0xff]
      %v4607 = vld [vmem:[#allocation3 + $0x15] sm:$0xff]
      %v4608 = vld [vmem:[#allocation3 + $0x1d] sm:$0xff]
      %v4609 = vld [vmem:[#allocation3 + $0x25] sm:$0xff]
      %v4610 = vld [vmem:[#allocation3 + $0x2d] sm:$0xff]
      %v4611 = vld [vmem:[#allocation3 + $0x35] sm:$0xff]
      %v4612 = vld [vmem:[#allocation3 + $0x3d] sm:$0xff]
      %v4613 = vld [vmem:[#allocation3 + $0x45] sm:$0xff]
      %v4614 = vld [vmem:[#allocation3 + $0x4d] sm:$0xff]
      %v4615 = vld [vmem:[#allocation3 + $0x55] sm:$0xff]
      %v4616 = vld [vmem:[#allocation3 + $0x5d] sm:$0xff]
      %v4617 = vld [vmem:[#allocation3 + $0x65] sm:$0xff]
      %v4618 = vld [vmem:[#allocation3 + $0x6d] sm:$0xff]
      %v4619 = vld [vmem:[#allocation3 + $0x75] sm:$0xff]
      %v4620 = vld [vmem:[#allocation3 + $0x7d] sm:$0xff]
      %v4621 = vld [vmem:[#allocation3 + $0x85] sm:$0xff]
      %v4622 = vld [vmem:[#allocation3 + $0x8d] sm:$0xff]
      %v4623 = vld [vmem:[#allocation3 + $0x95] sm:$0xff]
      %v4624 = vld [vmem:[#allocation3 + $0x9d] sm:$0xff]
      %v4625 = vld [vmem:[#allocation3 + $0xa5] sm:$0xff]
      %v4626 = vld [vmem:[#allocation3 + $0xad] sm:$0xff]
      %v4627 = vld [vmem:[#allocation3 + $0xb5] sm:$0xff]
      %v4628 = vld [vmem:[#allocation3 + $0xbd] sm:$0xff]
      %v4629 = vld [vmem:[#allocation3 + $0xc5] sm:$0xff]
      %v4630 = vld [vmem:[#allocation3 + $0xcd] sm:$0xff]
      %v4631 = vld [vmem:[#allocation3 + $0xd5] sm:$0xff]
      %v4632 = vld [vmem:[#allocation3 + $0xdd] sm:$0xff]
      %v4633 = vld [vmem:[#allocation3 + $0xe5] sm:$0xff]
      %v4634 = vld [vmem:[#allocation3 + $0xed] sm:$0xff]
      %v4635 = vld [vmem:[#allocation3 + $0xf5] sm:$0xff]
      %v4636 = vld [vmem:[#allocation3 + $0xfd] sm:$0xff]
      %v4637 = vld [vmem:[#allocation3 + $0x105] sm:$0xff]
      %v4638 = vld [vmem:[#allocation3 + $0x10d] sm:$0xff]
      %v4639 = vld [vmem:[#allocation3 + $0x115] sm:$0xff]
      %v4640 = vld [vmem:[#allocation3 + $0x11d] sm:$0xff]
      %v4641 = vld [vmem:[#allocation3 + $0x125] sm:$0xff]
      %v4642 = vld [vmem:[#allocation3 + $0x12d] sm:$0xff]
      %v4643 = vld [vmem:[#allocation3 + $0x135] sm:$0xff]
      %v4644 = vld [vmem:[#allocation3 + $0x13d] sm:$0xff]
      %v4645 = vld [vmem:[#allocation3 + $0x145] sm:$0xf]
      %v4646 = vpack.c.bf16 %v4606, %v4605
      %v4647 = vpack.c.bf16 %v4608, %v4607
      %v4648 = vpack.c.bf16 %v4610, %v4609
      %v4649 = vpack.c.bf16 %v4612, %v4611
      %v4650 = vpack.c.bf16 %v4614, %v4613
      %v4651 = vpack.c.bf16 %v4616, %v4615
      %v4652 = vpack.c.bf16 %v4618, %v4617
      %v4653 = vpack.c.bf16 %v4620, %v4619
      %v4654 = vpack.c.bf16 %v4622, %v4621
      %v4655 = vpack.c.bf16 %v4624, %v4623
      %v4656 = vpack.c.bf16 %v4626, %v4625
      %v4657 = vpack.c.bf16 %v4628, %v4627
      %v4658 = vpack.c.bf16 %v4630, %v4629
      %v4659 = vpack.c.bf16 %v4632, %v4631
      %v4660 = vpack.c.bf16 %v4634, %v4633
      %v4661 = vpack.c.bf16 %v4636, %v4635
      %v4662 = vpack.c.bf16 %v4638, %v4637
      %v4663 = vpack.c.bf16 %v4640, %v4639
      %v4664 = vpack.c.bf16 %v4642, %v4641
      %v4665 = vpack.c.bf16 %v4644, %v4643
      %v4666 = vpack.c.bf16 %v4645, %v4645
      %v4667 = vld [vmem:[%s6] sm:$0xf]
      %v4668 = vld [vmem:[%s6 + $0x4] sm:$0xf]
      %v4669 = vld [vmem:[%s6 + $0x8] sm:$0xf]
      %v4670 = vld [vmem:[%s6 + $0xc] sm:$0xf]
      %v4671 = vld [vmem:[%s6 + $0x10] sm:$0xf]
      %v4672 = vld [vmem:[%s6 + $0x14] sm:$0xf]
      %v4673 = vld [vmem:[%s6 + $0x18] sm:$0xf]
      %v4674 = vld [vmem:[%s6 + $0x1c] sm:$0xf]
      %v4675 = vld [vmem:[%s6 + $0x20] sm:$0xf]
      %v4676 = vld [vmem:[%s6 + $0x24] sm:$0xf]
      %v4677 = vld [vmem:[%s6 + $0x28] sm:$0xf]
      %v4678 = vld [vmem:[%s6 + $0x2c] sm:$0xf]
      %v4679 = vld [vmem:[%s6 + $0x30] sm:$0xf]
      %v4680 = vld [vmem:[%s6 + $0x34] sm:$0xf]
      %v4681 = vld [vmem:[%s6 + $0x38] sm:$0xf]
      %v4682 = vld [vmem:[%s6 + $0x3c] sm:$0xf]
      %v4683 = vld [vmem:[#allocation3 + $0x6] sm:$0xff]
      %v4684 = vld [vmem:[#allocation3 + $0xe] sm:$0xff]
      %v4685 = vld [vmem:[#allocation3 + $0x16] sm:$0xff]
      %v4686 = vld [vmem:[#allocation3 + $0x1e] sm:$0xff]
      %v4687 = vld [vmem:[#allocation3 + $0x26] sm:$0xff]
      %v4688 = vld [vmem:[#allocation3 + $0x2e] sm:$0xff]
      %v4689 = vld [vmem:[#allocation3 + $0x36] sm:$0xff]
      %v4690 = vld [vmem:[#allocation3 + $0x3e] sm:$0xff]
      %v4691 = vld [vmem:[#allocation3 + $0x46] sm:$0xff]
      %v4692 = vld [vmem:[#allocation3 + $0x4e] sm:$0xff]
      %v4693 = vld [vmem:[#allocation3 + $0x56] sm:$0xff]
      %v4694 = vld [vmem:[#allocation3 + $0x5e] sm:$0xff]
      %v4695 = vld [vmem:[#allocation3 + $0x66] sm:$0xff]
      %v4696 = vld [vmem:[#allocation3 + $0x6e] sm:$0xff]
      %v4697 = vld [vmem:[#allocation3 + $0x76] sm:$0xff]
      %v4698 = vld [vmem:[#allocation3 + $0x7e] sm:$0xff]
      %v4699 = vld [vmem:[#allocation3 + $0x86] sm:$0xff]
      %v4700 = vld [vmem:[#allocation3 + $0x8e] sm:$0xff]
      %v4701 = vld [vmem:[#allocation3 + $0x96] sm:$0xff]
      %v4702 = vld [vmem:[#allocation3 + $0x9e] sm:$0xff]
      %v4703 = vld [vmem:[#allocation3 + $0xa6] sm:$0xff]
      %v4704 = vld [vmem:[#allocation3 + $0xae] sm:$0xff]
      %v4705 = vld [vmem:[#allocation3 + $0xb6] sm:$0xff]
      %v4706 = vld [vmem:[#allocation3 + $0xbe] sm:$0xff]
      %v4707 = vld [vmem:[#allocation3 + $0xc6] sm:$0xff]
      %v4708 = vld [vmem:[#allocation3 + $0xce] sm:$0xff]
      %v4709 = vld [vmem:[#allocation3 + $0xd6] sm:$0xff]
      %v4710 = vld [vmem:[#allocation3 + $0xde] sm:$0xff]
      %v4711 = vld [vmem:[#allocation3 + $0xe6] sm:$0xff]
      %v4712 = vld [vmem:[#allocation3 + $0xee] sm:$0xff]
      %v4713 = vld [vmem:[#allocation3 + $0xf6] sm:$0xff]
      %v4714 = vld [vmem:[#allocation3 + $0xfe] sm:$0xff]
      %v4715 = vld [vmem:[#allocation3 + $0x106] sm:$0xff]
      %v4716 = vld [vmem:[#allocation3 + $0x10e] sm:$0xff]
      %v4717 = vld [vmem:[#allocation3 + $0x116] sm:$0xff]
      %v4718 = vld [vmem:[#allocation3 + $0x11e] sm:$0xff]
      %v4719 = vld [vmem:[#allocation3 + $0x126] sm:$0xff]
      %v4720 = vld [vmem:[#allocation3 + $0x12e] sm:$0xff]
      %v4721 = vld [vmem:[#allocation3 + $0x136] sm:$0xff]
      %v4722 = vld [vmem:[#allocation3 + $0x13e] sm:$0xff]
      %v4723 = vld [vmem:[#allocation3 + $0x146] sm:$0xf]
      %v4724 = vpack.c.bf16 %v4684, %v4683
      %v4725 = vpack.c.bf16 %v4686, %v4685
      %v4726 = vpack.c.bf16 %v4688, %v4687
      %v4727 = vpack.c.bf16 %v4690, %v4689
      %v4728 = vpack.c.bf16 %v4692, %v4691
      %v4729 = vpack.c.bf16 %v4694, %v4693
      %v4730 = vpack.c.bf16 %v4696, %v4695
      %v4731 = vpack.c.bf16 %v4698, %v4697
      %v4732 = vpack.c.bf16 %v4700, %v4699
      %v4733 = vpack.c.bf16 %v4702, %v4701
      %v4734 = vpack.c.bf16 %v4704, %v4703
      %v4735 = vpack.c.bf16 %v4706, %v4705
      %v4736 = vpack.c.bf16 %v4708, %v4707
      %v4737 = vpack.c.bf16 %v4710, %v4709
      %v4738 = vpack.c.bf16 %v4712, %v4711
      %v4739 = vpack.c.bf16 %v4714, %v4713
      %v4740 = vpack.c.bf16 %v4716, %v4715
      %v4741 = vpack.c.bf16 %v4718, %v4717
      %v4742 = vpack.c.bf16 %v4720, %v4719
      %v4743 = vpack.c.bf16 %v4722, %v4721
      %v4744 = vpack.c.bf16 %v4723, %v4723
      %s4745 = scalar_lea.vmem %s6, 64
      %v4746 = vld [vmem:[%s4745] sm:$0xf]
      %v4747 = vld [vmem:[%s4745 + $0x4] sm:$0xf]
      %v4748 = vld [vmem:[%s4745 + $0x8] sm:$0xf]
      %v4749 = vld [vmem:[%s4745 + $0xc] sm:$0xf]
      %v4750 = vld [vmem:[%s4745 + $0x10] sm:$0xf]
      %v4751 = vld [vmem:[%s4745 + $0x14] sm:$0xf]
      %v4752 = vld [vmem:[%s4745 + $0x18] sm:$0xf]
      %v4753 = vld [vmem:[%s4745 + $0x1c] sm:$0xf]
      %v4754 = vld [vmem:[%s4745 + $0x20] sm:$0xf]
      %v4755 = vld [vmem:[%s4745 + $0x24] sm:$0xf]
      %v4756 = vld [vmem:[%s4745 + $0x28] sm:$0xf]
      %v4757 = vld [vmem:[%s4745 + $0x2c] sm:$0xf]
      %v4758 = vld [vmem:[%s4745 + $0x30] sm:$0xf]
      %v4759 = vld [vmem:[%s4745 + $0x34] sm:$0xf]
      %v4760 = vld [vmem:[%s4745 + $0x38] sm:$0xf]
      %v4761 = vld [vmem:[%s4745 + $0x3c] sm:$0xf]
      %v4778 = vunpack.c.l.b16 %v4746
      %v4779 = vunpack.c.l.b16 %v4747
      %v4780 = vunpack.c.l.b16 %v4748
      %v4781 = vunpack.c.l.b16 %v4749
      %v4782 = vunpack.c.l.b16 %v4750
      %v4783 = vunpack.c.l.b16 %v4751
      %v4784 = vunpack.c.l.b16 %v4752
      %v4785 = vunpack.c.l.b16 %v4753
      %v4786 = vunpack.c.l.b16 %v4754
      %v4787 = vunpack.c.l.b16 %v4755
      %v4788 = vunpack.c.l.b16 %v4756
      %v4789 = vunpack.c.l.b16 %v4757
      %v4790 = vunpack.c.l.b16 %v4758
      %v4791 = vunpack.c.l.b16 %v4759
      %v4792 = vunpack.c.l.b16 %v4760
      %v4793 = vunpack.c.l.b16 %v4761
      %v4794 = vpack.c.b16 %v4779, %v4778
      %v4795 = vpack.c.b16 %v4781, %v4780
      %v4796 = vpack.c.b16 %v4783, %v4782
      %v4797 = vpack.c.b16 %v4785, %v4784
      %v4798 = vpack.c.b16 %v4787, %v4786
      %v4799 = vpack.c.b16 %v4789, %v4788
      %v4800 = vpack.c.b16 %v4791, %v4790
      %v4801 = vpack.c.b16 %v4793, %v4792
      %4810 = vmatprep.subr.bf16.mxu0 0
      %4811 = vmatpush1.bf16.msra.mxu0 %v4794
      %4812 = vmatprep.subr.bf16.mxu0 0
      %4813 = vmatpush1.bf16.msra.mxu0 %v4795
      %4814 = vmatprep.subr.bf16.mxu0 0
      %4815 = vmatpush1.bf16.msra.mxu0 %v4796
      %4816 = vmatprep.subr.bf16.mxu0 0
      %4817 = vmatpush1.bf16.msra.mxu0 %v4797
      %4818 = vmatprep.subr.bf16.mxu0 0
      %4819 = vmatpush1.bf16.msra.mxu0 %v4798
      %4820 = vmatprep.subr.bf16.mxu0 0
      %4821 = vmatpush1.bf16.msra.mxu0 %v4799
      %4822 = vmatprep.subr.bf16.mxu0 0
      %4823 = vmatpush1.bf16.msra.mxu0 %v4800
      %4824 = vmatprep.subr.bf16.mxu0 0
      %4825 = vmatpush1.bf16.msra.mxu0 %v4801
      %4826 = vmatprep.subr.bf16.mxu0 0
      %4827 = vmatpush1.bf16.msra.mxu0 0
      %4828 = vmatprep.subr.bf16.mxu0 0
      %4829 = vmatpush1.bf16.msra.mxu0 0
      %4830 = vmatprep.subr.bf16.mxu0 0
      %4831 = vmatpush1.bf16.msra.mxu0 0
      %4832 = vmatprep.subr.bf16.mxu0 0
      %4833 = vmatpush1.bf16.msra.mxu0 0
      %4834 = vmatprep.subr.bf16.mxu0 0
      %4835 = vmatpush1.bf16.msra.mxu0 0
      %4836 = vmatprep.subr.bf16.mxu0 0
      %4837 = vmatpush1.bf16.msra.mxu0 0
      %4838 = vmatprep.subr.bf16.mxu0 0
      %4839 = vmatpush1.bf16.msra.mxu0 0
      %4840 = vmatprep.subr.bf16.mxu0 0
      %4841 = vmatpush1.bf16.msra.mxu0 0
      %4842 = vmatprep.mubr.bf16.mxu0 0
      %4843 = vmatmul.mubr.bf16.gmra.mrb[0].mxu0 %v4724
      %v4844 = vpop.f32.mrb[0].mxu0
      %v4845 = vadd.f32 0.0, %v4844
      %v4846 = vpop.f32.mrb[0].mxu0
      %v4847 = vpop.f32.mrb[0].mxu0
      %v4848 = vadd.f32 0.0, %v4847
      %v4849 = vpop.f32.mrb[0].mxu0
      %4850 = vmatprep.mubr.bf16.mxu0 0
      %4851 = vmatmul.mubr.bf16.gmra.mrb[0].mxu0 %v4725
      %v4852 = vpop.f32.mrb[0].mxu0
      %v4853 = vadd.f32 0.0, %v4852
      %v4854 = vpop.f32.mrb[0].mxu0
      %v4855 = vpop.f32.mrb[0].mxu0
      %v4856 = vadd.f32 0.0, %v4855
      %v4857 = vpop.f32.mrb[0].mxu0
      %4858 = vmatprep.mubr.bf16.mxu0 0
      %4859 = vmatmul.mubr.bf16.gmra.mrb[0].mxu0 %v4726
      %v4860 = vpop.f32.mrb[0].mxu0
      %v4861 = vadd.f32 0.0, %v4860
      %v4862 = vpop.f32.mrb[0].mxu0
      %v4863 = vpop.f32.mrb[0].mxu0
      %v4864 = vadd.f32 0.0, %v4863
      %v4865 = vpop.f32.mrb[0].mxu0
      %4866 = vmatprep.mubr.bf16.mxu0 0
      %4867 = vmatmul.mubr.bf16.gmra.mrb[0].mxu0 %v4727
      %v4868 = vpop.f32.mrb[0].mxu0
      %v4869 = vadd.f32 0.0, %v4868
      %v4870 = vpop.f32.mrb[0].mxu0
      %v4871 = vpop.f32.mrb[0].mxu0
      %v4872 = vadd.f32 0.0, %v4871
      %v4873 = vpop.f32.mrb[0].mxu0
      %4874 = vmatprep.mubr.bf16.mxu0 0
      %4875 = vmatmul.mubr.bf16.gmra.mrb[0].mxu0 %v4728
      %v4876 = vpop.f32.mrb[0].mxu0
      %v4877 = vadd.f32 0.0, %v4876
      %v4878 = vpop.f32.mrb[0].mxu0
      %v4879 = vpop.f32.mrb[0].mxu0
      %v4880 = vadd.f32 0.0, %v4879
      %v4881 = vpop.f32.mrb[0].mxu0
      %4882 = vmatprep.mubr.bf16.mxu0 0
      %4883 = vmatmul.mubr.bf16.gmra.mrb[0].mxu0 %v4729
      %v4884 = vpop.f32.mrb[0].mxu0
      %v4885 = vadd.f32 0.0, %v4884
      %v4886 = vpop.f32.mrb[0].mxu0
      %v4887 = vpop.f32.mrb[0].mxu0
      %v4888 = vadd.f32 0.0, %v4887
      %v4889 = vpop.f32.mrb[0].mxu0
      %4890 = vmatprep.mubr.bf16.mxu0 0
      %4891 = vmatmul.mubr.bf16.gmra.mrb[0].mxu0 %v4730
      %v4892 = vpop.f32.mrb[0].mxu0
      %v4893 = vadd.f32 0.0, %v4892
      %v4894 = vpop.f32.mrb[0].mxu0
      %v4895 = vpop.f32.mrb[0].mxu0
      %v4896 = vadd.f32 0.0, %v4895
      %v4897 = vpop.f32.mrb[0].mxu0
      %4898 = vmatprep.mubr.bf16.mxu0 0
      %4899 = vmatmul.mubr.bf16.gmra.mrb[0].mxu0 %v4731
      %v4900 = vpop.f32.mrb[0].mxu0
      %v4901 = vadd.f32 0.0, %v4900
      %v4902 = vpop.f32.mrb[0].mxu0
      %v4903 = vpop.f32.mrb[0].mxu0
      %v4904 = vadd.f32 0.0, %v4903
      %v4905 = vpop.f32.mrb[0].mxu0
      %4906 = vmatprep.mubr.bf16.mxu0 0
      %4907 = vmatmul.mubr.bf16.gmra.mrb[0].mxu0 %v4732
      %v4908 = vpop.f32.mrb[0].mxu0
      %v4909 = vadd.f32 0.0, %v4908
      %v4910 = vpop.f32.mrb[0].mxu0
      %v4911 = vpop.f32.mrb[0].mxu0
      %v4912 = vadd.f32 0.0, %v4911
      %v4913 = vpop.f32.mrb[0].mxu0
      %4914 = vmatprep.mubr.bf16.mxu0 0
      %4915 = vmatmul.mubr.bf16.gmra.mrb[0].mxu0 %v4733
      %v4916 = vpop.f32.mrb[0].mxu0
      %v4917 = vadd.f32 0.0, %v4916
      %v4918 = vpop.f32.mrb[0].mxu0
      %v4919 = vpop.f32.mrb[0].mxu0
      %v4920 = vadd.f32 0.0, %v4919
      %v4921 = vpop.f32.mrb[0].mxu0
      %4922 = vmatprep.mubr.bf16.mxu0 0
      %4923 = vmatmul.mubr.bf16.gmra.mrb[0].mxu0 %v4734
      %v4924 = vpop.f32.mrb[0].mxu0
      %v4925 = vadd.f32 0.0, %v4924
      %v4926 = vpop.f32.mrb[0].mxu0
      %v4927 = vpop.f32.mrb[0].mxu0
      %v4928 = vadd.f32 0.0, %v4927
      %v4929 = vpop.f32.mrb[0].mxu0
      %4930 = vmatprep.mubr.bf16.mxu0 0
      %4931 = vmatmul.mubr.bf16.gmra.mrb[0].mxu0 %v4735
      %v4932 = vpop.f32.mrb[0].mxu0
      %v4933 = vadd.f32 0.0, %v4932
      %v4934 = vpop.f32.mrb[0].mxu0
      %v4935 = vpop.f32.mrb[0].mxu0
      %v4936 = vadd.f32 0.0, %v4935
      %v4937 = vpop.f32.mrb[0].mxu0
      %4938 = vmatprep.mubr.bf16.mxu0 0
      %4939 = vmatmul.mubr.bf16.gmra.mrb[0].mxu0 %v4736
      %v4940 = vpop.f32.mrb[0].mxu0
      %v4941 = vadd.f32 0.0, %v4940
      %v4942 = vpop.f32.mrb[0].mxu0
      %v4943 = vpop.f32.mrb[0].mxu0
      %v4944 = vadd.f32 0.0, %v4943
      %v4945 = vpop.f32.mrb[0].mxu0
      %4946 = vmatprep.mubr.bf16.mxu0 0
      %4947 = vmatmul.mubr.bf16.gmra.mrb[0].mxu0 %v4737
      %v4948 = vpop.f32.mrb[0].mxu0
      %v4949 = vadd.f32 0.0, %v4948
      %v4950 = vpop.f32.mrb[0].mxu0
      %v4951 = vpop.f32.mrb[0].mxu0
      %v4952 = vadd.f32 0.0, %v4951
      %v4953 = vpop.f32.mrb[0].mxu0
      %4954 = vmatprep.mubr.bf16.mxu0 0
      %4955 = vmatmul.mubr.bf16.gmra.mrb[0].mxu0 %v4738
      %v4956 = vpop.f32.mrb[0].mxu0
      %v4957 = vadd.f32 0.0, %v4956
      %v4958 = vpop.f32.mrb[0].mxu0
      %v4959 = vpop.f32.mrb[0].mxu0
      %v4960 = vadd.f32 0.0, %v4959
      %v4961 = vpop.f32.mrb[0].mxu0
      %4962 = vmatprep.mubr.bf16.mxu0 0
      %4963 = vmatmul.mubr.bf16.gmra.mrb[0].mxu0 %v4739
      %v4964 = vpop.f32.mrb[0].mxu0
      %v4965 = vadd.f32 0.0, %v4964
      %v4966 = vpop.f32.mrb[0].mxu0
      %v4967 = vpop.f32.mrb[0].mxu0
      %v4968 = vadd.f32 0.0, %v4967
      %v4969 = vpop.f32.mrb[0].mxu0
      %4970 = vmatprep.mubr.bf16.mxu0 0
      %4971 = vmatmul.mubr.bf16.gmra.mrb[0].mxu0 %v4740
      %v4972 = vpop.f32.mrb[0].mxu0
      %v4973 = vadd.f32 0.0, %v4972
      %v4974 = vpop.f32.mrb[0].mxu0
      %v4975 = vpop.f32.mrb[0].mxu0
      %v4976 = vadd.f32 0.0, %v4975
      %v4977 = vpop.f32.mrb[0].mxu0
      %4978 = vmatprep.mubr.bf16.mxu0 0
      %4979 = vmatmul.mubr.bf16.gmra.mrb[0].mxu0 %v4741
      %v4980 = vpop.f32.mrb[0].mxu0
      %v4981 = vadd.f32 0.0, %v4980
      %v4982 = vpop.f32.mrb[0].mxu0
      %v4983 = vpop.f32.mrb[0].mxu0
      %v4984 = vadd.f32 0.0, %v4983
      %v4985 = vpop.f32.mrb[0].mxu0
      %4986 = vmatprep.mubr.bf16.mxu0 0
      %4987 = vmatmul.mubr.bf16.gmra.mrb[0].mxu0 %v4742
      %v4988 = vpop.f32.mrb[0].mxu0
      %v4989 = vadd.f32 0.0, %v4988
      %v4990 = vpop.f32.mrb[0].mxu0
      %v4991 = vpop.f32.mrb[0].mxu0
      %v4992 = vadd.f32 0.0, %v4991
      %v4993 = vpop.f32.mrb[0].mxu0
      %4994 = vmatprep.mubr.bf16.mxu0 0
      %4995 = vmatmul.mubr.bf16.gmra.mrb[0].mxu0 %v4743
      %v4996 = vpop.f32.mrb[0].mxu0
      %v4997 = vadd.f32 0.0, %v4996
      %v4998 = vpop.f32.mrb[0].mxu0
      %v4999 = vpop.f32.mrb[0].mxu0
      %v5000 = vadd.f32 0.0, %v4999
      %v5001 = vpop.f32.mrb[0].mxu0
      %5002 = vmatprep.mubr.bf16.mxu0 0
      %5003 = vmatmul.mubr.bf16.gmra.mrb[0].mxu0 %v4744
      %v5004 = vpop.f32.mrb[0].mxu0
      %v5005 = vadd.f32 0.0, %v5004
      %v5006 = vpop.f32.mrb[0].mxu0
      %v5007 = vpop.f32.mrb[0].mxu0
      %v5008 = vpop.f32.mrb[0].mxu0
      %5009 = vdwg.mxu0
      %v5026 = vunpack.c.l.b16 %v4667
      %v5027 = vunpack.c.l.b16 %v4668
      %v5028 = vunpack.c.l.b16 %v4669
      %v5029 = vunpack.c.l.b16 %v4670
      %v5030 = vunpack.c.l.b16 %v4671
      %v5031 = vunpack.c.l.b16 %v4672
      %v5032 = vunpack.c.l.b16 %v4673
      %v5033 = vunpack.c.l.b16 %v4674
      %v5034 = vunpack.c.l.b16 %v4675
      %v5035 = vunpack.c.l.b16 %v4676
      %v5036 = vunpack.c.l.b16 %v4677
      %v5037 = vunpack.c.l.b16 %v4678
      %v5038 = vunpack.c.l.b16 %v4679
      %v5039 = vunpack.c.l.b16 %v4680
      %v5040 = vunpack.c.l.b16 %v4681
      %v5041 = vunpack.c.l.b16 %v4682
      %v5042 = vpack.c.b16 %v5027, %v5026
      %v5043 = vpack.c.b16 %v5029, %v5028
      %v5044 = vpack.c.b16 %v5031, %v5030
      %v5045 = vpack.c.b16 %v5033, %v5032
      %v5046 = vpack.c.b16 %v5035, %v5034
      %v5047 = vpack.c.b16 %v5037, %v5036
      %v5048 = vpack.c.b16 %v5039, %v5038
      %v5049 = vpack.c.b16 %v5041, %v5040
      %5058 = vmatprep.subr.bf16.mxu0 0
      %5059 = vmatpush1.bf16.msra.mxu0 %v5042
      %5060 = vmatprep.subr.bf16.mxu0 0
      %5061 = vmatpush1.bf16.msra.mxu0 %v5043
      %5062 = vmatprep.subr.bf16.mxu0 0
      %5063 = vmatpush1.bf16.msra.mxu0 %v5044
      %5064 = vmatprep.subr.bf16.mxu0 0
      %5065 = vmatpush1.bf16.msra.mxu0 %v5045
      %5066 = vmatprep.subr.bf16.mxu0 0
      %5067 = vmatpush1.bf16.msra.mxu0 %v5046
      %5068 = vmatprep.subr.bf16.mxu0 0
      %5069 = vmatpush1.bf16.msra.mxu0 %v5047
      %5070 = vmatprep.subr.bf16.mxu0 0
      %5071 = vmatpush1.bf16.msra.mxu0 %v5048
      %5072 = vmatprep.subr.bf16.mxu0 0
      %5073 = vmatpush1.bf16.msra.mxu0 %v5049
      %5074 = vmatprep.subr.bf16.mxu0 0
      %5075 = vmatpush1.bf16.msra.mxu0 0
      %5076 = vmatprep.subr.bf16.mxu0 0
      %5077 = vmatpush1.bf16.msra.mxu0 0
      %5078 = vmatprep.subr.bf16.mxu0 0
      %5079 = vmatpush1.bf16.msra.mxu0 0
      %5080 = vmatprep.subr.bf16.mxu0 0
      %5081 = vmatpush1.bf16.msra.mxu0 0
      %5082 = vmatprep.subr.bf16.mxu0 0
      %5083 = vmatpush1.bf16.msra.mxu0 0
      %5084 = vmatprep.subr.bf16.mxu0 0
      %5085 = vmatpush1.bf16.msra.mxu0 0
      %5086 = vmatprep.subr.bf16.mxu0 0
      %5087 = vmatpush1.bf16.msra.mxu0 0
      %5088 = vmatprep.subr.bf16.mxu0 0
      %5089 = vmatpush1.bf16.msra.mxu0 0
      %5090 = vmatprep.mubr.bf16.mxu0 0
      %5091 = vmatmul.mubr.bf16.gmra.mrb[0].mxu0 %v4646
      %v5092 = vpop.f32.mrb[0].mxu0
      %v5093 = vadd.f32 %v4845, %v5092
      %v5094 = vpop.f32.mrb[0].mxu0
      %v5095 = vpop.f32.mrb[0].mxu0
      %v5096 = vadd.f32 %v4848, %v5095
      %v5097 = vpop.f32.mrb[0].mxu0
      %5098 = vmatprep.mubr.bf16.mxu0 0
      %5099 = vmatmul.mubr.bf16.gmra.mrb[0].mxu0 %v4647
      %v5100 = vpop.f32.mrb[0].mxu0
      %v5101 = vadd.f32 %v4853, %v5100
      %v5102 = vpop.f32.mrb[0].mxu0
      %v5103 = vpop.f32.mrb[0].mxu0
      %v5104 = vadd.f32 %v4856, %v5103
      %v5105 = vpop.f32.mrb[0].mxu0
      %5106 = vmatprep.mubr.bf16.mxu0 0
      %5107 = vmatmul.mubr.bf16.gmra.mrb[0].mxu0 %v4648
      %v5108 = vpop.f32.mrb[0].mxu0
      %v5109 = vadd.f32 %v4861, %v5108
      %v5110 = vpop.f32.mrb[0].mxu0
      %v5111 = vpop.f32.mrb[0].mxu0
      %v5112 = vadd.f32 %v4864, %v5111
      %v5113 = vpop.f32.mrb[0].mxu0
      %5114 = vmatprep.mubr.bf16.mxu0 0
      %5115 = vmatmul.mubr.bf16.gmra.mrb[0].mxu0 %v4649
      %v5116 = vpop.f32.mrb[0].mxu0
      %v5117 = vadd.f32 %v4869, %v5116
      %v5118 = vpop.f32.mrb[0].mxu0
      %v5119 = vpop.f32.mrb[0].mxu0
      %v5120 = vadd.f32 %v4872, %v5119
      %v5121 = vpop.f32.mrb[0].mxu0
      %5122 = vmatprep.mubr.bf16.mxu0 0
      %5123 = vmatmul.mubr.bf16.gmra.mrb[0].mxu0 %v4650
      %v5124 = vpop.f32.mrb[0].mxu0
      %v5125 = vadd.f32 %v4877, %v5124
      %v5126 = vpop.f32.mrb[0].mxu0
      %v5127 = vpop.f32.mrb[0].mxu0
      %v5128 = vadd.f32 %v4880, %v5127
      %v5129 = vpop.f32.mrb[0].mxu0
      %5130 = vmatprep.mubr.bf16.mxu0 0
      %5131 = vmatmul.mubr.bf16.gmra.mrb[0].mxu0 %v4651
      %v5132 = vpop.f32.mrb[0].mxu0
      %v5133 = vadd.f32 %v4885, %v5132
      %v5134 = vpop.f32.mrb[0].mxu0
      %v5135 = vpop.f32.mrb[0].mxu0
      %v5136 = vadd.f32 %v4888, %v5135
      %v5137 = vpop.f32.mrb[0].mxu0
      %5138 = vmatprep.mubr.bf16.mxu0 0
      %5139 = vmatmul.mubr.bf16.gmra.mrb[0].mxu0 %v4652
      %v5140 = vpop.f32.mrb[0].mxu0
      %v5141 = vadd.f32 %v4893, %v5140
      %v5142 = vpop.f32.mrb[0].mxu0
      %v5143 = vpop.f32.mrb[0].mxu0
      %v5144 = vadd.f32 %v4896, %v5143
      %v5145 = vpop.f32.mrb[0].mxu0
      %5146 = vmatprep.mubr.bf16.mxu0 0
      %5147 = vmatmul.mubr.bf16.gmra.mrb[0].mxu0 %v4653
      %v5148 = vpop.f32.mrb[0].mxu0
      %v5149 = vadd.f32 %v4901, %v5148
      %v5150 = vpop.f32.mrb[0].mxu0
      %v5151 = vpop.f32.mrb[0].mxu0
      %v5152 = vadd.f32 %v4904, %v5151
      %v5153 = vpop.f32.mrb[0].mxu0
      %5154 = vmatprep.mubr.bf16.mxu0 0
      %5155 = vmatmul.mubr.bf16.gmra.mrb[0].mxu0 %v4654
      %v5156 = vpop.f32.mrb[0].mxu0
      %v5157 = vadd.f32 %v4909, %v5156
      %v5158 = vpop.f32.mrb[0].mxu0
      %v5159 = vpop.f32.mrb[0].mxu0
      %v5160 = vadd.f32 %v4912, %v5159
      %v5161 = vpop.f32.mrb[0].mxu0
      %5162 = vmatprep.mubr.bf16.mxu0 0
      %5163 = vmatmul.mubr.bf16.gmra.mrb[0].mxu0 %v4655
      %v5164 = vpop.f32.mrb[0].mxu0
      %v5165 = vadd.f32 %v4917, %v5164
      %v5166 = vpop.f32.mrb[0].mxu0
      %v5167 = vpop.f32.mrb[0].mxu0
      %v5168 = vadd.f32 %v4920, %v5167
      %v5169 = vpop.f32.mrb[0].mxu0
      %5170 = vmatprep.mubr.bf16.mxu0 0
      %5171 = vmatmul.mubr.bf16.gmra.mrb[0].mxu0 %v4656
      %v5172 = vpop.f32.mrb[0].mxu0
      %v5173 = vadd.f32 %v4925, %v5172
      %v5174 = vpop.f32.mrb[0].mxu0
      %v5175 = vpop.f32.mrb[0].mxu0
      %v5176 = vadd.f32 %v4928, %v5175
      %v5177 = vpop.f32.mrb[0].mxu0
      %5178 = vmatprep.mubr.bf16.mxu0 0
      %5179 = vmatmul.mubr.bf16.gmra.mrb[0].mxu0 %v4657
      %v5180 = vpop.f32.mrb[0].mxu0
      %v5181 = vadd.f32 %v4933, %v5180
      %v5182 = vpop.f32.mrb[0].mxu0
      %v5183 = vpop.f32.mrb[0].mxu0
      %v5184 = vadd.f32 %v4936, %v5183
      %v5185 = vpop.f32.mrb[0].mxu0
      %5186 = vmatprep.mubr.bf16.mxu0 0
      %5187 = vmatmul.mubr.bf16.gmra.mrb[0].mxu0 %v4658
      %v5188 = vpop.f32.mrb[0].mxu0
      %v5189 = vadd.f32 %v4941, %v5188
      %v5190 = vpop.f32.mrb[0].mxu0
      %v5191 = vpop.f32.mrb[0].mxu0
      %v5192 = vadd.f32 %v4944, %v5191
      %v5193 = vpop.f32.mrb[0].mxu0
      %5194 = vmatprep.mubr.bf16.mxu0 0
      %5195 = vmatmul.mubr.bf16.gmra.mrb[0].mxu0 %v4659
      %v5196 = vpop.f32.mrb[0].mxu0
      %v5197 = vadd.f32 %v4949, %v5196
      %v5198 = vpop.f32.mrb[0].mxu0
      %v5199 = vpop.f32.mrb[0].mxu0
      %v5200 = vadd.f32 %v4952, %v5199
      %v5201 = vpop.f32.mrb[0].mxu0
      %5202 = vmatprep.mubr.bf16.mxu0 0
      %5203 = vmatmul.mubr.bf16.gmra.mrb[0].mxu0 %v4660
      %v5204 = vpop.f32.mrb[0].mxu0
      %v5205 = vadd.f32 %v4957, %v5204
      %v5206 = vpop.f32.mrb[0].mxu0
      %v5207 = vpop.f32.mrb[0].mxu0
      %v5208 = vadd.f32 %v4960, %v5207
      %v5209 = vpop.f32.mrb[0].mxu0
      %5210 = vmatprep.mubr.bf16.mxu0 0
      %5211 = vmatmul.mubr.bf16.gmra.mrb[0].mxu0 %v4661
      %v5212 = vpop.f32.mrb[0].mxu0
      %v5213 = vadd.f32 %v4965, %v5212
      %v5214 = vpop.f32.mrb[0].mxu0
      %v5215 = vpop.f32.mrb[0].mxu0
      %v5216 = vadd.f32 %v4968, %v5215
      %v5217 = vpop.f32.mrb[0].mxu0
      %5218 = vmatprep.mubr.bf16.mxu0 0
      %5219 = vmatmul.mubr.bf16.gmra.mrb[0].mxu0 %v4662
      %v5220 = vpop.f32.mrb[0].mxu0
      %v5221 = vadd.f32 %v4973, %v5220
      %v5222 = vpop.f32.mrb[0].mxu0
      %v5223 = vpop.f32.mrb[0].mxu0
      %v5224 = vadd.f32 %v4976, %v5223
      %v5225 = vpop.f32.mrb[0].mxu0
      %5226 = vmatprep.mubr.bf16.mxu0 0
      %5227 = vmatmul.mubr.bf16.gmra.mrb[0].mxu0 %v4663
      %v5228 = vpop.f32.mrb[0].mxu0
      %v5229 = vadd.f32 %v4981, %v5228
      %v5230 = vpop.f32.mrb[0].mxu0
      %v5231 = vpop.f32.mrb[0].mxu0
      %v5232 = vadd.f32 %v4984, %v5231
      %v5233 = vpop.f32.mrb[0].mxu0
      %5234 = vmatprep.mubr.bf16.mxu0 0
      %5235 = vmatmul.mubr.bf16.gmra.mrb[0].mxu0 %v4664
      %v5236 = vpop.f32.mrb[0].mxu0
      %v5237 = vadd.f32 %v4989, %v5236
      %v5238 = vpop.f32.mrb[0].mxu0
      %v5239 = vpop.f32.mrb[0].mxu0
      %v5240 = vadd.f32 %v4992, %v5239
      %v5241 = vpop.f32.mrb[0].mxu0
      %5242 = vmatprep.mubr.bf16.mxu0 0
      %5243 = vmatmul.mubr.bf16.gmra.mrb[0].mxu0 %v4665
      %v5244 = vpop.f32.mrb[0].mxu0
      %v5245 = vadd.f32 %v4997, %v5244
      %v5246 = vpop.f32.mrb[0].mxu0
      %v5247 = vpop.f32.mrb[0].mxu0
      %v5248 = vadd.f32 %v5000, %v5247
      %v5249 = vpop.f32.mrb[0].mxu0
      %5250 = vmatprep.mubr.bf16.mxu0 0
      %5251 = vmatmul.mubr.bf16.gmra.mrb[0].mxu0 %v4666
      %v5252 = vpop.f32.mrb[0].mxu0
      %v5253 = vadd.f32 %v5005, %v5252
      %v5254 = vpop.f32.mrb[0].mxu0
      %v5255 = vpop.f32.mrb[0].mxu0
      %v5256 = vpop.f32.mrb[0].mxu0
      %5257 = vdwg.mxu0
      %v5258 = vld [vmem:[#allocation3 + $0x7] sm:$0xff]
      %v5259 = vld [vmem:[#allocation3 + $0xf] sm:$0xff]
      %v5260 = vld [vmem:[#allocation3 + $0x17] sm:$0xff]
      %v5261 = vld [vmem:[#allocation3 + $0x1f] sm:$0xff]
      %v5262 = vld [vmem:[#allocation3 + $0x27] sm:$0xff]
      %v5263 = vld [vmem:[#allocation3 + $0x2f] sm:$0xff]
      %v5264 = vld [vmem:[#allocation3 + $0x37] sm:$0xff]
      %v5265 = vld [vmem:[#allocation3 + $0x3f] sm:$0xff]
      %v5266 = vld [vmem:[#allocation3 + $0x47] sm:$0xff]
      %v5267 = vld [vmem:[#allocation3 + $0x4f] sm:$0xff]
      %v5268 = vld [vmem:[#allocation3 + $0x57] sm:$0xff]
      %v5269 = vld [vmem:[#allocation3 + $0x5f] sm:$0xff]
      %v5270 = vld [vmem:[#allocation3 + $0x67] sm:$0xff]
      %v5271 = vld [vmem:[#allocation3 + $0x6f] sm:$0xff]
      %v5272 = vld [vmem:[#allocation3 + $0x77] sm:$0xff]
      %v5273 = vld [vmem:[#allocation3 + $0x7f] sm:$0xff]
      %v5274 = vld [vmem:[#allocation3 + $0x87] sm:$0xff]
      %v5275 = vld [vmem:[#allocation3 + $0x8f] sm:$0xff]
      %v5276 = vld [vmem:[#allocation3 + $0x97] sm:$0xff]
      %v5277 = vld [vmem:[#allocation3 + $0x9f] sm:$0xff]
      %v5278 = vld [vmem:[#allocation3 + $0xa7] sm:$0xff]
      %v5279 = vld [vmem:[#allocation3 + $0xaf] sm:$0xff]
      %v5280 = vld [vmem:[#allocation3 + $0xb7] sm:$0xff]
      %v5281 = vld [vmem:[#allocation3 + $0xbf] sm:$0xff]
      %v5282 = vld [vmem:[#allocation3 + $0xc7] sm:$0xff]
      %v5283 = vld [vmem:[#allocation3 + $0xcf] sm:$0xff]
      %v5284 = vld [vmem:[#allocation3 + $0xd7] sm:$0xff]
      %v5285 = vld [vmem:[#allocation3 + $0xdf] sm:$0xff]
      %v5286 = vld [vmem:[#allocation3 + $0xe7] sm:$0xff]
      %v5287 = vld [vmem:[#allocation3 + $0xef] sm:$0xff]
      %v5288 = vld [vmem:[#allocation3 + $0xf7] sm:$0xff]
      %v5289 = vld [vmem:[#allocation3 + $0xff] sm:$0xff]
      %v5290 = vld [vmem:[#allocation3 + $0x107] sm:$0xff]
      %v5291 = vld [vmem:[#allocation3 + $0x10f] sm:$0xff]
      %v5292 = vld [vmem:[#allocation3 + $0x117] sm:$0xff]
      %v5293 = vld [vmem:[#allocation3 + $0x11f] sm:$0xff]
      %v5294 = vld [vmem:[#allocation3 + $0x127] sm:$0xff]
      %v5295 = vld [vmem:[#allocation3 + $0x12f] sm:$0xff]
      %v5296 = vld [vmem:[#allocation3 + $0x137] sm:$0xff]
      %v5297 = vld [vmem:[#allocation3 + $0x13f] sm:$0xff]
      %v5298 = vld [vmem:[#allocation3 + $0x147] sm:$0xf]
      %v5299 = vpack.c.bf16 %v5259, %v5258
      %v5300 = vpack.c.bf16 %v5261, %v5260
      %v5301 = vpack.c.bf16 %v5263, %v5262
      %v5302 = vpack.c.bf16 %v5265, %v5264
      %v5303 = vpack.c.bf16 %v5267, %v5266
      %v5304 = vpack.c.bf16 %v5269, %v5268
      %v5305 = vpack.c.bf16 %v5271, %v5270
      %v5306 = vpack.c.bf16 %v5273, %v5272
      %v5307 = vpack.c.bf16 %v5275, %v5274
      %v5308 = vpack.c.bf16 %v5277, %v5276
      %v5309 = vpack.c.bf16 %v5279, %v5278
      %v5310 = vpack.c.bf16 %v5281, %v5280
      %v5311 = vpack.c.bf16 %v5283, %v5282
      %v5312 = vpack.c.bf16 %v5285, %v5284
      %v5313 = vpack.c.bf16 %v5287, %v5286
      %v5314 = vpack.c.bf16 %v5289, %v5288
      %v5315 = vpack.c.bf16 %v5291, %v5290
      %v5316 = vpack.c.bf16 %v5293, %v5292
      %v5317 = vpack.c.bf16 %v5295, %v5294
      %v5318 = vpack.c.bf16 %v5297, %v5296
      %v5319 = vpack.c.bf16 %v5298, %v5298
      %s5320 = scalar_lea.vmem %s6, 128
      %v5321 = vld [vmem:[%s5320] sm:$0xf]
      %v5322 = vld [vmem:[%s5320 + $0x4] sm:$0xf]
      %v5323 = vld [vmem:[%s5320 + $0x8] sm:$0xf]
      %v5324 = vld [vmem:[%s5320 + $0xc] sm:$0xf]
      %v5325 = vld [vmem:[%s5320 + $0x10] sm:$0xf]
      %v5326 = vld [vmem:[%s5320 + $0x14] sm:$0xf]
      %v5327 = vld [vmem:[%s5320 + $0x18] sm:$0xf]
      %v5328 = vld [vmem:[%s5320 + $0x1c] sm:$0xf]
      %v5329 = vld [vmem:[%s5320 + $0x20] sm:$0xf]
      %v5330 = vld [vmem:[%s5320 + $0x24] sm:$0xf]
      %v5331 = vld [vmem:[%s5320 + $0x28] sm:$0xf]
      %v5332 = vld [vmem:[%s5320 + $0x2c] sm:$0xf]
      %v5333 = vld [vmem:[%s5320 + $0x30] sm:$0xf]
      %v5334 = vld [vmem:[%s5320 + $0x34] sm:$0xf]
      %v5335 = vld [vmem:[%s5320 + $0x38] sm:$0xf]
      %v5336 = vld [vmem:[%s5320 + $0x3c] sm:$0xf]
      %v5353 = vunpack.c.l.b16 %v5321
      %v5354 = vunpack.c.l.b16 %v5322
      %v5355 = vunpack.c.l.b16 %v5323
      %v5356 = vunpack.c.l.b16 %v5324
      %v5357 = vunpack.c.l.b16 %v5325
      %v5358 = vunpack.c.l.b16 %v5326
      %v5359 = vunpack.c.l.b16 %v5327
      %v5360 = vunpack.c.l.b16 %v5328
      %v5361 = vunpack.c.l.b16 %v5329
      %v5362 = vunpack.c.l.b16 %v5330
      %v5363 = vunpack.c.l.b16 %v5331
      %v5364 = vunpack.c.l.b16 %v5332
      %v5365 = vunpack.c.l.b16 %v5333
      %v5366 = vunpack.c.l.b16 %v5334
      %v5367 = vunpack.c.l.b16 %v5335
      %v5368 = vunpack.c.l.b16 %v5336
      %v5369 = vpack.c.b16 %v5354, %v5353
      %v5370 = vpack.c.b16 %v5356, %v5355
      %v5371 = vpack.c.b16 %v5358, %v5357
      %v5372 = vpack.c.b16 %v5360, %v5359
      %v5373 = vpack.c.b16 %v5362, %v5361
      %v5374 = vpack.c.b16 %v5364, %v5363
      %v5375 = vpack.c.b16 %v5366, %v5365
      %v5376 = vpack.c.b16 %v5368, %v5367
      %5385 = vmatprep.subr.bf16.mxu0 0
      %5386 = vmatpush1.bf16.msra.mxu0 %v5369
      %5387 = vmatprep.subr.bf16.mxu0 0
      %5388 = vmatpush1.bf16.msra.mxu0 %v5370
      %5389 = vmatprep.subr.bf16.mxu0 0
      %5390 = vmatpush1.bf16.msra.mxu0 %v5371
      %5391 = vmatprep.subr.bf16.mxu0 0
      %5392 = vmatpush1.bf16.msra.mxu0 %v5372
      %5393 = vmatprep.subr.bf16.mxu0 0
      %5394 = vmatpush1.bf16.msra.mxu0 %v5373
      %5395 = vmatprep.subr.bf16.mxu0 0
      %5396 = vmatpush1.bf16.msra.mxu0 %v5374
      %5397 = vmatprep.subr.bf16.mxu0 0
      %5398 = vmatpush1.bf16.msra.mxu0 %v5375
      %5399 = vmatprep.subr.bf16.mxu0 0
      %5400 = vmatpush1.bf16.msra.mxu0 %v5376
      %5401 = vmatprep.subr.bf16.mxu0 0
      %5402 = vmatpush1.bf16.msra.mxu0 0
      %5403 = vmatprep.subr.bf16.mxu0 0
      %5404 = vmatpush1.bf16.msra.mxu0 0
      %5405 = vmatprep.subr.bf16.mxu0 0
      %5406 = vmatpush1.bf16.msra.mxu0 0
      %5407 = vmatprep.subr.bf16.mxu0 0
      %5408 = vmatpush1.bf16.msra.mxu0 0
      %5409 = vmatprep.subr.bf16.mxu0 0
      %5410 = vmatpush1.bf16.msra.mxu0 0
      %5411 = vmatprep.subr.bf16.mxu0 0
      %5412 = vmatpush1.bf16.msra.mxu0 0
      %5413 = vmatprep.subr.bf16.mxu0 0
      %5414 = vmatpush1.bf16.msra.mxu0 0
      %5415 = vmatprep.subr.bf16.mxu0 0
      %5416 = vmatpush1.bf16.msra.mxu0 0
      %5417 = vmatprep.mubr.bf16.mxu0 0
      %5418 = vmatmul.mubr.bf16.gmra.mrb[0].mxu0 %v5299
      %v5419 = vpop.f32.mrb[0].mxu0
      %v5420 = vadd.f32 0.0, %v5419
      %v5421 = vpop.f32.mrb[0].mxu0
      %v5422 = vpop.f32.mrb[0].mxu0
      %v5423 = vadd.f32 0.0, %v5422
      %v5424 = vpop.f32.mrb[0].mxu0
      %5425 = vmatprep.mubr.bf16.mxu0 0
      %5426 = vmatmul.mubr.bf16.gmra.mrb[0].mxu0 %v5300
      %v5427 = vpop.f32.mrb[0].mxu0
      %v5428 = vadd.f32 0.0, %v5427
      %v5429 = vpop.f32.mrb[0].mxu0
      %v5430 = vpop.f32.mrb[0].mxu0
      %v5431 = vadd.f32 0.0, %v5430
      %v5432 = vpop.f32.mrb[0].mxu0
      %5433 = vmatprep.mubr.bf16.mxu0 0
      %5434 = vmatmul.mubr.bf16.gmra.mrb[0].mxu0 %v5301
      %v5435 = vpop.f32.mrb[0].mxu0
      %v5436 = vadd.f32 0.0, %v5435
      %v5437 = vpop.f32.mrb[0].mxu0
      %v5438 = vpop.f32.mrb[0].mxu0
      %v5439 = vadd.f32 0.0, %v5438
      %v5440 = vpop.f32.mrb[0].mxu0
      %5441 = vmatprep.mubr.bf16.mxu0 0
      %5442 = vmatmul.mubr.bf16.gmra.mrb[0].mxu0 %v5302
      %v5443 = vpop.f32.mrb[0].mxu0
      %v5444 = vadd.f32 0.0, %v5443
      %v5445 = vpop.f32.mrb[0].mxu0
      %v5446 = vpop.f32.mrb[0].mxu0
      %v5447 = vadd.f32 0.0, %v5446
      %v5448 = vpop.f32.mrb[0].mxu0
      %5449 = vmatprep.mubr.bf16.mxu0 0
      %5450 = vmatmul.mubr.bf16.gmra.mrb[0].mxu0 %v5303
      %v5451 = vpop.f32.mrb[0].mxu0
      %v5452 = vadd.f32 0.0, %v5451
      %v5453 = vpop.f32.mrb[0].mxu0
      %v5454 = vpop.f32.mrb[0].mxu0
      %v5455 = vadd.f32 0.0, %v5454
      %v5456 = vpop.f32.mrb[0].mxu0
      %5457 = vmatprep.mubr.bf16.mxu0 0
      %5458 = vmatmul.mubr.bf16.gmra.mrb[0].mxu0 %v5304
      %v5459 = vpop.f32.mrb[0].mxu0
      %v5460 = vadd.f32 0.0, %v5459
      %v5461 = vpop.f32.mrb[0].mxu0
      %v5462 = vpop.f32.mrb[0].mxu0
      %v5463 = vadd.f32 0.0, %v5462
      %v5464 = vpop.f32.mrb[0].mxu0
      %5465 = vmatprep.mubr.bf16.mxu0 0
      %5466 = vmatmul.mubr.bf16.gmra.mrb[0].mxu0 %v5305
      %v5467 = vpop.f32.mrb[0].mxu0
      %v5468 = vadd.f32 0.0, %v5467
      %v5469 = vpop.f32.mrb[0].mxu0
      %v5470 = vpop.f32.mrb[0].mxu0
      %v5471 = vadd.f32 0.0, %v5470
      %v5472 = vpop.f32.mrb[0].mxu0
      %5473 = vmatprep.mubr.bf16.mxu0 0
      %5474 = vmatmul.mubr.bf16.gmra.mrb[0].mxu0 %v5306
      %v5475 = vpop.f32.mrb[0].mxu0
      %v5476 = vadd.f32 0.0, %v5475
      %v5477 = vpop.f32.mrb[0].mxu0
      %v5478 = vpop.f32.mrb[0].mxu0
      %v5479 = vadd.f32 0.0, %v5478
      %v5480 = vpop.f32.mrb[0].mxu0
      %5481 = vmatprep.mubr.bf16.mxu0 0
      %5482 = vmatmul.mubr.bf16.gmra.mrb[0].mxu0 %v5307
      %v5483 = vpop.f32.mrb[0].mxu0
      %v5484 = vadd.f32 0.0, %v5483
      %v5485 = vpop.f32.mrb[0].mxu0
      %v5486 = vpop.f32.mrb[0].mxu0
      %v5487 = vadd.f32 0.0, %v5486
      %v5488 = vpop.f32.mrb[0].mxu0
      %5489 = vmatprep.mubr.bf16.mxu0 0
      %5490 = vmatmul.mubr.bf16.gmra.mrb[0].mxu0 %v5308
      %v5491 = vpop.f32.mrb[0].mxu0
      %v5492 = vadd.f32 0.0, %v5491
      %v5493 = vpop.f32.mrb[0].mxu0
      %v5494 = vpop.f32.mrb[0].mxu0
      %v5495 = vadd.f32 0.0, %v5494
      %v5496 = vpop.f32.mrb[0].mxu0
      %5497 = vmatprep.mubr.bf16.mxu0 0
      %5498 = vmatmul.mubr.bf16.gmra.mrb[0].mxu0 %v5309
      %v5499 = vpop.f32.mrb[0].mxu0
      %v5500 = vadd.f32 0.0, %v5499
      %v5501 = vpop.f32.mrb[0].mxu0
      %v5502 = vpop.f32.mrb[0].mxu0
      %v5503 = vadd.f32 0.0, %v5502
      %v5504 = vpop.f32.mrb[0].mxu0
      %5505 = vmatprep.mubr.bf16.mxu0 0
      %5506 = vmatmul.mubr.bf16.gmra.mrb[0].mxu0 %v5310
      %v5507 = vpop.f32.mrb[0].mxu0
      %v5508 = vadd.f32 0.0, %v5507
      %v5509 = vpop.f32.mrb[0].mxu0
      %v5510 = vpop.f32.mrb[0].mxu0
      %v5511 = vadd.f32 0.0, %v5510
      %v5512 = vpop.f32.mrb[0].mxu0
      %5513 = vmatprep.mubr.bf16.mxu0 0
      %5514 = vmatmul.mubr.bf16.gmra.mrb[0].mxu0 %v5311
      %v5515 = vpop.f32.mrb[0].mxu0
      %v5516 = vadd.f32 0.0, %v5515
      %v5517 = vpop.f32.mrb[0].mxu0
      %v5518 = vpop.f32.mrb[0].mxu0
      %v5519 = vadd.f32 0.0, %v5518
      %v5520 = vpop.f32.mrb[0].mxu0
      %5521 = vmatprep.mubr.bf16.mxu0 0
      %5522 = vmatmul.mubr.bf16.gmra.mrb[0].mxu0 %v5312
      %v5523 = vpop.f32.mrb[0].mxu0
      %v5524 = vadd.f32 0.0, %v5523
      %v5525 = vpop.f32.mrb[0].mxu0
      %v5526 = vpop.f32.mrb[0].mxu0
      %v5527 = vadd.f32 0.0, %v5526
      %v5528 = vpop.f32.mrb[0].mxu0
      %5529 = vmatprep.mubr.bf16.mxu0 0
      %5530 = vmatmul.mubr.bf16.gmra.mrb[0].mxu0 %v5313
      %v5531 = vpop.f32.mrb[0].mxu0
      %v5532 = vadd.f32 0.0, %v5531
      %v5533 = vpop.f32.mrb[0].mxu0
      %v5534 = vpop.f32.mrb[0].mxu0
      %v5535 = vadd.f32 0.0, %v5534
      %v5536 = vpop.f32.mrb[0].mxu0
      %5537 = vmatprep.mubr.bf16.mxu0 0
      %5538 = vmatmul.mubr.bf16.gmra.mrb[0].mxu0 %v5314
      %v5539 = vpop.f32.mrb[0].mxu0
      %v5540 = vadd.f32 0.0, %v5539
      %v5541 = vpop.f32.mrb[0].mxu0
      %v5542 = vpop.f32.mrb[0].mxu0
      %v5543 = vadd.f32 0.0, %v5542
      %v5544 = vpop.f32.mrb[0].mxu0
      %5545 = vmatprep.mubr.bf16.mxu0 0
      %5546 = vmatmul.mubr.bf16.gmra.mrb[0].mxu0 %v5315
      %v5547 = vpop.f32.mrb[0].mxu0
      %v5548 = vadd.f32 0.0, %v5547
      %v5549 = vpop.f32.mrb[0].mxu0
      %v5550 = vpop.f32.mrb[0].mxu0
      %v5551 = vadd.f32 0.0, %v5550
      %v5552 = vpop.f32.mrb[0].mxu0
      %5553 = vmatprep.mubr.bf16.mxu0 0
      %5554 = vmatmul.mubr.bf16.gmra.mrb[0].mxu0 %v5316
      %v5555 = vpop.f32.mrb[0].mxu0
      %v5556 = vadd.f32 0.0, %v5555
      %v5557 = vpop.f32.mrb[0].mxu0
      %v5558 = vpop.f32.mrb[0].mxu0
      %v5559 = vadd.f32 0.0, %v5558
      %v5560 = vpop.f32.mrb[0].mxu0
      %5561 = vmatprep.mubr.bf16.mxu0 0
      %5562 = vmatmul.mubr.bf16.gmra.mrb[0].mxu0 %v5317
      %v5563 = vpop.f32.mrb[0].mxu0
      %v5564 = vadd.f32 0.0, %v5563
      %v5565 = vpop.f32.mrb[0].mxu0
      %v5566 = vpop.f32.mrb[0].mxu0
      %v5567 = vadd.f32 0.0, %v5566
      %v5568 = vpop.f32.mrb[0].mxu0
      %5569 = vmatprep.mubr.bf16.mxu0 0
      %5570 = vmatmul.mubr.bf16.gmra.mrb[0].mxu0 %v5318
      %v5571 = vpop.f32.mrb[0].mxu0
      %v5572 = vadd.f32 0.0, %v5571
      %v5573 = vpop.f32.mrb[0].mxu0
      %v5574 = vpop.f32.mrb[0].mxu0
      %v5575 = vadd.f32 0.0, %v5574
      %v5576 = vpop.f32.mrb[0].mxu0
      %5577 = vmatprep.mubr.bf16.mxu0 0
      %5578 = vmatmul.mubr.bf16.gmra.mrb[0].mxu0 %v5319
      %v5579 = vpop.f32.mrb[0].mxu0
      %v5580 = vadd.f32 0.0, %v5579
      %v5581 = vpop.f32.mrb[0].mxu0
      %v5582 = vpop.f32.mrb[0].mxu0
      %v5583 = vpop.f32.mrb[0].mxu0
      %5584 = vdwg.mxu0
      %v5585 = vadd.f32 %v5093, %v5420
      %v5586 = vadd.f32 %v5096, %v5423
      %v5587 = vadd.f32 %v5101, %v5428
      %v5588 = vadd.f32 %v5104, %v5431
      %v5589 = vadd.f32 %v5109, %v5436
      %v5590 = vadd.f32 %v5112, %v5439
      %v5591 = vadd.f32 %v5117, %v5444
      %v5592 = vadd.f32 %v5120, %v5447
      %v5593 = vadd.f32 %v5125, %v5452
      %v5594 = vadd.f32 %v5128, %v5455
      %v5595 = vadd.f32 %v5133, %v5460
      %v5596 = vadd.f32 %v5136, %v5463
      %v5597 = vadd.f32 %v5141, %v5468
      %v5598 = vadd.f32 %v5144, %v5471
      %v5599 = vadd.f32 %v5149, %v5476
      %v5600 = vadd.f32 %v5152, %v5479
      %v5601 = vadd.f32 %v5157, %v5484
      %v5602 = vadd.f32 %v5160, %v5487
      %v5603 = vadd.f32 %v5165, %v5492
      %v5604 = vadd.f32 %v5168, %v5495
      %v5605 = vadd.f32 %v5173, %v5500
      %v5606 = vadd.f32 %v5176, %v5503
      %v5607 = vadd.f32 %v5181, %v5508
      %v5608 = vadd.f32 %v5184, %v5511
      %v5609 = vadd.f32 %v5189, %v5516
      %v5610 = vadd.f32 %v5192, %v5519
      %v5611 = vadd.f32 %v5197, %v5524
      %v5612 = vadd.f32 %v5200, %v5527
      %v5613 = vadd.f32 %v5205, %v5532
      %v5614 = vadd.f32 %v5208, %v5535
      %v5615 = vadd.f32 %v5213, %v5540
      %v5616 = vadd.f32 %v5216, %v5543
      %v5617 = vadd.f32 %v5221, %v5548
      %v5618 = vadd.f32 %v5224, %v5551
      %v5619 = vadd.f32 %v5229, %v5556
      %v5620 = vadd.f32 %v5232, %v5559
      %v5621 = vadd.f32 %v5237, %v5564
      %v5622 = vadd.f32 %v5240, %v5567
      %v5623 = vadd.f32 %v5245, %v5572
      %v5624 = vadd.f32 %v5248, %v5575
      %v5625 = vadd.f32 %v5253, %v5580
      %v5626 = vld [vmem:[#allocation3 + $0x17] sm:$0xff]
      %v5627 = vld [vmem:[#allocation3 + $0x1f] sm:$0xff]
      %v5628 = vld [vmem:[#allocation3 + $0x27] sm:$0xff]
      %v5629 = vld [vmem:[#allocation3 + $0x2f] sm:$0xff]
      %v5630 = vld [vmem:[#allocation3 + $0x37] sm:$0xff]
      %v5631 = vld [vmem:[#allocation3 + $0x3f] sm:$0xff]
      %v5632 = vld [vmem:[#allocation3 + $0x47] sm:$0xff]
      %v5633 = vld [vmem:[#allocation3 + $0x4f] sm:$0xff]
      %v5634 = vld [vmem:[#allocation3 + $0x57] sm:$0xff]
      %v5635 = vld [vmem:[#allocation3 + $0x5f] sm:$0xff]
      %v5636 = vld [vmem:[#allocation3 + $0x67] sm:$0xff]
      %v5637 = vld [vmem:[#allocation3 + $0x6f] sm:$0xff]
      %v5638 = vld [vmem:[#allocation3 + $0x77] sm:$0xff]
      %v5639 = vld [vmem:[#allocation3 + $0x7f] sm:$0xff]
      %v5640 = vld [vmem:[#allocation3 + $0x87] sm:$0xff]
      %v5641 = vld [vmem:[#allocation3 + $0x8f] sm:$0xff]
      %v5642 = vld [vmem:[#allocation3 + $0x97] sm:$0xff]
      %v5643 = vld [vmem:[#allocation3 + $0x9f] sm:$0xff]
      %v5644 = vld [vmem:[#allocation3 + $0xa7] sm:$0xff]
      %v5645 = vld [vmem:[#allocation3 + $0xaf] sm:$0xff]
      %v5646 = vld [vmem:[#allocation3 + $0xb7] sm:$0xff]
      %v5647 = vld [vmem:[#allocation3 + $0xbf] sm:$0xff]
      %v5648 = vld [vmem:[#allocation3 + $0xc7] sm:$0xff]
      %v5649 = vld [vmem:[#allocation3 + $0xcf] sm:$0xff]
      %v5650 = vld [vmem:[#allocation3 + $0xd7] sm:$0xff]
      %v5651 = vld [vmem:[#allocation3 + $0xdf] sm:$0xff]
      %v5652 = vld [vmem:[#allocation3 + $0xe7] sm:$0xff]
      %v5653 = vld [vmem:[#allocation3 + $0xef] sm:$0xff]
      %v5654 = vld [vmem:[#allocation3 + $0xf7] sm:$0xff]
      %v5655 = vld [vmem:[#allocation3 + $0xff] sm:$0xff]
      %v5656 = vld [vmem:[#allocation3 + $0x107] sm:$0xff]
      %v5657 = vld [vmem:[#allocation3 + $0x10f] sm:$0xff]
      %v5658 = vld [vmem:[#allocation3 + $0x117] sm:$0xff]
      %v5659 = vld [vmem:[#allocation3 + $0x11f] sm:$0xff]
      %v5660 = vld [vmem:[#allocation3 + $0x127] sm:$0xff]
      %v5661 = vld [vmem:[#allocation3 + $0x12f] sm:$0xff]
      %v5662 = vld [vmem:[#allocation3 + $0x137] sm:$0xff]
      %v5663 = vld [vmem:[#allocation3 + $0x13f] sm:$0xff]
      %v5664 = vld [vmem:[#allocation3 + $0x147] sm:$0xff]
      %v5665 = vld [vmem:[#allocation3 + $0x14f] sm:$0xff]
      %v5666 = vld [vmem:[#allocation3 + $0x157] sm:$0xf]
      %v5667 = vpack.c.bf16 %v5627, %v5626
      %v5668 = vpack.c.bf16 %v5629, %v5628
      %v5669 = vpack.c.bf16 %v5631, %v5630
      %v5670 = vpack.c.bf16 %v5633, %v5632
      %v5671 = vpack.c.bf16 %v5635, %v5634
      %v5672 = vpack.c.bf16 %v5637, %v5636
      %v5673 = vpack.c.bf16 %v5639, %v5638
      %v5674 = vpack.c.bf16 %v5641, %v5640
      %v5675 = vpack.c.bf16 %v5643, %v5642
      %v5676 = vpack.c.bf16 %v5645, %v5644
      %v5677 = vpack.c.bf16 %v5647, %v5646
      %v5678 = vpack.c.bf16 %v5649, %v5648
      %v5679 = vpack.c.bf16 %v5651, %v5650
      %v5680 = vpack.c.bf16 %v5653, %v5652
      %v5681 = vpack.c.bf16 %v5655, %v5654
      %v5682 = vpack.c.bf16 %v5657, %v5656
      %v5683 = vpack.c.bf16 %v5659, %v5658
      %v5684 = vpack.c.bf16 %v5661, %v5660
      %v5685 = vpack.c.bf16 %v5663, %v5662
      %v5686 = vpack.c.bf16 %v5665, %v5664
      %v5687 = vpack.c.bf16 %v5666, %v5666
      %s5688 = scalar_lea.vmem %s6, 192
      %v5689 = vld [vmem:[%s5688] sm:$0xf]
      %v5690 = vld [vmem:[%s5688 + $0x4] sm:$0xf]
      %v5691 = vld [vmem:[%s5688 + $0x8] sm:$0xf]
      %v5692 = vld [vmem:[%s5688 + $0xc] sm:$0xf]
      %v5693 = vld [vmem:[%s5688 + $0x10] sm:$0xf]
      %v5694 = vld [vmem:[%s5688 + $0x14] sm:$0xf]
      %v5695 = vld [vmem:[%s5688 + $0x18] sm:$0xf]
      %v5696 = vld [vmem:[%s5688 + $0x1c] sm:$0xf]
      %v5697 = vld [vmem:[%s5688 + $0x20] sm:$0xf]
      %v5698 = vld [vmem:[%s5688 + $0x24] sm:$0xf]
      %v5699 = vld [vmem:[%s5688 + $0x28] sm:$0xf]
      %v5700 = vld [vmem:[%s5688 + $0x2c] sm:$0xf]
      %v5701 = vld [vmem:[%s5688 + $0x30] sm:$0xf]
      %v5702 = vld [vmem:[%s5688 + $0x34] sm:$0xf]
      %v5703 = vld [vmem:[%s5688 + $0x38] sm:$0xf]
      %v5704 = vld [vmem:[%s5688 + $0x3c] sm:$0xf]
      %v5721 = vunpack.c.l.b16 %v5689
      %v5722 = vunpack.c.l.b16 %v5690
      %v5723 = vunpack.c.l.b16 %v5691
      %v5724 = vunpack.c.l.b16 %v5692
      %v5725 = vunpack.c.l.b16 %v5693
      %v5726 = vunpack.c.l.b16 %v5694
      %v5727 = vunpack.c.l.b16 %v5695
      %v5728 = vunpack.c.l.b16 %v5696
      %v5729 = vunpack.c.l.b16 %v5697
      %v5730 = vunpack.c.l.b16 %v5698
      %v5731 = vunpack.c.l.b16 %v5699
      %v5732 = vunpack.c.l.b16 %v5700
      %v5733 = vunpack.c.l.b16 %v5701
      %v5734 = vunpack.c.l.b16 %v5702
      %v5735 = vunpack.c.l.b16 %v5703
      %v5736 = vunpack.c.l.b16 %v5704
      %v5737 = vpack.c.b16 %v5722, %v5721
      %v5738 = vpack.c.b16 %v5724, %v5723
      %v5739 = vpack.c.b16 %v5726, %v5725
      %v5740 = vpack.c.b16 %v5728, %v5727
      %v5741 = vpack.c.b16 %v5730, %v5729
      %v5742 = vpack.c.b16 %v5732, %v5731
      %v5743 = vpack.c.b16 %v5734, %v5733
      %v5744 = vpack.c.b16 %v5736, %v5735
      %5753 = vmatprep.subr.bf16.mxu0 0
      %5754 = vmatpush1.bf16.msra.mxu0 %v5737
      %5755 = vmatprep.subr.bf16.mxu0 0
      %5756 = vmatpush1.bf16.msra.mxu0 %v5738
      %5757 = vmatprep.subr.bf16.mxu0 0
      %5758 = vmatpush1.bf16.msra.mxu0 %v5739
      %5759 = vmatprep.subr.bf16.mxu0 0
      %5760 = vmatpush1.bf16.msra.mxu0 %v5740
      %5761 = vmatprep.subr.bf16.mxu0 0
      %5762 = vmatpush1.bf16.msra.mxu0 %v5741
      %5763 = vmatprep.subr.bf16.mxu0 0
      %5764 = vmatpush1.bf16.msra.mxu0 %v5742
      %5765 = vmatprep.subr.bf16.mxu0 0
      %5766 = vmatpush1.bf16.msra.mxu0 %v5743
      %5767 = vmatprep.subr.bf16.mxu0 0
      %5768 = vmatpush1.bf16.msra.mxu0 %v5744
      %5769 = vmatprep.subr.bf16.mxu0 0
      %5770 = vmatpush1.bf16.msra.mxu0 0
      %5771 = vmatprep.subr.bf16.mxu0 0
      %5772 = vmatpush1.bf16.msra.mxu0 0
      %5773 = vmatprep.subr.bf16.mxu0 0
      %5774 = vmatpush1.bf16.msra.mxu0 0
      %5775 = vmatprep.subr.bf16.mxu0 0
      %5776 = vmatpush1.bf16.msra.mxu0 0
      %5777 = vmatprep.subr.bf16.mxu0 0
      %5778 = vmatpush1.bf16.msra.mxu0 0
      %5779 = vmatprep.subr.bf16.mxu0 0
      %5780 = vmatpush1.bf16.msra.mxu0 0
      %5781 = vmatprep.subr.bf16.mxu0 0
      %5782 = vmatpush1.bf16.msra.mxu0 0
      %5783 = vmatprep.subr.bf16.mxu0 0
      %5784 = vmatpush1.bf16.msra.mxu0 0
      %5785 = vmatprep.mubr.bf16.mxu0 0
      %5786 = vmatmul.mubr.bf16.gmra.mrb[0].mxu0 %v5667
      %v5787 = vpop.f32.mrb[0].mxu0
      %v5788 = vadd.f32 0.0, %v5787
      %v5789 = vpop.f32.mrb[0].mxu0
      %v5790 = vpop.f32.mrb[0].mxu0
      %v5791 = vadd.f32 0.0, %v5790
      %v5792 = vpop.f32.mrb[0].mxu0
      %5793 = vmatprep.mubr.bf16.mxu0 0
      %5794 = vmatmul.mubr.bf16.gmra.mrb[0].mxu0 %v5668
      %v5795 = vpop.f32.mrb[0].mxu0
      %v5796 = vadd.f32 0.0, %v5795
      %v5797 = vpop.f32.mrb[0].mxu0
      %v5798 = vpop.f32.mrb[0].mxu0
      %v5799 = vadd.f32 0.0, %v5798
      %v5800 = vpop.f32.mrb[0].mxu0
      %5801 = vmatprep.mubr.bf16.mxu0 0
      %5802 = vmatmul.mubr.bf16.gmra.mrb[0].mxu0 %v5669
      %v5803 = vpop.f32.mrb[0].mxu0
      %v5804 = vadd.f32 0.0, %v5803
      %v5805 = vpop.f32.mrb[0].mxu0
      %v5806 = vpop.f32.mrb[0].mxu0
      %v5807 = vadd.f32 0.0, %v5806
      %v5808 = vpop.f32.mrb[0].mxu0
      %5809 = vmatprep.mubr.bf16.mxu0 0
      %5810 = vmatmul.mubr.bf16.gmra.mrb[0].mxu0 %v5670
      %v5811 = vpop.f32.mrb[0].mxu0
      %v5812 = vadd.f32 0.0, %v5811
      %v5813 = vpop.f32.mrb[0].mxu0
      %v5814 = vpop.f32.mrb[0].mxu0
      %v5815 = vadd.f32 0.0, %v5814
      %v5816 = vpop.f32.mrb[0].mxu0
      %5817 = vmatprep.mubr.bf16.mxu0 0
      %5818 = vmatmul.mubr.bf16.gmra.mrb[0].mxu0 %v5671
      %v5819 = vpop.f32.mrb[0].mxu0
      %v5820 = vadd.f32 0.0, %v5819
      %v5821 = vpop.f32.mrb[0].mxu0
      %v5822 = vpop.f32.mrb[0].mxu0
      %v5823 = vadd.f32 0.0, %v5822
      %v5824 = vpop.f32.mrb[0].mxu0
      %5825 = vmatprep.mubr.bf16.mxu0 0
      %5826 = vmatmul.mubr.bf16.gmra.mrb[0].mxu0 %v5672
      %v5827 = vpop.f32.mrb[0].mxu0
      %v5828 = vadd.f32 0.0, %v5827
      %v5829 = vpop.f32.mrb[0].mxu0
      %v5830 = vpop.f32.mrb[0].mxu0
      %v5831 = vadd.f32 0.0, %v5830
      %v5832 = vpop.f32.mrb[0].mxu0
      %5833 = vmatprep.mubr.bf16.mxu0 0
      %5834 = vmatmul.mubr.bf16.gmra.mrb[0].mxu0 %v5673
      %v5835 = vpop.f32.mrb[0].mxu0
      %v5836 = vadd.f32 0.0, %v5835
      %v5837 = vpop.f32.mrb[0].mxu0
      %v5838 = vpop.f32.mrb[0].mxu0
      %v5839 = vadd.f32 0.0, %v5838
      %v5840 = vpop.f32.mrb[0].mxu0
      %5841 = vmatprep.mubr.bf16.mxu0 0
      %5842 = vmatmul.mubr.bf16.gmra.mrb[0].mxu0 %v5674
      %v5843 = vpop.f32.mrb[0].mxu0
      %v5844 = vadd.f32 0.0, %v5843
      %v5845 = vpop.f32.mrb[0].mxu0
      %v5846 = vpop.f32.mrb[0].mxu0
      %v5847 = vadd.f32 0.0, %v5846
      %v5848 = vpop.f32.mrb[0].mxu0
      %5849 = vmatprep.mubr.bf16.mxu0 0
      %5850 = vmatmul.mubr.bf16.gmra.mrb[0].mxu0 %v5675
      %v5851 = vpop.f32.mrb[0].mxu0
      %v5852 = vadd.f32 0.0, %v5851
      %v5853 = vpop.f32.mrb[0].mxu0
      %v5854 = vpop.f32.mrb[0].mxu0
      %v5855 = vadd.f32 0.0, %v5854
      %v5856 = vpop.f32.mrb[0].mxu0
      %5857 = vmatprep.mubr.bf16.mxu0 0
      %5858 = vmatmul.mubr.bf16.gmra.mrb[0].mxu0 %v5676
      %v5859 = vpop.f32.mrb[0].mxu0
      %v5860 = vadd.f32 0.0, %v5859
      %v5861 = vpop.f32.mrb[0].mxu0
      %v5862 = vpop.f32.mrb[0].mxu0
      %v5863 = vadd.f32 0.0, %v5862
      %v5864 = vpop.f32.mrb[0].mxu0
      %5865 = vmatprep.mubr.bf16.mxu0 0
      %5866 = vmatmul.mubr.bf16.gmra.mrb[0].mxu0 %v5677
      %v5867 = vpop.f32.mrb[0].mxu0
      %v5868 = vadd.f32 0.0, %v5867
      %v5869 = vpop.f32.mrb[0].mxu0
      %v5870 = vpop.f32.mrb[0].mxu0
      %v5871 = vadd.f32 0.0, %v5870
      %v5872 = vpop.f32.mrb[0].mxu0
      %5873 = vmatprep.mubr.bf16.mxu0 0
      %5874 = vmatmul.mubr.bf16.gmra.mrb[0].mxu0 %v5678
      %v5875 = vpop.f32.mrb[0].mxu0
      %v5876 = vadd.f32 0.0, %v5875
      %v5877 = vpop.f32.mrb[0].mxu0
      %v5878 = vpop.f32.mrb[0].mxu0
      %v5879 = vadd.f32 0.0, %v5878
      %v5880 = vpop.f32.mrb[0].mxu0
      %5881 = vmatprep.mubr.bf16.mxu0 0
      %5882 = vmatmul.mubr.bf16.gmra.mrb[0].mxu0 %v5679
      %v5883 = vpop.f32.mrb[0].mxu0
      %v5884 = vadd.f32 0.0, %v5883
      %v5885 = vpop.f32.mrb[0].mxu0
      %v5886 = vpop.f32.mrb[0].mxu0
      %v5887 = vadd.f32 0.0, %v5886
      %v5888 = vpop.f32.mrb[0].mxu0
      %5889 = vmatprep.mubr.bf16.mxu0 0
      %5890 = vmatmul.mubr.bf16.gmra.mrb[0].mxu0 %v5680
      %v5891 = vpop.f32.mrb[0].mxu0
      %v5892 = vadd.f32 0.0, %v5891
      %v5893 = vpop.f32.mrb[0].mxu0
      %v5894 = vpop.f32.mrb[0].mxu0
      %v5895 = vadd.f32 0.0, %v5894
      %v5896 = vpop.f32.mrb[0].mxu0
      %5897 = vmatprep.mubr.bf16.mxu0 0
      %5898 = vmatmul.mubr.bf16.gmra.mrb[0].mxu0 %v5681
      %v5899 = vpop.f32.mrb[0].mxu0
      %v5900 = vadd.f32 0.0, %v5899
      %v5901 = vpop.f32.mrb[0].mxu0
      %v5902 = vpop.f32.mrb[0].mxu0
      %v5903 = vadd.f32 0.0, %v5902
      %v5904 = vpop.f32.mrb[0].mxu0
      %5905 = vmatprep.mubr.bf16.mxu0 0
      %5906 = vmatmul.mubr.bf16.gmra.mrb[0].mxu0 %v5682
      %v5907 = vpop.f32.mrb[0].mxu0
      %v5908 = vadd.f32 0.0, %v5907
      %v5909 = vpop.f32.mrb[0].mxu0
      %v5910 = vpop.f32.mrb[0].mxu0
      %v5911 = vadd.f32 0.0, %v5910
      %v5912 = vpop.f32.mrb[0].mxu0
      %5913 = vmatprep.mubr.bf16.mxu0 0
      %5914 = vmatmul.mubr.bf16.gmra.mrb[0].mxu0 %v5683
      %v5915 = vpop.f32.mrb[0].mxu0
      %v5916 = vadd.f32 0.0, %v5915
      %v5917 = vpop.f32.mrb[0].mxu0
      %v5918 = vpop.f32.mrb[0].mxu0
      %v5919 = vadd.f32 0.0, %v5918
      %v5920 = vpop.f32.mrb[0].mxu0
      %5921 = vmatprep.mubr.bf16.mxu0 0
      %5922 = vmatmul.mubr.bf16.gmra.mrb[0].mxu0 %v5684
      %v5923 = vpop.f32.mrb[0].mxu0
      %v5924 = vadd.f32 0.0, %v5923
      %v5925 = vpop.f32.mrb[0].mxu0
      %v5926 = vpop.f32.mrb[0].mxu0
      %v5927 = vadd.f32 0.0, %v5926
      %v5928 = vpop.f32.mrb[0].mxu0
      %5929 = vmatprep.mubr.bf16.mxu0 0
      %5930 = vmatmul.mubr.bf16.gmra.mrb[0].mxu0 %v5685
      %v5931 = vpop.f32.mrb[0].mxu0
      %v5932 = vadd.f32 0.0, %v5931
      %v5933 = vpop.f32.mrb[0].mxu0
      %v5934 = vpop.f32.mrb[0].mxu0
      %v5935 = vadd.f32 0.0, %v5934
      %v5936 = vpop.f32.mrb[0].mxu0
      %5937 = vmatprep.mubr.bf16.mxu0 0
      %5938 = vmatmul.mubr.bf16.gmra.mrb[0].mxu0 %v5686
      %v5939 = vpop.f32.mrb[0].mxu0
      %v5940 = vadd.f32 0.0, %v5939
      %v5941 = vpop.f32.mrb[0].mxu0
      %v5942 = vpop.f32.mrb[0].mxu0
      %v5943 = vadd.f32 0.0, %v5942
      %v5944 = vpop.f32.mrb[0].mxu0
      %5945 = vmatprep.mubr.bf16.mxu0 0
      %5946 = vmatmul.mubr.bf16.gmra.mrb[0].mxu0 %v5687
      %v5947 = vpop.f32.mrb[0].mxu0
      %v5948 = vadd.f32 0.0, %v5947
      %v5949 = vpop.f32.mrb[0].mxu0
      %v5950 = vpop.f32.mrb[0].mxu0
      %v5951 = vpop.f32.mrb[0].mxu0
      %5952 = vdwg.mxu0
      %v5953 = vadd.f32 %v5585, %v5788
      %v5954 = vadd.f32 %v5586, %v5791
      %v5955 = vadd.f32 %v5587, %v5796
      %v5956 = vadd.f32 %v5588, %v5799
      %v5957 = vadd.f32 %v5589, %v5804
      %v5958 = vadd.f32 %v5590, %v5807
      %v5959 = vadd.f32 %v5591, %v5812
      %v5960 = vadd.f32 %v5592, %v5815
      %v5961 = vadd.f32 %v5593, %v5820
      %v5962 = vadd.f32 %v5594, %v5823
      %v5963 = vadd.f32 %v5595, %v5828
      %v5964 = vadd.f32 %v5596, %v5831
      %v5965 = vadd.f32 %v5597, %v5836
      %v5966 = vadd.f32 %v5598, %v5839
      %v5967 = vadd.f32 %v5599, %v5844
      %v5968 = vadd.f32 %v5600, %v5847
      %v5969 = vadd.f32 %v5601, %v5852
      %v5970 = vadd.f32 %v5602, %v5855
      %v5971 = vadd.f32 %v5603, %v5860
      %v5972 = vadd.f32 %v5604, %v5863
      %v5973 = vadd.f32 %v5605, %v5868
      %v5974 = vadd.f32 %v5606, %v5871
      %v5975 = vadd.f32 %v5607, %v5876
      %v5976 = vadd.f32 %v5608, %v5879
      %v5977 = vadd.f32 %v5609, %v5884
      %v5978 = vadd.f32 %v5610, %v5887
      %v5979 = vadd.f32 %v5611, %v5892
      %v5980 = vadd.f32 %v5612, %v5895
      %v5981 = vadd.f32 %v5613, %v5900
      %v5982 = vadd.f32 %v5614, %v5903
      %v5983 = vadd.f32 %v5615, %v5908
      %v5984 = vadd.f32 %v5616, %v5911
      %v5985 = vadd.f32 %v5617, %v5916
      %v5986 = vadd.f32 %v5618, %v5919
      %v5987 = vadd.f32 %v5619, %v5924
      %v5988 = vadd.f32 %v5620, %v5927
      %v5989 = vadd.f32 %v5621, %v5932
      %v5990 = vadd.f32 %v5622, %v5935
      %v5991 = vadd.f32 %v5623, %v5940
      %v5992 = vadd.f32 %v5624, %v5943
      %v5993 = vadd.f32 %v5625, %v5948
      %v5994 = vld [vmem:[#allocation3 + $0x18] sm:$0xff]
      %v5995 = vld [vmem:[#allocation3 + $0x20] sm:$0xff]
      %v5996 = vld [vmem:[#allocation3 + $0x28] sm:$0xff]
      %v5997 = vld [vmem:[#allocation3 + $0x30] sm:$0xff]
      %v5998 = vld [vmem:[#allocation3 + $0x38] sm:$0xff]
      %v5999 = vld [vmem:[#allocation3 + $0x40] sm:$0xff]
      %v6000 = vld [vmem:[#allocation3 + $0x48] sm:$0xff]
      %v6001 = vld [vmem:[#allocation3 + $0x50] sm:$0xff]
      %v6002 = vld [vmem:[#allocation3 + $0x58] sm:$0xff]
      %v6003 = vld [vmem:[#allocation3 + $0x60] sm:$0xff]
      %v6004 = vld [vmem:[#allocation3 + $0x68] sm:$0xff]
      %v6005 = vld [vmem:[#allocation3 + $0x70] sm:$0xff]
      %v6006 = vld [vmem:[#allocation3 + $0x78] sm:$0xff]
      %v6007 = vld [vmem:[#allocation3 + $0x80] sm:$0xff]
      %v6008 = vld [vmem:[#allocation3 + $0x88] sm:$0xff]
      %v6009 = vld [vmem:[#allocation3 + $0x90] sm:$0xff]
      %v6010 = vld [vmem:[#allocation3 + $0x98] sm:$0xff]
      %v6011 = vld [vmem:[#allocation3 + $0xa0] sm:$0xff]
      %v6012 = vld [vmem:[#allocation3 + $0xa8] sm:$0xff]
      %v6013 = vld [vmem:[#allocation3 + $0xb0] sm:$0xff]
      %v6014 = vld [vmem:[#allocation3 + $0xb8] sm:$0xff]
      %v6015 = vld [vmem:[#allocation3 + $0xc0] sm:$0xff]
      %v6016 = vld [vmem:[#allocation3 + $0xc8] sm:$0xff]
      %v6017 = vld [vmem:[#allocation3 + $0xd0] sm:$0xff]
      %v6018 = vld [vmem:[#allocation3 + $0xd8] sm:$0xff]
      %v6019 = vld [vmem:[#allocation3 + $0xe0] sm:$0xff]
      %v6020 = vld [vmem:[#allocation3 + $0xe8] sm:$0xff]
      %v6021 = vld [vmem:[#allocation3 + $0xf0] sm:$0xff]
      %v6022 = vld [vmem:[#allocation3 + $0xf8] sm:$0xff]
      %v6023 = vld [vmem:[#allocation3 + $0x100] sm:$0xff]
      %v6024 = vld [vmem:[#allocation3 + $0x108] sm:$0xff]
      %v6025 = vld [vmem:[#allocation3 + $0x110] sm:$0xff]
      %v6026 = vld [vmem:[#allocation3 + $0x118] sm:$0xff]
      %v6027 = vld [vmem:[#allocation3 + $0x120] sm:$0xff]
      %v6028 = vld [vmem:[#allocation3 + $0x128] sm:$0xff]
      %v6029 = vld [vmem:[#allocation3 + $0x130] sm:$0xff]
      %v6030 = vld [vmem:[#allocation3 + $0x138] sm:$0xff]
      %v6031 = vld [vmem:[#allocation3 + $0x140] sm:$0xff]
      %v6032 = vld [vmem:[#allocation3 + $0x148] sm:$0xff]
      %v6033 = vld [vmem:[#allocation3 + $0x150] sm:$0xff]
      %v6034 = vld [vmem:[#allocation3 + $0x158] sm:$0xf]
      %v6035 = vpack.c.bf16 %v5995, %v5994
      %v6036 = vpack.c.bf16 %v5997, %v5996
      %v6037 = vpack.c.bf16 %v5999, %v5998
      %v6038 = vpack.c.bf16 %v6001, %v6000
      %v6039 = vpack.c.bf16 %v6003, %v6002
      %v6040 = vpack.c.bf16 %v6005, %v6004
      %v6041 = vpack.c.bf16 %v6007, %v6006
      %v6042 = vpack.c.bf16 %v6009, %v6008
      %v6043 = vpack.c.bf16 %v6011, %v6010
      %v6044 = vpack.c.bf16 %v6013, %v6012
      %v6045 = vpack.c.bf16 %v6015, %v6014
      %v6046 = vpack.c.bf16 %v6017, %v6016
      %v6047 = vpack.c.bf16 %v6019, %v6018
      %v6048 = vpack.c.bf16 %v6021, %v6020
      %v6049 = vpack.c.bf16 %v6023, %v6022
      %v6050 = vpack.c.bf16 %v6025, %v6024
      %v6051 = vpack.c.bf16 %v6027, %v6026
      %v6052 = vpack.c.bf16 %v6029, %v6028
      %v6053 = vpack.c.bf16 %v6031, %v6030
      %v6054 = vpack.c.bf16 %v6033, %v6032
      %v6055 = vpack.c.bf16 %v6034, %v6034
      %s6056 = scalar_lea.vmem %s6, 256
      %v6057 = vld [vmem:[%s6056] sm:$0xf]
      %v6058 = vld [vmem:[%s6056 + $0x4] sm:$0xf]
      %v6059 = vld [vmem:[%s6056 + $0x8] sm:$0xf]
      %v6060 = vld [vmem:[%s6056 + $0xc] sm:$0xf]
      %v6061 = vld [vmem:[%s6056 + $0x10] sm:$0xf]
      %v6062 = vld [vmem:[%s6056 + $0x14] sm:$0xf]
      %v6063 = vld [vmem:[%s6056 + $0x18] sm:$0xf]
      %v6064 = vld [vmem:[%s6056 + $0x1c] sm:$0xf]
      %v6065 = vld [vmem:[%s6056 + $0x20] sm:$0xf]
      %v6066 = vld [vmem:[%s6056 + $0x24] sm:$0xf]
      %v6067 = vld [vmem:[%s6056 + $0x28] sm:$0xf]
      %v6068 = vld [vmem:[%s6056 + $0x2c] sm:$0xf]
      %v6069 = vld [vmem:[%s6056 + $0x30] sm:$0xf]
      %v6070 = vld [vmem:[%s6056 + $0x34] sm:$0xf]
      %v6071 = vld [vmem:[%s6056 + $0x38] sm:$0xf]
      %v6072 = vld [vmem:[%s6056 + $0x3c] sm:$0xf]
      %v6089 = vunpack.c.l.b16 %v6057
      %v6090 = vunpack.c.l.b16 %v6058
      %v6091 = vunpack.c.l.b16 %v6059
      %v6092 = vunpack.c.l.b16 %v6060
      %v6093 = vunpack.c.l.b16 %v6061
      %v6094 = vunpack.c.l.b16 %v6062
      %v6095 = vunpack.c.l.b16 %v6063
      %v6096 = vunpack.c.l.b16 %v6064
      %v6097 = vunpack.c.l.b16 %v6065
      %v6098 = vunpack.c.l.b16 %v6066
      %v6099 = vunpack.c.l.b16 %v6067
      %v6100 = vunpack.c.l.b16 %v6068
      %v6101 = vunpack.c.l.b16 %v6069
      %v6102 = vunpack.c.l.b16 %v6070
      %v6103 = vunpack.c.l.b16 %v6071
      %v6104 = vunpack.c.l.b16 %v6072
      %v6105 = vpack.c.b16 %v6090, %v6089
      %v6106 = vpack.c.b16 %v6092, %v6091
      %v6107 = vpack.c.b16 %v6094, %v6093
      %v6108 = vpack.c.b16 %v6096, %v6095
      %v6109 = vpack.c.b16 %v6098, %v6097
      %v6110 = vpack.c.b16 %v6100, %v6099
      %v6111 = vpack.c.b16 %v6102, %v6101
      %v6112 = vpack.c.b16 %v6104, %v6103
      %6121 = vmatprep.subr.bf16.mxu0 0
      %6122 = vmatpush1.bf16.msra.mxu0 %v6105
      %6123 = vmatprep.subr.bf16.mxu0 0
      %6124 = vmatpush1.bf16.msra.mxu0 %v6106
      %6125 = vmatprep.subr.bf16.mxu0 0
      %6126 = vmatpush1.bf16.msra.mxu0 %v6107
      %6127 = vmatprep.subr.bf16.mxu0 0
      %6128 = vmatpush1.bf16.msra.mxu0 %v6108
      %6129 = vmatprep.subr.bf16.mxu0 0
      %6130 = vmatpush1.bf16.msra.mxu0 %v6109
      %6131 = vmatprep.subr.bf16.mxu0 0
      %6132 = vmatpush1.bf16.msra.mxu0 %v6110
      %6133 = vmatprep.subr.bf16.mxu0 0
      %6134 = vmatpush1.bf16.msra.mxu0 %v6111
      %6135 = vmatprep.subr.bf16.mxu0 0
      %6136 = vmatpush1.bf16.msra.mxu0 %v6112
      %6137 = vmatprep.subr.bf16.mxu0 0
      %6138 = vmatpush1.bf16.msra.mxu0 0
      %6139 = vmatprep.subr.bf16.mxu0 0
      %6140 = vmatpush1.bf16.msra.mxu0 0
      %6141 = vmatprep.subr.bf16.mxu0 0
      %6142 = vmatpush1.bf16.msra.mxu0 0
      %6143 = vmatprep.subr.bf16.mxu0 0
      %6144 = vmatpush1.bf16.msra.mxu0 0
      %6145 = vmatprep.subr.bf16.mxu0 0
      %6146 = vmatpush1.bf16.msra.mxu0 0
      %6147 = vmatprep.subr.bf16.mxu0 0
      %6148 = vmatpush1.bf16.msra.mxu0 0
      %6149 = vmatprep.subr.bf16.mxu0 0
      %6150 = vmatpush1.bf16.msra.mxu0 0
      %6151 = vmatprep.subr.bf16.mxu0 0
      %6152 = vmatpush1.bf16.msra.mxu0 0
      %6153 = vmatprep.mubr.bf16.mxu0 0
      %6154 = vmatmul.mubr.bf16.gmra.mrb[0].mxu0 %v6035
      %v6155 = vpop.f32.mrb[0].mxu0
      %v6156 = vadd.f32 0.0, %v6155
      %v6157 = vpop.f32.mrb[0].mxu0
      %v6158 = vpop.f32.mrb[0].mxu0
      %v6159 = vadd.f32 0.0, %v6158
      %v6160 = vpop.f32.mrb[0].mxu0
      %6161 = vmatprep.mubr.bf16.mxu0 0
      %6162 = vmatmul.mubr.bf16.gmra.mrb[0].mxu0 %v6036
      %v6163 = vpop.f32.mrb[0].mxu0
      %v6164 = vadd.f32 0.0, %v6163
      %v6165 = vpop.f32.mrb[0].mxu0
      %v6166 = vpop.f32.mrb[0].mxu0
      %v6167 = vadd.f32 0.0, %v6166
      %v6168 = vpop.f32.mrb[0].mxu0
      %6169 = vmatprep.mubr.bf16.mxu0 0
      %6170 = vmatmul.mubr.bf16.gmra.mrb[0].mxu0 %v6037
      %v6171 = vpop.f32.mrb[0].mxu0
      %v6172 = vadd.f32 0.0, %v6171
      %v6173 = vpop.f32.mrb[0].mxu0
      %v6174 = vpop.f32.mrb[0].mxu0
      %v6175 = vadd.f32 0.0, %v6174
      %v6176 = vpop.f32.mrb[0].mxu0
      %6177 = vmatprep.mubr.bf16.mxu0 0
      %6178 = vmatmul.mubr.bf16.gmra.mrb[0].mxu0 %v6038
      %v6179 = vpop.f32.mrb[0].mxu0
      %v6180 = vadd.f32 0.0, %v6179
      %v6181 = vpop.f32.mrb[0].mxu0
      %v6182 = vpop.f32.mrb[0].mxu0
      %v6183 = vadd.f32 0.0, %v6182
      %v6184 = vpop.f32.mrb[0].mxu0
      %6185 = vmatprep.mubr.bf16.mxu0 0
      %6186 = vmatmul.mubr.bf16.gmra.mrb[0].mxu0 %v6039
      %v6187 = vpop.f32.mrb[0].mxu0
      %v6188 = vadd.f32 0.0, %v6187
      %v6189 = vpop.f32.mrb[0].mxu0
      %v6190 = vpop.f32.mrb[0].mxu0
      %v6191 = vadd.f32 0.0, %v6190
      %v6192 = vpop.f32.mrb[0].mxu0
      %6193 = vmatprep.mubr.bf16.mxu0 0
      %6194 = vmatmul.mubr.bf16.gmra.mrb[0].mxu0 %v6040
      %v6195 = vpop.f32.mrb[0].mxu0
      %v6196 = vadd.f32 0.0, %v6195
      %v6197 = vpop.f32.mrb[0].mxu0
      %v6198 = vpop.f32.mrb[0].mxu0
      %v6199 = vadd.f32 0.0, %v6198
      %v6200 = vpop.f32.mrb[0].mxu0
      %6201 = vmatprep.mubr.bf16.mxu0 0
      %6202 = vmatmul.mubr.bf16.gmra.mrb[0].mxu0 %v6041
      %v6203 = vpop.f32.mrb[0].mxu0
      %v6204 = vadd.f32 0.0, %v6203
      %v6205 = vpop.f32.mrb[0].mxu0
      %v6206 = vpop.f32.mrb[0].mxu0
      %v6207 = vadd.f32 0.0, %v6206
      %v6208 = vpop.f32.mrb[0].mxu0
      %6209 = vmatprep.mubr.bf16.mxu0 0
      %6210 = vmatmul.mubr.bf16.gmra.mrb[0].mxu0 %v6042
      %v6211 = vpop.f32.mrb[0].mxu0
      %v6212 = vadd.f32 0.0, %v6211
      %v6213 = vpop.f32.mrb[0].mxu0
      %v6214 = vpop.f32.mrb[0].mxu0
      %v6215 = vadd.f32 0.0, %v6214
      %v6216 = vpop.f32.mrb[0].mxu0
      %6217 = vmatprep.mubr.bf16.mxu0 0
      %6218 = vmatmul.mubr.bf16.gmra.mrb[0].mxu0 %v6043
      %v6219 = vpop.f32.mrb[0].mxu0
      %v6220 = vadd.f32 0.0, %v6219
      %v6221 = vpop.f32.mrb[0].mxu0
      %v6222 = vpop.f32.mrb[0].mxu0
      %v6223 = vadd.f32 0.0, %v6222
      %v6224 = vpop.f32.mrb[0].mxu0
      %6225 = vmatprep.mubr.bf16.mxu0 0
      %6226 = vmatmul.mubr.bf16.gmra.mrb[0].mxu0 %v6044
      %v6227 = vpop.f32.mrb[0].mxu0
      %v6228 = vadd.f32 0.0, %v6227
      %v6229 = vpop.f32.mrb[0].mxu0
      %v6230 = vpop.f32.mrb[0].mxu0
      %v6231 = vadd.f32 0.0, %v6230
      %v6232 = vpop.f32.mrb[0].mxu0
      %6233 = vmatprep.mubr.bf16.mxu0 0
      %6234 = vmatmul.mubr.bf16.gmra.mrb[0].mxu0 %v6045
      %v6235 = vpop.f32.mrb[0].mxu0
      %v6236 = vadd.f32 0.0, %v6235
      %v6237 = vpop.f32.mrb[0].mxu0
      %v6238 = vpop.f32.mrb[0].mxu0
      %v6239 = vadd.f32 0.0, %v6238
      %v6240 = vpop.f32.mrb[0].mxu0
      %6241 = vmatprep.mubr.bf16.mxu0 0
      %6242 = vmatmul.mubr.bf16.gmra.mrb[0].mxu0 %v6046
      %v6243 = vpop.f32.mrb[0].mxu0
      %v6244 = vadd.f32 0.0, %v6243
      %v6245 = vpop.f32.mrb[0].mxu0
      %v6246 = vpop.f32.mrb[0].mxu0
      %v6247 = vadd.f32 0.0, %v6246
      %v6248 = vpop.f32.mrb[0].mxu0
      %6249 = vmatprep.mubr.bf16.mxu0 0
      %6250 = vmatmul.mubr.bf16.gmra.mrb[0].mxu0 %v6047
      %v6251 = vpop.f32.mrb[0].mxu0
      %v6252 = vadd.f32 0.0, %v6251
      %v6253 = vpop.f32.mrb[0].mxu0
      %v6254 = vpop.f32.mrb[0].mxu0
      %v6255 = vadd.f32 0.0, %v6254
      %v6256 = vpop.f32.mrb[0].mxu0
      %6257 = vmatprep.mubr.bf16.mxu0 0
      %6258 = vmatmul.mubr.bf16.gmra.mrb[0].mxu0 %v6048
      %v6259 = vpop.f32.mrb[0].mxu0
      %v6260 = vadd.f32 0.0, %v6259
      %v6261 = vpop.f32.mrb[0].mxu0
      %v6262 = vpop.f32.mrb[0].mxu0
      %v6263 = vadd.f32 0.0, %v6262
      %v6264 = vpop.f32.mrb[0].mxu0
      %6265 = vmatprep.mubr.bf16.mxu0 0
      %6266 = vmatmul.mubr.bf16.gmra.mrb[0].mxu0 %v6049
      %v6267 = vpop.f32.mrb[0].mxu0
      %v6268 = vadd.f32 0.0, %v6267
      %v6269 = vpop.f32.mrb[0].mxu0
      %v6270 = vpop.f32.mrb[0].mxu0
      %v6271 = vadd.f32 0.0, %v6270
      %v6272 = vpop.f32.mrb[0].mxu0
      %6273 = vmatprep.mubr.bf16.mxu0 0
      %6274 = vmatmul.mubr.bf16.gmra.mrb[0].mxu0 %v6050
      %v6275 = vpop.f32.mrb[0].mxu0
      %v6276 = vadd.f32 0.0, %v6275
      %v6277 = vpop.f32.mrb[0].mxu0
      %v6278 = vpop.f32.mrb[0].mxu0
      %v6279 = vadd.f32 0.0, %v6278
      %v6280 = vpop.f32.mrb[0].mxu0
      %6281 = vmatprep.mubr.bf16.mxu0 0
      %6282 = vmatmul.mubr.bf16.gmra.mrb[0].mxu0 %v6051
      %v6283 = vpop.f32.mrb[0].mxu0
      %v6284 = vadd.f32 0.0, %v6283
      %v6285 = vpop.f32.mrb[0].mxu0
      %v6286 = vpop.f32.mrb[0].mxu0
      %v6287 = vadd.f32 0.0, %v6286
      %v6288 = vpop.f32.mrb[0].mxu0
      %6289 = vmatprep.mubr.bf16.mxu0 0
      %6290 = vmatmul.mubr.bf16.gmra.mrb[0].mxu0 %v6052
      %v6291 = vpop.f32.mrb[0].mxu0
      %v6292 = vadd.f32 0.0, %v6291
      %v6293 = vpop.f32.mrb[0].mxu0
      %v6294 = vpop.f32.mrb[0].mxu0
      %v6295 = vadd.f32 0.0, %v6294
      %v6296 = vpop.f32.mrb[0].mxu0
      %6297 = vmatprep.mubr.bf16.mxu0 0
      %6298 = vmatmul.mubr.bf16.gmra.mrb[0].mxu0 %v6053
      %v6299 = vpop.f32.mrb[0].mxu0
      %v6300 = vadd.f32 0.0, %v6299
      %v6301 = vpop.f32.mrb[0].mxu0
      %v6302 = vpop.f32.mrb[0].mxu0
      %v6303 = vadd.f32 0.0, %v6302
      %v6304 = vpop.f32.mrb[0].mxu0
      %6305 = vmatprep.mubr.bf16.mxu0 0
      %6306 = vmatmul.mubr.bf16.gmra.mrb[0].mxu0 %v6054
      %v6307 = vpop.f32.mrb[0].mxu0
      %v6308 = vadd.f32 0.0, %v6307
      %v6309 = vpop.f32.mrb[0].mxu0
      %v6310 = vpop.f32.mrb[0].mxu0
      %v6311 = vadd.f32 0.0, %v6310
      %v6312 = vpop.f32.mrb[0].mxu0
      %6313 = vmatprep.mubr.bf16.mxu0 0
      %6314 = vmatmul.mubr.bf16.gmra.mrb[0].mxu0 %v6055
      %v6315 = vpop.f32.mrb[0].mxu0
      %v6316 = vadd.f32 0.0, %v6315
      %v6317 = vpop.f32.mrb[0].mxu0
      %v6318 = vpop.f32.mrb[0].mxu0
      %v6319 = vpop.f32.mrb[0].mxu0
      %6320 = vdwg.mxu0
      %v6321 = vadd.f32 %v5953, %v6156
      %v6322 = vadd.f32 %v5954, %v6159
      %v6323 = vadd.f32 %v5955, %v6164
      %v6324 = vadd.f32 %v5956, %v6167
      %v6325 = vadd.f32 %v5957, %v6172
      %v6326 = vadd.f32 %v5958, %v6175
      %v6327 = vadd.f32 %v5959, %v6180
      %v6328 = vadd.f32 %v5960, %v6183
      %v6329 = vadd.f32 %v5961, %v6188
      %v6330 = vadd.f32 %v5962, %v6191
      %v6331 = vadd.f32 %v5963, %v6196
      %v6332 = vadd.f32 %v5964, %v6199
      %v6333 = vadd.f32 %v5965, %v6204
      %v6334 = vadd.f32 %v5966, %v6207
      %v6335 = vadd.f32 %v5967, %v6212
      %v6336 = vadd.f32 %v5968, %v6215
      %v6337 = vadd.f32 %v5969, %v6220
      %v6338 = vadd.f32 %v5970, %v6223
      %v6339 = vadd.f32 %v5971, %v6228
      %v6340 = vadd.f32 %v5972, %v6231
      %v6341 = vadd.f32 %v5973, %v6236
      %v6342 = vadd.f32 %v5974, %v6239
      %v6343 = vadd.f32 %v5975, %v6244
      %v6344 = vadd.f32 %v5976, %v6247
      %v6345 = vadd.f32 %v5977, %v6252
      %v6346 = vadd.f32 %v5978, %v6255
      %v6347 = vadd.f32 %v5979, %v6260
      %v6348 = vadd.f32 %v5980, %v6263
      %v6349 = vadd.f32 %v5981, %v6268
      %v6350 = vadd.f32 %v5982, %v6271
      %v6351 = vadd.f32 %v5983, %v6276
      %v6352 = vadd.f32 %v5984, %v6279
      %v6353 = vadd.f32 %v5985, %v6284
      %v6354 = vadd.f32 %v5986, %v6287
      %v6355 = vadd.f32 %v5987, %v6292
      %v6356 = vadd.f32 %v5988, %v6295
      %v6357 = vadd.f32 %v5989, %v6300
      %v6358 = vadd.f32 %v5990, %v6303
      %v6359 = vadd.f32 %v5991, %v6308
      %v6360 = vadd.f32 %v5992, %v6311
      %v6361 = vadd.f32 %v5993, %v6316
      %v6362 = vld [vmem:[#allocation3 + $0x19] sm:$0xff]
      %v6363 = vld [vmem:[#allocation3 + $0x21] sm:$0xff]
      %v6364 = vld [vmem:[#allocation3 + $0x29] sm:$0xff]
      %v6365 = vld [vmem:[#allocation3 + $0x31] sm:$0xff]
      %v6366 = vld [vmem:[#allocation3 + $0x39] sm:$0xff]
      %v6367 = vld [vmem:[#allocation3 + $0x41] sm:$0xff]
      %v6368 = vld [vmem:[#allocation3 + $0x49] sm:$0xff]
      %v6369 = vld [vmem:[#allocation3 + $0x51] sm:$0xff]
      %v6370 = vld [vmem:[#allocation3 + $0x59] sm:$0xff]
      %v6371 = vld [vmem:[#allocation3 + $0x61] sm:$0xff]
      %v6372 = vld [vmem:[#allocation3 + $0x69] sm:$0xff]
      %v6373 = vld [vmem:[#allocation3 + $0x71] sm:$0xff]
      %v6374 = vld [vmem:[#allocation3 + $0x79] sm:$0xff]
      %v6375 = vld [vmem:[#allocation3 + $0x81] sm:$0xff]
      %v6376 = vld [vmem:[#allocation3 + $0x89] sm:$0xff]
      %v6377 = vld [vmem:[#allocation3 + $0x91] sm:$0xff]
      %v6378 = vld [vmem:[#allocation3 + $0x99] sm:$0xff]
      %v6379 = vld [vmem:[#allocation3 + $0xa1] sm:$0xff]
      %v6380 = vld [vmem:[#allocation3 + $0xa9] sm:$0xff]
      %v6381 = vld [vmem:[#allocation3 + $0xb1] sm:$0xff]
      %v6382 = vld [vmem:[#allocation3 + $0xb9] sm:$0xff]
      %v6383 = vld [vmem:[#allocation3 + $0xc1] sm:$0xff]
      %v6384 = vld [vmem:[#allocation3 + $0xc9] sm:$0xff]
      %v6385 = vld [vmem:[#allocation3 + $0xd1] sm:$0xff]
      %v6386 = vld [vmem:[#allocation3 + $0xd9] sm:$0xff]
      %v6387 = vld [vmem:[#allocation3 + $0xe1] sm:$0xff]
      %v6388 = vld [vmem:[#allocation3 + $0xe9] sm:$0xff]
      %v6389 = vld [vmem:[#allocation3 + $0xf1] sm:$0xff]
      %v6390 = vld [vmem:[#allocation3 + $0xf9] sm:$0xff]
      %v6391 = vld [vmem:[#allocation3 + $0x101] sm:$0xff]
      %v6392 = vld [vmem:[#allocation3 + $0x109] sm:$0xff]
      %v6393 = vld [vmem:[#allocation3 + $0x111] sm:$0xff]
      %v6394 = vld [vmem:[#allocation3 + $0x119] sm:$0xff]
      %v6395 = vld [vmem:[#allocation3 + $0x121] sm:$0xff]
      %v6396 = vld [vmem:[#allocation3 + $0x129] sm:$0xff]
      %v6397 = vld [vmem:[#allocation3 + $0x131] sm:$0xff]
      %v6398 = vld [vmem:[#allocation3 + $0x139] sm:$0xff]
      %v6399 = vld [vmem:[#allocation3 + $0x141] sm:$0xff]
      %v6400 = vld [vmem:[#allocation3 + $0x149] sm:$0xff]
      %v6401 = vld [vmem:[#allocation3 + $0x151] sm:$0xff]
      %v6402 = vld [vmem:[#allocation3 + $0x159] sm:$0xf]
      %v6403 = vpack.c.bf16 %v6363, %v6362
      %v6404 = vpack.c.bf16 %v6365, %v6364
      %v6405 = vpack.c.bf16 %v6367, %v6366
      %v6406 = vpack.c.bf16 %v6369, %v6368
      %v6407 = vpack.c.bf16 %v6371, %v6370
      %v6408 = vpack.c.bf16 %v6373, %v6372
      %v6409 = vpack.c.bf16 %v6375, %v6374
      %v6410 = vpack.c.bf16 %v6377, %v6376
      %v6411 = vpack.c.bf16 %v6379, %v6378
      %v6412 = vpack.c.bf16 %v6381, %v6380
      %v6413 = vpack.c.bf16 %v6383, %v6382
      %v6414 = vpack.c.bf16 %v6385, %v6384
      %v6415 = vpack.c.bf16 %v6387, %v6386
      %v6416 = vpack.c.bf16 %v6389, %v6388
      %v6417 = vpack.c.bf16 %v6391, %v6390
      %v6418 = vpack.c.bf16 %v6393, %v6392
      %v6419 = vpack.c.bf16 %v6395, %v6394
      %v6420 = vpack.c.bf16 %v6397, %v6396
      %v6421 = vpack.c.bf16 %v6399, %v6398
      %v6422 = vpack.c.bf16 %v6401, %v6400
      %v6423 = vpack.c.bf16 %v6402, %v6402
      %s6424 = scalar_lea.vmem %s6, 320
      %v6425 = vld [vmem:[%s6424] sm:$0xf]
      %v6426 = vld [vmem:[%s6424 + $0x4] sm:$0xf]
      %v6427 = vld [vmem:[%s6424 + $0x8] sm:$0xf]
      %v6428 = vld [vmem:[%s6424 + $0xc] sm:$0xf]
      %v6429 = vld [vmem:[%s6424 + $0x10] sm:$0xf]
      %v6430 = vld [vmem:[%s6424 + $0x14] sm:$0xf]
      %v6431 = vld [vmem:[%s6424 + $0x18] sm:$0xf]
      %v6432 = vld [vmem:[%s6424 + $0x1c] sm:$0xf]
      %v6433 = vld [vmem:[%s6424 + $0x20] sm:$0xf]
      %v6434 = vld [vmem:[%s6424 + $0x24] sm:$0xf]
      %v6435 = vld [vmem:[%s6424 + $0x28] sm:$0xf]
      %v6436 = vld [vmem:[%s6424 + $0x2c] sm:$0xf]
      %v6437 = vld [vmem:[%s6424 + $0x30] sm:$0xf]
      %v6438 = vld [vmem:[%s6424 + $0x34] sm:$0xf]
      %v6439 = vld [vmem:[%s6424 + $0x38] sm:$0xf]
      %v6440 = vld [vmem:[%s6424 + $0x3c] sm:$0xf]
      %v6457 = vunpack.c.l.b16 %v6425
      %v6458 = vunpack.c.l.b16 %v6426
      %v6459 = vunpack.c.l.b16 %v6427
      %v6460 = vunpack.c.l.b16 %v6428
      %v6461 = vunpack.c.l.b16 %v6429
      %v6462 = vunpack.c.l.b16 %v6430
      %v6463 = vunpack.c.l.b16 %v6431
      %v6464 = vunpack.c.l.b16 %v6432
      %v6465 = vunpack.c.l.b16 %v6433
      %v6466 = vunpack.c.l.b16 %v6434
      %v6467 = vunpack.c.l.b16 %v6435
      %v6468 = vunpack.c.l.b16 %v6436
      %v6469 = vunpack.c.l.b16 %v6437
      %v6470 = vunpack.c.l.b16 %v6438
      %v6471 = vunpack.c.l.b16 %v6439
      %v6472 = vunpack.c.l.b16 %v6440
      %v6473 = vpack.c.b16 %v6458, %v6457
      %v6474 = vpack.c.b16 %v6460, %v6459
      %v6475 = vpack.c.b16 %v6462, %v6461
      %v6476 = vpack.c.b16 %v6464, %v6463
      %v6477 = vpack.c.b16 %v6466, %v6465
      %v6478 = vpack.c.b16 %v6468, %v6467
      %v6479 = vpack.c.b16 %v6470, %v6469
      %v6480 = vpack.c.b16 %v6472, %v6471
      %6489 = vmatprep.subr.bf16.mxu0 0
      %6490 = vmatpush1.bf16.msra.mxu0 %v6473
      %6491 = vmatprep.subr.bf16.mxu0 0
      %6492 = vmatpush1.bf16.msra.mxu0 %v6474
      %6493 = vmatprep.subr.bf16.mxu0 0
      %6494 = vmatpush1.bf16.msra.mxu0 %v6475
      %6495 = vmatprep.subr.bf16.mxu0 0
      %6496 = vmatpush1.bf16.msra.mxu0 %v6476
      %6497 = vmatprep.subr.bf16.mxu0 0
      %6498 = vmatpush1.bf16.msra.mxu0 %v6477
      %6499 = vmatprep.subr.bf16.mxu0 0
      %6500 = vmatpush1.bf16.msra.mxu0 %v6478
      %6501 = vmatprep.subr.bf16.mxu0 0
      %6502 = vmatpush1.bf16.msra.mxu0 %v6479
      %6503 = vmatprep.subr.bf16.mxu0 0
      %6504 = vmatpush1.bf16.msra.mxu0 %v6480
      %6505 = vmatprep.subr.bf16.mxu0 0
      %6506 = vmatpush1.bf16.msra.mxu0 0
      %6507 = vmatprep.subr.bf16.mxu0 0
      %6508 = vmatpush1.bf16.msra.mxu0 0
      %6509 = vmatprep.subr.bf16.mxu0 0
      %6510 = vmatpush1.bf16.msra.mxu0 0
      %6511 = vmatprep.subr.bf16.mxu0 0
      %6512 = vmatpush1.bf16.msra.mxu0 0
      %6513 = vmatprep.subr.bf16.mxu0 0
      %6514 = vmatpush1.bf16.msra.mxu0 0
      %6515 = vmatprep.subr.bf16.mxu0 0
      %6516 = vmatpush1.bf16.msra.mxu0 0
      %6517 = vmatprep.subr.bf16.mxu0 0
      %6518 = vmatpush1.bf16.msra.mxu0 0
      %6519 = vmatprep.subr.bf16.mxu0 0
      %6520 = vmatpush1.bf16.msra.mxu0 0
      %6521 = vmatprep.mubr.bf16.mxu0 0
      %6522 = vmatmul.mubr.bf16.gmra.mrb[0].mxu0 %v6403
      %v6523 = vpop.f32.mrb[0].mxu0
      %v6524 = vadd.f32 0.0, %v6523
      %v6525 = vpop.f32.mrb[0].mxu0
      %v6526 = vpop.f32.mrb[0].mxu0
      %v6527 = vadd.f32 0.0, %v6526
      %v6528 = vpop.f32.mrb[0].mxu0
      %6529 = vmatprep.mubr.bf16.mxu0 0
      %6530 = vmatmul.mubr.bf16.gmra.mrb[0].mxu0 %v6404
      %v6531 = vpop.f32.mrb[0].mxu0
      %v6532 = vadd.f32 0.0, %v6531
      %v6533 = vpop.f32.mrb[0].mxu0
      %v6534 = vpop.f32.mrb[0].mxu0
      %v6535 = vadd.f32 0.0, %v6534
      %v6536 = vpop.f32.mrb[0].mxu0
      %6537 = vmatprep.mubr.bf16.mxu0 0
      %6538 = vmatmul.mubr.bf16.gmra.mrb[0].mxu0 %v6405
      %v6539 = vpop.f32.mrb[0].mxu0
      %v6540 = vadd.f32 0.0, %v6539
      %v6541 = vpop.f32.mrb[0].mxu0
      %v6542 = vpop.f32.mrb[0].mxu0
      %v6543 = vadd.f32 0.0, %v6542
      %v6544 = vpop.f32.mrb[0].mxu0
      %6545 = vmatprep.mubr.bf16.mxu0 0
      %6546 = vmatmul.mubr.bf16.gmra.mrb[0].mxu0 %v6406
      %v6547 = vpop.f32.mrb[0].mxu0
      %v6548 = vadd.f32 0.0, %v6547
      %v6549 = vpop.f32.mrb[0].mxu0
      %v6550 = vpop.f32.mrb[0].mxu0
      %v6551 = vadd.f32 0.0, %v6550
      %v6552 = vpop.f32.mrb[0].mxu0
      %6553 = vmatprep.mubr.bf16.mxu0 0
      %6554 = vmatmul.mubr.bf16.gmra.mrb[0].mxu0 %v6407
      %v6555 = vpop.f32.mrb[0].mxu0
      %v6556 = vadd.f32 0.0, %v6555
      %v6557 = vpop.f32.mrb[0].mxu0
      %v6558 = vpop.f32.mrb[0].mxu0
      %v6559 = vadd.f32 0.0, %v6558
      %v6560 = vpop.f32.mrb[0].mxu0
      %6561 = vmatprep.mubr.bf16.mxu0 0
      %6562 = vmatmul.mubr.bf16.gmra.mrb[0].mxu0 %v6408
      %v6563 = vpop.f32.mrb[0].mxu0
      %v6564 = vadd.f32 0.0, %v6563
      %v6565 = vpop.f32.mrb[0].mxu0
      %v6566 = vpop.f32.mrb[0].mxu0
      %v6567 = vadd.f32 0.0, %v6566
      %v6568 = vpop.f32.mrb[0].mxu0
      %6569 = vmatprep.mubr.bf16.mxu0 0
      %6570 = vmatmul.mubr.bf16.gmra.mrb[0].mxu0 %v6409
      %v6571 = vpop.f32.mrb[0].mxu0
      %v6572 = vadd.f32 0.0, %v6571
      %v6573 = vpop.f32.mrb[0].mxu0
      %v6574 = vpop.f32.mrb[0].mxu0
      %v6575 = vadd.f32 0.0, %v6574
      %v6576 = vpop.f32.mrb[0].mxu0
      %6577 = vmatprep.mubr.bf16.mxu0 0
      %6578 = vmatmul.mubr.bf16.gmra.mrb[0].mxu0 %v6410
      %v6579 = vpop.f32.mrb[0].mxu0
      %v6580 = vadd.f32 0.0, %v6579
      %v6581 = vpop.f32.mrb[0].mxu0
      %v6582 = vpop.f32.mrb[0].mxu0
      %v6583 = vadd.f32 0.0, %v6582
      %v6584 = vpop.f32.mrb[0].mxu0
      %6585 = vmatprep.mubr.bf16.mxu0 0
      %6586 = vmatmul.mubr.bf16.gmra.mrb[0].mxu0 %v6411
      %v6587 = vpop.f32.mrb[0].mxu0
      %v6588 = vadd.f32 0.0, %v6587
      %v6589 = vpop.f32.mrb[0].mxu0
      %v6590 = vpop.f32.mrb[0].mxu0
      %v6591 = vadd.f32 0.0, %v6590
      %v6592 = vpop.f32.mrb[0].mxu0
      %6593 = vmatprep.mubr.bf16.mxu0 0
      %6594 = vmatmul.mubr.bf16.gmra.mrb[0].mxu0 %v6412
      %v6595 = vpop.f32.mrb[0].mxu0
      %v6596 = vadd.f32 0.0, %v6595
      %v6597 = vpop.f32.mrb[0].mxu0
      %v6598 = vpop.f32.mrb[0].mxu0
      %v6599 = vadd.f32 0.0, %v6598
      %v6600 = vpop.f32.mrb[0].mxu0
      %6601 = vmatprep.mubr.bf16.mxu0 0
      %6602 = vmatmul.mubr.bf16.gmra.mrb[0].mxu0 %v6413
      %v6603 = vpop.f32.mrb[0].mxu0
      %v6604 = vadd.f32 0.0, %v6603
      %v6605 = vpop.f32.mrb[0].mxu0
      %v6606 = vpop.f32.mrb[0].mxu0
      %v6607 = vadd.f32 0.0, %v6606
      %v6608 = vpop.f32.mrb[0].mxu0
      %6609 = vmatprep.mubr.bf16.mxu0 0
      %6610 = vmatmul.mubr.bf16.gmra.mrb[0].mxu0 %v6414
      %v6611 = vpop.f32.mrb[0].mxu0
      %v6612 = vadd.f32 0.0, %v6611
      %v6613 = vpop.f32.mrb[0].mxu0
      %v6614 = vpop.f32.mrb[0].mxu0
      %v6615 = vadd.f32 0.0, %v6614
      %v6616 = vpop.f32.mrb[0].mxu0
      %6617 = vmatprep.mubr.bf16.mxu0 0
      %6618 = vmatmul.mubr.bf16.gmra.mrb[0].mxu0 %v6415
      %v6619 = vpop.f32.mrb[0].mxu0
      %v6620 = vadd.f32 0.0, %v6619
      %v6621 = vpop.f32.mrb[0].mxu0
      %v6622 = vpop.f32.mrb[0].mxu0
      %v6623 = vadd.f32 0.0, %v6622
      %v6624 = vpop.f32.mrb[0].mxu0
      %6625 = vmatprep.mubr.bf16.mxu0 0
      %6626 = vmatmul.mubr.bf16.gmra.mrb[0].mxu0 %v6416
      %v6627 = vpop.f32.mrb[0].mxu0
      %v6628 = vadd.f32 0.0, %v6627
      %v6629 = vpop.f32.mrb[0].mxu0
      %v6630 = vpop.f32.mrb[0].mxu0
      %v6631 = vadd.f32 0.0, %v6630
      %v6632 = vpop.f32.mrb[0].mxu0
      %6633 = vmatprep.mubr.bf16.mxu0 0
      %6634 = vmatmul.mubr.bf16.gmra.mrb[0].mxu0 %v6417
      %v6635 = vpop.f32.mrb[0].mxu0
      %v6636 = vadd.f32 0.0, %v6635
      %v6637 = vpop.f32.mrb[0].mxu0
      %v6638 = vpop.f32.mrb[0].mxu0
      %v6639 = vadd.f32 0.0, %v6638
      %v6640 = vpop.f32.mrb[0].mxu0
      %6641 = vmatprep.mubr.bf16.mxu0 0
      %6642 = vmatmul.mubr.bf16.gmra.mrb[0].mxu0 %v6418
      %v6643 = vpop.f32.mrb[0].mxu0
      %v6644 = vadd.f32 0.0, %v6643
      %v6645 = vpop.f32.mrb[0].mxu0
      %v6646 = vpop.f32.mrb[0].mxu0
      %v6647 = vadd.f32 0.0, %v6646
      %v6648 = vpop.f32.mrb[0].mxu0
      %6649 = vmatprep.mubr.bf16.mxu0 0
      %6650 = vmatmul.mubr.bf16.gmra.mrb[0].mxu0 %v6419
      %v6651 = vpop.f32.mrb[0].mxu0
      %v6652 = vadd.f32 0.0, %v6651
      %v6653 = vpop.f32.mrb[0].mxu0
      %v6654 = vpop.f32.mrb[0].mxu0
      %v6655 = vadd.f32 0.0, %v6654
      %v6656 = vpop.f32.mrb[0].mxu0
      %6657 = vmatprep.mubr.bf16.mxu0 0
      %6658 = vmatmul.mubr.bf16.gmra.mrb[0].mxu0 %v6420
      %v6659 = vpop.f32.mrb[0].mxu0
      %v6660 = vadd.f32 0.0, %v6659
      %v6661 = vpop.f32.mrb[0].mxu0
      %v6662 = vpop.f32.mrb[0].mxu0
      %v6663 = vadd.f32 0.0, %v6662
      %v6664 = vpop.f32.mrb[0].mxu0
      %6665 = vmatprep.mubr.bf16.mxu0 0
      %6666 = vmatmul.mubr.bf16.gmra.mrb[0].mxu0 %v6421
      %v6667 = vpop.f32.mrb[0].mxu0
      %v6668 = vadd.f32 0.0, %v6667
      %v6669 = vpop.f32.mrb[0].mxu0
      %v6670 = vpop.f32.mrb[0].mxu0
      %v6671 = vadd.f32 0.0, %v6670
      %v6672 = vpop.f32.mrb[0].mxu0
      %6673 = vmatprep.mubr.bf16.mxu0 0
      %6674 = vmatmul.mubr.bf16.gmra.mrb[0].mxu0 %v6422
      %v6675 = vpop.f32.mrb[0].mxu0
      %v6676 = vadd.f32 0.0, %v6675
      %v6677 = vpop.f32.mrb[0].mxu0
      %v6678 = vpop.f32.mrb[0].mxu0
      %v6679 = vadd.f32 0.0, %v6678
      %v6680 = vpop.f32.mrb[0].mxu0
      %6681 = vmatprep.mubr.bf16.mxu0 0
      %6682 = vmatmul.mubr.bf16.gmra.mrb[0].mxu0 %v6423
      %v6683 = vpop.f32.mrb[0].mxu0
      %v6684 = vadd.f32 0.0, %v6683
      %v6685 = vpop.f32.mrb[0].mxu0
      %v6686 = vpop.f32.mrb[0].mxu0
      %v6687 = vpop.f32.mrb[0].mxu0
      %6688 = vdwg.mxu0
      %v6689 = vadd.f32 %v6321, %v6524
      %v6690 = vadd.f32 %v6322, %v6527
      %v6691 = vadd.f32 %v6323, %v6532
      %v6692 = vadd.f32 %v6324, %v6535
      %v6693 = vadd.f32 %v6325, %v6540
      %v6694 = vadd.f32 %v6326, %v6543
      %v6695 = vadd.f32 %v6327, %v6548
      %v6696 = vadd.f32 %v6328, %v6551
      %v6697 = vadd.f32 %v6329, %v6556
      %v6698 = vadd.f32 %v6330, %v6559
      %v6699 = vadd.f32 %v6331, %v6564
      %v6700 = vadd.f32 %v6332, %v6567
      %v6701 = vadd.f32 %v6333, %v6572
      %v6702 = vadd.f32 %v6334, %v6575
      %v6703 = vadd.f32 %v6335, %v6580
      %v6704 = vadd.f32 %v6336, %v6583
      %v6705 = vadd.f32 %v6337, %v6588
      %v6706 = vadd.f32 %v6338, %v6591
      %v6707 = vadd.f32 %v6339, %v6596
      %v6708 = vadd.f32 %v6340, %v6599
      %v6709 = vadd.f32 %v6341, %v6604
      %v6710 = vadd.f32 %v6342, %v6607
      %v6711 = vadd.f32 %v6343, %v6612
      %v6712 = vadd.f32 %v6344, %v6615
      %v6713 = vadd.f32 %v6345, %v6620
      %v6714 = vadd.f32 %v6346, %v6623
      %v6715 = vadd.f32 %v6347, %v6628
      %v6716 = vadd.f32 %v6348, %v6631
      %v6717 = vadd.f32 %v6349, %v6636
      %v6718 = vadd.f32 %v6350, %v6639
      %v6719 = vadd.f32 %v6351, %v6644
      %v6720 = vadd.f32 %v6352, %v6647
      %v6721 = vadd.f32 %v6353, %v6652
      %v6722 = vadd.f32 %v6354, %v6655
      %v6723 = vadd.f32 %v6355, %v6660
      %v6724 = vadd.f32 %v6356, %v6663
      %v6725 = vadd.f32 %v6357, %v6668
      %v6726 = vadd.f32 %v6358, %v6671
      %v6727 = vadd.f32 %v6359, %v6676
      %v6728 = vadd.f32 %v6360, %v6679
      %v6729 = vadd.f32 %v6361, %v6684
      %v6730 = vld [vmem:[#allocation3 + $0x29] sm:$0xff]
      %v6731 = vld [vmem:[#allocation3 + $0x31] sm:$0xff]
      %v6732 = vld [vmem:[#allocation3 + $0x39] sm:$0xff]
      %v6733 = vld [vmem:[#allocation3 + $0x41] sm:$0xff]
      %v6734 = vld [vmem:[#allocation3 + $0x49] sm:$0xff]
      %v6735 = vld [vmem:[#allocation3 + $0x51] sm:$0xff]
      %v6736 = vld [vmem:[#allocation3 + $0x59] sm:$0xff]
      %v6737 = vld [vmem:[#allocation3 + $0x61] sm:$0xff]
      %v6738 = vld [vmem:[#allocation3 + $0x69] sm:$0xff]
      %v6739 = vld [vmem:[#allocation3 + $0x71] sm:$0xff]
      %v6740 = vld [vmem:[#allocation3 + $0x79] sm:$0xff]
      %v6741 = vld [vmem:[#allocation3 + $0x81] sm:$0xff]
      %v6742 = vld [vmem:[#allocation3 + $0x89] sm:$0xff]
      %v6743 = vld [vmem:[#allocation3 + $0x91] sm:$0xff]
      %v6744 = vld [vmem:[#allocation3 + $0x99] sm:$0xff]
      %v6745 = vld [vmem:[#allocation3 + $0xa1] sm:$0xff]
      %v6746 = vld [vmem:[#allocation3 + $0xa9] sm:$0xff]
      %v6747 = vld [vmem:[#allocation3 + $0xb1] sm:$0xff]
      %v6748 = vld [vmem:[#allocation3 + $0xb9] sm:$0xff]
      %v6749 = vld [vmem:[#allocation3 + $0xc1] sm:$0xff]
      %v6750 = vld [vmem:[#allocation3 + $0xc9] sm:$0xff]
      %v6751 = vld [vmem:[#allocation3 + $0xd1] sm:$0xff]
      %v6752 = vld [vmem:[#allocation3 + $0xd9] sm:$0xff]
      %v6753 = vld [vmem:[#allocation3 + $0xe1] sm:$0xff]
      %v6754 = vld [vmem:[#allocation3 + $0xe9] sm:$0xff]
      %v6755 = vld [vmem:[#allocation3 + $0xf1] sm:$0xff]
      %v6756 = vld [vmem:[#allocation3 + $0xf9] sm:$0xff]
      %v6757 = vld [vmem:[#allocation3 + $0x101] sm:$0xff]
      %v6758 = vld [vmem:[#allocation3 + $0x109] sm:$0xff]
      %v6759 = vld [vmem:[#allocation3 + $0x111] sm:$0xff]
      %v6760 = vld [vmem:[#allocation3 + $0x119] sm:$0xff]
      %v6761 = vld [vmem:[#allocation3 + $0x121] sm:$0xff]
      %v6762 = vld [vmem:[#allocation3 + $0x129] sm:$0xff]
      %v6763 = vld [vmem:[#allocation3 + $0x131] sm:$0xff]
      %v6764 = vld [vmem:[#allocation3 + $0x139] sm:$0xff]
      %v6765 = vld [vmem:[#allocation3 + $0x141] sm:$0xff]
      %v6766 = vld [vmem:[#allocation3 + $0x149] sm:$0xff]
      %v6767 = vld [vmem:[#allocation3 + $0x151] sm:$0xff]
      %v6768 = vld [vmem:[#allocation3 + $0x159] sm:$0xff]
      %v6769 = vld [vmem:[#allocation3 + $0x161] sm:$0xff]
      %v6770 = vld [vmem:[#allocation3 + $0x169] sm:$0xf]
      %v6771 = vpack.c.bf16 %v6731, %v6730
      %v6772 = vpack.c.bf16 %v6733, %v6732
      %v6773 = vpack.c.bf16 %v6735, %v6734
      %v6774 = vpack.c.bf16 %v6737, %v6736
      %v6775 = vpack.c.bf16 %v6739, %v6738
      %v6776 = vpack.c.bf16 %v6741, %v6740
      %v6777 = vpack.c.bf16 %v6743, %v6742
      %v6778 = vpack.c.bf16 %v6745, %v6744
      %v6779 = vpack.c.bf16 %v6747, %v6746
      %v6780 = vpack.c.bf16 %v6749, %v6748
      %v6781 = vpack.c.bf16 %v6751, %v6750
      %v6782 = vpack.c.bf16 %v6753, %v6752
      %v6783 = vpack.c.bf16 %v6755, %v6754
      %v6784 = vpack.c.bf16 %v6757, %v6756
      %v6785 = vpack.c.bf16 %v6759, %v6758
      %v6786 = vpack.c.bf16 %v6761, %v6760
      %v6787 = vpack.c.bf16 %v6763, %v6762
      %v6788 = vpack.c.bf16 %v6765, %v6764
      %v6789 = vpack.c.bf16 %v6767, %v6766
      %v6790 = vpack.c.bf16 %v6769, %v6768
      %v6791 = vpack.c.bf16 %v6770, %v6770
      %s6792 = scalar_lea.vmem %s6, 384
      %v6793 = vld [vmem:[%s6792] sm:$0xf]
      %v6794 = vld [vmem:[%s6792 + $0x4] sm:$0xf]
      %v6795 = vld [vmem:[%s6792 + $0x8] sm:$0xf]
      %v6796 = vld [vmem:[%s6792 + $0xc] sm:$0xf]
      %v6797 = vld [vmem:[%s6792 + $0x10] sm:$0xf]
      %v6798 = vld [vmem:[%s6792 + $0x14] sm:$0xf]
      %v6799 = vld [vmem:[%s6792 + $0x18] sm:$0xf]
      %v6800 = vld [vmem:[%s6792 + $0x1c] sm:$0xf]
      %v6801 = vld [vmem:[%s6792 + $0x20] sm:$0xf]
      %v6802 = vld [vmem:[%s6792 + $0x24] sm:$0xf]
      %v6803 = vld [vmem:[%s6792 + $0x28] sm:$0xf]
      %v6804 = vld [vmem:[%s6792 + $0x2c] sm:$0xf]
      %v6805 = vld [vmem:[%s6792 + $0x30] sm:$0xf]
      %v6806 = vld [vmem:[%s6792 + $0x34] sm:$0xf]
      %v6807 = vld [vmem:[%s6792 + $0x38] sm:$0xf]
      %v6808 = vld [vmem:[%s6792 + $0x3c] sm:$0xf]
      %v6825 = vunpack.c.l.b16 %v6793
      %v6826 = vunpack.c.l.b16 %v6794
      %v6827 = vunpack.c.l.b16 %v6795
      %v6828 = vunpack.c.l.b16 %v6796
      %v6829 = vunpack.c.l.b16 %v6797
      %v6830 = vunpack.c.l.b16 %v6798
      %v6831 = vunpack.c.l.b16 %v6799
      %v6832 = vunpack.c.l.b16 %v6800
      %v6833 = vunpack.c.l.b16 %v6801
      %v6834 = vunpack.c.l.b16 %v6802
      %v6835 = vunpack.c.l.b16 %v6803
      %v6836 = vunpack.c.l.b16 %v6804
      %v6837 = vunpack.c.l.b16 %v6805
      %v6838 = vunpack.c.l.b16 %v6806
      %v6839 = vunpack.c.l.b16 %v6807
      %v6840 = vunpack.c.l.b16 %v6808
      %v6841 = vpack.c.b16 %v6826, %v6825
      %v6842 = vpack.c.b16 %v6828, %v6827
      %v6843 = vpack.c.b16 %v6830, %v6829
      %v6844 = vpack.c.b16 %v6832, %v6831
      %v6845 = vpack.c.b16 %v6834, %v6833
      %v6846 = vpack.c.b16 %v6836, %v6835
      %v6847 = vpack.c.b16 %v6838, %v6837
      %v6848 = vpack.c.b16 %v6840, %v6839
      %6857 = vmatprep.subr.bf16.mxu0 0
      %6858 = vmatpush1.bf16.msra.mxu0 %v6841
      %6859 = vmatprep.subr.bf16.mxu0 0
      %6860 = vmatpush1.bf16.msra.mxu0 %v6842
      %6861 = vmatprep.subr.bf16.mxu0 0
      %6862 = vmatpush1.bf16.msra.mxu0 %v6843
      %6863 = vmatprep.subr.bf16.mxu0 0
      %6864 = vmatpush1.bf16.msra.mxu0 %v6844
      %6865 = vmatprep.subr.bf16.mxu0 0
      %6866 = vmatpush1.bf16.msra.mxu0 %v6845
      %6867 = vmatprep.subr.bf16.mxu0 0
      %6868 = vmatpush1.bf16.msra.mxu0 %v6846
      %6869 = vmatprep.subr.bf16.mxu0 0
      %6870 = vmatpush1.bf16.msra.mxu0 %v6847
      %6871 = vmatprep.subr.bf16.mxu0 0
      %6872 = vmatpush1.bf16.msra.mxu0 %v6848
      %6873 = vmatprep.subr.bf16.mxu0 0
      %6874 = vmatpush1.bf16.msra.mxu0 0
      %6875 = vmatprep.subr.bf16.mxu0 0
      %6876 = vmatpush1.bf16.msra.mxu0 0
      %6877 = vmatprep.subr.bf16.mxu0 0
      %6878 = vmatpush1.bf16.msra.mxu0 0
      %6879 = vmatprep.subr.bf16.mxu0 0
      %6880 = vmatpush1.bf16.msra.mxu0 0
      %6881 = vmatprep.subr.bf16.mxu0 0
      %6882 = vmatpush1.bf16.msra.mxu0 0
      %6883 = vmatprep.subr.bf16.mxu0 0
      %6884 = vmatpush1.bf16.msra.mxu0 0
      %6885 = vmatprep.subr.bf16.mxu0 0
      %6886 = vmatpush1.bf16.msra.mxu0 0
      %6887 = vmatprep.subr.bf16.mxu0 0
      %6888 = vmatpush1.bf16.msra.mxu0 0
      %6889 = vmatprep.mubr.bf16.mxu0 0
      %6890 = vmatmul.mubr.bf16.gmra.mrb[0].mxu0 %v6771
      %v6891 = vpop.f32.mrb[0].mxu0
      %v6892 = vadd.f32 0.0, %v6891
      %v6893 = vpop.f32.mrb[0].mxu0
      %v6894 = vpop.f32.mrb[0].mxu0
      %v6895 = vadd.f32 0.0, %v6894
      %v6896 = vpop.f32.mrb[0].mxu0
      %6897 = vmatprep.mubr.bf16.mxu0 0
      %6898 = vmatmul.mubr.bf16.gmra.mrb[0].mxu0 %v6772
      %v6899 = vpop.f32.mrb[0].mxu0
      %v6900 = vadd.f32 0.0, %v6899
      %v6901 = vpop.f32.mrb[0].mxu0
      %v6902 = vpop.f32.mrb[0].mxu0
      %v6903 = vadd.f32 0.0, %v6902
      %v6904 = vpop.f32.mrb[0].mxu0
      %6905 = vmatprep.mubr.bf16.mxu0 0
      %6906 = vmatmul.mubr.bf16.gmra.mrb[0].mxu0 %v6773
      %v6907 = vpop.f32.mrb[0].mxu0
      %v6908 = vadd.f32 0.0, %v6907
      %v6909 = vpop.f32.mrb[0].mxu0
      %v6910 = vpop.f32.mrb[0].mxu0
      %v6911 = vadd.f32 0.0, %v6910
      %v6912 = vpop.f32.mrb[0].mxu0
      %6913 = vmatprep.mubr.bf16.mxu0 0
      %6914 = vmatmul.mubr.bf16.gmra.mrb[0].mxu0 %v6774
      %v6915 = vpop.f32.mrb[0].mxu0
      %v6916 = vadd.f32 0.0, %v6915
      %v6917 = vpop.f32.mrb[0].mxu0
      %v6918 = vpop.f32.mrb[0].mxu0
      %v6919 = vadd.f32 0.0, %v6918
      %v6920 = vpop.f32.mrb[0].mxu0
      %6921 = vmatprep.mubr.bf16.mxu0 0
      %6922 = vmatmul.mubr.bf16.gmra.mrb[0].mxu0 %v6775
      %v6923 = vpop.f32.mrb[0].mxu0
      %v6924 = vadd.f32 0.0, %v6923
      %v6925 = vpop.f32.mrb[0].mxu0
      %v6926 = vpop.f32.mrb[0].mxu0
      %v6927 = vadd.f32 0.0, %v6926
      %v6928 = vpop.f32.mrb[0].mxu0
      %6929 = vmatprep.mubr.bf16.mxu0 0
      %6930 = vmatmul.mubr.bf16.gmra.mrb[0].mxu0 %v6776
      %v6931 = vpop.f32.mrb[0].mxu0
      %v6932 = vadd.f32 0.0, %v6931
      %v6933 = vpop.f32.mrb[0].mxu0
      %v6934 = vpop.f32.mrb[0].mxu0
      %v6935 = vadd.f32 0.0, %v6934
      %v6936 = vpop.f32.mrb[0].mxu0
      %6937 = vmatprep.mubr.bf16.mxu0 0
      %6938 = vmatmul.mubr.bf16.gmra.mrb[0].mxu0 %v6777
      %v6939 = vpop.f32.mrb[0].mxu0
      %v6940 = vadd.f32 0.0, %v6939
      %v6941 = vpop.f32.mrb[0].mxu0
      %v6942 = vpop.f32.mrb[0].mxu0
      %v6943 = vadd.f32 0.0, %v6942
      %v6944 = vpop.f32.mrb[0].mxu0
      %6945 = vmatprep.mubr.bf16.mxu0 0
      %6946 = vmatmul.mubr.bf16.gmra.mrb[0].mxu0 %v6778
      %v6947 = vpop.f32.mrb[0].mxu0
      %v6948 = vadd.f32 0.0, %v6947
      %v6949 = vpop.f32.mrb[0].mxu0
      %v6950 = vpop.f32.mrb[0].mxu0
      %v6951 = vadd.f32 0.0, %v6950
      %v6952 = vpop.f32.mrb[0].mxu0
      %6953 = vmatprep.mubr.bf16.mxu0 0
      %6954 = vmatmul.mubr.bf16.gmra.mrb[0].mxu0 %v6779
      %v6955 = vpop.f32.mrb[0].mxu0
      %v6956 = vadd.f32 0.0, %v6955
      %v6957 = vpop.f32.mrb[0].mxu0
      %v6958 = vpop.f32.mrb[0].mxu0
      %v6959 = vadd.f32 0.0, %v6958
      %v6960 = vpop.f32.mrb[0].mxu0
      %6961 = vmatprep.mubr.bf16.mxu0 0
      %6962 = vmatmul.mubr.bf16.gmra.mrb[0].mxu0 %v6780
      %v6963 = vpop.f32.mrb[0].mxu0
      %v6964 = vadd.f32 0.0, %v6963
      %v6965 = vpop.f32.mrb[0].mxu0
      %v6966 = vpop.f32.mrb[0].mxu0
      %v6967 = vadd.f32 0.0, %v6966
      %v6968 = vpop.f32.mrb[0].mxu0
      %6969 = vmatprep.mubr.bf16.mxu0 0
      %6970 = vmatmul.mubr.bf16.gmra.mrb[0].mxu0 %v6781
      %v6971 = vpop.f32.mrb[0].mxu0
      %v6972 = vadd.f32 0.0, %v6971
      %v6973 = vpop.f32.mrb[0].mxu0
      %v6974 = vpop.f32.mrb[0].mxu0
      %v6975 = vadd.f32 0.0, %v6974
      %v6976 = vpop.f32.mrb[0].mxu0
      %6977 = vmatprep.mubr.bf16.mxu0 0
      %6978 = vmatmul.mubr.bf16.gmra.mrb[0].mxu0 %v6782
      %v6979 = vpop.f32.mrb[0].mxu0
      %v6980 = vadd.f32 0.0, %v6979
      %v6981 = vpop.f32.mrb[0].mxu0
      %v6982 = vpop.f32.mrb[0].mxu0
      %v6983 = vadd.f32 0.0, %v6982
      %v6984 = vpop.f32.mrb[0].mxu0
      %6985 = vmatprep.mubr.bf16.mxu0 0
      %6986 = vmatmul.mubr.bf16.gmra.mrb[0].mxu0 %v6783
      %v6987 = vpop.f32.mrb[0].mxu0
      %v6988 = vadd.f32 0.0, %v6987
      %v6989 = vpop.f32.mrb[0].mxu0
      %v6990 = vpop.f32.mrb[0].mxu0
      %v6991 = vadd.f32 0.0, %v6990
      %v6992 = vpop.f32.mrb[0].mxu0
      %6993 = vmatprep.mubr.bf16.mxu0 0
      %6994 = vmatmul.mubr.bf16.gmra.mrb[0].mxu0 %v6784
      %v6995 = vpop.f32.mrb[0].mxu0
      %v6996 = vadd.f32 0.0, %v6995
      %v6997 = vpop.f32.mrb[0].mxu0
      %v6998 = vpop.f32.mrb[0].mxu0
      %v6999 = vadd.f32 0.0, %v6998
      %v7000 = vpop.f32.mrb[0].mxu0
      %7001 = vmatprep.mubr.bf16.mxu0 0
      %7002 = vmatmul.mubr.bf16.gmra.mrb[0].mxu0 %v6785
      %v7003 = vpop.f32.mrb[0].mxu0
      %v7004 = vadd.f32 0.0, %v7003
      %v7005 = vpop.f32.mrb[0].mxu0
      %v7006 = vpop.f32.mrb[0].mxu0
      %v7007 = vadd.f32 0.0, %v7006
      %v7008 = vpop.f32.mrb[0].mxu0
      %7009 = vmatprep.mubr.bf16.mxu0 0
      %7010 = vmatmul.mubr.bf16.gmra.mrb[0].mxu0 %v6786
      %v7011 = vpop.f32.mrb[0].mxu0
      %v7012 = vadd.f32 0.0, %v7011
      %v7013 = vpop.f32.mrb[0].mxu0
      %v7014 = vpop.f32.mrb[0].mxu0
      %v7015 = vadd.f32 0.0, %v7014
      %v7016 = vpop.f32.mrb[0].mxu0
      %7017 = vmatprep.mubr.bf16.mxu0 0
      %7018 = vmatmul.mubr.bf16.gmra.mrb[0].mxu0 %v6787
      %v7019 = vpop.f32.mrb[0].mxu0
      %v7020 = vadd.f32 0.0, %v7019
      %v7021 = vpop.f32.mrb[0].mxu0
      %v7022 = vpop.f32.mrb[0].mxu0
      %v7023 = vadd.f32 0.0, %v7022
      %v7024 = vpop.f32.mrb[0].mxu0
      %7025 = vmatprep.mubr.bf16.mxu0 0
      %7026 = vmatmul.mubr.bf16.gmra.mrb[0].mxu0 %v6788
      %v7027 = vpop.f32.mrb[0].mxu0
      %v7028 = vadd.f32 0.0, %v7027
      %v7029 = vpop.f32.mrb[0].mxu0
      %v7030 = vpop.f32.mrb[0].mxu0
      %v7031 = vadd.f32 0.0, %v7030
      %v7032 = vpop.f32.mrb[0].mxu0
      %7033 = vmatprep.mubr.bf16.mxu0 0
      %7034 = vmatmul.mubr.bf16.gmra.mrb[0].mxu0 %v6789
      %v7035 = vpop.f32.mrb[0].mxu0
      %v7036 = vadd.f32 0.0, %v7035
      %v7037 = vpop.f32.mrb[0].mxu0
      %v7038 = vpop.f32.mrb[0].mxu0
      %v7039 = vadd.f32 0.0, %v7038
      %v7040 = vpop.f32.mrb[0].mxu0
      %7041 = vmatprep.mubr.bf16.mxu0 0
      %7042 = vmatmul.mubr.bf16.gmra.mrb[0].mxu0 %v6790
      %v7043 = vpop.f32.mrb[0].mxu0
      %v7044 = vadd.f32 0.0, %v7043
      %v7045 = vpop.f32.mrb[0].mxu0
      %v7046 = vpop.f32.mrb[0].mxu0
      %v7047 = vadd.f32 0.0, %v7046
      %v7048 = vpop.f32.mrb[0].mxu0
      %7049 = vmatprep.mubr.bf16.mxu0 0
      %7050 = vmatmul.mubr.bf16.gmra.mrb[0].mxu0 %v6791
      %v7051 = vpop.f32.mrb[0].mxu0
      %v7052 = vadd.f32 0.0, %v7051
      %v7053 = vpop.f32.mrb[0].mxu0
      %v7054 = vpop.f32.mrb[0].mxu0
      %v7055 = vpop.f32.mrb[0].mxu0
      %7056 = vdwg.mxu0
      %v7057 = vadd.f32 %v6689, %v6892
      %v7058 = vadd.f32 %v6690, %v6895
      %v7059 = vadd.f32 %v6691, %v6900
      %v7060 = vadd.f32 %v6692, %v6903
      %v7061 = vadd.f32 %v6693, %v6908
      %v7062 = vadd.f32 %v6694, %v6911
      %v7063 = vadd.f32 %v6695, %v6916
      %v7064 = vadd.f32 %v6696, %v6919
      %v7065 = vadd.f32 %v6697, %v6924
      %v7066 = vadd.f32 %v6698, %v6927
      %v7067 = vadd.f32 %v6699, %v6932
      %v7068 = vadd.f32 %v6700, %v6935
      %v7069 = vadd.f32 %v6701, %v6940
      %v7070 = vadd.f32 %v6702, %v6943
      %v7071 = vadd.f32 %v6703, %v6948
      %v7072 = vadd.f32 %v6704, %v6951
      %v7073 = vadd.f32 %v6705, %v6956
      %v7074 = vadd.f32 %v6706, %v6959
      %v7075 = vadd.f32 %v6707, %v6964
      %v7076 = vadd.f32 %v6708, %v6967
      %v7077 = vadd.f32 %v6709, %v6972
      %v7078 = vadd.f32 %v6710, %v6975
      %v7079 = vadd.f32 %v6711, %v6980
      %v7080 = vadd.f32 %v6712, %v6983
      %v7081 = vadd.f32 %v6713, %v6988
      %v7082 = vadd.f32 %v6714, %v6991
      %v7083 = vadd.f32 %v6715, %v6996
      %v7084 = vadd.f32 %v6716, %v6999
      %v7085 = vadd.f32 %v6717, %v7004
      %v7086 = vadd.f32 %v6718, %v7007
      %v7087 = vadd.f32 %v6719, %v7012
      %v7088 = vadd.f32 %v6720, %v7015
      %v7089 = vadd.f32 %v6721, %v7020
      %v7090 = vadd.f32 %v6722, %v7023
      %v7091 = vadd.f32 %v6723, %v7028
      %v7092 = vadd.f32 %v6724, %v7031
      %v7093 = vadd.f32 %v6725, %v7036
      %v7094 = vadd.f32 %v6726, %v7039
      %v7095 = vadd.f32 %v6727, %v7044
      %v7096 = vadd.f32 %v6728, %v7047
      %v7097 = vadd.f32 %v6729, %v7052
      %v7098 = vld [vmem:[#allocation3 + $0x2a] sm:$0xff]
      %v7099 = vld [vmem:[#allocation3 + $0x32] sm:$0xff]
      %v7100 = vld [vmem:[#allocation3 + $0x3a] sm:$0xff]
      %v7101 = vld [vmem:[#allocation3 + $0x42] sm:$0xff]
      %v7102 = vld [vmem:[#allocation3 + $0x4a] sm:$0xff]
      %v7103 = vld [vmem:[#allocation3 + $0x52] sm:$0xff]
      %v7104 = vld [vmem:[#allocation3 + $0x5a] sm:$0xff]
      %v7105 = vld [vmem:[#allocation3 + $0x62] sm:$0xff]
      %v7106 = vld [vmem:[#allocation3 + $0x6a] sm:$0xff]
      %v7107 = vld [vmem:[#allocation3 + $0x72] sm:$0xff]
      %v7108 = vld [vmem:[#allocation3 + $0x7a] sm:$0xff]
      %v7109 = vld [vmem:[#allocation3 + $0x82] sm:$0xff]
      %v7110 = vld [vmem:[#allocation3 + $0x8a] sm:$0xff]
      %v7111 = vld [vmem:[#allocation3 + $0x92] sm:$0xff]
      %v7112 = vld [vmem:[#allocation3 + $0x9a] sm:$0xff]
      %v7113 = vld [vmem:[#allocation3 + $0xa2] sm:$0xff]
      %v7114 = vld [vmem:[#allocation3 + $0xaa] sm:$0xff]
      %v7115 = vld [vmem:[#allocation3 + $0xb2] sm:$0xff]
      %v7116 = vld [vmem:[#allocation3 + $0xba] sm:$0xff]
      %v7117 = vld [vmem:[#allocation3 + $0xc2] sm:$0xff]
      %v7118 = vld [vmem:[#allocation3 + $0xca] sm:$0xff]
      %v7119 = vld [vmem:[#allocation3 + $0xd2] sm:$0xff]
      %v7120 = vld [vmem:[#allocation3 + $0xda] sm:$0xff]
      %v7121 = vld [vmem:[#allocation3 + $0xe2] sm:$0xff]
      %v7122 = vld [vmem:[#allocation3 + $0xea] sm:$0xff]
      %v7123 = vld [vmem:[#allocation3 + $0xf2] sm:$0xff]
      %v7124 = vld [vmem:[#allocation3 + $0xfa] sm:$0xff]
      %v7125 = vld [vmem:[#allocation3 + $0x102] sm:$0xff]
      %v7126 = vld [vmem:[#allocation3 + $0x10a] sm:$0xff]
      %v7127 = vld [vmem:[#allocation3 + $0x112] sm:$0xff]
      %v7128 = vld [vmem:[#allocation3 + $0x11a] sm:$0xff]
      %v7129 = vld [vmem:[#allocation3 + $0x122] sm:$0xff]
      %v7130 = vld [vmem:[#allocation3 + $0x12a] sm:$0xff]
      %v7131 = vld [vmem:[#allocation3 + $0x132] sm:$0xff]
      %v7132 = vld [vmem:[#allocation3 + $0x13a] sm:$0xff]
      %v7133 = vld [vmem:[#allocation3 + $0x142] sm:$0xff]
      %v7134 = vld [vmem:[#allocation3 + $0x14a] sm:$0xff]
      %v7135 = vld [vmem:[#allocation3 + $0x152] sm:$0xff]
      %v7136 = vld [vmem:[#allocation3 + $0x15a] sm:$0xff]
      %v7137 = vld [vmem:[#allocation3 + $0x162] sm:$0xff]
      %v7138 = vld [vmem:[#allocation3 + $0x16a] sm:$0xf]
      %v7139 = vpack.c.bf16 %v7099, %v7098
      %v7140 = vpack.c.bf16 %v7101, %v7100
      %v7141 = vpack.c.bf16 %v7103, %v7102
      %v7142 = vpack.c.bf16 %v7105, %v7104
      %v7143 = vpack.c.bf16 %v7107, %v7106
      %v7144 = vpack.c.bf16 %v7109, %v7108
      %v7145 = vpack.c.bf16 %v7111, %v7110
      %v7146 = vpack.c.bf16 %v7113, %v7112
      %v7147 = vpack.c.bf16 %v7115, %v7114
      %v7148 = vpack.c.bf16 %v7117, %v7116
      %v7149 = vpack.c.bf16 %v7119, %v7118
      %v7150 = vpack.c.bf16 %v7121, %v7120
      %v7151 = vpack.c.bf16 %v7123, %v7122
      %v7152 = vpack.c.bf16 %v7125, %v7124
      %v7153 = vpack.c.bf16 %v7127, %v7126
      %v7154 = vpack.c.bf16 %v7129, %v7128
      %v7155 = vpack.c.bf16 %v7131, %v7130
      %v7156 = vpack.c.bf16 %v7133, %v7132
      %v7157 = vpack.c.bf16 %v7135, %v7134
      %v7158 = vpack.c.bf16 %v7137, %v7136
      %v7159 = vpack.c.bf16 %v7138, %v7138
      %s7160 = scalar_lea.vmem %s6, 448
      %v7161 = vld [vmem:[%s7160] sm:$0xf]
      %v7162 = vld [vmem:[%s7160 + $0x4] sm:$0xf]
      %v7163 = vld [vmem:[%s7160 + $0x8] sm:$0xf]
      %v7164 = vld [vmem:[%s7160 + $0xc] sm:$0xf]
      %v7165 = vld [vmem:[%s7160 + $0x10] sm:$0xf]
      %v7166 = vld [vmem:[%s7160 + $0x14] sm:$0xf]
      %v7167 = vld [vmem:[%s7160 + $0x18] sm:$0xf]
      %v7168 = vld [vmem:[%s7160 + $0x1c] sm:$0xf]
      %v7169 = vld [vmem:[%s7160 + $0x20] sm:$0xf]
      %v7170 = vld [vmem:[%s7160 + $0x24] sm:$0xf]
      %v7171 = vld [vmem:[%s7160 + $0x28] sm:$0xf]
      %v7172 = vld [vmem:[%s7160 + $0x2c] sm:$0xf]
      %v7173 = vld [vmem:[%s7160 + $0x30] sm:$0xf]
      %v7174 = vld [vmem:[%s7160 + $0x34] sm:$0xf]
      %v7175 = vld [vmem:[%s7160 + $0x38] sm:$0xf]
      %v7176 = vld [vmem:[%s7160 + $0x3c] sm:$0xf]
      %v7193 = vunpack.c.l.b16 %v7161
      %v7194 = vunpack.c.l.b16 %v7162
      %v7195 = vunpack.c.l.b16 %v7163
      %v7196 = vunpack.c.l.b16 %v7164
      %v7197 = vunpack.c.l.b16 %v7165
      %v7198 = vunpack.c.l.b16 %v7166
      %v7199 = vunpack.c.l.b16 %v7167
      %v7200 = vunpack.c.l.b16 %v7168
      %v7201 = vunpack.c.l.b16 %v7169
      %v7202 = vunpack.c.l.b16 %v7170
      %v7203 = vunpack.c.l.b16 %v7171
      %v7204 = vunpack.c.l.b16 %v7172
      %v7205 = vunpack.c.l.b16 %v7173
      %v7206 = vunpack.c.l.b16 %v7174
      %v7207 = vunpack.c.l.b16 %v7175
      %v7208 = vunpack.c.l.b16 %v7176
      %v7209 = vpack.c.b16 %v7194, %v7193
      %v7210 = vpack.c.b16 %v7196, %v7195
      %v7211 = vpack.c.b16 %v7198, %v7197
      %v7212 = vpack.c.b16 %v7200, %v7199
      %v7213 = vpack.c.b16 %v7202, %v7201
      %v7214 = vpack.c.b16 %v7204, %v7203
      %v7215 = vpack.c.b16 %v7206, %v7205
      %v7216 = vpack.c.b16 %v7208, %v7207
      %7225 = vmatprep.subr.bf16.mxu0 0
      %7226 = vmatpush1.bf16.msra.mxu0 %v7209
      %7227 = vmatprep.subr.bf16.mxu0 0
      %7228 = vmatpush1.bf16.msra.mxu0 %v7210
      %7229 = vmatprep.subr.bf16.mxu0 0
      %7230 = vmatpush1.bf16.msra.mxu0 %v7211
      %7231 = vmatprep.subr.bf16.mxu0 0
      %7232 = vmatpush1.bf16.msra.mxu0 %v7212
      %7233 = vmatprep.subr.bf16.mxu0 0
      %7234 = vmatpush1.bf16.msra.mxu0 %v7213
      %7235 = vmatprep.subr.bf16.mxu0 0
      %7236 = vmatpush1.bf16.msra.mxu0 %v7214
      %7237 = vmatprep.subr.bf16.mxu0 0
      %7238 = vmatpush1.bf16.msra.mxu0 %v7215
      %7239 = vmatprep.subr.bf16.mxu0 0
      %7240 = vmatpush1.bf16.msra.mxu0 %v7216
      %7241 = vmatprep.subr.bf16.mxu0 0
      %7242 = vmatpush1.bf16.msra.mxu0 0
      %7243 = vmatprep.subr.bf16.mxu0 0
      %7244 = vmatpush1.bf16.msra.mxu0 0
      %7245 = vmatprep.subr.bf16.mxu0 0
      %7246 = vmatpush1.bf16.msra.mxu0 0
      %7247 = vmatprep.subr.bf16.mxu0 0
      %7248 = vmatpush1.bf16.msra.mxu0 0
      %7249 = vmatprep.subr.bf16.mxu0 0
      %7250 = vmatpush1.bf16.msra.mxu0 0
      %7251 = vmatprep.subr.bf16.mxu0 0
      %7252 = vmatpush1.bf16.msra.mxu0 0
      %7253 = vmatprep.subr.bf16.mxu0 0
      %7254 = vmatpush1.bf16.msra.mxu0 0
      %7255 = vmatprep.subr.bf16.mxu0 0
      %7256 = vmatpush1.bf16.msra.mxu0 0
      %7257 = vmatprep.mubr.bf16.mxu0 0
      %7258 = vmatmul.mubr.bf16.gmra.mrb[0].mxu0 %v7139
      %v7259 = vpop.f32.mrb[0].mxu0
      %v7260 = vadd.f32 0.0, %v7259
      %v7261 = vpop.f32.mrb[0].mxu0
      %v7262 = vpop.f32.mrb[0].mxu0
      %v7263 = vadd.f32 0.0, %v7262
      %v7264 = vpop.f32.mrb[0].mxu0
      %7265 = vmatprep.mubr.bf16.mxu0 0
      %7266 = vmatmul.mubr.bf16.gmra.mrb[0].mxu0 %v7140
      %v7267 = vpop.f32.mrb[0].mxu0
      %v7268 = vadd.f32 0.0, %v7267
      %v7269 = vpop.f32.mrb[0].mxu0
      %v7270 = vpop.f32.mrb[0].mxu0
      %v7271 = vadd.f32 0.0, %v7270
      %v7272 = vpop.f32.mrb[0].mxu0
      %7273 = vmatprep.mubr.bf16.mxu0 0
      %7274 = vmatmul.mubr.bf16.gmra.mrb[0].mxu0 %v7141
      %v7275 = vpop.f32.mrb[0].mxu0
      %v7276 = vadd.f32 0.0, %v7275
      %v7277 = vpop.f32.mrb[0].mxu0
      %v7278 = vpop.f32.mrb[0].mxu0
      %v7279 = vadd.f32 0.0, %v7278
      %v7280 = vpop.f32.mrb[0].mxu0
      %7281 = vmatprep.mubr.bf16.mxu0 0
      %7282 = vmatmul.mubr.bf16.gmra.mrb[0].mxu0 %v7142
      %v7283 = vpop.f32.mrb[0].mxu0
      %v7284 = vadd.f32 0.0, %v7283
      %v7285 = vpop.f32.mrb[0].mxu0
      %v7286 = vpop.f32.mrb[0].mxu0
      %v7287 = vadd.f32 0.0, %v7286
      %v7288 = vpop.f32.mrb[0].mxu0
      %7289 = vmatprep.mubr.bf16.mxu0 0
      %7290 = vmatmul.mubr.bf16.gmra.mrb[0].mxu0 %v7143
      %v7291 = vpop.f32.mrb[0].mxu0
      %v7292 = vadd.f32 0.0, %v7291
      %v7293 = vpop.f32.mrb[0].mxu0
      %v7294 = vpop.f32.mrb[0].mxu0
      %v7295 = vadd.f32 0.0, %v7294
      %v7296 = vpop.f32.mrb[0].mxu0
      %7297 = vmatprep.mubr.bf16.mxu0 0
      %7298 = vmatmul.mubr.bf16.gmra.mrb[0].mxu0 %v7144
      %v7299 = vpop.f32.mrb[0].mxu0
      %v7300 = vadd.f32 0.0, %v7299
      %v7301 = vpop.f32.mrb[0].mxu0
      %v7302 = vpop.f32.mrb[0].mxu0
      %v7303 = vadd.f32 0.0, %v7302
      %v7304 = vpop.f32.mrb[0].mxu0
      %7305 = vmatprep.mubr.bf16.mxu0 0
      %7306 = vmatmul.mubr.bf16.gmra.mrb[0].mxu0 %v7145
      %v7307 = vpop.f32.mrb[0].mxu0
      %v7308 = vadd.f32 0.0, %v7307
      %v7309 = vpop.f32.mrb[0].mxu0
      %v7310 = vpop.f32.mrb[0].mxu0
      %v7311 = vadd.f32 0.0, %v7310
      %v7312 = vpop.f32.mrb[0].mxu0
      %7313 = vmatprep.mubr.bf16.mxu0 0
      %7314 = vmatmul.mubr.bf16.gmra.mrb[0].mxu0 %v7146
      %v7315 = vpop.f32.mrb[0].mxu0
      %v7316 = vadd.f32 0.0, %v7315
      %v7317 = vpop.f32.mrb[0].mxu0
      %v7318 = vpop.f32.mrb[0].mxu0
      %v7319 = vadd.f32 0.0, %v7318
      %v7320 = vpop.f32.mrb[0].mxu0
      %7321 = vmatprep.mubr.bf16.mxu0 0
      %7322 = vmatmul.mubr.bf16.gmra.mrb[0].mxu0 %v7147
      %v7323 = vpop.f32.mrb[0].mxu0
      %v7324 = vadd.f32 0.0, %v7323
      %v7325 = vpop.f32.mrb[0].mxu0
      %v7326 = vpop.f32.mrb[0].mxu0
      %v7327 = vadd.f32 0.0, %v7326
      %v7328 = vpop.f32.mrb[0].mxu0
      %7329 = vmatprep.mubr.bf16.mxu0 0
      %7330 = vmatmul.mubr.bf16.gmra.mrb[0].mxu0 %v7148
      %v7331 = vpop.f32.mrb[0].mxu0
      %v7332 = vadd.f32 0.0, %v7331
      %v7333 = vpop.f32.mrb[0].mxu0
      %v7334 = vpop.f32.mrb[0].mxu0
      %v7335 = vadd.f32 0.0, %v7334
      %v7336 = vpop.f32.mrb[0].mxu0
      %7337 = vmatprep.mubr.bf16.mxu0 0
      %7338 = vmatmul.mubr.bf16.gmra.mrb[0].mxu0 %v7149
      %v7339 = vpop.f32.mrb[0].mxu0
      %v7340 = vadd.f32 0.0, %v7339
      %v7341 = vpop.f32.mrb[0].mxu0
      %v7342 = vpop.f32.mrb[0].mxu0
      %v7343 = vadd.f32 0.0, %v7342
      %v7344 = vpop.f32.mrb[0].mxu0
      %7345 = vmatprep.mubr.bf16.mxu0 0
      %7346 = vmatmul.mubr.bf16.gmra.mrb[0].mxu0 %v7150
      %v7347 = vpop.f32.mrb[0].mxu0
      %v7348 = vadd.f32 0.0, %v7347
      %v7349 = vpop.f32.mrb[0].mxu0
      %v7350 = vpop.f32.mrb[0].mxu0
      %v7351 = vadd.f32 0.0, %v7350
      %v7352 = vpop.f32.mrb[0].mxu0
      %7353 = vmatprep.mubr.bf16.mxu0 0
      %7354 = vmatmul.mubr.bf16.gmra.mrb[0].mxu0 %v7151
      %v7355 = vpop.f32.mrb[0].mxu0
      %v7356 = vadd.f32 0.0, %v7355
      %v7357 = vpop.f32.mrb[0].mxu0
      %v7358 = vpop.f32.mrb[0].mxu0
      %v7359 = vadd.f32 0.0, %v7358
      %v7360 = vpop.f32.mrb[0].mxu0
      %7361 = vmatprep.mubr.bf16.mxu0 0
      %7362 = vmatmul.mubr.bf16.gmra.mrb[0].mxu0 %v7152
      %v7363 = vpop.f32.mrb[0].mxu0
      %v7364 = vadd.f32 0.0, %v7363
      %v7365 = vpop.f32.mrb[0].mxu0
      %v7366 = vpop.f32.mrb[0].mxu0
      %v7367 = vadd.f32 0.0, %v7366
      %v7368 = vpop.f32.mrb[0].mxu0
      %7369 = vmatprep.mubr.bf16.mxu0 0
      %7370 = vmatmul.mubr.bf16.gmra.mrb[0].mxu0 %v7153
      %v7371 = vpop.f32.mrb[0].mxu0
      %v7372 = vadd.f32 0.0, %v7371
      %v7373 = vpop.f32.mrb[0].mxu0
      %v7374 = vpop.f32.mrb[0].mxu0
      %v7375 = vadd.f32 0.0, %v7374
      %v7376 = vpop.f32.mrb[0].mxu0
      %7377 = vmatprep.mubr.bf16.mxu0 0
      %7378 = vmatmul.mubr.bf16.gmra.mrb[0].mxu0 %v7154
      %v7379 = vpop.f32.mrb[0].mxu0
      %v7380 = vadd.f32 0.0, %v7379
      %v7381 = vpop.f32.mrb[0].mxu0
      %v7382 = vpop.f32.mrb[0].mxu0
      %v7383 = vadd.f32 0.0, %v7382
      %v7384 = vpop.f32.mrb[0].mxu0
      %7385 = vmatprep.mubr.bf16.mxu0 0
      %7386 = vmatmul.mubr.bf16.gmra.mrb[0].mxu0 %v7155
      %v7387 = vpop.f32.mrb[0].mxu0
      %v7388 = vadd.f32 0.0, %v7387
      %v7389 = vpop.f32.mrb[0].mxu0
      %v7390 = vpop.f32.mrb[0].mxu0
      %v7391 = vadd.f32 0.0, %v7390
      %v7392 = vpop.f32.mrb[0].mxu0
      %7393 = vmatprep.mubr.bf16.mxu0 0
      %7394 = vmatmul.mubr.bf16.gmra.mrb[0].mxu0 %v7156
      %v7395 = vpop.f32.mrb[0].mxu0
      %v7396 = vadd.f32 0.0, %v7395
      %v7397 = vpop.f32.mrb[0].mxu0
      %v7398 = vpop.f32.mrb[0].mxu0
      %v7399 = vadd.f32 0.0, %v7398
      %v7400 = vpop.f32.mrb[0].mxu0
      %7401 = vmatprep.mubr.bf16.mxu0 0
      %7402 = vmatmul.mubr.bf16.gmra.mrb[0].mxu0 %v7157
      %v7403 = vpop.f32.mrb[0].mxu0
      %v7404 = vadd.f32 0.0, %v7403
      %v7405 = vpop.f32.mrb[0].mxu0
      %v7406 = vpop.f32.mrb[0].mxu0
      %v7407 = vadd.f32 0.0, %v7406
      %v7408 = vpop.f32.mrb[0].mxu0
      %7409 = vmatprep.mubr.bf16.mxu0 0
      %7410 = vmatmul.mubr.bf16.gmra.mrb[0].mxu0 %v7158
      %v7411 = vpop.f32.mrb[0].mxu0
      %v7412 = vadd.f32 0.0, %v7411
      %v7413 = vpop.f32.mrb[0].mxu0
      %v7414 = vpop.f32.mrb[0].mxu0
      %v7415 = vadd.f32 0.0, %v7414
      %v7416 = vpop.f32.mrb[0].mxu0
      %7417 = vmatprep.mubr.bf16.mxu0 0
      %7418 = vmatmul.mubr.bf16.gmra.mrb[0].mxu0 %v7159
      %v7419 = vpop.f32.mrb[0].mxu0
      %v7420 = vadd.f32 0.0, %v7419
      %v7421 = vpop.f32.mrb[0].mxu0
      %v7422 = vpop.f32.mrb[0].mxu0
      %v7423 = vpop.f32.mrb[0].mxu0
      %7424 = vdwg.mxu0
      %v7425 = vadd.f32 %v7057, %v7260
      %v7426 = vadd.f32 %v7058, %v7263
      %v7427 = vadd.f32 %v7059, %v7268
      %v7428 = vadd.f32 %v7060, %v7271
      %v7429 = vadd.f32 %v7061, %v7276
      %v7430 = vadd.f32 %v7062, %v7279
      %v7431 = vadd.f32 %v7063, %v7284
      %v7432 = vadd.f32 %v7064, %v7287
      %v7433 = vadd.f32 %v7065, %v7292
      %v7434 = vadd.f32 %v7066, %v7295
      %v7435 = vadd.f32 %v7067, %v7300
      %v7436 = vadd.f32 %v7068, %v7303
      %v7437 = vadd.f32 %v7069, %v7308
      %v7438 = vadd.f32 %v7070, %v7311
      %v7439 = vadd.f32 %v7071, %v7316
      %v7440 = vadd.f32 %v7072, %v7319
      %v7441 = vadd.f32 %v7073, %v7324
      %v7442 = vadd.f32 %v7074, %v7327
      %v7443 = vadd.f32 %v7075, %v7332
      %v7444 = vadd.f32 %v7076, %v7335
      %v7445 = vadd.f32 %v7077, %v7340
      %v7446 = vadd.f32 %v7078, %v7343
      %v7447 = vadd.f32 %v7079, %v7348
      %v7448 = vadd.f32 %v7080, %v7351
      %v7449 = vadd.f32 %v7081, %v7356
      %v7450 = vadd.f32 %v7082, %v7359
      %v7451 = vadd.f32 %v7083, %v7364
      %v7452 = vadd.f32 %v7084, %v7367
      %v7453 = vadd.f32 %v7085, %v7372
      %v7454 = vadd.f32 %v7086, %v7375
      %v7455 = vadd.f32 %v7087, %v7380
      %v7456 = vadd.f32 %v7088, %v7383
      %v7457 = vadd.f32 %v7089, %v7388
      %v7458 = vadd.f32 %v7090, %v7391
      %v7459 = vadd.f32 %v7091, %v7396
      %v7460 = vadd.f32 %v7092, %v7399
      %v7461 = vadd.f32 %v7093, %v7404
      %v7462 = vadd.f32 %v7094, %v7407
      %v7463 = vadd.f32 %v7095, %v7412
      %v7464 = vadd.f32 %v7096, %v7415
      %v7465 = vadd.f32 %v7097, %v7420
      %v7466 = vld [vmem:[#allocation3 + $0x2b] sm:$0xff]
      %v7467 = vld [vmem:[#allocation3 + $0x33] sm:$0xff]
      %v7468 = vld [vmem:[#allocation3 + $0x3b] sm:$0xff]
      %v7469 = vld [vmem:[#allocation3 + $0x43] sm:$0xff]
      %v7470 = vld [vmem:[#allocation3 + $0x4b] sm:$0xff]
      %v7471 = vld [vmem:[#allocation3 + $0x53] sm:$0xff]
      %v7472 = vld [vmem:[#allocation3 + $0x5b] sm:$0xff]
      %v7473 = vld [vmem:[#allocation3 + $0x63] sm:$0xff]
      %v7474 = vld [vmem:[#allocation3 + $0x6b] sm:$0xff]
      %v7475 = vld [vmem:[#allocation3 + $0x73] sm:$0xff]
      %v7476 = vld [vmem:[#allocation3 + $0x7b] sm:$0xff]
      %v7477 = vld [vmem:[#allocation3 + $0x83] sm:$0xff]
      %v7478 = vld [vmem:[#allocation3 + $0x8b] sm:$0xff]
      %v7479 = vld [vmem:[#allocation3 + $0x93] sm:$0xff]
      %v7480 = vld [vmem:[#allocation3 + $0x9b] sm:$0xff]
      %v7481 = vld [vmem:[#allocation3 + $0xa3] sm:$0xff]
      %v7482 = vld [vmem:[#allocation3 + $0xab] sm:$0xff]
      %v7483 = vld [vmem:[#allocation3 + $0xb3] sm:$0xff]
      %v7484 = vld [vmem:[#allocation3 + $0xbb] sm:$0xff]
      %v7485 = vld [vmem:[#allocation3 + $0xc3] sm:$0xff]
      %v7486 = vld [vmem:[#allocation3 + $0xcb] sm:$0xff]
      %v7487 = vld [vmem:[#allocation3 + $0xd3] sm:$0xff]
      %v7488 = vld [vmem:[#allocation3 + $0xdb] sm:$0xff]
      %v7489 = vld [vmem:[#allocation3 + $0xe3] sm:$0xff]
      %v7490 = vld [vmem:[#allocation3 + $0xeb] sm:$0xff]
      %v7491 = vld [vmem:[#allocation3 + $0xf3] sm:$0xff]
      %v7492 = vld [vmem:[#allocation3 + $0xfb] sm:$0xff]
      %v7493 = vld [vmem:[#allocation3 + $0x103] sm:$0xff]
      %v7494 = vld [vmem:[#allocation3 + $0x10b] sm:$0xff]
      %v7495 = vld [vmem:[#allocation3 + $0x113] sm:$0xff]
      %v7496 = vld [vmem:[#allocation3 + $0x11b] sm:$0xff]
      %v7497 = vld [vmem:[#allocation3 + $0x123] sm:$0xff]
      %v7498 = vld [vmem:[#allocation3 + $0x12b] sm:$0xff]
      %v7499 = vld [vmem:[#allocation3 + $0x133] sm:$0xff]
      %v7500 = vld [vmem:[#allocation3 + $0x13b] sm:$0xff]
      %v7501 = vld [vmem:[#allocation3 + $0x143] sm:$0xff]
      %v7502 = vld [vmem:[#allocation3 + $0x14b] sm:$0xff]
      %v7503 = vld [vmem:[#allocation3 + $0x153] sm:$0xff]
      %v7504 = vld [vmem:[#allocation3 + $0x15b] sm:$0xff]
      %v7505 = vld [vmem:[#allocation3 + $0x163] sm:$0xff]
      %v7506 = vld [vmem:[#allocation3 + $0x16b] sm:$0xf]
      %v7507 = vpack.c.bf16 %v7467, %v7466
      %v7508 = vpack.c.bf16 %v7469, %v7468
      %v7509 = vpack.c.bf16 %v7471, %v7470
      %v7510 = vpack.c.bf16 %v7473, %v7472
      %v7511 = vpack.c.bf16 %v7475, %v7474
      %v7512 = vpack.c.bf16 %v7477, %v7476
      %v7513 = vpack.c.bf16 %v7479, %v7478
      %v7514 = vpack.c.bf16 %v7481, %v7480
      %v7515 = vpack.c.bf16 %v7483, %v7482
      %v7516 = vpack.c.bf16 %v7485, %v7484
      %v7517 = vpack.c.bf16 %v7487, %v7486
      %v7518 = vpack.c.bf16 %v7489, %v7488
      %v7519 = vpack.c.bf16 %v7491, %v7490
      %v7520 = vpack.c.bf16 %v7493, %v7492
      %v7521 = vpack.c.bf16 %v7495, %v7494
      %v7522 = vpack.c.bf16 %v7497, %v7496
      %v7523 = vpack.c.bf16 %v7499, %v7498
      %v7524 = vpack.c.bf16 %v7501, %v7500
      %v7525 = vpack.c.bf16 %v7503, %v7502
      %v7526 = vpack.c.bf16 %v7505, %v7504
      %v7527 = vpack.c.bf16 %v7506, %v7506
      %s7528 = scalar_lea.vmem %s6, 512
      %v7529 = vld [vmem:[%s7528] sm:$0xf]
      %v7530 = vld [vmem:[%s7528 + $0x4] sm:$0xf]
      %v7531 = vld [vmem:[%s7528 + $0x8] sm:$0xf]
      %v7532 = vld [vmem:[%s7528 + $0xc] sm:$0xf]
      %v7533 = vld [vmem:[%s7528 + $0x10] sm:$0xf]
      %v7534 = vld [vmem:[%s7528 + $0x14] sm:$0xf]
      %v7535 = vld [vmem:[%s7528 + $0x18] sm:$0xf]
      %v7536 = vld [vmem:[%s7528 + $0x1c] sm:$0xf]
      %v7537 = vld [vmem:[%s7528 + $0x20] sm:$0xf]
      %v7538 = vld [vmem:[%s7528 + $0x24] sm:$0xf]
      %v7539 = vld [vmem:[%s7528 + $0x28] sm:$0xf]
      %v7540 = vld [vmem:[%s7528 + $0x2c] sm:$0xf]
      %v7541 = vld [vmem:[%s7528 + $0x30] sm:$0xf]
      %v7542 = vld [vmem:[%s7528 + $0x34] sm:$0xf]
      %v7543 = vld [vmem:[%s7528 + $0x38] sm:$0xf]
      %v7544 = vld [vmem:[%s7528 + $0x3c] sm:$0xf]
      %v7561 = vunpack.c.l.b16 %v7529
      %v7562 = vunpack.c.l.b16 %v7530
      %v7563 = vunpack.c.l.b16 %v7531
      %v7564 = vunpack.c.l.b16 %v7532
      %v7565 = vunpack.c.l.b16 %v7533
      %v7566 = vunpack.c.l.b16 %v7534
      %v7567 = vunpack.c.l.b16 %v7535
      %v7568 = vunpack.c.l.b16 %v7536
      %v7569 = vunpack.c.l.b16 %v7537
      %v7570 = vunpack.c.l.b16 %v7538
      %v7571 = vunpack.c.l.b16 %v7539
      %v7572 = vunpack.c.l.b16 %v7540
      %v7573 = vunpack.c.l.b16 %v7541
      %v7574 = vunpack.c.l.b16 %v7542
      %v7575 = vunpack.c.l.b16 %v7543
      %v7576 = vunpack.c.l.b16 %v7544
      %v7577 = vpack.c.b16 %v7562, %v7561
      %v7578 = vpack.c.b16 %v7564, %v7563
      %v7579 = vpack.c.b16 %v7566, %v7565
      %v7580 = vpack.c.b16 %v7568, %v7567
      %v7581 = vpack.c.b16 %v7570, %v7569
      %v7582 = vpack.c.b16 %v7572, %v7571
      %v7583 = vpack.c.b16 %v7574, %v7573
      %v7584 = vpack.c.b16 %v7576, %v7575
      %7593 = vmatprep.subr.bf16.mxu0 0
      %7594 = vmatpush1.bf16.msra.mxu0 %v7577
      %7595 = vmatprep.subr.bf16.mxu0 0
      %7596 = vmatpush1.bf16.msra.mxu0 %v7578
      %7597 = vmatprep.subr.bf16.mxu0 0
      %7598 = vmatpush1.bf16.msra.mxu0 %v7579
      %7599 = vmatprep.subr.bf16.mxu0 0
      %7600 = vmatpush1.bf16.msra.mxu0 %v7580
      %7601 = vmatprep.subr.bf16.mxu0 0
      %7602 = vmatpush1.bf16.msra.mxu0 %v7581
      %7603 = vmatprep.subr.bf16.mxu0 0
      %7604 = vmatpush1.bf16.msra.mxu0 %v7582
      %7605 = vmatprep.subr.bf16.mxu0 0
      %7606 = vmatpush1.bf16.msra.mxu0 %v7583
      %7607 = vmatprep.subr.bf16.mxu0 0
      %7608 = vmatpush1.bf16.msra.mxu0 %v7584
      %7609 = vmatprep.subr.bf16.mxu0 0
      %7610 = vmatpush1.bf16.msra.mxu0 0
      %7611 = vmatprep.subr.bf16.mxu0 0
      %7612 = vmatpush1.bf16.msra.mxu0 0
      %7613 = vmatprep.subr.bf16.mxu0 0
      %7614 = vmatpush1.bf16.msra.mxu0 0
      %7615 = vmatprep.subr.bf16.mxu0 0
      %7616 = vmatpush1.bf16.msra.mxu0 0
      %7617 = vmatprep.subr.bf16.mxu0 0
      %7618 = vmatpush1.bf16.msra.mxu0 0
      %7619 = vmatprep.subr.bf16.mxu0 0
      %7620 = vmatpush1.bf16.msra.mxu0 0
      %7621 = vmatprep.subr.bf16.mxu0 0
      %7622 = vmatpush1.bf16.msra.mxu0 0
      %7623 = vmatprep.subr.bf16.mxu0 0
      %7624 = vmatpush1.bf16.msra.mxu0 0
      %7625 = vmatprep.mubr.bf16.mxu0 0
      %7626 = vmatmul.mubr.bf16.gmra.mrb[0].mxu0 %v7507
      %v7627 = vpop.f32.mrb[0].mxu0
      %v7628 = vadd.f32 0.0, %v7627
      %v7629 = vpop.f32.mrb[0].mxu0
      %v7630 = vpop.f32.mrb[0].mxu0
      %v7631 = vadd.f32 0.0, %v7630
      %v7632 = vpop.f32.mrb[0].mxu0
      %7633 = vmatprep.mubr.bf16.mxu0 0
      %7634 = vmatmul.mubr.bf16.gmra.mrb[0].mxu0 %v7508
      %v7635 = vpop.f32.mrb[0].mxu0
      %v7636 = vadd.f32 0.0, %v7635
      %v7637 = vpop.f32.mrb[0].mxu0
      %v7638 = vpop.f32.mrb[0].mxu0
      %v7639 = vadd.f32 0.0, %v7638
      %v7640 = vpop.f32.mrb[0].mxu0
      %7641 = vmatprep.mubr.bf16.mxu0 0
      %7642 = vmatmul.mubr.bf16.gmra.mrb[0].mxu0 %v7509
      %v7643 = vpop.f32.mrb[0].mxu0
      %v7644 = vadd.f32 0.0, %v7643
      %v7645 = vpop.f32.mrb[0].mxu0
      %v7646 = vpop.f32.mrb[0].mxu0
      %v7647 = vadd.f32 0.0, %v7646
      %v7648 = vpop.f32.mrb[0].mxu0
      %7649 = vmatprep.mubr.bf16.mxu0 0
      %7650 = vmatmul.mubr.bf16.gmra.mrb[0].mxu0 %v7510
      %v7651 = vpop.f32.mrb[0].mxu0
      %v7652 = vadd.f32 0.0, %v7651
      %v7653 = vpop.f32.mrb[0].mxu0
      %v7654 = vpop.f32.mrb[0].mxu0
      %v7655 = vadd.f32 0.0, %v7654
      %v7656 = vpop.f32.mrb[0].mxu0
      %7657 = vmatprep.mubr.bf16.mxu0 0
      %7658 = vmatmul.mubr.bf16.gmra.mrb[0].mxu0 %v7511
      %v7659 = vpop.f32.mrb[0].mxu0
      %v7660 = vadd.f32 0.0, %v7659
      %v7661 = vpop.f32.mrb[0].mxu0
      %v7662 = vpop.f32.mrb[0].mxu0
      %v7663 = vadd.f32 0.0, %v7662
      %v7664 = vpop.f32.mrb[0].mxu0
      %7665 = vmatprep.mubr.bf16.mxu0 0
      %7666 = vmatmul.mubr.bf16.gmra.mrb[0].mxu0 %v7512
      %v7667 = vpop.f32.mrb[0].mxu0
      %v7668 = vadd.f32 0.0, %v7667
      %v7669 = vpop.f32.mrb[0].mxu0
      %v7670 = vpop.f32.mrb[0].mxu0
      %v7671 = vadd.f32 0.0, %v7670
      %v7672 = vpop.f32.mrb[0].mxu0
      %7673 = vmatprep.mubr.bf16.mxu0 0
      %7674 = vmatmul.mubr.bf16.gmra.mrb[0].mxu0 %v7513
      %v7675 = vpop.f32.mrb[0].mxu0
      %v7676 = vadd.f32 0.0, %v7675
      %v7677 = vpop.f32.mrb[0].mxu0
      %v7678 = vpop.f32.mrb[0].mxu0
      %v7679 = vadd.f32 0.0, %v7678
      %v7680 = vpop.f32.mrb[0].mxu0
      %7681 = vmatprep.mubr.bf16.mxu0 0
      %7682 = vmatmul.mubr.bf16.gmra.mrb[0].mxu0 %v7514
      %v7683 = vpop.f32.mrb[0].mxu0
      %v7684 = vadd.f32 0.0, %v7683
      %v7685 = vpop.f32.mrb[0].mxu0
      %v7686 = vpop.f32.mrb[0].mxu0
      %v7687 = vadd.f32 0.0, %v7686
      %v7688 = vpop.f32.mrb[0].mxu0
      %7689 = vmatprep.mubr.bf16.mxu0 0
      %7690 = vmatmul.mubr.bf16.gmra.mrb[0].mxu0 %v7515
      %v7691 = vpop.f32.mrb[0].mxu0
      %v7692 = vadd.f32 0.0, %v7691
      %v7693 = vpop.f32.mrb[0].mxu0
      %v7694 = vpop.f32.mrb[0].mxu0
      %v7695 = vadd.f32 0.0, %v7694
      %v7696 = vpop.f32.mrb[0].mxu0
      %7697 = vmatprep.mubr.bf16.mxu0 0
      %7698 = vmatmul.mubr.bf16.gmra.mrb[0].mxu0 %v7516
      %v7699 = vpop.f32.mrb[0].mxu0
      %v7700 = vadd.f32 0.0, %v7699
      %v7701 = vpop.f32.mrb[0].mxu0
      %v7702 = vpop.f32.mrb[0].mxu0
      %v7703 = vadd.f32 0.0, %v7702
      %v7704 = vpop.f32.mrb[0].mxu0
      %7705 = vmatprep.mubr.bf16.mxu0 0
      %7706 = vmatmul.mubr.bf16.gmra.mrb[0].mxu0 %v7517
      %v7707 = vpop.f32.mrb[0].mxu0
      %v7708 = vadd.f32 0.0, %v7707
      %v7709 = vpop.f32.mrb[0].mxu0
      %v7710 = vpop.f32.mrb[0].mxu0
      %v7711 = vadd.f32 0.0, %v7710
      %v7712 = vpop.f32.mrb[0].mxu0
      %7713 = vmatprep.mubr.bf16.mxu0 0
      %7714 = vmatmul.mubr.bf16.gmra.mrb[0].mxu0 %v7518
      %v7715 = vpop.f32.mrb[0].mxu0
      %v7716 = vadd.f32 0.0, %v7715
      %v7717 = vpop.f32.mrb[0].mxu0
      %v7718 = vpop.f32.mrb[0].mxu0
      %v7719 = vadd.f32 0.0, %v7718
      %v7720 = vpop.f32.mrb[0].mxu0
      %7721 = vmatprep.mubr.bf16.mxu0 0
      %7722 = vmatmul.mubr.bf16.gmra.mrb[0].mxu0 %v7519
      %v7723 = vpop.f32.mrb[0].mxu0
      %v7724 = vadd.f32 0.0, %v7723
      %v7725 = vpop.f32.mrb[0].mxu0
      %v7726 = vpop.f32.mrb[0].mxu0
      %v7727 = vadd.f32 0.0, %v7726
      %v7728 = vpop.f32.mrb[0].mxu0
      %7729 = vmatprep.mubr.bf16.mxu0 0
      %7730 = vmatmul.mubr.bf16.gmra.mrb[0].mxu0 %v7520
      %v7731 = vpop.f32.mrb[0].mxu0
      %v7732 = vadd.f32 0.0, %v7731
      %v7733 = vpop.f32.mrb[0].mxu0
      %v7734 = vpop.f32.mrb[0].mxu0
      %v7735 = vadd.f32 0.0, %v7734
      %v7736 = vpop.f32.mrb[0].mxu0
      %7737 = vmatprep.mubr.bf16.mxu0 0
      %7738 = vmatmul.mubr.bf16.gmra.mrb[0].mxu0 %v7521
      %v7739 = vpop.f32.mrb[0].mxu0
      %v7740 = vadd.f32 0.0, %v7739
      %v7741 = vpop.f32.mrb[0].mxu0
      %v7742 = vpop.f32.mrb[0].mxu0
      %v7743 = vadd.f32 0.0, %v7742
      %v7744 = vpop.f32.mrb[0].mxu0
      %7745 = vmatprep.mubr.bf16.mxu0 0
      %7746 = vmatmul.mubr.bf16.gmra.mrb[0].mxu0 %v7522
      %v7747 = vpop.f32.mrb[0].mxu0
      %v7748 = vadd.f32 0.0, %v7747
      %v7749 = vpop.f32.mrb[0].mxu0
      %v7750 = vpop.f32.mrb[0].mxu0
      %v7751 = vadd.f32 0.0, %v7750
      %v7752 = vpop.f32.mrb[0].mxu0
      %7753 = vmatprep.mubr.bf16.mxu0 0
      %7754 = vmatmul.mubr.bf16.gmra.mrb[0].mxu0 %v7523
      %v7755 = vpop.f32.mrb[0].mxu0
      %v7756 = vadd.f32 0.0, %v7755
      %v7757 = vpop.f32.mrb[0].mxu0
      %v7758 = vpop.f32.mrb[0].mxu0
      %v7759 = vadd.f32 0.0, %v7758
      %v7760 = vpop.f32.mrb[0].mxu0
      %7761 = vmatprep.mubr.bf16.mxu0 0
      %7762 = vmatmul.mubr.bf16.gmra.mrb[0].mxu0 %v7524
      %v7763 = vpop.f32.mrb[0].mxu0
      %v7764 = vadd.f32 0.0, %v7763
      %v7765 = vpop.f32.mrb[0].mxu0
      %v7766 = vpop.f32.mrb[0].mxu0
      %v7767 = vadd.f32 0.0, %v7766
      %v7768 = vpop.f32.mrb[0].mxu0
      %7769 = vmatprep.mubr.bf16.mxu0 0
      %7770 = vmatmul.mubr.bf16.gmra.mrb[0].mxu0 %v7525
      %v7771 = vpop.f32.mrb[0].mxu0
      %v7772 = vadd.f32 0.0, %v7771
      %v7773 = vpop.f32.mrb[0].mxu0
      %v7774 = vpop.f32.mrb[0].mxu0
      %v7775 = vadd.f32 0.0, %v7774
      %v7776 = vpop.f32.mrb[0].mxu0
      %7777 = vmatprep.mubr.bf16.mxu0 0
      %7778 = vmatmul.mubr.bf16.gmra.mrb[0].mxu0 %v7526
      %v7779 = vpop.f32.mrb[0].mxu0
      %v7780 = vadd.f32 0.0, %v7779
      %v7781 = vpop.f32.mrb[0].mxu0
      %v7782 = vpop.f32.mrb[0].mxu0
      %v7783 = vadd.f32 0.0, %v7782
      %v7784 = vpop.f32.mrb[0].mxu0
      %7785 = vmatprep.mubr.bf16.mxu0 0
      %7786 = vmatmul.mubr.bf16.gmra.mrb[0].mxu0 %v7527
      %v7787 = vpop.f32.mrb[0].mxu0
      %v7788 = vadd.f32 0.0, %v7787
      %v7789 = vpop.f32.mrb[0].mxu0
      %v7790 = vpop.f32.mrb[0].mxu0
      %v7791 = vpop.f32.mrb[0].mxu0
      %7792 = vdwg.mxu0
      %v7793 = vadd.f32 %v7425, %v7628
      %v7794 = vadd.f32 %v7426, %v7631
      %v7795 = vadd.f32 %v7427, %v7636
      %v7796 = vadd.f32 %v7428, %v7639
      %v7797 = vadd.f32 %v7429, %v7644
      %v7798 = vadd.f32 %v7430, %v7647
      %v7799 = vadd.f32 %v7431, %v7652
      %v7800 = vadd.f32 %v7432, %v7655
      %v7801 = vadd.f32 %v7433, %v7660
      %v7802 = vadd.f32 %v7434, %v7663
      %v7803 = vadd.f32 %v7435, %v7668
      %v7804 = vadd.f32 %v7436, %v7671
      %v7805 = vadd.f32 %v7437, %v7676
      %v7806 = vadd.f32 %v7438, %v7679
      %v7807 = vadd.f32 %v7439, %v7684
      %v7808 = vadd.f32 %v7440, %v7687
      %v7809 = vadd.f32 %v7441, %v7692
      %v7810 = vadd.f32 %v7442, %v7695
      %v7811 = vadd.f32 %v7443, %v7700
      %v7812 = vadd.f32 %v7444, %v7703
      %v7813 = vadd.f32 %v7445, %v7708
      %v7814 = vadd.f32 %v7446, %v7711
      %v7815 = vadd.f32 %v7447, %v7716
      %v7816 = vadd.f32 %v7448, %v7719
      %v7817 = vadd.f32 %v7449, %v7724
      %v7818 = vadd.f32 %v7450, %v7727
      %v7819 = vadd.f32 %v7451, %v7732
      %v7820 = vadd.f32 %v7452, %v7735
      %v7821 = vadd.f32 %v7453, %v7740
      %v7822 = vadd.f32 %v7454, %v7743
      %v7823 = vadd.f32 %v7455, %v7748
      %v7824 = vadd.f32 %v7456, %v7751
      %v7825 = vadd.f32 %v7457, %v7756
      %v7826 = vadd.f32 %v7458, %v7759
      %v7827 = vadd.f32 %v7459, %v7764
      %v7828 = vadd.f32 %v7460, %v7767
      %v7829 = vadd.f32 %v7461, %v7772
      %v7830 = vadd.f32 %v7462, %v7775
      %v7831 = vadd.f32 %v7463, %v7780
      %v7832 = vadd.f32 %v7464, %v7783
      %v7833 = vadd.f32 %v7465, %v7788
      %v7834 = vld [vmem:[%s327 + $0x18] sm:$0xff]
      %v7835 = vld [vmem:[%s327 + $0x20] sm:$0xff]
      %v7836 = vld [vmem:[%s327 + $0x28] sm:$0xff]
      %v7837 = vld [vmem:[%s327 + $0x30] sm:$0xff]
      %v7838 = vld [vmem:[%s327 + $0x38] sm:$0xff]
      %v7839 = vld [vmem:[%s327 + $0x40] sm:$0xff]
      %v7840 = vld [vmem:[%s327 + $0x48] sm:$0xff]
      %v7841 = vld [vmem:[%s327 + $0x50] sm:$0xff]
      %v7842 = vld [vmem:[%s327 + $0x58] sm:$0xff]
      %v7843 = vld [vmem:[%s327 + $0x60] sm:$0xff]
      %v7844 = vld [vmem:[%s327 + $0x68] sm:$0xff]
      %v7845 = vld [vmem:[%s327 + $0x70] sm:$0xff]
      %v7846 = vld [vmem:[%s327 + $0x78] sm:$0xff]
      %v7847 = vld [vmem:[%s327 + $0x80] sm:$0xff]
      %v7848 = vld [vmem:[%s327 + $0x88] sm:$0xff]
      %v7849 = vld [vmem:[%s327 + $0x90] sm:$0xff]
      %v7850 = vld [vmem:[%s327 + $0x98] sm:$0xff]
      %v7851 = vld [vmem:[%s327 + $0xa0] sm:$0xff]
      %v7852 = vld [vmem:[%s327 + $0xa8] sm:$0xff]
      %v7853 = vld [vmem:[%s327 + $0xb0] sm:$0xff]
      %v7854 = vld [vmem:[%s327 + $0xb8] sm:$0xff]
      %v7855 = vld [vmem:[%s327 + $0xc0] sm:$0xff]
      %v7856 = vld [vmem:[%s327 + $0xc8] sm:$0xff]
      %v7857 = vld [vmem:[%s327 + $0xd0] sm:$0xff]
      %v7858 = vld [vmem:[%s327 + $0xd8] sm:$0xff]
      %v7859 = vld [vmem:[%s327 + $0xe0] sm:$0xff]
      %v7860 = vld [vmem:[%s327 + $0xe8] sm:$0xff]
      %v7861 = vld [vmem:[%s327 + $0xf0] sm:$0xff]
      %v7862 = vld [vmem:[%s327 + $0xf8] sm:$0xff]
      %v7863 = vld [vmem:[%s327 + $0x100] sm:$0xff]
      %v7864 = vld [vmem:[%s327 + $0x108] sm:$0xff]
      %v7865 = vld [vmem:[%s327 + $0x110] sm:$0xff]
      %v7866 = vld [vmem:[%s327 + $0x118] sm:$0xff]
      %v7867 = vld [vmem:[%s327 + $0x120] sm:$0xff]
      %v7868 = vld [vmem:[%s327 + $0x128] sm:$0xff]
      %v7869 = vld [vmem:[%s327 + $0x130] sm:$0xff]
      %v7870 = vld [vmem:[%s327 + $0x138] sm:$0xff]
      %v7871 = vld [vmem:[%s327 + $0x140] sm:$0xff]
      %v7872 = vld [vmem:[%s327 + $0x148] sm:$0xff]
      %v7873 = vld [vmem:[%s327 + $0x150] sm:$0xff]
      %v7874 = vld [vmem:[%s327 + $0x158] sm:$0xf]
      %v7875 = vpack.c.bf16 %v7835, %v7834
      %v7876 = vpack.c.bf16 %v7837, %v7836
      %v7877 = vpack.c.bf16 %v7839, %v7838
      %v7878 = vpack.c.bf16 %v7841, %v7840
      %v7879 = vpack.c.bf16 %v7843, %v7842
      %v7880 = vpack.c.bf16 %v7845, %v7844
      %v7881 = vpack.c.bf16 %v7847, %v7846
      %v7882 = vpack.c.bf16 %v7849, %v7848
      %v7883 = vpack.c.bf16 %v7851, %v7850
      %v7884 = vpack.c.bf16 %v7853, %v7852
      %v7885 = vpack.c.bf16 %v7855, %v7854
      %v7886 = vpack.c.bf16 %v7857, %v7856
      %v7887 = vpack.c.bf16 %v7859, %v7858
      %v7888 = vpack.c.bf16 %v7861, %v7860
      %v7889 = vpack.c.bf16 %v7863, %v7862
      %v7890 = vpack.c.bf16 %v7865, %v7864
      %v7891 = vpack.c.bf16 %v7867, %v7866
      %v7892 = vpack.c.bf16 %v7869, %v7868
      %v7893 = vpack.c.bf16 %v7871, %v7870
      %v7894 = vpack.c.bf16 %v7873, %v7872
      %v7895 = vpack.c.bf16 %v7874, %v7874
      %v7896 = vld [vmem:[%s8] sm:$0xf]
      %v7897 = vld [vmem:[%s8 + $0x4] sm:$0xf]
      %v7898 = vld [vmem:[%s8 + $0x8] sm:$0xf]
      %v7899 = vld [vmem:[%s8 + $0xc] sm:$0xf]
      %v7900 = vld [vmem:[%s8 + $0x10] sm:$0xf]
      %v7901 = vld [vmem:[%s8 + $0x14] sm:$0xf]
      %v7902 = vld [vmem:[%s8 + $0x18] sm:$0xf]
      %v7903 = vld [vmem:[%s8 + $0x1c] sm:$0xf]
      %v7904 = vld [vmem:[%s8 + $0x20] sm:$0xf]
      %v7905 = vld [vmem:[%s8 + $0x24] sm:$0xf]
      %v7906 = vld [vmem:[%s8 + $0x28] sm:$0xf]
      %v7907 = vld [vmem:[%s8 + $0x2c] sm:$0xf]
      %v7908 = vld [vmem:[%s8 + $0x30] sm:$0xf]
      %v7909 = vld [vmem:[%s8 + $0x34] sm:$0xf]
      %v7910 = vld [vmem:[%s8 + $0x38] sm:$0xf]
      %v7911 = vld [vmem:[%s8 + $0x3c] sm:$0xf]
      %v7928 = vunpack.c.l.b16 %v7896
      %v7929 = vunpack.c.l.b16 %v7897
      %v7930 = vunpack.c.l.b16 %v7898
      %v7931 = vunpack.c.l.b16 %v7899
      %v7932 = vunpack.c.l.b16 %v7900
      %v7933 = vunpack.c.l.b16 %v7901
      %v7934 = vunpack.c.l.b16 %v7902
      %v7935 = vunpack.c.l.b16 %v7903
      %v7936 = vunpack.c.l.b16 %v7904
      %v7937 = vunpack.c.l.b16 %v7905
      %v7938 = vunpack.c.l.b16 %v7906
      %v7939 = vunpack.c.l.b16 %v7907
      %v7940 = vunpack.c.l.b16 %v7908
      %v7941 = vunpack.c.l.b16 %v7909
      %v7942 = vunpack.c.l.b16 %v7910
      %v7943 = vunpack.c.l.b16 %v7911
      %v7944 = vpack.c.b16 %v7929, %v7928
      %v7945 = vpack.c.b16 %v7931, %v7930
      %v7946 = vpack.c.b16 %v7933, %v7932
      %v7947 = vpack.c.b16 %v7935, %v7934
      %v7948 = vpack.c.b16 %v7937, %v7936
      %v7949 = vpack.c.b16 %v7939, %v7938
      %v7950 = vpack.c.b16 %v7941, %v7940
      %v7951 = vpack.c.b16 %v7943, %v7942
      %7960 = vmatprep.subr.bf16.mxu0 0
      %7961 = vmatpush1.bf16.msra.mxu0 %v7944
      %7962 = vmatprep.subr.bf16.mxu0 0
      %7963 = vmatpush1.bf16.msra.mxu0 %v7945
      %7964 = vmatprep.subr.bf16.mxu0 0
      %7965 = vmatpush1.bf16.msra.mxu0 %v7946
      %7966 = vmatprep.subr.bf16.mxu0 0
      %7967 = vmatpush1.bf16.msra.mxu0 %v7947
      %7968 = vmatprep.subr.bf16.mxu0 0
      %7969 = vmatpush1.bf16.msra.mxu0 %v7948
      %7970 = vmatprep.subr.bf16.mxu0 0
      %7971 = vmatpush1.bf16.msra.mxu0 %v7949
      %7972 = vmatprep.subr.bf16.mxu0 0
      %7973 = vmatpush1.bf16.msra.mxu0 %v7950
      %7974 = vmatprep.subr.bf16.mxu0 0
      %7975 = vmatpush1.bf16.msra.mxu0 %v7951
      %7976 = vmatprep.subr.bf16.mxu0 0
      %7977 = vmatpush1.bf16.msra.mxu0 0
      %7978 = vmatprep.subr.bf16.mxu0 0
      %7979 = vmatpush1.bf16.msra.mxu0 0
      %7980 = vmatprep.subr.bf16.mxu0 0
      %7981 = vmatpush1.bf16.msra.mxu0 0
      %7982 = vmatprep.subr.bf16.mxu0 0
      %7983 = vmatpush1.bf16.msra.mxu0 0
      %7984 = vmatprep.subr.bf16.mxu0 0
      %7985 = vmatpush1.bf16.msra.mxu0 0
      %7986 = vmatprep.subr.bf16.mxu0 0
      %7987 = vmatpush1.bf16.msra.mxu0 0
      %7988 = vmatprep.subr.bf16.mxu0 0
      %7989 = vmatpush1.bf16.msra.mxu0 0
      %7990 = vmatprep.subr.bf16.mxu0 0
      %7991 = vmatpush1.bf16.msra.mxu0 0
      %7992 = vmatprep.mubr.bf16.mxu0 0
      %7993 = vmatmul.mubr.bf16.gmra.mrb[0].mxu0 %v7875
      %v7994 = vpop.f32.mrb[0].mxu0
      %v7995 = vadd.f32 0.0, %v7994
      %v7996 = vpop.f32.mrb[0].mxu0
      %v7997 = vpop.f32.mrb[0].mxu0
      %v7998 = vadd.f32 0.0, %v7997
      %v7999 = vpop.f32.mrb[0].mxu0
      %8000 = vmatprep.mubr.bf16.mxu0 0
      %8001 = vmatmul.mubr.bf16.gmra.mrb[0].mxu0 %v7876
      %v8002 = vpop.f32.mrb[0].mxu0
      %v8003 = vadd.f32 0.0, %v8002
      %v8004 = vpop.f32.mrb[0].mxu0
      %v8005 = vpop.f32.mrb[0].mxu0
      %v8006 = vadd.f32 0.0, %v8005
      %v8007 = vpop.f32.mrb[0].mxu0
      %8008 = vmatprep.mubr.bf16.mxu0 0
      %8009 = vmatmul.mubr.bf16.gmra.mrb[0].mxu0 %v7877
      %v8010 = vpop.f32.mrb[0].mxu0
      %v8011 = vadd.f32 0.0, %v8010
      %v8012 = vpop.f32.mrb[0].mxu0
      %v8013 = vpop.f32.mrb[0].mxu0
      %v8014 = vadd.f32 0.0, %v8013
      %v8015 = vpop.f32.mrb[0].mxu0
      %8016 = vmatprep.mubr.bf16.mxu0 0
      %8017 = vmatmul.mubr.bf16.gmra.mrb[0].mxu0 %v7878
      %v8018 = vpop.f32.mrb[0].mxu0
      %v8019 = vadd.f32 0.0, %v8018
      %v8020 = vpop.f32.mrb[0].mxu0
      %v8021 = vpop.f32.mrb[0].mxu0
      %v8022 = vadd.f32 0.0, %v8021
      %v8023 = vpop.f32.mrb[0].mxu0
      %8024 = vmatprep.mubr.bf16.mxu0 0
      %8025 = vmatmul.mubr.bf16.gmra.mrb[0].mxu0 %v7879
      %v8026 = vpop.f32.mrb[0].mxu0
      %v8027 = vadd.f32 0.0, %v8026
      %v8028 = vpop.f32.mrb[0].mxu0
      %v8029 = vpop.f32.mrb[0].mxu0
      %v8030 = vadd.f32 0.0, %v8029
      %v8031 = vpop.f32.mrb[0].mxu0
      %8032 = vmatprep.mubr.bf16.mxu0 0
      %8033 = vmatmul.mubr.bf16.gmra.mrb[0].mxu0 %v7880
      %v8034 = vpop.f32.mrb[0].mxu0
      %v8035 = vadd.f32 0.0, %v8034
      %v8036 = vpop.f32.mrb[0].mxu0
      %v8037 = vpop.f32.mrb[0].mxu0
      %v8038 = vadd.f32 0.0, %v8037
      %v8039 = vpop.f32.mrb[0].mxu0
      %8040 = vmatprep.mubr.bf16.mxu0 0
      %8041 = vmatmul.mubr.bf16.gmra.mrb[0].mxu0 %v7881
      %v8042 = vpop.f32.mrb[0].mxu0
      %v8043 = vadd.f32 0.0, %v8042
      %v8044 = vpop.f32.mrb[0].mxu0
      %v8045 = vpop.f32.mrb[0].mxu0
      %v8046 = vadd.f32 0.0, %v8045
      %v8047 = vpop.f32.mrb[0].mxu0
      %8048 = vmatprep.mubr.bf16.mxu0 0
      %8049 = vmatmul.mubr.bf16.gmra.mrb[0].mxu0 %v7882
      %v8050 = vpop.f32.mrb[0].mxu0
      %v8051 = vadd.f32 0.0, %v8050
      %v8052 = vpop.f32.mrb[0].mxu0
      %v8053 = vpop.f32.mrb[0].mxu0
      %v8054 = vadd.f32 0.0, %v8053
      %v8055 = vpop.f32.mrb[0].mxu0
      %8056 = vmatprep.mubr.bf16.mxu0 0
      %8057 = vmatmul.mubr.bf16.gmra.mrb[0].mxu0 %v7883
      %v8058 = vpop.f32.mrb[0].mxu0
      %v8059 = vadd.f32 0.0, %v8058
      %v8060 = vpop.f32.mrb[0].mxu0
      %v8061 = vpop.f32.mrb[0].mxu0
      %v8062 = vadd.f32 0.0, %v8061
      %v8063 = vpop.f32.mrb[0].mxu0
      %8064 = vmatprep.mubr.bf16.mxu0 0
      %8065 = vmatmul.mubr.bf16.gmra.mrb[0].mxu0 %v7884
      %v8066 = vpop.f32.mrb[0].mxu0
      %v8067 = vadd.f32 0.0, %v8066
      %v8068 = vpop.f32.mrb[0].mxu0
      %v8069 = vpop.f32.mrb[0].mxu0
      %v8070 = vadd.f32 0.0, %v8069
      %v8071 = vpop.f32.mrb[0].mxu0
      %8072 = vmatprep.mubr.bf16.mxu0 0
      %8073 = vmatmul.mubr.bf16.gmra.mrb[0].mxu0 %v7885
      %v8074 = vpop.f32.mrb[0].mxu0
      %v8075 = vadd.f32 0.0, %v8074
      %v8076 = vpop.f32.mrb[0].mxu0
      %v8077 = vpop.f32.mrb[0].mxu0
      %v8078 = vadd.f32 0.0, %v8077
      %v8079 = vpop.f32.mrb[0].mxu0
      %8080 = vmatprep.mubr.bf16.mxu0 0
      %8081 = vmatmul.mubr.bf16.gmra.mrb[0].mxu0 %v7886
      %v8082 = vpop.f32.mrb[0].mxu0
      %v8083 = vadd.f32 0.0, %v8082
      %v8084 = vpop.f32.mrb[0].mxu0
      %v8085 = vpop.f32.mrb[0].mxu0
      %v8086 = vadd.f32 0.0, %v8085
      %v8087 = vpop.f32.mrb[0].mxu0
      %8088 = vmatprep.mubr.bf16.mxu0 0
      %8089 = vmatmul.mubr.bf16.gmra.mrb[0].mxu0 %v7887
      %v8090 = vpop.f32.mrb[0].mxu0
      %v8091 = vadd.f32 0.0, %v8090
      %v8092 = vpop.f32.mrb[0].mxu0
      %v8093 = vpop.f32.mrb[0].mxu0
      %v8094 = vadd.f32 0.0, %v8093
      %v8095 = vpop.f32.mrb[0].mxu0
      %8096 = vmatprep.mubr.bf16.mxu0 0
      %8097 = vmatmul.mubr.bf16.gmra.mrb[0].mxu0 %v7888
      %v8098 = vpop.f32.mrb[0].mxu0
      %v8099 = vadd.f32 0.0, %v8098
      %v8100 = vpop.f32.mrb[0].mxu0
      %v8101 = vpop.f32.mrb[0].mxu0
      %v8102 = vadd.f32 0.0, %v8101
      %v8103 = vpop.f32.mrb[0].mxu0
      %8104 = vmatprep.mubr.bf16.mxu0 0
      %8105 = vmatmul.mubr.bf16.gmra.mrb[0].mxu0 %v7889
      %v8106 = vpop.f32.mrb[0].mxu0
      %v8107 = vadd.f32 0.0, %v8106
      %v8108 = vpop.f32.mrb[0].mxu0
      %v8109 = vpop.f32.mrb[0].mxu0
      %v8110 = vadd.f32 0.0, %v8109
      %v8111 = vpop.f32.mrb[0].mxu0
      %8112 = vmatprep.mubr.bf16.mxu0 0
      %8113 = vmatmul.mubr.bf16.gmra.mrb[0].mxu0 %v7890
      %v8114 = vpop.f32.mrb[0].mxu0
      %v8115 = vadd.f32 0.0, %v8114
      %v8116 = vpop.f32.mrb[0].mxu0
      %v8117 = vpop.f32.mrb[0].mxu0
      %v8118 = vadd.f32 0.0, %v8117
      %v8119 = vpop.f32.mrb[0].mxu0
      %8120 = vmatprep.mubr.bf16.mxu0 0
      %8121 = vmatmul.mubr.bf16.gmra.mrb[0].mxu0 %v7891
      %v8122 = vpop.f32.mrb[0].mxu0
      %v8123 = vadd.f32 0.0, %v8122
      %v8124 = vpop.f32.mrb[0].mxu0
      %v8125 = vpop.f32.mrb[0].mxu0
      %v8126 = vadd.f32 0.0, %v8125
      %v8127 = vpop.f32.mrb[0].mxu0
      %8128 = vmatprep.mubr.bf16.mxu0 0
      %8129 = vmatmul.mubr.bf16.gmra.mrb[0].mxu0 %v7892
      %v8130 = vpop.f32.mrb[0].mxu0
      %v8131 = vadd.f32 0.0, %v8130
      %v8132 = vpop.f32.mrb[0].mxu0
      %v8133 = vpop.f32.mrb[0].mxu0
      %v8134 = vadd.f32 0.0, %v8133
      %v8135 = vpop.f32.mrb[0].mxu0
      %8136 = vmatprep.mubr.bf16.mxu0 0
      %8137 = vmatmul.mubr.bf16.gmra.mrb[0].mxu0 %v7893
      %v8138 = vpop.f32.mrb[0].mxu0
      %v8139 = vadd.f32 0.0, %v8138
      %v8140 = vpop.f32.mrb[0].mxu0
      %v8141 = vpop.f32.mrb[0].mxu0
      %v8142 = vadd.f32 0.0, %v8141
      %v8143 = vpop.f32.mrb[0].mxu0
      %8144 = vmatprep.mubr.bf16.mxu0 0
      %8145 = vmatmul.mubr.bf16.gmra.mrb[0].mxu0 %v7894
      %v8146 = vpop.f32.mrb[0].mxu0
      %v8147 = vadd.f32 0.0, %v8146
      %v8148 = vpop.f32.mrb[0].mxu0
      %v8149 = vpop.f32.mrb[0].mxu0
      %v8150 = vadd.f32 0.0, %v8149
      %v8151 = vpop.f32.mrb[0].mxu0
      %8152 = vmatprep.mubr.bf16.mxu0 0
      %8153 = vmatmul.mubr.bf16.gmra.mrb[0].mxu0 %v7895
      %v8154 = vpop.f32.mrb[0].mxu0
      %v8155 = vadd.f32 0.0, %v8154
      %v8156 = vpop.f32.mrb[0].mxu0
      %v8157 = vpop.f32.mrb[0].mxu0
      %v8158 = vpop.f32.mrb[0].mxu0
      %8159 = vdwg.mxu0
      %v8160 = vld [vmem:[%s7] sm:$0x1]
      %v8162 = vlaneseq
      %v8163 = vshrl.u32 %v8162, 7
      %v8164 = vsub.s32 0, %v8163
      %v8165 = vrot.slane %v8160, %v8164
      %v8167 = vadd.f32 %v7793, %v8165
      %v8168 = vadd.f32 %v7794, %v8165
      %v8169 = vadd.f32 %v7795, %v8165
      %v8170 = vadd.f32 %v7796, %v8165
      %v8171 = vadd.f32 %v7797, %v8165
      %v8172 = vadd.f32 %v7798, %v8165
      %v8173 = vadd.f32 %v7799, %v8165
      %v8174 = vadd.f32 %v7800, %v8165
      %v8175 = vadd.f32 %v7801, %v8165
      %v8176 = vadd.f32 %v7802, %v8165
      %v8177 = vadd.f32 %v7803, %v8165
      %v8178 = vadd.f32 %v7804, %v8165
      %v8179 = vadd.f32 %v7805, %v8165
      %v8180 = vadd.f32 %v7806, %v8165
      %v8181 = vadd.f32 %v7807, %v8165
      %v8182 = vadd.f32 %v7808, %v8165
      %v8183 = vadd.f32 %v7809, %v8165
      %v8184 = vadd.f32 %v7810, %v8165
      %v8185 = vadd.f32 %v7811, %v8165
      %v8186 = vadd.f32 %v7812, %v8165
      %v8187 = vadd.f32 %v7813, %v8165
      %v8188 = vadd.f32 %v7814, %v8165
      %v8189 = vadd.f32 %v7815, %v8165
      %v8190 = vadd.f32 %v7816, %v8165
      %v8191 = vadd.f32 %v7817, %v8165
      %v8192 = vadd.f32 %v7818, %v8165
      %v8193 = vadd.f32 %v7819, %v8165
      %v8194 = vadd.f32 %v7820, %v8165
      %v8195 = vadd.f32 %v7821, %v8165
      %v8196 = vadd.f32 %v7822, %v8165
      %v8197 = vadd.f32 %v7823, %v8165
      %v8198 = vadd.f32 %v7824, %v8165
      %v8199 = vadd.f32 %v7825, %v8165
      %v8200 = vadd.f32 %v7826, %v8165
      %v8201 = vadd.f32 %v7827, %v8165
      %v8202 = vadd.f32 %v7828, %v8165
      %v8203 = vadd.f32 %v7829, %v8165
      %v8204 = vadd.f32 %v7830, %v8165
      %v8205 = vadd.f32 %v7831, %v8165
      %v8206 = vadd.f32 %v7832, %v8165
      %v8207 = vadd.f32 %v7833, %v8165
      %v8208 = vadd.f32 %v8167, %v7995
      %v8209 = vadd.f32 %v8168, %v7998
      %v8210 = vadd.f32 %v8169, %v8003
      %v8211 = vadd.f32 %v8170, %v8006
      %v8212 = vadd.f32 %v8171, %v8011
      %v8213 = vadd.f32 %v8172, %v8014
      %v8214 = vadd.f32 %v8173, %v8019
      %v8215 = vadd.f32 %v8174, %v8022
      %v8216 = vadd.f32 %v8175, %v8027
      %v8217 = vadd.f32 %v8176, %v8030
      %v8218 = vadd.f32 %v8177, %v8035
      %v8219 = vadd.f32 %v8178, %v8038
      %v8220 = vadd.f32 %v8179, %v8043
      %v8221 = vadd.f32 %v8180, %v8046
      %v8222 = vadd.f32 %v8181, %v8051
      %v8223 = vadd.f32 %v8182, %v8054
      %v8224 = vadd.f32 %v8183, %v8059
      %v8225 = vadd.f32 %v8184, %v8062
      %v8226 = vadd.f32 %v8185, %v8067
      %v8227 = vadd.f32 %v8186, %v8070
      %v8228 = vadd.f32 %v8187, %v8075
      %v8229 = vadd.f32 %v8188, %v8078
      %v8230 = vadd.f32 %v8189, %v8083
      %v8231 = vadd.f32 %v8190, %v8086
      %v8232 = vadd.f32 %v8191, %v8091
      %v8233 = vadd.f32 %v8192, %v8094
      %v8234 = vadd.f32 %v8193, %v8099
      %v8235 = vadd.f32 %v8194, %v8102
      %v8236 = vadd.f32 %v8195, %v8107
      %v8237 = vadd.f32 %v8196, %v8110
      %v8238 = vadd.f32 %v8197, %v8115
      %v8239 = vadd.f32 %v8198, %v8118
      %v8240 = vadd.f32 %v8199, %v8123
      %v8241 = vadd.f32 %v8200, %v8126
      %v8242 = vadd.f32 %v8201, %v8131
      %v8243 = vadd.f32 %v8202, %v8134
      %v8244 = vadd.f32 %v8203, %v8139
      %v8245 = vadd.f32 %v8204, %v8142
      %v8246 = vadd.f32 %v8205, %v8147
      %v8247 = vadd.f32 %v8206, %v8150
      %v8248 = vadd.f32 %v8207, %v8155
      %8249 = vst [vmem:[%s332] sm:$0xff] %v8208
      %8250 = vst [vmem:[%s332 + $0x8] sm:$0xff] %v8209
      %8251 = vst [vmem:[%s332 + $0x10] sm:$0xff] %v8210
      %8252 = vst [vmem:[%s332 + $0x18] sm:$0xff] %v8211
      %8253 = vst [vmem:[%s332 + $0x20] sm:$0xff] %v8212
      %8254 = vst [vmem:[%s332 + $0x28] sm:$0xff] %v8213
      %8255 = vst [vmem:[%s332 + $0x30] sm:$0xff] %v8214
      %8256 = vst [vmem:[%s332 + $0x38] sm:$0xff] %v8215
      %8257 = vst [vmem:[%s332 + $0x40] sm:$0xff] %v8216
      %8258 = vst [vmem:[%s332 + $0x48] sm:$0xff] %v8217
      %8259 = vst [vmem:[%s332 + $0x50] sm:$0xff] %v8218
      %8260 = vst [vmem:[%s332 + $0x58] sm:$0xff] %v8219
      %8261 = vst [vmem:[%s332 + $0x60] sm:$0xff] %v8220
      %8262 = vst [vmem:[%s332 + $0x68] sm:$0xff] %v8221
      %8263 = vst [vmem:[%s332 + $0x70] sm:$0xff] %v8222
      %8264 = vst [vmem:[%s332 + $0x78] sm:$0xff] %v8223
      %8265 = vst [vmem:[%s332 + $0x80] sm:$0xff] %v8224
      %8266 = vst [vmem:[%s332 + $0x88] sm:$0xff] %v8225
      %8267 = vst [vmem:[%s332 + $0x90] sm:$0xff] %v8226
      %8268 = vst [vmem:[%s332 + $0x98] sm:$0xff] %v8227
      %8269 = vst [vmem:[%s332 + $0xa0] sm:$0xff] %v8228
      %8270 = vst [vmem:[%s332 + $0xa8] sm:$0xff] %v8229
      %8271 = vst [vmem:[%s332 + $0xb0] sm:$0xff] %v8230
      %8272 = vst [vmem:[%s332 + $0xb8] sm:$0xff] %v8231
      %8273 = vst [vmem:[%s332 + $0xc0] sm:$0xff] %v8232
      %8274 = vst [vmem:[%s332 + $0xc8] sm:$0xff] %v8233
      %8275 = vst [vmem:[%s332 + $0xd0] sm:$0xff] %v8234
      %8276 = vst [vmem:[%s332 + $0xd8] sm:$0xff] %v8235
      %8277 = vst [vmem:[%s332 + $0xe0] sm:$0xff] %v8236
      %8278 = vst [vmem:[%s332 + $0xe8] sm:$0xff] %v8237
      %8279 = vst [vmem:[%s332 + $0xf0] sm:$0xff] %v8238
      %8280 = vst [vmem:[%s332 + $0xf8] sm:$0xff] %v8239
      %8281 = vst [vmem:[%s332 + $0x100] sm:$0xff] %v8240
      %8282 = vst [vmem:[%s332 + $0x108] sm:$0xff] %v8241
      %8283 = vst [vmem:[%s332 + $0x110] sm:$0xff] %v8242
      %8284 = vst [vmem:[%s332 + $0x118] sm:$0xff] %v8243
      %8285 = vst [vmem:[%s332 + $0x120] sm:$0xff] %v8244
      %8286 = vst [vmem:[%s332 + $0x128] sm:$0xff] %v8245
      %8287 = vst [vmem:[%s332 + $0x130] sm:$0xff] %v8246
      %8288 = vst [vmem:[%s332 + $0x138] sm:$0xff] %v8247
      %8289 = vst [vmem:[%s332 + $0x140] sm:$0xf] %v8248
      %p8290 = scmp.lt.s32.totalorder %s20, 1
      %s8291 = scalar_select %p8290, %s20, 1
      %s8292 = smul.addr %s8291, 41
      %s8293 = smul.addr %s8292, 8
      %s8294 = scalar_lea.vmem %s9, %s8293
      // Predicated region
      $region57: #{tpu_custom_call.1} parent=55 // pred_check
        %p8295 = pneg %p232
      $region58: #{tpu_custom_call.1} parent=55 // pred_check_branch
        %8297 = sbr.rel (%p8295) target = $region60
      $region59: #{tpu_custom_call.1} parent=55 // pred_region
        _
      $region60: #{tpu_custom_call.1} parent=55 // pred_fallthru
        _
    $region56: #{tpu_custom_call.1} parent=5 // pred_fallthru
      _
    %p8298 = scmp.le.s32.totalorder 2, %s15
    // Predicated region
    $region61: #{tpu_custom_call.1} parent=5 // pred_check
      %p8299 = pneg %p8298
    $region62: #{tpu_custom_call.1} parent=5 // pred_check_branch
      %8301 = sbr.rel (%p8299) target = $region64
    $region63: #{tpu_custom_call.1} parent=5 // pred_region
      %s8302 = ssub.s32 %s15, 2
      // Predicated region
      $region65: #{tpu_custom_call.1} parent=63 // pred_check
        %p8303 = pneg %p238
      $region66: #{tpu_custom_call.1} parent=63 // pred_check_branch
        %8305 = sbr.rel (%p8303) target = $region68
      $region67: #{tpu_custom_call.1} parent=63 // pred_region
        %p8306 = scmp.lt.s32.totalorder %s21, 1
        %s8307 = scalar_select %p8306, %s21, 1
        %s8308 = smul.addr %s8307, 41
        %s8309 = smul.addr %s8308, 8
        %s8310 = scalar_lea.vmem %s9, %s8309
      $region68: #{tpu_custom_call.1} parent=63 // pred_fallthru
        _
    $region64: #{tpu_custom_call.1} parent=5 // pred_fallthru
      _
  $region6: #{tpu_custom_call.1} parent=0 // loop_footer
    %s19 = sadd.s32 1, %s15
  $region7: #{tpu_custom_call.1} parent=0 // loop_footer_branch
    %14 = sbr.rel target = $region3
  $region8: #{tpu_custom_call.1} parent=0 // loop_exit
    _

</llo_original>
